<compile_context>
chip_gen: v7x
topology: tpu7x:2x2x1
jax: 0.10.0
libtpu: 0.0.40
codegen_flags: <defaults>
</compile_context>

<pallas_src>
import functools
import math

import jax
import jax.numpy as jnp
from jax.experimental import pallas as pl
from jax.experimental.pallas import tpu as pltpu

DTYPE = jnp.float32
WDTYPE = jnp.bfloat16          # MXU-native operand dtype for the heavy matmuls
LN_EPS = 1e-5                  # nn.LayerNorm default
L_MAX = 4096                   # HyenaOperator(l_max=4096)
FILTER_ORDER = 64              # HyenaFilter default `order`
POS_EMB_DIM = 3                # HyenaFilter default `emb_dim`
N_BLOCKS = 8
D_PAD = 128                    # padded channel dim (lane-dense)
H_PAD = 128                    # padded FFN hidden dim (2*d -> 128)
O_PAD = 128                    # padded output dim


# ----------------------------------------------------------------------------- helpers

def _gelu(x):
    # TODO(synk): torch.nn.GELU defaults to the exact erf form; tanh approximation is
    # used in-kernel because erf has no reliable Mosaic lowering.
    c = math.sqrt(2.0 / math.pi)
    return 0.5 * x * (1.0 + jnp.tanh(c * (x + 0.044715 * x * x * x)))


# ----------------------------------------------------------------------------- kernel

def _encoder_kernel(x_ref, embw_ref, lng_ref, lnb_ref,
                    wi_ref, bi_ref, sw_ref, sb_ref, T_ref, D_ref,
                    wo_ref, bo_ref,
                    f1w_ref, f1b_ref, f2w_ref, f2b_ref, f3w_ref, f3b_ref,
                    projw_ref,
                    o_ref,
                    xe_s, acc_s, *, B, L, d_real):
    """Whole encoder forward.  grid = (N_BLOCKS,), one Hyena+FFN branch per step."""
    g = pl.program_id(0)
    n_blk = pl.num_programs(0)
    M = x_ref.shape[0]                      # B * L rows (batch folded into matmul M dim)
    DP = embw_ref.shape[1]                  # padded channel dim (128, lane-dense)

    gamma = lng_ref[...]
    beta = lnb_ref[...]

    # LayerNorm masked to the true d_real channels (padded lanes carry zeros and must
    # keep carrying zeros: gamma/beta pads are zero).
    lane = jax.lax.broadcasted_iota(jnp.int32, (1, DP), 1)
    ch_mask = (lane < d_real).astype(jnp.float32)
    inv_n = 1.0 / float(d_real)

    def masked_ln(x):
        x = x.astype(jnp.float32)
        mu = jnp.sum(x * ch_mask, axis=-1, keepdims=True) * inv_n
        diff = (x - mu) * ch_mask
        var = jnp.sum(diff * diff, axis=-1, keepdims=True) * inv_n
        return diff * jax.lax.rsqrt(var + LN_EPS) * gamma + beta

    # --- embedding computed once (g==0), kept resident in VMEM scratch -----------------
    @pl.when(g == 0)
    def _():
        xe_s[...] = jnp.dot(x_ref[...], embw_ref[...],
                            preferred_element_type=jnp.float32)
        acc_s[...] = jnp.zeros_like(acc_s)

    xe = xe_s[...]
    xn = masked_ln(xe)        # recomputed per block: cheap VPU/EUP, saves a scratch

    # --- Hyena in_proj: Linear(d, 3d) on all B*L rows (bf16 -> MXU) --------------------
    u = (jnp.dot(xn.astype(WDTYPE), wi_ref[0], preferred_element_type=jnp.float32)
         + bi_ref[0])

    # --- short_filter: depthwise causal Conv1d(k=3, padding=2)[..., :L]
    #     uc[t] = w0*u[t-2] + w1*u[t-1] + w2*u[t] + b ; per-sequence position masks keep
    #     the flattened-batch roll from leaking across batch boundaries.
    row = jax.lax.broadcasted_iota(jnp.int32, (M, 1), 0)
    if (L & (L - 1)) == 0:
        pos = row & (L - 1)
    else:
        pos = row % L
    m1 = (pos >= 1).astype(jnp.float32)
    m2 = (pos >= 2).astype(jnp.float32)
    sw = sw_ref[0]
    u1 = pltpu.roll(u, shift=1, axis=0) * m1
    u2 = pltpu.roll(u, shift=2, axis=0) * m2
    uc = sw[2:3] * u + sw[1:2] * u1 + sw[0:1] * u2 + sb_ref[0]

    xa = uc[:, :DP]                         # 128-lane-aligned gate slices
    xb = uc[:, DP:2 * DP]
    v = uc[:, 2 * DP:] * xb                 # first gate (order = 2)

    # --- long implicit causal conv: per-channel Toeplitz matmul on the MXU.
    #     T[c*L + t, s] = k[t-s, c] * (s <= t) (built host-side, bf16, real channels).
    #     Batch is folded into the matmul N dim: v_packed[s, b*d + c] = v[b, s, c],
    #     Y = T @ v_packed, and conv[b, t, c] = Y[c*L + t, b*d + c] (diag selection).
    T = T_ref[0]                                                   # (d_real*L, L)
    v_packed = jnp.concatenate(
        [v[b * L:(b + 1) * L, :d_real] for b in range(B)], axis=1)  # (L, B*d_real)
    Y = jnp.dot(T, v_packed.astype(WDTYPE), preferred_element_type=jnp.float32)
    Y = Y.reshape(d_real, L, B * d_real)

    ci = jax.lax.broadcasted_iota(jnp.int32, (d_real, B * d_real), 0)
    cj = jax.lax.broadcasted_iota(jnp.int32, (d_real, B * d_real), 1)
    if (d_real & (d_real - 1)) == 0:
        cj = cj & (d_real - 1)
    else:
        cj = cj % d_real
    sel = (ci == cj).astype(jnp.float32)                            # (d_real, B*d_real)

    conv_pack = jnp.sum(Y * sel[:, None, :], axis=0)                # (L, B*d_real)
    conv = jnp.concatenate(
        [conv_pack[:, b * d_real:(b + 1) * d_real] for b in range(B)], axis=0)
    conv = jnp.concatenate(
        [conv, jnp.zeros((M, DP - d_real), jnp.float32)], axis=1)   # lane-pad to DP

    v = conv + v * D_ref[0]                 # fftconv's "+ u * D" (no scratch round-trip)
    y = v * xa                              # final gate

    # --- out_proj, then norm(h) + x residual (shared LayerNorm) ------------------------
    h = (jnp.dot(y.astype(WDTYPE), wo_ref[0], preferred_element_type=jnp.float32)
         + bo_ref[0])
    z = masked_ln(h) + xe

    # --- FeedForward_q (Dropout identity in eval), accumulated over the 8 branches -----
    h1 = _gelu(jnp.dot(z.astype(WDTYPE), f1w_ref[0],
                       preferred_element_type=jnp.float32) + f1b_ref[0])
    h2 = _gelu(jnp.dot(h1.astype(WDTYPE), f2w_ref[0],
                       preferred_element_type=jnp.float32) + f2b_ref[0])
    f = jnp.dot(h2.astype(WDTYPE), f3w_ref[0],
                preferred_element_type=jnp.float32) + f3b_ref[0]
    acc_s[...] = acc_s[...] + f

    # --- final shared LayerNorm + project_to_latent, emitted on the last branch --------
    @pl.when(g == n_blk - 1)
    def _():
        s = masked_ln(acc_s[...])
        o_ref[...] = jnp.dot(s.astype(WDTYPE), projw_ref[...],
                             preferred_element_type=jnp.float32).astype(o_ref.dtype)


# ----------------------------------------------------------------------------- wrapper

def encoder_forward(iparams, x, input_pos=None, *, d_real, out_dim):
    # `input_pos` is accepted but unused, matching the PyTorch forward().
    del input_pos
    B, L, Cin = x.shape
    blk = iparams['blocks']
    G = blk['wi'].shape[0]
    DP = iparams['emb_w'].shape[1]
    HP = blk['f1w'].shape[2]
    OP = iparams['proj_w'].shape[1]
    M = B * L
    assert blk['T'].shape[1] == d_real * L and blk['T'].shape[2] == L

    def const2(g):
        return (0, 0)

    def per_block(g):
        return (g, 0, 0)

    kernel = functools.partial(_encoder_kernel, B=B, L=L, d_real=d_real)

    out = pl.pallas_call(
        kernel,
        out_shape=jax.ShapeDtypeStruct((M, OP), DTYPE),
        grid=(G,),
        in_specs=[
            pl.BlockSpec((M, Cin), const2),               # x (flattened batch*seq)
            pl.BlockSpec((Cin, DP), const2),              # to_embedding W (bias-free)
            pl.BlockSpec((1, DP), const2),                # shared LayerNorm gamma
            pl.BlockSpec((1, DP), const2),                # shared LayerNorm beta
            pl.BlockSpec((1, DP, 3 * DP), per_block),     # Hyena in_proj W
            pl.BlockSpec((1, 1, 3 * DP), per_block),      # Hyena in_proj b
            pl.BlockSpec((1, 3, 3 * DP), per_block),      # short filter taps
            pl.BlockSpec((1, 1, 3 * DP), per_block),      # short filter bias
            pl.BlockSpec((1, d_real * L, L), per_block),  # causal Toeplitz long filter
            pl.BlockSpec((1, 1, DP), per_block),          # filter bias D
            pl.BlockSpec((1, DP, DP), per_block),         # Hyena out_proj W
            pl.BlockSpec((1, 1, DP), per_block),          # Hyena out_proj b
            pl.BlockSpec((1, DP, HP), per_block),         # FFN W1
            pl.BlockSpec((1, 1, HP), per_block),          # FFN b1
            pl.BlockSpec((1, HP, HP), per_block),         # FFN W2
            pl.BlockSpec((1, 1, HP), per_block),          # FFN b2
            pl.BlockSpec((1, HP, DP), per_block),         # FFN W3
            pl.BlockSpec((1, 1, DP), per_block),          # FFN b3
            pl.BlockSpec((DP, OP), const2),               # project_to_latent W (bf16)
        ],
        out_specs=pl.BlockSpec((M, OP), const2),          # written once, at g == G-1
        scratch_shapes=[pltpu.VMEM((M, DP), jnp.float32),     # xe (embedding, resident)
                        pltpu.VMEM((M, DP), jnp.float32)],    # acc (sum of 8 branches)
        compiler_params=pltpu.CompilerParams(
            # single grid axis is a reduction over the 8 branches -> "arbitrary".
            # TODO(synk): on v7x add a leading "parallel" batch axis for the 2nd TC.
            dimension_semantics=("arbitrary",),
            vmem_limit_bytes=64 * 1024 * 1024),
    )(x.reshape(M, Cin), iparams['emb_w'], iparams['ln_g'], iparams['ln_b'],
      blk['wi'], blk['bi'], blk['sw'], blk['sb'], blk['T'], blk['D'],
      blk['wo'], blk['bo'], blk['f1w'], blk['f1b'], blk['f2w'], blk['f2b'],
      blk['f3w'], blk['f3b'], iparams['proj_w'])
    # slice the lane-padded output back to the true latent dim
    return out.reshape(B, L, OP)[:, :, :out_dim]


# --------------------------------------------------------------------- parameter glue

def init_params(key, input_channels, in_emb_dim, out_seq_emb_dim):
    d = in_emb_dim
    keys = iter(jax.random.split(key, 256))

    def rnd(shape, scale):
        return (scale * jax.random.normal(next(keys), shape)).astype(DTYPE)

    def one_block():
        return dict(
            # HyenaOperator (order=2): in_proj (d -> 3d), depthwise short filter,
            # implicit long-filter MLP, out_proj (d -> d)
            wi=rnd((d, 3 * d), 0.1), bi=rnd((1, 3 * d), 0.02),
            sw=rnd((3, 3 * d), 0.3), sb=rnd((1, 3 * d), 0.02),
            wo=rnd((d, d), 0.1), bo=rnd((1, d), 0.02),
            D=rnd((1, d), 1.0),                        # HyenaFilter.bias ~ randn(d)
            freq=jnp.ones((1, FILTER_ORDER), DTYPE),   # Sin activation, w=1
            fw0=rnd((POS_EMB_DIM, FILTER_ORDER), 0.5), fb0=rnd((1, FILTER_ORDER), 0.1),
            fw1=rnd((FILTER_ORDER, FILTER_ORDER), 0.2), fb1=rnd((1, FILTER_ORDER), 0.1),
            fw2=rnd((FILTER_ORDER, FILTER_ORDER), 0.2), fb2=rnd((1, FILTER_ORDER), 0.1),
            fw3=rnd((FILTER_ORDER, d), 0.2),
            # FeedForward_q: Linear(d,2d) -> GELU -> Linear(2d,2d) -> GELU -> Linear(2d,d)
            f1w=rnd((d, 2 * d), 0.1), f1b=jnp.zeros((1, 2 * d), DTYPE),
            f2w=rnd((2 * d, 2 * d), 0.1), f2b=jnp.zeros((1, 2 * d), DTYPE),
            f3w=rnd((2 * d, d), 0.1), f3b=jnp.zeros((1, d), DTYPE),
        )

    blocks = [one_block() for _ in range(N_BLOCKS)]
    stacked = {name: jnp.stack([b[name] for b in blocks], axis=0) for name in blocks[0]}
    return dict(
        emb_w=rnd((input_channels, d), 0.1),          # to_embedding (bias=False)
        ln_g=jnp.ones((1, d), DTYPE),                 # shared LayerNorm
        ln_b=jnp.zeros((1, d), DTYPE),
        proj_w=rnd((d, out_seq_emb_dim), 0.1),        # project_to_latent (bias=False)
        blocks=stacked,
    )


def compute_filters(blk, L):
    """Parameter-only precompute of the Hyena implicit long-conv filter k (no x dependence)."""
    t = jnp.linspace(0.0, 1.0, L_MAX)[:, None]
    tr = jnp.linspace(0.0, L_MAX - 1.0, L_MAX)[:, None]
    w = 2.0 * math.pi * tr / L_MAX
    bands = (POS_EMB_DIM - 1) // 2
    f = jnp.linspace(1e-4, bands - 1.0, bands)[None, :]
    zc = jnp.exp(-1j * f * w)
    z = jnp.concatenate([t, zc.real, zc.imag], axis=-1)[:L].astype(DTYPE)   # (L, 3)
    tt = t[:L].astype(DTYPE)                                                # (L, 1)

    def one(fw0, fb0, fw1, fb1, fw2, fb2, fw3, freq):
        h = jnp.sin(freq * (z @ fw0 + fb0))
        h = jnp.sin(freq * (h @ fw1 + fb1))
        h = jnp.sin(freq * (h @ fw2 + fb2))
        h = h @ fw3                                                         # (L, d)
        d_model = fw3.shape[1]
        max_decay = math.log(1e-2) / 0.3
        min_decay = math.log(1e-2) / 1.5
        deltas = jnp.linspace(min_decay, max_decay, d_model)[None, :]
        decay = jnp.exp(-tt * jnp.abs(deltas))                              # ExponentialModulation
        return (h * decay).astype(DTYPE)

    return jax.vmap(one)(blk['fw0'], blk['fb0'], blk['fw1'], blk['fb1'],
                         blk['fw2'], blk['fb2'], blk['fw3'], blk['freq'])


def _toeplitz_one(k):
    """(L, d) filter -> (d*L, L) causal Toeplitz operator, T[c*L+t, s] = k[t-s, c]*(s<=t)."""
    L, d = k.shape
    t = jnp.arange(L)[:, None]
    s = jnp.arange(L)[None, :]
    lag = t - s
    mask = lag >= 0
    T = jnp.where(mask[:, :, None], k[jnp.where(mask, lag, 0)], 0.0)        # (L, L, d)
    return jnp.transpose(T, (2, 0, 1)).reshape(d * L, L)


def _zero_pad_axis(a, axis, new_size):
    pad = [(0, 0)] * a.ndim
    pad[axis] = (0, new_size - a.shape[axis])
    return jnp.pad(a, pad)


def _pad_last_grouped(a, n_groups, new_group):
    """Last axis = n_groups*old -> n_groups*new, each group's real cols first, zeros after."""
    parts = jnp.split(a, n_groups, axis=-1)
    return jnp.concatenate([_zero_pad_axis(p, -1, new_group) for p in parts], axis=-1)


def prepare_inference_params(params, L):
    """One-off (per parameter set / seq length) precompute, hoisted out of the forward:
    implicit filters -> Toeplitz operators, zero-padding every dim to a 128-lane boundary
    (lane-dense kernel), and bf16 casts of all matmul weights."""
    blk = params['blocks']
    k = compute_filters(blk, L)                            # (G, L, d_real)
    T = jax.vmap(_toeplitz_one)(k).astype(WDTYPE)          # (G, d_real*L, L)

    wi = _zero_pad_axis(_pad_last_grouped(blk['wi'], 3, D_PAD), 1, D_PAD).astype(WDTYPE)
    new_blk = dict(
        wi=wi,
        bi=_pad_last_grouped(blk['bi'], 3, D_PAD),
        sw=_pad_last_grouped(blk['sw'], 3, D_PAD),
        sb=_pad_last_grouped(blk['sb'], 3, D_PAD),
        T=T,
        D=_zero_pad_axis(blk['D'], -1, D_PAD),
        wo=_zero_pad_axis(_zero_pad_axis(blk['wo'], -1, D_PAD), 1, D_PAD).astype(WDTYPE),
        bo=_zero_pad_axis(blk['bo'], -1, D_PAD),
        f1w=_zero_pad_axis(_zero_pad_axis(blk['f1w'], -1, H_PAD), 1, D_PAD).astype(WDTYPE),
        f1b=_zero_pad_axis(blk['f1b'], -1, H_PAD),
        f2w=_zero_pad_axis(_zero_pad_axis(blk['f2w'], -1, H_PAD), 1, H_PAD).astype(WDTYPE),
        f2b=_zero_pad_axis(blk['f2b'], -1, H_PAD),
        f3w=_zero_pad_axis(_zero_pad_axis(blk['f3w'], -1, D_PAD), 1, H_PAD).astype(WDTYPE),
        f3b=_zero_pad_axis(blk['f3b'], -1, D_PAD),
    )
    return dict(
        emb_w=_zero_pad_axis(params['emb_w'], -1, D_PAD),          # keep f32 for xe parity
        ln_g=_zero_pad_axis(params['ln_g'], -1, D_PAD),            # pads zero -> padded
        ln_b=_zero_pad_axis(params['ln_b'], -1, D_PAD),            # lanes stay zero
        proj_w=_zero_pad_axis(_zero_pad_axis(params['proj_w'], -1, O_PAD),
                              0, D_PAD).astype(WDTYPE),
        blocks=new_blk,
    )


# ----------------------------------------------------------------------------- main

if __name__ == "__main__":
    B, L = 2, 64
    input_channels, in_emb_dim, out_seq_emb_dim = 4, 32, 64

    key = jax.random.PRNGKey(0)
    pkey, xkey, poskey = jax.random.split(key, 3)
    params = init_params(pkey, input_channels, in_emb_dim, out_seq_emb_dim)
    iparams = prepare_inference_params(params, L)          # hoisted, parameter-only
    x = jax.random.normal(xkey, (B, L, input_channels), dtype=DTYPE)
    input_pos = jax.random.normal(poskey, (B, L, 2), dtype=DTYPE)

    fwd = jax.jit(functools.partial(encoder_forward,
                                    d_real=in_emb_dim, out_dim=out_seq_emb_dim))
    out = jax.block_until_ready(fwd(iparams, x, input_pos))

    assert out.shape == (B, L, out_seq_emb_dim), out.shape
    assert bool(jnp.all(jnp.isfinite(out)))
    print("KERNEL_OK")
</pallas_src>

<mosaic_0001>
module attributes {stable_mosaic.version = 11 : i64} {
  func.func @_encoder_kernel(%arg0: i32, %arg1: memref<128x4xf32, #tpu.memory_space<vmem>>, %arg2: memref<4x128xf32, #tpu.memory_space<vmem>>, %arg3: memref<1x128xf32, #tpu.memory_space<vmem>>, %arg4: memref<1x128xf32, #tpu.memory_space<vmem>>, %arg5: memref<1x128x384xbf16, #tpu.memory_space<vmem>>, %arg6: memref<1x1x384xf32, #tpu.memory_space<vmem>>, %arg7: memref<1x3x384xf32, #tpu.memory_space<vmem>>, %arg8: memref<1x1x384xf32, #tpu.memory_space<vmem>>, %arg9: memref<1x2048x64xbf16, #tpu.memory_space<vmem>>, %arg10: memref<1x1x128xf32, #tpu.memory_space<vmem>>, %arg11: memref<1x128x128xbf16, #tpu.memory_space<vmem>>, %arg12: memref<1x1x128xf32, #tpu.memory_space<vmem>>, %arg13: memref<1x128x128xbf16, #tpu.memory_space<vmem>>, %arg14: memref<1x1x128xf32, #tpu.memory_space<vmem>>, %arg15: memref<1x128x128xbf16, #tpu.memory_space<vmem>>, %arg16: memref<1x1x128xf32, #tpu.memory_space<vmem>>, %arg17: memref<1x128x128xbf16, #tpu.memory_space<vmem>>, %arg18: memref<1x1x128xf32, #tpu.memory_space<vmem>>, %arg19: memref<128x128xbf16, #tpu.memory_space<vmem>>, %arg20: memref<128x128xf32, #tpu.memory_space<vmem>>, %arg21: memref<128x128xf32, #tpu.memory_space<vmem>>, %arg22: memref<128x128xf32, #tpu.memory_space<vmem>>) attributes {dimension_semantics = [#tpu.dimension_semantics<arbitrary>], iteration_bounds = array<i64: 8>, scalar_prefetch = 0 : i64, scratch_operands = 2 : i64, tpu.core_type = #tpu.core_type<tc>, window_params = [{pipeline_mode = #tpu.pipeline_mode<synchronous>, transform_indices = @transform_0, window_bounds = array<i64: 128, 4>}, {pipeline_mode = #tpu.pipeline_mode<synchronous>, transform_indices = @transform_1, window_bounds = array<i64: 4, 128>}, {pipeline_mode = #tpu.pipeline_mode<synchronous>, transform_indices = @transform_2, window_bounds = array<i64: 1, 128>}, {pipeline_mode = #tpu.pipeline_mode<synchronous>, transform_indices = @transform_3, window_bounds = array<i64: 1, 128>}, {transform_indices = @transform_4, window_bounds = array<i64: 1, 128, 384>}, {transform_indices = @transform_5, window_bounds = array<i64: 1, 1, 384>}, {transform_indices = @transform_6, window_bounds = array<i64: 1, 3, 384>}, {transform_indices = @transform_7, window_bounds = array<i64: 1, 1, 384>}, {transform_indices = @transform_8, window_bounds = array<i64: 1, 2048, 64>}, {transform_indices = @transform_9, window_bounds = array<i64: 1, 1, 128>}, {transform_indices = @transform_10, window_bounds = array<i64: 1, 128, 128>}, {transform_indices = @transform_11, window_bounds = array<i64: 1, 1, 128>}, {transform_indices = @transform_12, window_bounds = array<i64: 1, 128, 128>}, {transform_indices = @transform_13, window_bounds = array<i64: 1, 1, 128>}, {transform_indices = @transform_14, window_bounds = array<i64: 1, 128, 128>}, {transform_indices = @transform_15, window_bounds = array<i64: 1, 1, 128>}, {transform_indices = @transform_16, window_bounds = array<i64: 1, 128, 128>}, {transform_indices = @transform_17, window_bounds = array<i64: 1, 1, 128>}, {pipeline_mode = #tpu.pipeline_mode<synchronous>, transform_indices = @transform_18, window_bounds = array<i64: 128, 128>}, {pipeline_mode = #tpu.pipeline_mode<synchronous>, transform_indices = @transform_19, window_bounds = array<i64: 128, 128>}]} {
    %c0 = arith.constant 0 : index
    %c0_0 = arith.constant 0 : index
    %0 = vector.load %arg3[%c0, %c0_0] : memref<1x128xf32, #tpu.memory_space<vmem>>, vector<1x128xf32>
    %c0_1 = arith.constant 0 : index
    %c0_2 = arith.constant 0 : index
    %1 = vector.load %arg4[%c0_1, %c0_2] : memref<1x128xf32, #tpu.memory_space<vmem>>, vector<1x128xf32>
    %2 = tpu.iota {dimensions = array<i32: 1>} : vector<1x128xi32>
    %c32_i32 = arith.constant 32 : i32
    %3 = vector.broadcast %c32_i32 : i32 to vector<1x128xi32>
    %4 = arith.cmpi slt, %2, %3 : vector<1x128xi32>
    %5 = arith.extui %4 : vector<1x128xi1> to vector<1x128xi32>
    %6 = arith.sitofp %5 : vector<1x128xi32> to vector<1x128xf32>
    %c0_i32 = arith.constant 0 : i32
    %7 = arith.cmpi eq, %arg0, %c0_i32 : i32
    %8 = arith.extui %7 : i1 to i32
    %c0_i32_3 = arith.constant 0 : i32
    %9 = arith.cmpi ne, %8, %c0_i32_3 : i32
    scf.if %9 {
      %c0_80 = arith.constant 0 : index
      %c0_81 = arith.constant 0 : index
      %200 = vector.load %arg1[%c0_80, %c0_81] : memref<128x4xf32, #tpu.memory_space<vmem>>, vector<128x4xf32>
      %c0_82 = arith.constant 0 : index
      %c0_83 = arith.constant 0 : index
      %201 = vector.load %arg2[%c0_82, %c0_83] : memref<4x128xf32, #tpu.memory_space<vmem>>, vector<4x128xf32>
      %cst_84 = arith.constant dense<0.000000e+00> : vector<128x128xf32>
      %202 = tpu.matmul %200, %201, %cst_84 {dimension_numbers = #tpu.dot_dimension_numbers<[1], [0], [0], [1], [0, 0, 1, 1], [], []>} : vector<128x4xf32>, vector<4x128xf32>, vector<128x128xf32> -> vector<128x128xf32>
      %c0_85 = arith.constant 0 : index
      %c0_86 = arith.constant 0 : index
      %203 = vector.load %arg21[%c0_85, %c0_86] : memref<128x128xf32, #tpu.memory_space<vmem>>, vector<128x128xf32>
      tpu.vector_store %arg21[%c0_85, %c0_86], %202 {strides = array<i32>} : memref<128x128xf32, #tpu.memory_space<vmem>>, vector<128x128xf32>,
      %cst_87 = arith.constant 0.000000e+00 : f32
      %204 = vector.broadcast %cst_87 : f32 to vector<128x128xf32>
      %c0_88 = arith.constant 0 : index
      %c0_89 = arith.constant 0 : index
      %205 = vector.load %arg22[%c0_88, %c0_89] : memref<128x128xf32, #tpu.memory_space<vmem>>, vector<128x128xf32>
      tpu.vector_store %arg22[%c0_88, %c0_89], %204 {strides = array<i32>} : memref<128x128xf32, #tpu.memory_space<vmem>>, vector<128x128xf32>,
    } else {
    }
    %c0_4 = arith.constant 0 : index
    %c0_5 = arith.constant 0 : index
    %10 = vector.load %arg21[%c0_4, %c0_5] : memref<128x128xf32, #tpu.memory_space<vmem>>, vector<128x128xf32>
    %11 = vector.broadcast %6 : vector<1x128xf32> to vector<128x128xf32>
    %12 = arith.mulf %10, %11 : vector<128x128xf32>
    %cst = arith.constant dense<0.000000e+00> : vector<128xf32>
    %13 = vector.multi_reduction <add>, %12, %cst [1] : vector<128x128xf32> to vector<128xf32>
    %14 = vector.shape_cast %13 : vector<128xf32> to vector<128x1xf32>
    %cst_6 = arith.constant 3.125000e-02 : f32
    %15 = vector.broadcast %cst_6 : f32 to vector<128x1xf32>
    %16 = arith.mulf %14, %15 : vector<128x1xf32>
    %17 = vector.broadcast %16 : vector<128x1xf32> to vector<128x128xf32>
    %18 = arith.subf %10, %17 : vector<128x128xf32>
    %19 = vector.broadcast %6 : vector<1x128xf32> to vector<128x128xf32>
    %20 = arith.mulf %18, %19 : vector<128x128xf32>
    %21 = arith.mulf %20, %20 : vector<128x128xf32>
    %cst_7 = arith.constant dense<0.000000e+00> : vector<128xf32>
    %22 = vector.multi_reduction <add>, %21, %cst_7 [1] : vector<128x128xf32> to vector<128xf32>
    %23 = vector.shape_cast %22 : vector<128xf32> to vector<128x1xf32>
    %cst_8 = arith.constant 3.125000e-02 : f32
    %24 = vector.broadcast %cst_8 : f32 to vector<128x1xf32>
    %25 = arith.mulf %23, %24 : vector<128x1xf32>
    %cst_9 = arith.constant 9.99999974E-6 : f32
    %26 = vector.broadcast %cst_9 : f32 to vector<128x1xf32>
    %27 = arith.addf %25, %26 : vector<128x1xf32>
    %28 = math.rsqrt %27 : vector<128x1xf32>
    %29 = vector.broadcast %28 : vector<128x1xf32> to vector<128x128xf32>
    %30 = arith.mulf %20, %29 : vector<128x128xf32>
    %31 = vector.broadcast %0 : vector<1x128xf32> to vector<128x128xf32>
    %32 = arith.mulf %30, %31 : vector<128x128xf32>
    %33 = vector.broadcast %1 : vector<1x128xf32> to vector<128x128xf32>
    %34 = arith.addf %32, %33 : vector<128x128xf32>
    %35 = arith.truncf %34 : vector<128x128xf32> to vector<128x128xbf16>
    %c0_10 = arith.constant 0 : index
    %c0_11 = arith.constant 0 : index
    %c0_12 = arith.constant 0 : index
    %36 = vector.load %arg5[%c0_10, %c0_11, %c0_12] : memref<1x128x384xbf16, #tpu.memory_space<vmem>>, vector<1x128x384xbf16>
    %37 = vector.shape_cast %36 : vector<1x128x384xbf16> to vector<128x384xbf16>
    %cst_13 = arith.constant dense<0.000000e+00> : vector<128x384xf32>
    %38 = tpu.matmul %35, %37, %cst_13 {dimension_numbers = #tpu.dot_dimension_numbers<[1], [0], [0], [1], [0, 0, 1, 1], [], []>} : vector<128x128xbf16>, vector<128x384xbf16>, vector<128x384xf32> -> vector<128x384xf32>
    %c0_14 = arith.constant 0 : index
    %c0_15 = arith.constant 0 : index
    %c0_16 = arith.constant 0 : index
    %39 = vector.load %arg6[%c0_14, %c0_15, %c0_16] : memref<1x1x384xf32, #tpu.memory_space<vmem>>, vector<1x1x384xf32>
    %40 = vector.shape_cast %39 : vector<1x1x384xf32> to vector<1x384xf32>
    %41 = vector.broadcast %40 : vector<1x384xf32> to vector<128x384xf32>
    %42 = arith.addf %38, %41 : vector<128x384xf32>
    %43 = tpu.iota {dimensions = array<i32: 0>} : vector<128x1xi32>
    %c63_i32 = arith.constant 63 : i32
    %44 = vector.broadcast %c63_i32 : i32 to vector<128x1xi32>
    %45 = arith.andi %43, %44 : vector<128x1xi32>
    %c1_i32 = arith.constant 1 : i32
    %46 = vector.broadcast %c1_i32 : i32 to vector<128x1xi32>
    %47 = arith.cmpi sge, %45, %46 : vector<128x1xi32>
    %48 = arith.extui %47 : vector<128x1xi1> to vector<128x1xi32>
    %49 = arith.sitofp %48 : vector<128x1xi32> to vector<128x1xf32>
    %c2_i32 = arith.constant 2 : i32
    %50 = vector.broadcast %c2_i32 : i32 to vector<128x1xi32>
    %51 = arith.cmpi sge, %45, %50 : vector<128x1xi32>
    %52 = arith.extui %51 : vector<128x1xi1> to vector<128x1xi32>
    %53 = arith.sitofp %52 : vector<128x1xi32> to vector<128x1xf32>
    %c0_17 = arith.constant 0 : index
    %c0_18 = arith.constant 0 : index
    %c0_19 = arith.constant 0 : index
    %54 = vector.load %arg7[%c0_17, %c0_18, %c0_19] : memref<1x3x384xf32, #tpu.memory_space<vmem>>, vector<1x3x384xf32>
    %55 = vector.shape_cast %54 : vector<1x3x384xf32> to vector<3x384xf32>
    %c1_i32_20 = arith.constant 1 : i32
    %56 = tpu.dynamic_rotate %42 by %c1_i32_20 dim 0 : vector<128x384xf32>, i32 -> vector<128x384xf32>
    %57 = vector.broadcast %49 : vector<128x1xf32> to vector<128x384xf32>
    %58 = arith.mulf %56, %57 : vector<128x384xf32>
    %c2_i32_21 = arith.constant 2 : i32
    %59 = tpu.dynamic_rotate %42 by %c2_i32_21 dim 0 : vector<128x384xf32>, i32 -> vector<128x384xf32>
    %60 = vector.broadcast %53 : vector<128x1xf32> to vector<128x384xf32>
    %61 = arith.mulf %59, %60 : vector<128x384xf32>
    %62 = vector.extract_strided_slice %55 {offsets = [2, 0], sizes = [1, 384], strides = [1, 1]} : vector<3x384xf32> to vector<1x384xf32>
    %63 = vector.broadcast %62 : vector<1x384xf32> to vector<128x384xf32>
    %64 = arith.mulf %63, %42 : vector<128x384xf32>
    %65 = vector.extract_strided_slice %55 {offsets = [1, 0], sizes = [1, 384], strides = [1, 1]} : vector<3x384xf32> to vector<1x384xf32>
    %66 = vector.broadcast %65 : vector<1x384xf32> to vector<128x384xf32>
    %67 = arith.mulf %66, %58 : vector<128x384xf32>
    %68 = arith.addf %64, %67 : vector<128x384xf32>
    %69 = vector.extract_strided_slice %55 {offsets = [0, 0], sizes = [1, 384], strides = [1, 1]} : vector<3x384xf32> to vector<1x384xf32>
    %70 = vector.broadcast %69 : vector<1x384xf32> to vector<128x384xf32>
    %71 = arith.mulf %70, %61 : vector<128x384xf32>
    %72 = arith.addf %68, %71 : vector<128x384xf32>
    %c0_22 = arith.constant 0 : index
    %c0_23 = arith.constant 0 : index
    %c0_24 = arith.constant 0 : index
    %73 = vector.load %arg8[%c0_22, %c0_23, %c0_24] : memref<1x1x384xf32, #tpu.memory_space<vmem>>, vector<1x1x384xf32>
    %74 = vector.shape_cast %73 : vector<1x1x384xf32> to vector<1x384xf32>
    %75 = vector.broadcast %74 : vector<1x384xf32> to vector<128x384xf32>
    %76 = arith.addf %72, %75 : vector<128x384xf32>
    %77 = vector.extract_strided_slice %76 {offsets = [0, 0], sizes = [128, 128], strides = [1, 1]} : vector<128x384xf32> to vector<128x128xf32>
    %78 = vector.extract_strided_slice %76 {offsets = [0, 128], sizes = [128, 128], strides = [1, 1]} : vector<128x384xf32> to vector<128x128xf32>
    %79 = vector.extract_strided_slice %76 {offsets = [0, 256], sizes = [128, 128], strides = [1, 1]} : vector<128x384xf32> to vector<128x128xf32>
    %80 = arith.mulf %79, %78 : vector<128x128xf32>
    %c0_25 = arith.constant 0 : index
    %c0_26 = arith.constant 0 : index
    %c0_27 = arith.constant 0 : index
    %81 = vector.load %arg9[%c0_25, %c0_26, %c0_27] : memref<1x2048x64xbf16, #tpu.memory_space<vmem>>, vector<1x2048x64xbf16>
    %82 = vector.shape_cast %81 : vector<1x2048x64xbf16> to vector<2048x64xbf16>
    %83 = vector.extract_strided_slice %80 {offsets = [0, 0], sizes = [64, 32], strides = [1, 1]} : vector<128x128xf32> to vector<64x32xf32>
    %84 = vector.extract_strided_slice %80 {offsets = [64, 0], sizes = [64, 32], strides = [1, 1]} : vector<128x128xf32> to vector<64x32xf32>
    %85 = tpu.concatenate %83, %84 in 1 : vector<64x32xf32>, vector<64x32xf32> -> vector<64x64xf32>
    %86 = arith.truncf %85 : vector<64x64xf32> to vector<64x64xbf16>
    %cst_28 = arith.constant dense<0.000000e+00> : vector<2048x64xf32>
    %87 = tpu.matmul %82, %86, %cst_28 {dimension_numbers = #tpu.dot_dimension_numbers<[1], [0], [0], [1], [0, 0, 1, 1], [], []>} : vector<2048x64xbf16>, vector<64x64xbf16>, vector<2048x64xf32> -> vector<2048x64xf32>
    %88 = vector.shape_cast %87 : vector<2048x64xf32> to vector<32x64x64xf32>
    %89 = tpu.iota {dimensions = array<i32: 0>} : vector<32x64xi32>
    %90 = tpu.iota {dimensions = array<i32: 1>} : vector<32x64xi32>
    %c31_i32 = arith.constant 31 : i32
    %91 = vector.broadcast %c31_i32 : i32 to vector<32x64xi32>
    %92 = arith.andi %90, %91 : vector<32x64xi32>
    %93 = arith.cmpi eq, %89, %92 : vector<32x64xi32>
    %94 = arith.extui %93 : vector<32x64xi1> to vector<32x64xi32>
    %95 = arith.sitofp %94 : vector<32x64xi32> to vector<32x64xf32>
    %96 = vector.shape_cast %95 : vector<32x64xf32> to vector<32x1x64xf32>
    %97 = vector.broadcast %96 : vector<32x1x64xf32> to vector<32x64x64xf32>
    %98 = arith.mulf %88, %97 : vector<32x64x64xf32>
    %cst_29 = arith.constant dense<0.000000e+00> : vector<64x64xf32>
    %99 = vector.multi_reduction <add>, %98, %cst_29 [0] : vector<32x64x64xf32> to vector<64x64xf32>
    %100 = vector.extract_strided_slice %99 {offsets = [0, 0], sizes = [64, 32], strides = [1, 1]} : vector<64x64xf32> to vector<64x32xf32>
    %101 = vector.extract_strided_slice %99 {offsets = [0, 32], sizes = [64, 32], strides = [1, 1]} : vector<64x64xf32> to vector<64x32xf32>
    %102 = tpu.concatenate %100, %101 in 0 : vector<64x32xf32>, vector<64x32xf32> -> vector<128x32xf32>
    %cst_30 = arith.constant 0.000000e+00 : f32
    %103 = vector.broadcast %cst_30 : f32 to vector<128x96xf32>
    %104 = tpu.concatenate %102, %103 in 1 : vector<128x32xf32>, vector<128x96xf32> -> vector<128x128xf32>
    %c0_31 = arith.constant 0 : index
    %c0_32 = arith.constant 0 : index
    %c0_33 = arith.constant 0 : index
    %105 = vector.load %arg10[%c0_31, %c0_32, %c0_33] : memref<1x1x128xf32, #tpu.memory_space<vmem>>, vector<1x1x128xf32>
    %106 = vector.shape_cast %105 : vector<1x1x128xf32> to vector<1x128xf32>
    %107 = vector.broadcast %106 : vector<1x128xf32> to vector<128x128xf32>
    %108 = arith.mulf %80, %107 : vector<128x128xf32>
    %109 = arith.addf %104, %108 : vector<128x128xf32>
    %110 = arith.mulf %109, %77 : vector<128x128xf32>
    %111 = arith.truncf %110 : vector<128x128xf32> to vector<128x128xbf16>
    %c0_34 = arith.constant 0 : index
    %c0_35 = arith.constant 0 : index
    %c0_36 = arith.constant 0 : index
    %112 = vector.load %arg11[%c0_34, %c0_35, %c0_36] : memref<1x128x128xbf16, #tpu.memory_space<vmem>>, vector<1x128x128xbf16>
    %113 = vector.shape_cast %112 : vector<1x128x128xbf16> to vector<128x128xbf16>
    %cst_37 = arith.constant dense<0.000000e+00> : vector<128x128xf32>
    %114 = tpu.matmul %111, %113, %cst_37 {dimension_numbers = #tpu.dot_dimension_numbers<[1], [0], [0], [1], [0, 0, 1, 1], [], []>} : vector<128x128xbf16>, vector<128x128xbf16>, vector<128x128xf32> -> vector<128x128xf32>
    %c0_38 = arith.constant 0 : index
    %c0_39 = arith.constant 0 : index
    %c0_40 = arith.constant 0 : index
    %115 = vector.load %arg12[%c0_38, %c0_39, %c0_40] : memref<1x1x128xf32, #tpu.memory_space<vmem>>, vector<1x1x128xf32>
    %116 = vector.shape_cast %115 : vector<1x1x128xf32> to vector<1x128xf32>
    %117 = vector.broadcast %116 : vector<1x128xf32> to vector<128x128xf32>
    %118 = arith.addf %114, %117 : vector<128x128xf32>
    %119 = vector.broadcast %6 : vector<1x128xf32> to vector<128x128xf32>
    %120 = arith.mulf %118, %119 : vector<128x128xf32>
    %cst_41 = arith.constant dense<0.000000e+00> : vector<128xf32>
    %121 = vector.multi_reduction <add>, %120, %cst_41 [1] : vector<128x128xf32> to vector<128xf32>
    %122 = vector.shape_cast %121 : vector<128xf32> to vector<128x1xf32>
    %cst_42 = arith.constant 3.125000e-02 : f32
    %123 = vector.broadcast %cst_42 : f32 to vector<128x1xf32>
    %124 = arith.mulf %122, %123 : vector<128x1xf32>
    %125 = vector.broadcast %124 : vector<128x1xf32> to vector<128x128xf32>
    %126 = arith.subf %118, %125 : vector<128x128xf32>
    %127 = vector.broadcast %6 : vector<1x128xf32> to vector<128x128xf32>
    %128 = arith.mulf %126, %127 : vector<128x128xf32>
    %129 = arith.mulf %128, %128 : vector<128x128xf32>
    %cst_43 = arith.constant dense<0.000000e+00> : vector<128xf32>
    %130 = vector.multi_reduction <add>, %129, %cst_43 [1] : vector<128x128xf32> to vector<128xf32>
    %131 = vector.shape_cast %130 : vector<128xf32> to vector<128x1xf32>
    %cst_44 = arith.constant 3.125000e-02 : f32
    %132 = vector.broadcast %cst_44 : f32 to vector<128x1xf32>
    %133 = arith.mulf %131, %132 : vector<128x1xf32>
    %cst_45 = arith.constant 9.99999974E-6 : f32
    %134 = vector.broadcast %cst_45 : f32 to vector<128x1xf32>
    %135 = arith.addf %133, %134 : vector<128x1xf32>
    %136 = math.rsqrt %135 : vector<128x1xf32>
    %137 = vector.broadcast %136 : vector<128x1xf32> to vector<128x128xf32>
    %138 = arith.mulf %128, %137 : vector<128x128xf32>
    %139 = vector.broadcast %0 : vector<1x128xf32> to vector<128x128xf32>
    %140 = arith.mulf %138, %139 : vector<128x128xf32>
    %141 = vector.broadcast %1 : vector<1x128xf32> to vector<128x128xf32>
    %142 = arith.addf %140, %141 : vector<128x128xf32>
    %143 = arith.addf %142, %10 : vector<128x128xf32>
    %144 = arith.truncf %143 : vector<128x128xf32> to vector<128x128xbf16>
    %c0_46 = arith.constant 0 : index
    %c0_47 = arith.constant 0 : index
    %c0_48 = arith.constant 0 : index
    %145 = vector.load %arg13[%c0_46, %c0_47, %c0_48] : memref<1x128x128xbf16, #tpu.memory_space<vmem>>, vector<1x128x128xbf16>
    %146 = vector.shape_cast %145 : vector<1x128x128xbf16> to vector<128x128xbf16>
    %cst_49 = arith.constant dense<0.000000e+00> : vector<128x128xf32>
    %147 = tpu.matmul %144, %146, %cst_49 {dimension_numbers = #tpu.dot_dimension_numbers<[1], [0], [0], [1], [0, 0, 1, 1], [], []>} : vector<128x128xbf16>, vector<128x128xbf16>, vector<128x128xf32> -> vector<128x128xf32>
    %c0_50 = arith.constant 0 : index
    %c0_51 = arith.constant 0 : index
    %c0_52 = arith.constant 0 : index
    %148 = vector.load %arg14[%c0_50, %c0_51, %c0_52] : memref<1x1x128xf32, #tpu.memory_space<vmem>>, vector<1x1x128xf32>
    %149 = vector.shape_cast %148 : vector<1x1x128xf32> to vector<1x128xf32>
    %150 = vector.broadcast %149 : vector<1x128xf32> to vector<128x128xf32>
    %151 = arith.addf %147, %150 : vector<128x128xf32>
    %cst_53 = arith.constant 5.000000e-01 : f32
    %152 = vector.broadcast %cst_53 : f32 to vector<128x128xf32>
    %153 = arith.mulf %152, %151 : vector<128x128xf32>
    %cst_54 = arith.constant 4.471500e-02 : f32
    %154 = vector.broadcast %cst_54 : f32 to vector<128x128xf32>
    %155 = arith.mulf %154, %151 : vector<128x128xf32>
    %156 = arith.mulf %155, %151 : vector<128x128xf32>
    %157 = arith.mulf %156, %151 : vector<128x128xf32>
    %158 = arith.addf %151, %157 : vector<128x128xf32>
    %cst_55 = arith.constant 0.797884583 : f32
    %159 = vector.broadcast %cst_55 : f32 to vector<128x128xf32>
    %160 = arith.mulf %159, %158 : vector<128x128xf32>
    %161 = math.tanh %160 : vector<128x128xf32>
    %cst_56 = arith.constant 1.000000e+00 : f32
    %162 = vector.broadcast %cst_56 : f32 to vector<128x128xf32>
    %163 = arith.addf %162, %161 : vector<128x128xf32>
    %164 = arith.mulf %153, %163 : vector<128x128xf32>
    %165 = arith.truncf %164 : vector<128x128xf32> to vector<128x128xbf16>
    %c0_57 = arith.constant 0 : index
    %c0_58 = arith.constant 0 : index
    %c0_59 = arith.constant 0 : index
    %166 = vector.load %arg15[%c0_57, %c0_58, %c0_59] : memref<1x128x128xbf16, #tpu.memory_space<vmem>>, vector<1x128x128xbf16>
    %167 = vector.shape_cast %166 : vector<1x128x128xbf16> to vector<128x128xbf16>
    %cst_60 = arith.constant dense<0.000000e+00> : vector<128x128xf32>
    %168 = tpu.matmul %165, %167, %cst_60 {dimension_numbers = #tpu.dot_dimension_numbers<[1], [0], [0], [1], [0, 0, 1, 1], [], []>} : vector<128x128xbf16>, vector<128x128xbf16>, vector<128x128xf32> -> vector<128x128xf32>
    %c0_61 = arith.constant 0 : index
    %c0_62 = arith.constant 0 : index
    %c0_63 = arith.constant 0 : index
    %169 = vector.load %arg16[%c0_61, %c0_62, %c0_63] : memref<1x1x128xf32, #tpu.memory_space<vmem>>, vector<1x1x128xf32>
    %170 = vector.shape_cast %169 : vector<1x1x128xf32> to vector<1x128xf32>
    %171 = vector.broadcast %170 : vector<1x128xf32> to vector<128x128xf32>
    %172 = arith.addf %168, %171 : vector<128x128xf32>
    %cst_64 = arith.constant 5.000000e-01 : f32
    %173 = vector.broadcast %cst_64 : f32 to vector<128x128xf32>
    %174 = arith.mulf %173, %172 : vector<128x128xf32>
    %cst_65 = arith.constant 4.471500e-02 : f32
    %175 = vector.broadcast %cst_65 : f32 to vector<128x128xf32>
    %176 = arith.mulf %175, %172 : vector<128x128xf32>
    %177 = arith.mulf %176, %172 : vector<128x128xf32>
    %178 = arith.mulf %177, %172 : vector<128x128xf32>
    %179 = arith.addf %172, %178 : vector<128x128xf32>
    %cst_66 = arith.constant 0.797884583 : f32
    %180 = vector.broadcast %cst_66 : f32 to vector<128x128xf32>
    %181 = arith.mulf %180, %179 : vector<128x128xf32>
    %182 = math.tanh %181 : vector<128x128xf32>
    %cst_67 = arith.constant 1.000000e+00 : f32
    %183 = vector.broadcast %cst_67 : f32 to vector<128x128xf32>
    %184 = arith.addf %183, %182 : vector<128x128xf32>
    %185 = arith.mulf %174, %184 : vector<128x128xf32>
    %186 = arith.truncf %185 : vector<128x128xf32> to vector<128x128xbf16>
    %c0_68 = arith.constant 0 : index
    %c0_69 = arith.constant 0 : index
    %c0_70 = arith.constant 0 : index
    %187 = vector.load %arg17[%c0_68, %c0_69, %c0_70] : memref<1x128x128xbf16, #tpu.memory_space<vmem>>, vector<1x128x128xbf16>
    %188 = vector.shape_cast %187 : vector<1x128x128xbf16> to vector<128x128xbf16>
    %cst_71 = arith.constant dense<0.000000e+00> : vector<128x128xf32>
    %189 = tpu.matmul %186, %188, %cst_71 {dimension_numbers = #tpu.dot_dimension_numbers<[1], [0], [0], [1], [0, 0, 1, 1], [], []>} : vector<128x128xbf16>, vector<128x128xbf16>, vector<128x128xf32> -> vector<128x128xf32>
    %c0_72 = arith.constant 0 : index
    %c0_73 = arith.constant 0 : index
    %c0_74 = arith.constant 0 : index
    %190 = vector.load %arg18[%c0_72, %c0_73, %c0_74] : memref<1x1x128xf32, #tpu.memory_space<vmem>>, vector<1x1x128xf32>
    %191 = vector.shape_cast %190 : vector<1x1x128xf32> to vector<1x128xf32>
    %192 = vector.broadcast %191 : vector<1x128xf32> to vector<128x128xf32>
    %193 = arith.addf %189, %192 : vector<128x128xf32>
    %c0_75 = arith.constant 0 : index
    %c0_76 = arith.constant 0 : index
    %194 = vector.load %arg22[%c0_75, %c0_76] : memref<128x128xf32, #tpu.memory_space<vmem>>, vector<128x128xf32>
    %195 = arith.addf %194, %193 : vector<128x128xf32>
    %c0_77 = arith.constant 0 : index
    %c0_78 = arith.constant 0 : index
    %196 = vector.load %arg22[%c0_77, %c0_78] : memref<128x128xf32, #tpu.memory_space<vmem>>, vector<128x128xf32>
    tpu.vector_store %arg22[%c0_77, %c0_78], %195 {strides = array<i32>} : memref<128x128xf32, #tpu.memory_space<vmem>>, vector<128x128xf32>,
    %c7_i32 = arith.constant 7 : i32
    %197 = arith.cmpi eq, %arg0, %c7_i32 : i32
    %198 = arith.extui %197 : i1 to i32
    %c0_i32_79 = arith.constant 0 : i32
    %199 = arith.cmpi ne, %198, %c0_i32_79 : i32
    scf.if %199 {
      %c0_80 = arith.constant 0 : index
      %c0_81 = arith.constant 0 : index
      %200 = vector.load %arg22[%c0_80, %c0_81] : memref<128x128xf32, #tpu.memory_space<vmem>>, vector<128x128xf32>
      %201 = vector.broadcast %6 : vector<1x128xf32> to vector<128x128xf32>
      %202 = arith.mulf %200, %201 : vector<128x128xf32>
      %cst_82 = arith.constant dense<0.000000e+00> : vector<128xf32>
      %203 = vector.multi_reduction <add>, %202, %cst_82 [1] : vector<128x128xf32> to vector<128xf32>
      %204 = vector.shape_cast %203 : vector<128xf32> to vector<128x1xf32>
      %cst_83 = arith.constant 3.125000e-02 : f32
      %205 = vector.broadcast %cst_83 : f32 to vector<128x1xf32>
      %206 = arith.mulf %204, %205 : vector<128x1xf32>
      %207 = vector.broadcast %206 : vector<128x1xf32> to vector<128x128xf32>
      %208 = arith.subf %200, %207 : vector<128x128xf32>
      %209 = vector.broadcast %6 : vector<1x128xf32> to vector<128x128xf32>
      %210 = arith.mulf %208, %209 : vector<128x128xf32>
      %211 = arith.mulf %210, %210 : vector<128x128xf32>
      %cst_84 = arith.constant dense<0.000000e+00> : vector<128xf32>
      %212 = vector.multi_reduction <add>, %211, %cst_84 [1] : vector<128x128xf32> to vector<128xf32>
      %213 = vector.shape_cast %212 : vector<128xf32> to vector<128x1xf32>
      %cst_85 = arith.constant 3.125000e-02 : f32
      %214 = vector.broadcast %cst_85 : f32 to vector<128x1xf32>
      %215 = arith.mulf %213, %214 : vector<128x1xf32>
      %cst_86 = arith.constant 9.99999974E-6 : f32
      %216 = vector.broadcast %cst_86 : f32 to vector<128x1xf32>
      %217 = arith.addf %215, %216 : vector<128x1xf32>
      %218 = math.rsqrt %217 : vector<128x1xf32>
      %219 = vector.broadcast %218 : vector<128x1xf32> to vector<128x128xf32>
      %220 = arith.mulf %210, %219 : vector<128x128xf32>
      %221 = vector.broadcast %0 : vector<1x128xf32> to vector<128x128xf32>
      %222 = arith.mulf %220, %221 : vector<128x128xf32>
      %223 = vector.broadcast %1 : vector<1x128xf32> to vector<128x128xf32>
      %224 = arith.addf %222, %223 : vector<128x128xf32>
      %225 = arith.truncf %224 : vector<128x128xf32> to vector<128x128xbf16>
      %c0_87 = arith.constant 0 : index
      %c0_88 = arith.constant 0 : index
      %226 = vector.load %arg19[%c0_87, %c0_88] : memref<128x128xbf16, #tpu.memory_space<vmem>>, vector<128x128xbf16>
      %cst_89 = arith.constant dense<0.000000e+00> : vector<128x128xf32>
      %227 = tpu.matmul %225, %226, %cst_89 {dimension_numbers = #tpu.dot_dimension_numbers<[1], [0], [0], [1], [0, 0, 1, 1], [], []>} : vector<128x128xbf16>, vector<128x128xbf16>, vector<128x128xf32> -> vector<128x128xf32>
      %c0_90 = arith.constant 0 : index
      %c0_91 = arith.constant 0 : index
      %228 = vector.load %arg20[%c0_90, %c0_91] : memref<128x128xf32, #tpu.memory_space<vmem>>, vector<128x128xf32>
      tpu.vector_store %arg20[%c0_90, %c0_91], %227 {strides = array<i32>} : memref<128x128xf32, #tpu.memory_space<vmem>>, vector<128x128xf32>,
    } else {
    }
    return
  }
  func.func @transform_0(%arg0: i32) -> (i32, i32) {
    %c0_i32 = arith.constant 0 : i32
    %c0_i32_0 = arith.constant 0 : i32
    %c0_i32_1 = arith.constant 0 : i32
    return %c0_i32, %c0_i32_0 : i32, i32
  }
  func.func @transform_1(%arg0: i32) -> (i32, i32) {
    %c0_i32 = arith.constant 0 : i32
    %c0_i32_0 = arith.constant 0 : i32
    %c0_i32_1 = arith.constant 0 : i32
    return %c0_i32, %c0_i32_0 : i32, i32
  }
  func.func @transform_2(%arg0: i32) -> (i32, i32) {
    %c0_i32 = arith.constant 0 : i32
    %c0_i32_0 = arith.constant 0 : i32
    %c0_i32_1 = arith.constant 0 : i32
    return %c0_i32, %c0_i32_0 : i32, i32
  }
  func.func @transform_3(%arg0: i32) -> (i32, i32) {
    %c0_i32 = arith.constant 0 : i32
    %c0_i32_0 = arith.constant 0 : i32
    %c0_i32_1 = arith.constant 0 : i32
    return %c0_i32, %c0_i32_0 : i32, i32
  }
  func.func @transform_4(%arg0: i32) -> (i32, i32, i32) {
    %c0_i32 = arith.constant 0 : i32
    %c0_i32_0 = arith.constant 0 : i32
    %c0_i32_1 = arith.constant 0 : i32
    return %arg0, %c0_i32, %c0_i32_0 : i32, i32, i32
  }
  func.func @transform_5(%arg0: i32) -> (i32, i32, i32) {
    %c0_i32 = arith.constant 0 : i32
    %c0_i32_0 = arith.constant 0 : i32
    %c0_i32_1 = arith.constant 0 : i32
    return %arg0, %c0_i32, %c0_i32_0 : i32, i32, i32
  }
  func.func @transform_6(%arg0: i32) -> (i32, i32, i32) {
    %c0_i32 = arith.constant 0 : i32
    %c0_i32_0 = arith.constant 0 : i32
    %c0_i32_1 = arith.constant 0 : i32
    return %arg0, %c0_i32, %c0_i32_0 : i32, i32, i32
  }
  func.func @transform_7(%arg0: i32) -> (i32, i32, i32) {
    %c0_i32 = arith.constant 0 : i32
    %c0_i32_0 = arith.constant 0 : i32
    %c0_i32_1 = arith.constant 0 : i32
    return %arg0, %c0_i32, %c0_i32_0 : i32, i32, i32
  }
  func.func @transform_8(%arg0: i32) -> (i32, i32, i32) {
    %c0_i32 = arith.constant 0 : i32
    %c0_i32_0 = arith.constant 0 : i32
    %c0_i32_1 = arith.constant 0 : i32
    return %arg0, %c0_i32, %c0_i32_0 : i32, i32, i32
  }
  func.func @transform_9(%arg0: i32) -> (i32, i32, i32) {
    %c0_i32 = arith.constant 0 : i32
    %c0_i32_0 = arith.constant 0 : i32
    %c0_i32_1 = arith.constant 0 : i32
    return %arg0, %c0_i32, %c0_i32_0 : i32, i32, i32
  }
  func.func @transform_10(%arg0: i32) -> (i32, i32, i32) {
    %c0_i32 = arith.constant 0 : i32
    %c0_i32_0 = arith.constant 0 : i32
    %c0_i32_1 = arith.constant 0 : i32
    return %arg0, %c0_i32, %c0_i32_0 : i32, i32, i32
  }
  func.func @transform_11(%arg0: i32) -> (i32, i32, i32) {
    %c0_i32 = arith.constant 0 : i32
    %c0_i32_0 = arith.constant 0 : i32
    %c0_i32_1 = arith.constant 0 : i32
    return %arg0, %c0_i32, %c0_i32_0 : i32, i32, i32
  }
  func.func @transform_12(%arg0: i32) -> (i32, i32, i32) {
    %c0_i32 = arith.constant 0 : i32
    %c0_i32_0 = arith.constant 0 : i32
    %c0_i32_1 = arith.constant 0 : i32
    return %arg0, %c0_i32, %c0_i32_0 : i32, i32, i32
  }
  func.func @transform_13(%arg0: i32) -> (i32, i32, i32) {
    %c0_i32 = arith.constant 0 : i32
    %c0_i32_0 = arith.constant 0 : i32
    %c0_i32_1 = arith.constant 0 : i32
    return %arg0, %c0_i32, %c0_i32_0 : i32, i32, i32
  }
  func.func @transform_14(%arg0: i32) -> (i32, i32, i32) {
    %c0_i32 = arith.constant 0 : i32
    %c0_i32_0 = arith.constant 0 : i32
    %c0_i32_1 = arith.constant 0 : i32
    return %arg0, %c0_i32, %c0_i32_0 : i32, i32, i32
  }
  func.func @transform_15(%arg0: i32) -> (i32, i32, i32) {
    %c0_i32 = arith.constant 0 : i32
    %c0_i32_0 = arith.constant 0 : i32
    %c0_i32_1 = arith.constant 0 : i32
    return %arg0, %c0_i32, %c0_i32_0 : i32, i32, i32
  }
  func.func @transform_16(%arg0: i32) -> (i32, i32, i32) {
    %c0_i32 = arith.constant 0 : i32
    %c0_i32_0 = arith.constant 0 : i32
    %c0_i32_1 = arith.constant 0 : i32
    return %arg0, %c0_i32, %c0_i32_0 : i32, i32, i32
  }
  func.func @transform_17(%arg0: i32) -> (i32, i32, i32) {
    %c0_i32 = arith.constant 0 : i32
    %c0_i32_0 = arith.constant 0 : i32
    %c0_i32_1 = arith.constant 0 : i32
    return %arg0, %c0_i32, %c0_i32_0 : i32, i32, i32
  }
  func.func @transform_18(%arg0: i32) -> (i32, i32) {
    %c0_i32 = arith.constant 0 : i32
    %c0_i32_0 = arith.constant 0 : i32
    %c0_i32_1 = arith.constant 0 : i32
    return %c0_i32, %c0_i32_0 : i32, i32
  }
  func.func @transform_19(%arg0: i32) -> (i32, i32) {
    %c0_i32 = arith.constant 0 : i32
    %c0_i32_0 = arith.constant 0 : i32
    %c0_i32_1 = arith.constant 0 : i32
    return %c0_i32, %c0_i32_0 : i32, i32
  }
}

</mosaic_0001>

<llo_original>
// kernel: encoder_forward.1
$region0: #{encoder_forward.1}
  #allocation0 [shape = 'u32[]', space=smem, size = 0x4, offset = 0x4, fixed_abs, tag = 'smem constant byte address 0x4 - core index']
  #allocation1 [shape = 'u32[144,128]{1,0:T(1,128)}', space=vmem, size = 0x12000, scoped, tag = 'internal scratch']
  #allocation2 [shape = 'f32[128,128]{1,0:T(8,128)}', space=vmem, size = 0x10000, scoped, tag = 'scratch operand']
  #allocation3 [shape = 'f32[128,128]{1,0:T(8,128)}', space=vmem, size = 0x10000, scoped, tag = 'scratch operand']
  %s0 = inlined_call_operand.hbm [shape: f32[128,4], index: 0, kind: input, shape index: {}]
  %s1 = inlined_call_operand.hbm [shape: f32[4,128], index: 1, kind: input, shape index: {}]
  %s2 = inlined_call_operand.hbm [shape: f32[1,128], index: 2, kind: input, shape index: {}]
  %s3 = inlined_call_operand.hbm [shape: f32[1,128], index: 3, kind: input, shape index: {}]
  %s4 = inlined_call_operand.hbm [shape: bf16[8,128,384], index: 4, kind: input, shape index: {}]
  %s5 = inlined_call_operand.hbm [shape: f32[8,1,384], index: 5, kind: input, shape index: {}]
  %s6 = inlined_call_operand.hbm [shape: f32[8,3,384], index: 6, kind: input, shape index: {}]
  %s7 = inlined_call_operand.hbm [shape: f32[8,1,384], index: 7, kind: input, shape index: {}]
  %s8 = inlined_call_operand.hbm [shape: bf16[8,2048,64], index: 8, kind: input, shape index: {}]
  %s9 = inlined_call_operand.hbm [shape: f32[8,1,128], index: 9, kind: input, shape index: {}]
  %s10 = inlined_call_operand.hbm [shape: bf16[8,128,128], index: 10, kind: input, shape index: {}]
  %s11 = inlined_call_operand.hbm [shape: f32[8,1,128], index: 11, kind: input, shape index: {}]
  %s12 = inlined_call_operand.hbm [shape: bf16[8,128,128], index: 12, kind: input, shape index: {}]
  %s13 = inlined_call_operand.hbm [shape: f32[8,1,128], index: 13, kind: input, shape index: {}]
  %s14 = inlined_call_operand.hbm [shape: bf16[8,128,128], index: 14, kind: input, shape index: {}]
  %s15 = inlined_call_operand.hbm [shape: f32[8,1,128], index: 15, kind: input, shape index: {}]
  %s16 = inlined_call_operand.hbm [shape: bf16[8,128,128], index: 16, kind: input, shape index: {}]
  %s17 = inlined_call_operand.hbm [shape: f32[8,1,128], index: 17, kind: input, shape index: {}]
  %s18 = inlined_call_operand.hbm [shape: bf16[128,128], index: 18, kind: input, shape index: {}]
  %s19 = inlined_call_operand.hbm [shape: f32[128,128], index: 19, kind: output, shape index: {}]
  %s20 = sld [smem:[#allocation0]]
  $region193: #{encoder_forward.1} parent=0
    _
  %s22 = ssub.s32 1, %s20
  %s23 = scalar_select 0, %s22, %s20
  $region1: #{encoder_forward.1} parent=0
    #allocation4 [shape = 'u8[65536]{0}', space=vmem, size = 0x10000, scoped, tag = 'input window, operand 0, single buffered']
    #allocation5 [shape = 's32[2]{0}', space=sflag, size = 0x8, scoped, tag = 'scoped memory for encoder_forward.1']
    #allocation6 [shape = 's32[2]{0}', space=sflag, size = 0x8, scoped, tag = 'scoped memory for encoder_forward.1']
    #allocation7 [shape = 'u8[2048]{0}', space=vmem, size = 0x800, scoped, tag = 'input window, operand 1, single buffered']
    #allocation8 [shape = 's32[1]{0}', space=sflag, size = 0x4, scoped, tag = 'scoped memory for encoder_forward.1']
    #allocation9 [shape = 'u8[512]{0}', space=vmem, size = 0x400, scoped, tag = 'input window, operand 2, single buffered']
    #allocation10 [shape = 'u8[512]{0}', space=vmem, size = 0x400, scoped, tag = 'input window, operand 3, single buffered']
    #allocation11 [shape = 's32[1]{0}', space=sflag, size = 0x4, scoped, tag = 'scoped memory for encoder_forward.1']
    #allocation12 [shape = 'u8[196608]{0}', space=vmem, size = 0x30000, scoped, tag = 'input window, operand 4']
    #allocation13 [shape = 'u8[3072]{0}', space=vmem, size = 0xc00, scoped, tag = 'input window, operand 5']
    #allocation14 [shape = 'u8[12288]{0}', space=vmem, size = 0x3000, scoped, tag = 'input window, operand 6']
    #allocation15 [shape = 'u8[3072]{0}', space=vmem, size = 0xc00, scoped, tag = 'input window, operand 7']
    #allocation16 [shape = 'u8[1048576]{0}', space=vmem, size = 0x100000, scoped, tag = 'input window, operand 8']
    #allocation17 [shape = 'u8[1024]{0}', space=vmem, size = 0x400, scoped, tag = 'input window, operand 9']
    #allocation18 [shape = 'u8[65536]{0}', space=vmem, size = 0x10000, scoped, tag = 'input window, operand 10']
    #allocation19 [shape = 'u8[1024]{0}', space=vmem, size = 0x400, scoped, tag = 'input window, operand 11']
    #allocation20 [shape = 'u8[65536]{0}', space=vmem, size = 0x10000, scoped, tag = 'input window, operand 12']
    #allocation21 [shape = 'u8[1024]{0}', space=vmem, size = 0x400, scoped, tag = 'input window, operand 13']
    #allocation22 [shape = 'u8[65536]{0}', space=vmem, size = 0x10000, scoped, tag = 'input window, operand 14']
    #allocation23 [shape = 'u8[1024]{0}', space=vmem, size = 0x400, scoped, tag = 'input window, operand 15']
    #allocation24 [shape = 'u8[65536]{0}', space=vmem, size = 0x10000, scoped, tag = 'input window, operand 16']
    #allocation25 [shape = 'u8[1024]{0}', space=vmem, size = 0x400, scoped, tag = 'input window, operand 17']
    #allocation26 [shape = 'u8[32768]{0}', space=vmem, size = 0x8000, scoped, tag = 'input window, operand 18, single buffered']
    #allocation27 [shape = 'u8[65536]{0}', space=vmem, size = 0x10000, scoped, tag = 'output window, operand 0, single buffered']
    %24 = vsyncpa [#allocation5], 0
    %25 = vsyncpa [#allocation8], 0
    %26 = vsyncpa [#allocation11], 0
    %27 = vsyncpa [#allocation6], 0
    loop: start=0, step=1, limit=10
    $region2: #{encoder_forward.1} parent=1 // loop_pre_header
      _
    $region3: #{encoder_forward.1} parent=1 // loop_header
      %s29 = sphi 0, %s33
      %p30 = scmp.ge.s32.totalorder %s29, 10
      %s37 = sphi 0, %s37
      %s39 = sphi 0, %s37
      %s40 = sphi 0, %s39
      %s54 = sphi 0, %s40
      %s58 = sphi 0, %s58
      %s60 = sphi 0, %s58
      %s61 = sphi 0, %s60
      %s75 = sphi 0, %s61
      %s79 = sphi 0, %s79
      %s81 = sphi 0, %s79
      %s82 = sphi 0, %s81
      %s96 = sphi 0, %s82
      %s100 = sphi 0, %s100
      %s102 = sphi 0, %s100
      %s103 = sphi 0, %s102
      %s117 = sphi 0, %s103
      %s123 = sphi 0, %s125
      %s126 = sphi 0, %s123
      %s127 = sphi 0, %s126
      %s143 = sphi 0, %s127
      %s149 = sphi 0, %s151
      %s152 = sphi 0, %s149
      %s153 = sphi 0, %s152
      %s169 = sphi 0, %s153
      %s175 = sphi 0, %s177
      %s178 = sphi 0, %s175
      %s179 = sphi 0, %s178
      %s195 = sphi 0, %s179
      %s201 = sphi 0, %s203
      %s204 = sphi 0, %s201
      %s205 = sphi 0, %s204
      %s221 = sphi 0, %s205
      %s227 = sphi 0, %s229
      %s230 = sphi 0, %s227
      %s231 = sphi 0, %s230
      %s247 = sphi 0, %s231
      %s253 = sphi 0, %s255
      %s256 = sphi 0, %s253
      %s257 = sphi 0, %s256
      %s273 = sphi 0, %s257
      %s279 = sphi 0, %s281
      %s282 = sphi 0, %s279
      %s283 = sphi 0, %s282
      %s299 = sphi 0, %s283
      %s305 = sphi 0, %s307
      %s308 = sphi 0, %s305
      %s309 = sphi 0, %s308
      %s325 = sphi 0, %s309
      %s331 = sphi 0, %s333
      %s334 = sphi 0, %s331
      %s335 = sphi 0, %s334
      %s351 = sphi 0, %s335
      %s357 = sphi 0, %s359
      %s360 = sphi 0, %s357
      %s361 = sphi 0, %s360
      %s377 = sphi 0, %s361
      %s383 = sphi 0, %s385
      %s386 = sphi 0, %s383
      %s387 = sphi 0, %s386
      %s403 = sphi 0, %s387
      %s409 = sphi 0, %s411
      %s412 = sphi 0, %s409
      %s413 = sphi 0, %s412
      %s429 = sphi 0, %s413
      %s435 = sphi 0, %s437
      %s438 = sphi 0, %s435
      %s439 = sphi 0, %s438
      %s455 = sphi 0, %s439
      %s461 = sphi 0, %s463
      %s464 = sphi 0, %s461
      %s465 = sphi 0, %s464
      %s481 = sphi 0, %s465
      %s485 = sphi 0, %s485
      %s487 = sphi 0, %s485
      %s488 = sphi 0, %s487
      %s502 = sphi 0, %s488
      %s506 = sphi 0, %s506
      %s508 = sphi 0, %s506
      %s509 = sphi 0, %s508
      %s523 = sphi 0, %s509
    $region4: #{encoder_forward.1} parent=1 // loop_header_branch
      %32 = sbr.rel (%p30) target = $region8
    $region5: #{encoder_forward.1} parent=1 // loop_body
      %s34 = ssub.s32 %s29, 1
      %s35 = ssub.s32 %s29, 2
      %s36 = sadd.s32 %s29, 1
      %s38 = sadd.s32 %s37, 1
      %p41 = scmp.eq.s32.totalorder %s29, 7
      %p42 = scmp.ne.s32.totalorder %s37, %s39
      %p43 = scmp.eq.s32.totalorder %s29, 0
      %p44 = por %p42, %p43
      %p45 = scmp.ne.s32.totalorder %s37, %s39
      %p46 = scmp.eq.s32.totalorder %s34, 7
      %p47 = por %p45, %p46
      %p48 = scmp.ne.s32.totalorder %s39, %s40
      %p49 = scmp.eq.s32.totalorder %s34, 0
      %p50 = por %p48, %p49
      %p51 = scmp.ne.s32.totalorder %s39, %s40
      %p52 = scmp.eq.s32.totalorder %s35, 7
      %p53 = por %p51, %p52
      %p55 = scmp.ne.s32.totalorder %s40, %s54
      %p56 = scmp.eq.s32.totalorder %s35, 0
      %p57 = por %p55, %p56
      %s59 = sadd.s32 %s58, 1
      %p62 = scmp.eq.s32.totalorder %s29, 7
      %p63 = scmp.ne.s32.totalorder %s58, %s60
      %p64 = scmp.eq.s32.totalorder %s29, 0
      %p65 = por %p63, %p64
      %p66 = scmp.ne.s32.totalorder %s58, %s60
      %p67 = scmp.eq.s32.totalorder %s34, 7
      %p68 = por %p66, %p67
      %p69 = scmp.ne.s32.totalorder %s60, %s61
      %p70 = scmp.eq.s32.totalorder %s34, 0
      %p71 = por %p69, %p70
      %p72 = scmp.ne.s32.totalorder %s60, %s61
      %p73 = scmp.eq.s32.totalorder %s35, 7
      %p74 = por %p72, %p73
      %p76 = scmp.ne.s32.totalorder %s61, %s75
      %p77 = scmp.eq.s32.totalorder %s35, 0
      %p78 = por %p76, %p77
      %s80 = sadd.s32 %s79, 1
      %p83 = scmp.eq.s32.totalorder %s29, 7
      %p84 = scmp.ne.s32.totalorder %s79, %s81
      %p85 = scmp.eq.s32.totalorder %s29, 0
      %p86 = por %p84, %p85
      %p87 = scmp.ne.s32.totalorder %s79, %s81
      %p88 = scmp.eq.s32.totalorder %s34, 7
      %p89 = por %p87, %p88
      %p90 = scmp.ne.s32.totalorder %s81, %s82
      %p91 = scmp.eq.s32.totalorder %s34, 0
      %p92 = por %p90, %p91
      %p93 = scmp.ne.s32.totalorder %s81, %s82
      %p94 = scmp.eq.s32.totalorder %s35, 7
      %p95 = por %p93, %p94
      %p97 = scmp.ne.s32.totalorder %s82, %s96
      %p98 = scmp.eq.s32.totalorder %s35, 0
      %p99 = por %p97, %p98
      %s101 = sadd.s32 %s100, 1
      %p104 = scmp.eq.s32.totalorder %s29, 7
      %p105 = scmp.ne.s32.totalorder %s100, %s102
      %p106 = scmp.eq.s32.totalorder %s29, 0
      %p107 = por %p105, %p106
      %p108 = scmp.ne.s32.totalorder %s100, %s102
      %p109 = scmp.eq.s32.totalorder %s34, 7
      %p110 = por %p108, %p109
      %p111 = scmp.ne.s32.totalorder %s102, %s103
      %p112 = scmp.eq.s32.totalorder %s34, 0
      %p113 = por %p111, %p112
      %p114 = scmp.ne.s32.totalorder %s102, %s103
      %p115 = scmp.eq.s32.totalorder %s35, 7
      %p116 = por %p114, %p115
      %p118 = scmp.ne.s32.totalorder %s103, %s117
      %p119 = scmp.eq.s32.totalorder %s35, 0
      %p120 = por %p118, %p119
      %s121 = ssub.s32 %s29, %s36
      %p122 = scmp.eq.s32.totalorder %s121, 0
      %s124 = sadd.s32 %s123, 1
      %s125 = scalar_select %p122, %s123, %s124
      %p128 = pneg %p122
      %p129 = scmp.eq.s32.totalorder %s29, 7
      %p130 = por %p128, %p129
      %p131 = scmp.ne.s32.totalorder %s123, %s126
      %p132 = scmp.eq.s32.totalorder %s29, 0
      %p133 = por %p131, %p132
      %p134 = scmp.ne.s32.totalorder %s123, %s126
      %p135 = scmp.eq.s32.totalorder %s34, 7
      %p136 = por %p134, %p135
      %p137 = scmp.ne.s32.totalorder %s126, %s127
      %p138 = scmp.eq.s32.totalorder %s34, 0
      %p139 = por %p137, %p138
      %p140 = scmp.ne.s32.totalorder %s126, %s127
      %p141 = scmp.eq.s32.totalorder %s35, 7
      %p142 = por %p140, %p141
      %p144 = scmp.ne.s32.totalorder %s127, %s143
      %p145 = scmp.eq.s32.totalorder %s35, 0
      %p146 = por %p144, %p145
      %s147 = ssub.s32 %s29, %s36
      %p148 = scmp.eq.s32.totalorder %s147, 0
      %s150 = sadd.s32 %s149, 1
      %s151 = scalar_select %p148, %s149, %s150
      %p154 = pneg %p148
      %p155 = scmp.eq.s32.totalorder %s29, 7
      %p156 = por %p154, %p155
      %p157 = scmp.ne.s32.totalorder %s149, %s152
      %p158 = scmp.eq.s32.totalorder %s29, 0
      %p159 = por %p157, %p158
      %p160 = scmp.ne.s32.totalorder %s149, %s152
      %p161 = scmp.eq.s32.totalorder %s34, 7
      %p162 = por %p160, %p161
      %p163 = scmp.ne.s32.totalorder %s152, %s153
      %p164 = scmp.eq.s32.totalorder %s34, 0
      %p165 = por %p163, %p164
      %p166 = scmp.ne.s32.totalorder %s152, %s153
      %p167 = scmp.eq.s32.totalorder %s35, 7
      %p168 = por %p166, %p167
      %p170 = scmp.ne.s32.totalorder %s153, %s169
      %p171 = scmp.eq.s32.totalorder %s35, 0
      %p172 = por %p170, %p171
      %s173 = ssub.s32 %s29, %s36
      %p174 = scmp.eq.s32.totalorder %s173, 0
      %s176 = sadd.s32 %s175, 1
      %s177 = scalar_select %p174, %s175, %s176
      %p180 = pneg %p174
      %p181 = scmp.eq.s32.totalorder %s29, 7
      %p182 = por %p180, %p181
      %p183 = scmp.ne.s32.totalorder %s175, %s178
      %p184 = scmp.eq.s32.totalorder %s29, 0
      %p185 = por %p183, %p184
      %p186 = scmp.ne.s32.totalorder %s175, %s178
      %p187 = scmp.eq.s32.totalorder %s34, 7
      %p188 = por %p186, %p187
      %p189 = scmp.ne.s32.totalorder %s178, %s179
      %p190 = scmp.eq.s32.totalorder %s34, 0
      %p191 = por %p189, %p190
      %p192 = scmp.ne.s32.totalorder %s178, %s179
      %p193 = scmp.eq.s32.totalorder %s35, 7
      %p194 = por %p192, %p193
      %p196 = scmp.ne.s32.totalorder %s179, %s195
      %p197 = scmp.eq.s32.totalorder %s35, 0
      %p198 = por %p196, %p197
      %s199 = ssub.s32 %s29, %s36
      %p200 = scmp.eq.s32.totalorder %s199, 0
      %s202 = sadd.s32 %s201, 1
      %s203 = scalar_select %p200, %s201, %s202
      %p206 = pneg %p200
      %p207 = scmp.eq.s32.totalorder %s29, 7
      %p208 = por %p206, %p207
      %p209 = scmp.ne.s32.totalorder %s201, %s204
      %p210 = scmp.eq.s32.totalorder %s29, 0
      %p211 = por %p209, %p210
      %p212 = scmp.ne.s32.totalorder %s201, %s204
      %p213 = scmp.eq.s32.totalorder %s34, 7
      %p214 = por %p212, %p213
      %p215 = scmp.ne.s32.totalorder %s204, %s205
      %p216 = scmp.eq.s32.totalorder %s34, 0
      %p217 = por %p215, %p216
      %p218 = scmp.ne.s32.totalorder %s204, %s205
      %p219 = scmp.eq.s32.totalorder %s35, 7
      %p220 = por %p218, %p219
      %p222 = scmp.ne.s32.totalorder %s205, %s221
      %p223 = scmp.eq.s32.totalorder %s35, 0
      %p224 = por %p222, %p223
      %s225 = ssub.s32 %s29, %s36
      %p226 = scmp.eq.s32.totalorder %s225, 0
      %s228 = sadd.s32 %s227, 1
      %s229 = scalar_select %p226, %s227, %s228
      %p232 = pneg %p226
      %p233 = scmp.eq.s32.totalorder %s29, 7
      %p234 = por %p232, %p233
      %p235 = scmp.ne.s32.totalorder %s227, %s230
      %p236 = scmp.eq.s32.totalorder %s29, 0
      %p237 = por %p235, %p236
      %p238 = scmp.ne.s32.totalorder %s227, %s230
      %p239 = scmp.eq.s32.totalorder %s34, 7
      %p240 = por %p238, %p239
      %p241 = scmp.ne.s32.totalorder %s230, %s231
      %p242 = scmp.eq.s32.totalorder %s34, 0
      %p243 = por %p241, %p242
      %p244 = scmp.ne.s32.totalorder %s230, %s231
      %p245 = scmp.eq.s32.totalorder %s35, 7
      %p246 = por %p244, %p245
      %p248 = scmp.ne.s32.totalorder %s231, %s247
      %p249 = scmp.eq.s32.totalorder %s35, 0
      %p250 = por %p248, %p249
      %s251 = ssub.s32 %s29, %s36
      %p252 = scmp.eq.s32.totalorder %s251, 0
      %s254 = sadd.s32 %s253, 1
      %s255 = scalar_select %p252, %s253, %s254
      %p258 = pneg %p252
      %p259 = scmp.eq.s32.totalorder %s29, 7
      %p260 = por %p258, %p259
      %p261 = scmp.ne.s32.totalorder %s253, %s256
      %p262 = scmp.eq.s32.totalorder %s29, 0
      %p263 = por %p261, %p262
      %p264 = scmp.ne.s32.totalorder %s253, %s256
      %p265 = scmp.eq.s32.totalorder %s34, 7
      %p266 = por %p264, %p265
      %p267 = scmp.ne.s32.totalorder %s256, %s257
      %p268 = scmp.eq.s32.totalorder %s34, 0
      %p269 = por %p267, %p268
      %p270 = scmp.ne.s32.totalorder %s256, %s257
      %p271 = scmp.eq.s32.totalorder %s35, 7
      %p272 = por %p270, %p271
      %p274 = scmp.ne.s32.totalorder %s257, %s273
      %p275 = scmp.eq.s32.totalorder %s35, 0
      %p276 = por %p274, %p275
      %s277 = ssub.s32 %s29, %s36
      %p278 = scmp.eq.s32.totalorder %s277, 0
      %s280 = sadd.s32 %s279, 1
      %s281 = scalar_select %p278, %s279, %s280
      %p284 = pneg %p278
      %p285 = scmp.eq.s32.totalorder %s29, 7
      %p286 = por %p284, %p285
      %p287 = scmp.ne.s32.totalorder %s279, %s282
      %p288 = scmp.eq.s32.totalorder %s29, 0
      %p289 = por %p287, %p288
      %p290 = scmp.ne.s32.totalorder %s279, %s282
      %p291 = scmp.eq.s32.totalorder %s34, 7
      %p292 = por %p290, %p291
      %p293 = scmp.ne.s32.totalorder %s282, %s283
      %p294 = scmp.eq.s32.totalorder %s34, 0
      %p295 = por %p293, %p294
      %p296 = scmp.ne.s32.totalorder %s282, %s283
      %p297 = scmp.eq.s32.totalorder %s35, 7
      %p298 = por %p296, %p297
      %p300 = scmp.ne.s32.totalorder %s283, %s299
      %p301 = scmp.eq.s32.totalorder %s35, 0
      %p302 = por %p300, %p301
      %s303 = ssub.s32 %s29, %s36
      %p304 = scmp.eq.s32.totalorder %s303, 0
      %s306 = sadd.s32 %s305, 1
      %s307 = scalar_select %p304, %s305, %s306
      %p310 = pneg %p304
      %p311 = scmp.eq.s32.totalorder %s29, 7
      %p312 = por %p310, %p311
      %p313 = scmp.ne.s32.totalorder %s305, %s308
      %p314 = scmp.eq.s32.totalorder %s29, 0
      %p315 = por %p313, %p314
      %p316 = scmp.ne.s32.totalorder %s305, %s308
      %p317 = scmp.eq.s32.totalorder %s34, 7
      %p318 = por %p316, %p317
      %p319 = scmp.ne.s32.totalorder %s308, %s309
      %p320 = scmp.eq.s32.totalorder %s34, 0
      %p321 = por %p319, %p320
      %p322 = scmp.ne.s32.totalorder %s308, %s309
      %p323 = scmp.eq.s32.totalorder %s35, 7
      %p324 = por %p322, %p323
      %p326 = scmp.ne.s32.totalorder %s309, %s325
      %p327 = scmp.eq.s32.totalorder %s35, 0
      %p328 = por %p326, %p327
      %s329 = ssub.s32 %s29, %s36
      %p330 = scmp.eq.s32.totalorder %s329, 0
      %s332 = sadd.s32 %s331, 1
      %s333 = scalar_select %p330, %s331, %s332
      %p336 = pneg %p330
      %p337 = scmp.eq.s32.totalorder %s29, 7
      %p338 = por %p336, %p337
      %p339 = scmp.ne.s32.totalorder %s331, %s334
      %p340 = scmp.eq.s32.totalorder %s29, 0
      %p341 = por %p339, %p340
      %p342 = scmp.ne.s32.totalorder %s331, %s334
      %p343 = scmp.eq.s32.totalorder %s34, 7
      %p344 = por %p342, %p343
      %p345 = scmp.ne.s32.totalorder %s334, %s335
      %p346 = scmp.eq.s32.totalorder %s34, 0
      %p347 = por %p345, %p346
      %p348 = scmp.ne.s32.totalorder %s334, %s335
      %p349 = scmp.eq.s32.totalorder %s35, 7
      %p350 = por %p348, %p349
      %p352 = scmp.ne.s32.totalorder %s335, %s351
      %p353 = scmp.eq.s32.totalorder %s35, 0
      %p354 = por %p352, %p353
      %s355 = ssub.s32 %s29, %s36
      %p356 = scmp.eq.s32.totalorder %s355, 0
      %s358 = sadd.s32 %s357, 1
      %s359 = scalar_select %p356, %s357, %s358
      %p362 = pneg %p356
      %p363 = scmp.eq.s32.totalorder %s29, 7
      %p364 = por %p362, %p363
      %p365 = scmp.ne.s32.totalorder %s357, %s360
      %p366 = scmp.eq.s32.totalorder %s29, 0
      %p367 = por %p365, %p366
      %p368 = scmp.ne.s32.totalorder %s357, %s360
      %p369 = scmp.eq.s32.totalorder %s34, 7
      %p370 = por %p368, %p369
      %p371 = scmp.ne.s32.totalorder %s360, %s361
      %p372 = scmp.eq.s32.totalorder %s34, 0
      %p373 = por %p371, %p372
      %p374 = scmp.ne.s32.totalorder %s360, %s361
      %p375 = scmp.eq.s32.totalorder %s35, 7
      %p376 = por %p374, %p375
      %p378 = scmp.ne.s32.totalorder %s361, %s377
      %p379 = scmp.eq.s32.totalorder %s35, 0
      %p380 = por %p378, %p379
      %s381 = ssub.s32 %s29, %s36
      %p382 = scmp.eq.s32.totalorder %s381, 0
      %s384 = sadd.s32 %s383, 1
      %s385 = scalar_select %p382, %s383, %s384
      %p388 = pneg %p382
      %p389 = scmp.eq.s32.totalorder %s29, 7
      %p390 = por %p388, %p389
      %p391 = scmp.ne.s32.totalorder %s383, %s386
      %p392 = scmp.eq.s32.totalorder %s29, 0
      %p393 = por %p391, %p392
      %p394 = scmp.ne.s32.totalorder %s383, %s386
      %p395 = scmp.eq.s32.totalorder %s34, 7
      %p396 = por %p394, %p395
      %p397 = scmp.ne.s32.totalorder %s386, %s387
      %p398 = scmp.eq.s32.totalorder %s34, 0
      %p399 = por %p397, %p398
      %p400 = scmp.ne.s32.totalorder %s386, %s387
      %p401 = scmp.eq.s32.totalorder %s35, 7
      %p402 = por %p400, %p401
      %p404 = scmp.ne.s32.totalorder %s387, %s403
      %p405 = scmp.eq.s32.totalorder %s35, 0
      %p406 = por %p404, %p405
      %s407 = ssub.s32 %s29, %s36
      %p408 = scmp.eq.s32.totalorder %s407, 0
      %s410 = sadd.s32 %s409, 1
      %s411 = scalar_select %p408, %s409, %s410
      %p414 = pneg %p408
      %p415 = scmp.eq.s32.totalorder %s29, 7
      %p416 = por %p414, %p415
      %p417 = scmp.ne.s32.totalorder %s409, %s412
      %p418 = scmp.eq.s32.totalorder %s29, 0
      %p419 = por %p417, %p418
      %p420 = scmp.ne.s32.totalorder %s409, %s412
      %p421 = scmp.eq.s32.totalorder %s34, 7
      %p422 = por %p420, %p421
      %p423 = scmp.ne.s32.totalorder %s412, %s413
      %p424 = scmp.eq.s32.totalorder %s34, 0
      %p425 = por %p423, %p424
      %p426 = scmp.ne.s32.totalorder %s412, %s413
      %p427 = scmp.eq.s32.totalorder %s35, 7
      %p428 = por %p426, %p427
      %p430 = scmp.ne.s32.totalorder %s413, %s429
      %p431 = scmp.eq.s32.totalorder %s35, 0
      %p432 = por %p430, %p431
      %s433 = ssub.s32 %s29, %s36
      %p434 = scmp.eq.s32.totalorder %s433, 0
      %s436 = sadd.s32 %s435, 1
      %s437 = scalar_select %p434, %s435, %s436
      %p440 = pneg %p434
      %p441 = scmp.eq.s32.totalorder %s29, 7
      %p442 = por %p440, %p441
      %p443 = scmp.ne.s32.totalorder %s435, %s438
      %p444 = scmp.eq.s32.totalorder %s29, 0
      %p445 = por %p443, %p444
      %p446 = scmp.ne.s32.totalorder %s435, %s438
      %p447 = scmp.eq.s32.totalorder %s34, 7
      %p448 = por %p446, %p447
      %p449 = scmp.ne.s32.totalorder %s438, %s439
      %p450 = scmp.eq.s32.totalorder %s34, 0
      %p451 = por %p449, %p450
      %p452 = scmp.ne.s32.totalorder %s438, %s439
      %p453 = scmp.eq.s32.totalorder %s35, 7
      %p454 = por %p452, %p453
      %p456 = scmp.ne.s32.totalorder %s439, %s455
      %p457 = scmp.eq.s32.totalorder %s35, 0
      %p458 = por %p456, %p457
      %s459 = ssub.s32 %s29, %s36
      %p460 = scmp.eq.s32.totalorder %s459, 0
      %s462 = sadd.s32 %s461, 1
      %s463 = scalar_select %p460, %s461, %s462
      %p466 = pneg %p460
      %p467 = scmp.eq.s32.totalorder %s29, 7
      %p468 = por %p466, %p467
      %p469 = scmp.ne.s32.totalorder %s461, %s464
      %p470 = scmp.eq.s32.totalorder %s29, 0
      %p471 = por %p469, %p470
      %p472 = scmp.ne.s32.totalorder %s461, %s464
      %p473 = scmp.eq.s32.totalorder %s34, 7
      %p474 = por %p472, %p473
      %p475 = scmp.ne.s32.totalorder %s464, %s465
      %p476 = scmp.eq.s32.totalorder %s34, 0
      %p477 = por %p475, %p476
      %p478 = scmp.ne.s32.totalorder %s464, %s465
      %p479 = scmp.eq.s32.totalorder %s35, 7
      %p480 = por %p478, %p479
      %p482 = scmp.ne.s32.totalorder %s465, %s481
      %p483 = scmp.eq.s32.totalorder %s35, 0
      %p484 = por %p482, %p483
      %s486 = sadd.s32 %s485, 1
      %p489 = scmp.eq.s32.totalorder %s29, 7
      %p490 = scmp.ne.s32.totalorder %s485, %s487
      %p491 = scmp.eq.s32.totalorder %s29, 0
      %p492 = por %p490, %p491
      %p493 = scmp.ne.s32.totalorder %s485, %s487
      %p494 = scmp.eq.s32.totalorder %s34, 7
      %p495 = por %p493, %p494
      %p496 = scmp.ne.s32.totalorder %s487, %s488
      %p497 = scmp.eq.s32.totalorder %s34, 0
      %p498 = por %p496, %p497
      %p499 = scmp.ne.s32.totalorder %s487, %s488
      %p500 = scmp.eq.s32.totalorder %s35, 7
      %p501 = por %p499, %p500
      %p503 = scmp.ne.s32.totalorder %s488, %s502
      %p504 = scmp.eq.s32.totalorder %s35, 0
      %p505 = por %p503, %p504
      %s507 = sadd.s32 %s506, 1
      %p510 = scmp.eq.s32.totalorder %s29, 7
      %p511 = scmp.ne.s32.totalorder %s506, %s508
      %p512 = scmp.eq.s32.totalorder %s29, 0
      %p513 = por %p511, %p512
      %p514 = scmp.ne.s32.totalorder %s506, %s508
      %p515 = scmp.eq.s32.totalorder %s34, 7
      %p516 = por %p514, %p515
      %p517 = scmp.ne.s32.totalorder %s508, %s509
      %p518 = scmp.eq.s32.totalorder %s34, 0
      %p519 = por %p517, %p518
      %p520 = scmp.ne.s32.totalorder %s508, %s509
      %p521 = scmp.eq.s32.totalorder %s35, 7
      %p522 = por %p520, %p521
      %p524 = scmp.ne.s32.totalorder %s509, %s523
      %p525 = scmp.eq.s32.totalorder %s35, 0
      %p526 = por %p524, %p525
      %p527 = scmp.le.s32.totalorder 1, %s29
      %p528 = scmp.lt.s32.totalorder %s29, 9
      %p529 = pnand %p527, %p528
      %p530 = pneg %p529
      // Predicated region
      $region9: #{encoder_forward.1} parent=5 // pred_check
        _
      $region10: #{encoder_forward.1} parent=5 // pred_check_branch
        %532 = sbr.rel (%p529) target = $region12
      $region11: #{encoder_forward.1} parent=5 // pred_region
        %s533 = ssub.s32 %s29, 1
        // Predicated region
        $region13: #{encoder_forward.1} parent=11 // pred_check
          %p534 = pneg %p50
        $region14: #{encoder_forward.1} parent=11 // pred_check_branch
          %536 = sbr.rel (%p534) target = $region16
        $region15: #{encoder_forward.1} parent=11 // pred_region
          %s538 = ssub.s32 2048, 2048
          %539 = vsyncadd [#allocation5], %s538
          %s540 = sshll.u32 [#allocation4], 4
          %s541 = int_to_ptr.vmem [resolvable:$true] %s540
          %546 = dma.hbm_to_vmem [thread:$0]  %s0, 2048, %s541, [#allocation5], 128, 128, 8
        $region16: #{encoder_forward.1} parent=11 // pred_fallthru
          _
        // Predicated region
        $region17: #{encoder_forward.1} parent=11 // pred_check
          %p547 = pneg %p71
        $region18: #{encoder_forward.1} parent=11 // pred_check_branch
          %549 = sbr.rel (%p547) target = $region20
        $region19: #{encoder_forward.1} parent=11 // pred_region
          %s551 = ssub.s32 64, 64
          %552 = vsyncadd [#allocation8], %s551
          %s554 = sshll.u32 [#allocation7], 4
          %s555 = int_to_ptr.vmem [resolvable:$true] %s554
          %557 = dma.hbm_to_vmem [thread:$0]  %s1, 64, %s555, [#allocation8]
        $region20: #{encoder_forward.1} parent=11 // pred_fallthru
          _
        // Predicated region
        $region21: #{encoder_forward.1} parent=11 // pred_check
          %p558 = pneg %p92
        $region22: #{encoder_forward.1} parent=11 // pred_check_branch
          %560 = sbr.rel (%p558) target = $region24
        $region23: #{encoder_forward.1} parent=11 // pred_region
          %s562 = ssub.s32 16, 16
          %563 = vsyncadd [#allocation8], %s562
          %s565 = sshll.u32 [#allocation9], 4
          %s566 = int_to_ptr.vmem [resolvable:$true] %s565
          %568 = dma.hbm_to_vmem [thread:$0]  %s2, 16, %s566, [#allocation8]
        $region24: #{encoder_forward.1} parent=11 // pred_fallthru
          _
        // Predicated region
        $region25: #{encoder_forward.1} parent=11 // pred_check
          %p569 = pneg %p113
        $region26: #{encoder_forward.1} parent=11 // pred_check_branch
          %571 = sbr.rel (%p569) target = $region28
        $region27: #{encoder_forward.1} parent=11 // pred_region
          %s573 = ssub.s32 16, 16
          %574 = vsyncadd [#allocation11], %s573
          %s576 = sshll.u32 [#allocation10], 4
          %s577 = int_to_ptr.vmem [resolvable:$true] %s576
          %579 = dma.hbm_to_vmem [thread:$0]  %s3, 16, %s577, [#allocation11]
        $region28: #{encoder_forward.1} parent=11 // pred_fallthru
          _
        // Predicated region
        $region29: #{encoder_forward.1} parent=11 // pred_check
          %p580 = pneg %p498
        $region30: #{encoder_forward.1} parent=11 // pred_check_branch
          %582 = sbr.rel (%p580) target = $region32
        $region31: #{encoder_forward.1} parent=11 // pred_region
          %s584 = ssub.s32 1024, 1024
          %585 = vsyncadd [#allocation8], %s584
          %s586 = sshll.u32 [#allocation26], 4
          %s587 = int_to_ptr.vmem [resolvable:$true] %s586
          %592 = dma.hbm_to_vmem [thread:$0]  %s18, 1024, %s587, [#allocation8], 64, 64, 4
        $region32: #{encoder_forward.1} parent=11 // pred_fallthru
          _
      $region12: #{encoder_forward.1} parent=5 // pred_fallthru
        _
      %p593 = scmp.lt.s32.totalorder %s29, 8
      // Predicated region
      $region33: #{encoder_forward.1} parent=5 // pred_check
        %p594 = pneg %p593
      $region34: #{encoder_forward.1} parent=5 // pred_check_branch
        %596 = sbr.rel (%p594) target = $region36
      $region35: #{encoder_forward.1} parent=5 // pred_region
        // Predicated region
        $region37: #{encoder_forward.1} parent=35 // pred_check
          %p597 = pneg %p133
        $region38: #{encoder_forward.1} parent=35 // pred_check_branch
          %599 = sbr.rel (%p597) target = $region40
        $region39: #{encoder_forward.1} parent=35 // pred_region
          %s600 = sand.u32 %s29, 1
          %s601 = scalar_lea.sflag [#allocation5], %s600
          %s602 = sand.u32 %s123, 1
          %s603 = smul.addr %s602, 192
          %s604 = scalar_lea.vmem [#allocation12], %s603
          %s606 = ssub.s32 3072, 3072
          %607 = vsyncadd %s601, %s606
          %s608 = smul.addr %s29, 48
          %s609 = smul.addr %s608, 64
          %s610 = scalar_lea.hbm %s4, %s609
          %s611 = sshll.u32 %s604, 4
          %s612 = int_to_ptr.vmem [resolvable:$true] %s611
          %617 = dma.hbm_to_vmem [thread:$0]  %s610, 3072, %s612, %s601, 192, 192, 12
        $region40: #{encoder_forward.1} parent=35 // pred_fallthru
          _
        // Predicated region
        $region41: #{encoder_forward.1} parent=35 // pred_check
          %p618 = pneg %p159
        $region42: #{encoder_forward.1} parent=35 // pred_check_branch
          %620 = sbr.rel (%p618) target = $region44
        $region43: #{encoder_forward.1} parent=35 // pred_region
          %s621 = sand.u32 %s29, 1
          %s622 = scalar_lea.sflag [#allocation5], %s621
          %s623 = sand.u32 %s149, 1
          %s624 = smul.addr %s623, 3
          %s625 = scalar_lea.vmem [#allocation13], %s624
          %s627 = ssub.s32 48, 48
          %628 = vsyncadd %s622, %s627
          %s629 = smul.addr %s29, 3
          %s630 = smul.addr %s629, 16
          %s631 = scalar_lea.hbm %s5, %s630
          %s633 = sshll.u32 %s625, 4
          %s634 = int_to_ptr.vmem [resolvable:$true] %s633
          %636 = dma.hbm_to_vmem [thread:$0]  %s631, 48, %s634, %s622
        $region44: #{encoder_forward.1} parent=35 // pred_fallthru
          _
        // Predicated region
        $region45: #{encoder_forward.1} parent=35 // pred_check
          %p637 = pneg %p185
        $region46: #{encoder_forward.1} parent=35 // pred_check_branch
          %639 = sbr.rel (%p637) target = $region48
        $region47: #{encoder_forward.1} parent=35 // pred_region
          %s640 = sand.u32 %s29, 1
          %s641 = scalar_lea.sflag [#allocation5], %s640
          %s642 = sand.u32 %s175, 1
          %s643 = smul.addr %s642, 12
          %s644 = scalar_lea.vmem [#allocation14], %s643
          %s646 = ssub.s32 192, 192
          %647 = vsyncadd %s641, %s646
          %s648 = smul.addr %s29, 3
          %s649 = smul.addr %s648, 64
          %s650 = scalar_lea.hbm %s6, %s649
          %s652 = sshll.u32 %s644, 4
          %s653 = int_to_ptr.vmem [resolvable:$true] %s652
          %655 = dma.hbm_to_vmem [thread:$0]  %s650, 192, %s653, %s641
        $region48: #{encoder_forward.1} parent=35 // pred_fallthru
          _
        // Predicated region
        $region49: #{encoder_forward.1} parent=35 // pred_check
          %p656 = pneg %p211
        $region50: #{encoder_forward.1} parent=35 // pred_check_branch
          %658 = sbr.rel (%p656) target = $region52
        $region51: #{encoder_forward.1} parent=35 // pred_region
          %s659 = sand.u32 %s29, 1
          %s660 = scalar_lea.sflag [#allocation5], %s659
          %s661 = sand.u32 %s201, 1
          %s662 = smul.addr %s661, 3
          %s663 = scalar_lea.vmem [#allocation15], %s662
          %s665 = ssub.s32 48, 48
          %666 = vsyncadd %s660, %s665
          %s667 = smul.addr %s29, 3
          %s668 = smul.addr %s667, 16
          %s669 = scalar_lea.hbm %s7, %s668
          %s671 = sshll.u32 %s663, 4
          %s672 = int_to_ptr.vmem [resolvable:$true] %s671
          %674 = dma.hbm_to_vmem [thread:$0]  %s669, 48, %s672, %s660
        $region52: #{encoder_forward.1} parent=35 // pred_fallthru
          _
        // Predicated region
        $region53: #{encoder_forward.1} parent=35 // pred_check
          %p675 = pneg %p237
        $region54: #{encoder_forward.1} parent=35 // pred_check_branch
          %677 = sbr.rel (%p675) target = $region56
        $region55: #{encoder_forward.1} parent=35 // pred_region
          %s678 = sand.u32 %s29, 1
          %s679 = scalar_lea.sflag [#allocation5], %s678
          %s680 = sand.u32 %s227, 1
          %s681 = smul.addr %s680, 1024
          %s682 = scalar_lea.vmem [#allocation16], %s681
          %s684 = ssub.s32 16384, 16384
          %685 = vsyncadd %s679, %s684
          %s686 = smul.addr %s29, 256
          %s687 = smul.addr %s686, 64
          %s688 = scalar_lea.hbm %s8, %s687
          %s689 = sshll.u32 %s682, 4
          %s690 = int_to_ptr.vmem [resolvable:$true] %s689
          %695 = dma.hbm_to_vmem [thread:$0]  %s688, 16384, %s690, %s679, 64, 64, 4
        $region56: #{encoder_forward.1} parent=35 // pred_fallthru
          _
        // Predicated region
        $region57: #{encoder_forward.1} parent=35 // pred_check
          %p696 = pneg %p263
        $region58: #{encoder_forward.1} parent=35 // pred_check_branch
          %698 = sbr.rel (%p696) target = $region60
        $region59: #{encoder_forward.1} parent=35 // pred_region
          %s699 = sand.u32 %s29, 1
          %s700 = scalar_lea.sflag [#allocation5], %s699
          %s701 = sand.u32 %s253, 1
          %s702 = scalar_lea.vmem [#allocation17], %s701
          %s704 = ssub.s32 16, 16
          %705 = vsyncadd %s700, %s704
          %s706 = smul.addr %s29, 16
          %s707 = scalar_lea.hbm %s9, %s706
          %s709 = sshll.u32 %s702, 4
          %s710 = int_to_ptr.vmem [resolvable:$true] %s709
          %712 = dma.hbm_to_vmem [thread:$0]  %s707, 16, %s710, %s700
        $region60: #{encoder_forward.1} parent=35 // pred_fallthru
          _
        // Predicated region
        $region61: #{encoder_forward.1} parent=35 // pred_check
          %p713 = pneg %p289
        $region62: #{encoder_forward.1} parent=35 // pred_check_branch
          %715 = sbr.rel (%p713) target = $region64
        $region63: #{encoder_forward.1} parent=35 // pred_region
          %s716 = sand.u32 %s29, 1
          %s717 = scalar_lea.sflag [#allocation5], %s716
          %s718 = sand.u32 %s279, 1
          %s719 = smul.addr %s718, 64
          %s720 = scalar_lea.vmem [#allocation18], %s719
          %s722 = ssub.s32 1024, 1024
          %723 = vsyncadd %s717, %s722
          %s724 = smul.addr %s29, 16
          %s725 = smul.addr %s724, 64
          %s726 = scalar_lea.hbm %s10, %s725
          %s727 = sshll.u32 %s720, 4
          %s728 = int_to_ptr.vmem [resolvable:$true] %s727
          %733 = dma.hbm_to_vmem [thread:$0]  %s726, 1024, %s728, %s717, 64, 64, 4
        $region64: #{encoder_forward.1} parent=35 // pred_fallthru
          _
        // Predicated region
        $region65: #{encoder_forward.1} parent=35 // pred_check
          %p734 = pneg %p315
        $region66: #{encoder_forward.1} parent=35 // pred_check_branch
          %736 = sbr.rel (%p734) target = $region68
        $region67: #{encoder_forward.1} parent=35 // pred_region
          %s737 = sand.u32 %s29, 1
          %s738 = scalar_lea.sflag [#allocation5], %s737
          %s739 = sand.u32 %s305, 1
          %s740 = scalar_lea.vmem [#allocation19], %s739
          %s742 = ssub.s32 16, 16
          %743 = vsyncadd %s738, %s742
          %s744 = smul.addr %s29, 16
          %s745 = scalar_lea.hbm %s11, %s744
          %s747 = sshll.u32 %s740, 4
          %s748 = int_to_ptr.vmem [resolvable:$true] %s747
          %750 = dma.hbm_to_vmem [thread:$0]  %s745, 16, %s748, %s738
        $region68: #{encoder_forward.1} parent=35 // pred_fallthru
          _
        // Predicated region
        $region69: #{encoder_forward.1} parent=35 // pred_check
          %p751 = pneg %p341
        $region70: #{encoder_forward.1} parent=35 // pred_check_branch
          %753 = sbr.rel (%p751) target = $region72
        $region71: #{encoder_forward.1} parent=35 // pred_region
          %s754 = sand.u32 %s29, 1
          %s755 = scalar_lea.sflag [#allocation5], %s754
          %s756 = sand.u32 %s331, 1
          %s757 = smul.addr %s756, 64
          %s758 = scalar_lea.vmem [#allocation20], %s757
          %s760 = ssub.s32 1024, 1024
          %761 = vsyncadd %s755, %s760
          %s762 = smul.addr %s29, 16
          %s763 = smul.addr %s762, 64
          %s764 = scalar_lea.hbm %s12, %s763
          %s765 = sshll.u32 %s758, 4
          %s766 = int_to_ptr.vmem [resolvable:$true] %s765
          %771 = dma.hbm_to_vmem [thread:$0]  %s764, 1024, %s766, %s755, 64, 64, 4
        $region72: #{encoder_forward.1} parent=35 // pred_fallthru
          _
        // Predicated region
        $region73: #{encoder_forward.1} parent=35 // pred_check
          %p772 = pneg %p367
        $region74: #{encoder_forward.1} parent=35 // pred_check_branch
          %774 = sbr.rel (%p772) target = $region76
        $region75: #{encoder_forward.1} parent=35 // pred_region
          %s775 = sand.u32 %s29, 1
          %s776 = scalar_lea.sflag [#allocation5], %s775
          %s777 = sand.u32 %s357, 1
          %s778 = scalar_lea.vmem [#allocation21], %s777
          %s780 = ssub.s32 16, 16
          %781 = vsyncadd %s776, %s780
          %s782 = smul.addr %s29, 16
          %s783 = scalar_lea.hbm %s13, %s782
          %s785 = sshll.u32 %s778, 4
          %s786 = int_to_ptr.vmem [resolvable:$true] %s785
          %788 = dma.hbm_to_vmem [thread:$0]  %s783, 16, %s786, %s776
        $region76: #{encoder_forward.1} parent=35 // pred_fallthru
          _
        // Predicated region
        $region77: #{encoder_forward.1} parent=35 // pred_check
          %p789 = pneg %p393
        $region78: #{encoder_forward.1} parent=35 // pred_check_branch
          %791 = sbr.rel (%p789) target = $region80
        $region79: #{encoder_forward.1} parent=35 // pred_region
          %s792 = sand.u32 %s29, 1
          %s793 = scalar_lea.sflag [#allocation5], %s792
          %s794 = sand.u32 %s383, 1
          %s795 = smul.addr %s794, 64
          %s796 = scalar_lea.vmem [#allocation22], %s795
          %s798 = ssub.s32 1024, 1024
          %799 = vsyncadd %s793, %s798
          %s800 = smul.addr %s29, 16
          %s801 = smul.addr %s800, 64
          %s802 = scalar_lea.hbm %s14, %s801
          %s803 = sshll.u32 %s796, 4
          %s804 = int_to_ptr.vmem [resolvable:$true] %s803
          %809 = dma.hbm_to_vmem [thread:$0]  %s802, 1024, %s804, %s793, 64, 64, 4
        $region80: #{encoder_forward.1} parent=35 // pred_fallthru
          _
        // Predicated region
        $region81: #{encoder_forward.1} parent=35 // pred_check
          %p810 = pneg %p419
        $region82: #{encoder_forward.1} parent=35 // pred_check_branch
          %812 = sbr.rel (%p810) target = $region84
        $region83: #{encoder_forward.1} parent=35 // pred_region
          %s813 = sand.u32 %s29, 1
          %s814 = scalar_lea.sflag [#allocation5], %s813
          %s815 = sand.u32 %s409, 1
          %s816 = scalar_lea.vmem [#allocation23], %s815
          %s818 = ssub.s32 16, 16
          %819 = vsyncadd %s814, %s818
          %s820 = smul.addr %s29, 16
          %s821 = scalar_lea.hbm %s15, %s820
          %s823 = sshll.u32 %s816, 4
          %s824 = int_to_ptr.vmem [resolvable:$true] %s823
          %826 = dma.hbm_to_vmem [thread:$0]  %s821, 16, %s824, %s814
        $region84: #{encoder_forward.1} parent=35 // pred_fallthru
          _
        // Predicated region
        $region85: #{encoder_forward.1} parent=35 // pred_check
          %p827 = pneg %p445
        $region86: #{encoder_forward.1} parent=35 // pred_check_branch
          %829 = sbr.rel (%p827) target = $region88
        $region87: #{encoder_forward.1} parent=35 // pred_region
          %s830 = sand.u32 %s29, 1
          %s831 = scalar_lea.sflag [#allocation5], %s830
          %s832 = sand.u32 %s435, 1
          %s833 = smul.addr %s832, 64
          %s834 = scalar_lea.vmem [#allocation24], %s833
          %s836 = ssub.s32 1024, 1024
          %837 = vsyncadd %s831, %s836
          %s838 = smul.addr %s29, 16
          %s839 = smul.addr %s838, 64
          %s840 = scalar_lea.hbm %s16, %s839
          %s841 = sshll.u32 %s834, 4
          %s842 = int_to_ptr.vmem [resolvable:$true] %s841
          %847 = dma.hbm_to_vmem [thread:$0]  %s840, 1024, %s842, %s831, 64, 64, 4
        $region88: #{encoder_forward.1} parent=35 // pred_fallthru
          _
        // Predicated region
        $region89: #{encoder_forward.1} parent=35 // pred_check
          %p848 = pneg %p471
        $region90: #{encoder_forward.1} parent=35 // pred_check_branch
          %850 = sbr.rel (%p848) target = $region92
        $region91: #{encoder_forward.1} parent=35 // pred_region
          %s851 = sand.u32 %s29, 1
          %s852 = scalar_lea.sflag [#allocation5], %s851
          %s853 = sand.u32 %s461, 1
          %s854 = scalar_lea.vmem [#allocation25], %s853
          %s856 = ssub.s32 16, 16
          %857 = vsyncadd %s852, %s856
          %s858 = smul.addr %s29, 16
          %s859 = scalar_lea.hbm %s17, %s858
          %s861 = sshll.u32 %s854, 4
          %s862 = int_to_ptr.vmem [resolvable:$true] %s861
          %864 = dma.hbm_to_vmem [thread:$0]  %s859, 16, %s862, %s852
        $region92: #{encoder_forward.1} parent=35 // pred_fallthru
          _
      $region36: #{encoder_forward.1} parent=5 // pred_fallthru
        _
      %p865 = scmp.le.s32.totalorder 1, %s29
      %p866 = scmp.lt.s32.totalorder %s29, 9
      %p867 = pnand %p865, %p866
      %p868 = pneg %p867
      // Predicated region
      $region93: #{encoder_forward.1} parent=5 // pred_check
        _
      $region94: #{encoder_forward.1} parent=5 // pred_check_branch
        %870 = sbr.rel (%p867) target = $region96
      $region95: #{encoder_forward.1} parent=5 // pred_region
        %s871 = ssub.s32 %s29, 1
        // Predicated region
        $region97: #{encoder_forward.1} parent=95 // pred_check
          %p872 = pneg %p50
        $region98: #{encoder_forward.1} parent=95 // pred_check_branch
          %874 = sbr.rel (%p872) target = $region100
        $region99: #{encoder_forward.1} parent=95 // pred_region
          %875 = dma.done [#allocation5], 2048
        $region100: #{encoder_forward.1} parent=95 // pred_fallthru
          _
        // Predicated region
        $region101: #{encoder_forward.1} parent=95 // pred_check
          %p876 = pneg %p71
        $region102: #{encoder_forward.1} parent=95 // pred_check_branch
          %878 = sbr.rel (%p876) target = $region104
        $region103: #{encoder_forward.1} parent=95 // pred_region
          %879 = dma.done [#allocation8], 64
        $region104: #{encoder_forward.1} parent=95 // pred_fallthru
          _
        // Predicated region
        $region105: #{encoder_forward.1} parent=95 // pred_check
          %p880 = pneg %p92
        $region106: #{encoder_forward.1} parent=95 // pred_check_branch
          %882 = sbr.rel (%p880) target = $region108
        $region107: #{encoder_forward.1} parent=95 // pred_region
          %883 = dma.done [#allocation8], 16
        $region108: #{encoder_forward.1} parent=95 // pred_fallthru
          _
        // Predicated region
        $region109: #{encoder_forward.1} parent=95 // pred_check
          %p884 = pneg %p113
        $region110: #{encoder_forward.1} parent=95 // pred_check_branch
          %886 = sbr.rel (%p884) target = $region112
        $region111: #{encoder_forward.1} parent=95 // pred_region
          %887 = dma.done [#allocation11], 16
        $region112: #{encoder_forward.1} parent=95 // pred_fallthru
          _
        %s888 = sand.u32 %s34, 1
        %s889 = scalar_lea.sflag [#allocation5], %s888
        %s890 = sand.u32 %s126, 1
        %s891 = smul.addr %s890, 192
        %s892 = scalar_lea.vmem [#allocation12], %s891
        // Predicated region
        $region113: #{encoder_forward.1} parent=95 // pred_check
          %p893 = pneg %p139
        $region114: #{encoder_forward.1} parent=95 // pred_check_branch
          %895 = sbr.rel (%p893) target = $region116
        $region115: #{encoder_forward.1} parent=95 // pred_region
          %896 = dma.done %s889, 3072
        $region116: #{encoder_forward.1} parent=95 // pred_fallthru
          _
        %s897 = sand.u32 %s34, 1
        %s898 = scalar_lea.sflag [#allocation5], %s897
        %s899 = sand.u32 %s152, 1
        %s900 = smul.addr %s899, 3
        %s901 = scalar_lea.vmem [#allocation13], %s900
        // Predicated region
        $region117: #{encoder_forward.1} parent=95 // pred_check
          %p902 = pneg %p165
        $region118: #{encoder_forward.1} parent=95 // pred_check_branch
          %904 = sbr.rel (%p902) target = $region120
        $region119: #{encoder_forward.1} parent=95 // pred_region
          %905 = dma.done %s898, 48
        $region120: #{encoder_forward.1} parent=95 // pred_fallthru
          _
        %s906 = sand.u32 %s34, 1
        %s907 = scalar_lea.sflag [#allocation5], %s906
        %s908 = sand.u32 %s178, 1
        %s909 = smul.addr %s908, 12
        %s910 = scalar_lea.vmem [#allocation14], %s909
        // Predicated region
        $region121: #{encoder_forward.1} parent=95 // pred_check
          %p911 = pneg %p191
        $region122: #{encoder_forward.1} parent=95 // pred_check_branch
          %913 = sbr.rel (%p911) target = $region124
        $region123: #{encoder_forward.1} parent=95 // pred_region
          %914 = dma.done %s907, 192
        $region124: #{encoder_forward.1} parent=95 // pred_fallthru
          _
        %s915 = sand.u32 %s34, 1
        %s916 = scalar_lea.sflag [#allocation5], %s915
        %s917 = sand.u32 %s204, 1
        %s918 = smul.addr %s917, 3
        %s919 = scalar_lea.vmem [#allocation15], %s918
        // Predicated region
        $region125: #{encoder_forward.1} parent=95 // pred_check
          %p920 = pneg %p217
        $region126: #{encoder_forward.1} parent=95 // pred_check_branch
          %922 = sbr.rel (%p920) target = $region128
        $region127: #{encoder_forward.1} parent=95 // pred_region
          %923 = dma.done %s916, 48
        $region128: #{encoder_forward.1} parent=95 // pred_fallthru
          _
        %s924 = sand.u32 %s34, 1
        %s925 = scalar_lea.sflag [#allocation5], %s924
        %s926 = sand.u32 %s230, 1
        %s927 = smul.addr %s926, 1024
        %s928 = scalar_lea.vmem [#allocation16], %s927
        // Predicated region
        $region129: #{encoder_forward.1} parent=95 // pred_check
          %p929 = pneg %p243
        $region130: #{encoder_forward.1} parent=95 // pred_check_branch
          %931 = sbr.rel (%p929) target = $region132
        $region131: #{encoder_forward.1} parent=95 // pred_region
          %932 = dma.done %s925, 16384
        $region132: #{encoder_forward.1} parent=95 // pred_fallthru
          _
        %s933 = sand.u32 %s34, 1
        %s934 = scalar_lea.sflag [#allocation5], %s933
        %s935 = sand.u32 %s256, 1
        %s936 = scalar_lea.vmem [#allocation17], %s935
        // Predicated region
        $region133: #{encoder_forward.1} parent=95 // pred_check
          %p937 = pneg %p269
        $region134: #{encoder_forward.1} parent=95 // pred_check_branch
          %939 = sbr.rel (%p937) target = $region136
        $region135: #{encoder_forward.1} parent=95 // pred_region
          %940 = dma.done %s934, 16
        $region136: #{encoder_forward.1} parent=95 // pred_fallthru
          _
        %s941 = sand.u32 %s34, 1
        %s942 = scalar_lea.sflag [#allocation5], %s941
        %s943 = sand.u32 %s282, 1
        %s944 = smul.addr %s943, 64
        %s945 = scalar_lea.vmem [#allocation18], %s944
        // Predicated region
        $region137: #{encoder_forward.1} parent=95 // pred_check
          %p946 = pneg %p295
        $region138: #{encoder_forward.1} parent=95 // pred_check_branch
          %948 = sbr.rel (%p946) target = $region140
        $region139: #{encoder_forward.1} parent=95 // pred_region
          %949 = dma.done %s942, 1024
        $region140: #{encoder_forward.1} parent=95 // pred_fallthru
          _
        %s950 = sand.u32 %s34, 1
        %s951 = scalar_lea.sflag [#allocation5], %s950
        %s952 = sand.u32 %s308, 1
        %s953 = scalar_lea.vmem [#allocation19], %s952
        // Predicated region
        $region141: #{encoder_forward.1} parent=95 // pred_check
          %p954 = pneg %p321
        $region142: #{encoder_forward.1} parent=95 // pred_check_branch
          %956 = sbr.rel (%p954) target = $region144
        $region143: #{encoder_forward.1} parent=95 // pred_region
          %957 = dma.done %s951, 16
        $region144: #{encoder_forward.1} parent=95 // pred_fallthru
          _
        %s958 = sand.u32 %s34, 1
        %s959 = scalar_lea.sflag [#allocation5], %s958
        %s960 = sand.u32 %s334, 1
        %s961 = smul.addr %s960, 64
        %s962 = scalar_lea.vmem [#allocation20], %s961
        // Predicated region
        $region145: #{encoder_forward.1} parent=95 // pred_check
          %p963 = pneg %p347
        $region146: #{encoder_forward.1} parent=95 // pred_check_branch
          %965 = sbr.rel (%p963) target = $region148
        $region147: #{encoder_forward.1} parent=95 // pred_region
          %966 = dma.done %s959, 1024
        $region148: #{encoder_forward.1} parent=95 // pred_fallthru
          _
        %s967 = sand.u32 %s34, 1
        %s968 = scalar_lea.sflag [#allocation5], %s967
        %s969 = sand.u32 %s360, 1
        %s970 = scalar_lea.vmem [#allocation21], %s969
        // Predicated region
        $region149: #{encoder_forward.1} parent=95 // pred_check
          %p971 = pneg %p373
        $region150: #{encoder_forward.1} parent=95 // pred_check_branch
          %973 = sbr.rel (%p971) target = $region152
        $region151: #{encoder_forward.1} parent=95 // pred_region
          %974 = dma.done %s968, 16
        $region152: #{encoder_forward.1} parent=95 // pred_fallthru
          _
        %s975 = sand.u32 %s34, 1
        %s976 = scalar_lea.sflag [#allocation5], %s975
        %s977 = sand.u32 %s386, 1
        %s978 = smul.addr %s977, 64
        %s979 = scalar_lea.vmem [#allocation22], %s978
        // Predicated region
        $region153: #{encoder_forward.1} parent=95 // pred_check
          %p980 = pneg %p399
        $region154: #{encoder_forward.1} parent=95 // pred_check_branch
          %982 = sbr.rel (%p980) target = $region156
        $region155: #{encoder_forward.1} parent=95 // pred_region
          %983 = dma.done %s976, 1024
        $region156: #{encoder_forward.1} parent=95 // pred_fallthru
          _
        %s984 = sand.u32 %s34, 1
        %s985 = scalar_lea.sflag [#allocation5], %s984
        %s986 = sand.u32 %s412, 1
        %s987 = scalar_lea.vmem [#allocation23], %s986
        // Predicated region
        $region157: #{encoder_forward.1} parent=95 // pred_check
          %p988 = pneg %p425
        $region158: #{encoder_forward.1} parent=95 // pred_check_branch
          %990 = sbr.rel (%p988) target = $region160
        $region159: #{encoder_forward.1} parent=95 // pred_region
          %991 = dma.done %s985, 16
        $region160: #{encoder_forward.1} parent=95 // pred_fallthru
          _
        %s992 = sand.u32 %s34, 1
        %s993 = scalar_lea.sflag [#allocation5], %s992
        %s994 = sand.u32 %s438, 1
        %s995 = smul.addr %s994, 64
        %s996 = scalar_lea.vmem [#allocation24], %s995
        // Predicated region
        $region161: #{encoder_forward.1} parent=95 // pred_check
          %p997 = pneg %p451
        $region162: #{encoder_forward.1} parent=95 // pred_check_branch
          %999 = sbr.rel (%p997) target = $region164
        $region163: #{encoder_forward.1} parent=95 // pred_region
          %1000 = dma.done %s993, 1024
        $region164: #{encoder_forward.1} parent=95 // pred_fallthru
          _
        %s1001 = sand.u32 %s34, 1
        %s1002 = scalar_lea.sflag [#allocation5], %s1001
        %s1003 = sand.u32 %s464, 1
        %s1004 = scalar_lea.vmem [#allocation25], %s1003
        // Predicated region
        $region165: #{encoder_forward.1} parent=95 // pred_check
          %p1005 = pneg %p477
        $region166: #{encoder_forward.1} parent=95 // pred_check_branch
          %1007 = sbr.rel (%p1005) target = $region168
        $region167: #{encoder_forward.1} parent=95 // pred_region
          %1008 = dma.done %s1002, 16
        $region168: #{encoder_forward.1} parent=95 // pred_fallthru
          _
        // Predicated region
        $region169: #{encoder_forward.1} parent=95 // pred_check
          %p1009 = pneg %p498
        $region170: #{encoder_forward.1} parent=95 // pred_check_branch
          %1011 = sbr.rel (%p1009) target = $region172
        $region171: #{encoder_forward.1} parent=95 // pred_region
          %1012 = dma.done [#allocation8], 1024
        $region172: #{encoder_forward.1} parent=95 // pred_fallthru
          _
        %p1013 = pneg %p50
        %p1014 = pneg %p47
        %p1015 = pneg %p71
        %p1016 = pneg %p68
        %p1017 = pneg %p92
        %p1018 = pneg %p89
        %p1019 = pneg %p113
        %p1020 = pneg %p110
        %s1021 = sand.u32 %s34, 1
        %s1022 = scalar_lea.sflag [#allocation5], %s1021
        %s1023 = sand.u32 %s126, 1
        %s1024 = smul.addr %s1023, 192
        %s1025 = scalar_lea.vmem [#allocation12], %s1024
        %p1026 = pneg %p139
        %p1027 = pneg %p136
        %s1028 = sand.u32 %s34, 1
        %s1029 = scalar_lea.sflag [#allocation5], %s1028
        %s1030 = sand.u32 %s152, 1
        %s1031 = smul.addr %s1030, 3
        %s1032 = scalar_lea.vmem [#allocation13], %s1031
        %p1033 = pneg %p165
        %p1034 = pneg %p162
        %s1035 = sand.u32 %s34, 1
        %s1036 = scalar_lea.sflag [#allocation5], %s1035
        %s1037 = sand.u32 %s178, 1
        %s1038 = smul.addr %s1037, 12
        %s1039 = scalar_lea.vmem [#allocation14], %s1038
        %p1040 = pneg %p191
        %p1041 = pneg %p188
        %s1042 = sand.u32 %s34, 1
        %s1043 = scalar_lea.sflag [#allocation5], %s1042
        %s1044 = sand.u32 %s204, 1
        %s1045 = smul.addr %s1044, 3
        %s1046 = scalar_lea.vmem [#allocation15], %s1045
        %p1047 = pneg %p217
        %p1048 = pneg %p214
        %s1049 = sand.u32 %s34, 1
        %s1050 = scalar_lea.sflag [#allocation5], %s1049
        %s1051 = sand.u32 %s230, 1
        %s1052 = smul.addr %s1051, 1024
        %s1053 = scalar_lea.vmem [#allocation16], %s1052
        %p1054 = pneg %p243
        %p1055 = pneg %p240
        %s1056 = sand.u32 %s34, 1
        %s1057 = scalar_lea.sflag [#allocation5], %s1056
        %s1058 = sand.u32 %s256, 1
        %s1059 = scalar_lea.vmem [#allocation17], %s1058
        %p1060 = pneg %p269
        %p1061 = pneg %p266
        %s1062 = sand.u32 %s34, 1
        %s1063 = scalar_lea.sflag [#allocation5], %s1062
        %s1064 = sand.u32 %s282, 1
        %s1065 = smul.addr %s1064, 64
        %s1066 = scalar_lea.vmem [#allocation18], %s1065
        %p1067 = pneg %p295
        %p1068 = pneg %p292
        %s1069 = sand.u32 %s34, 1
        %s1070 = scalar_lea.sflag [#allocation5], %s1069
        %s1071 = sand.u32 %s308, 1
        %s1072 = scalar_lea.vmem [#allocation19], %s1071
        %p1073 = pneg %p321
        %p1074 = pneg %p318
        %s1075 = sand.u32 %s34, 1
        %s1076 = scalar_lea.sflag [#allocation5], %s1075
        %s1077 = sand.u32 %s334, 1
        %s1078 = smul.addr %s1077, 64
        %s1079 = scalar_lea.vmem [#allocation20], %s1078
        %p1080 = pneg %p347
        %p1081 = pneg %p344
        %s1082 = sand.u32 %s34, 1
        %s1083 = scalar_lea.sflag [#allocation5], %s1082
        %s1084 = sand.u32 %s360, 1
        %s1085 = scalar_lea.vmem [#allocation21], %s1084
        %p1086 = pneg %p373
        %p1087 = pneg %p370
        %s1088 = sand.u32 %s34, 1
        %s1089 = scalar_lea.sflag [#allocation5], %s1088
        %s1090 = sand.u32 %s386, 1
        %s1091 = smul.addr %s1090, 64
        %s1092 = scalar_lea.vmem [#allocation22], %s1091
        %p1093 = pneg %p399
        %p1094 = pneg %p396
        %s1095 = sand.u32 %s34, 1
        %s1096 = scalar_lea.sflag [#allocation5], %s1095
        %s1097 = sand.u32 %s412, 1
        %s1098 = scalar_lea.vmem [#allocation23], %s1097
        %p1099 = pneg %p425
        %p1100 = pneg %p422
        %s1101 = sand.u32 %s34, 1
        %s1102 = scalar_lea.sflag [#allocation5], %s1101
        %s1103 = sand.u32 %s438, 1
        %s1104 = smul.addr %s1103, 64
        %s1105 = scalar_lea.vmem [#allocation24], %s1104
        %p1106 = pneg %p451
        %p1107 = pneg %p448
        %s1108 = sand.u32 %s34, 1
        %s1109 = scalar_lea.sflag [#allocation5], %s1108
        %s1110 = sand.u32 %s464, 1
        %s1111 = scalar_lea.vmem [#allocation25], %s1110
        %p1112 = pneg %p477
        %p1113 = pneg %p474
        %p1114 = pneg %p498
        %p1115 = pneg %p495
        %p1116 = pneg %p519
        %p1117 = pneg %p516
        %v1119 = vld [vmem:[#allocation9] sm:$0x1]
        %v1120 = vld [vmem:[#allocation10] sm:$0x1]
        %v1121 = vlaneseq
        %v1122 = vand.u32 %v1121, 127
        %vm1123 = vcmp.lt.s32.totalorder %v1122, 32
        %v1124 = vsel %vm1123, 1, 0
        %v1125 = vcvt.s32.f32 %v1124
        %p1126 = scmp.eq.s32.totalorder %s34, 0
        // Predicated region
        $region173: #{encoder_forward.1} parent=95 // pred_check
          %p1127 = pneg %p1126
        $region174: #{encoder_forward.1} parent=95 // pred_check_branch
          %1129 = sbr.rel (%p1127) target = $region176
        $region175: #{encoder_forward.1} parent=95 // pred_region
          %v1130 = vld [vmem:[#allocation4] sm:$0xff]
          %v1131 = vld [vmem:[#allocation4 + $0x8] sm:$0xff]
          %v1132 = vld [vmem:[#allocation4 + $0x10] sm:$0xff]
          %v1133 = vld [vmem:[#allocation4 + $0x18] sm:$0xff]
          %v1134 = vld [vmem:[#allocation4 + $0x20] sm:$0xff]
          %v1135 = vld [vmem:[#allocation4 + $0x28] sm:$0xff]
          %v1136 = vld [vmem:[#allocation4 + $0x30] sm:$0xff]
          %v1137 = vld [vmem:[#allocation4 + $0x38] sm:$0xff]
          %v1138 = vld [vmem:[#allocation4 + $0x40] sm:$0xff]
          %v1139 = vld [vmem:[#allocation4 + $0x48] sm:$0xff]
          %v1140 = vld [vmem:[#allocation4 + $0x50] sm:$0xff]
          %v1141 = vld [vmem:[#allocation4 + $0x58] sm:$0xff]
          %v1142 = vld [vmem:[#allocation4 + $0x60] sm:$0xff]
          %v1143 = vld [vmem:[#allocation4 + $0x68] sm:$0xff]
          %v1144 = vld [vmem:[#allocation4 + $0x70] sm:$0xff]
          %v1145 = vld [vmem:[#allocation4 + $0x78] sm:$0xff]
          %v1146 = vld [vmem:[#allocation7] sm:$0xf]
          %vm1147 = vcmask 31744
          %v1149 = vsel %vm1147, %v1130, 0
          %v1152 = vsel %vm1147, %v1131, 0
          %v1155 = vsel %vm1147, %v1132, 0
          %v1158 = vsel %vm1147, %v1133, 0
          %v1161 = vsel %vm1147, %v1134, 0
          %v1164 = vsel %vm1147, %v1135, 0
          %v1167 = vsel %vm1147, %v1136, 0
          %v1170 = vsel %vm1147, %v1137, 0
          %v1173 = vsel %vm1147, %v1138, 0
          %v1176 = vsel %vm1147, %v1139, 0
          %v1179 = vsel %vm1147, %v1140, 0
          %v1182 = vsel %vm1147, %v1141, 0
          %v1185 = vsel %vm1147, %v1142, 0
          %v1188 = vsel %vm1147, %v1143, 0
          %v1191 = vsel %vm1147, %v1144, 0
          %v1194 = vsel %vm1147, %v1145, 0
          %vm1196 = vcmask 1043456
          %v1198 = vsel %vm1196, %v1146, 0
          %1200 = vmatprep.subr.mxu0 0.0
          %1201 = vmatpush1.msra.mxu0 %v1198
          %1202 = vmatprep.subr.mxu0 0.0
          %1203 = vmatpush1.msra.mxu0 0.0
          %1204 = vmatprep.subr.mxu0 0.0
          %1205 = vmatpush1.msra.mxu0 0.0
          %1206 = vmatprep.subr.mxu0 0.0
          %1207 = vmatpush1.msra.mxu0 0.0
          %1208 = vmatprep.subr.mxu0 0.0
          %1209 = vmatpush1.msra.mxu0 0.0
          %1210 = vmatprep.subr.mxu0 0.0
          %1211 = vmatpush1.msra.mxu0 0.0
          %1212 = vmatprep.subr.mxu0 0.0
          %1213 = vmatpush1.msra.mxu0 0.0
          %1214 = vmatprep.subr.mxu0 0.0
          %1215 = vmatpush1.msra.mxu0 0.0
          %1216 = vmatprep.subr.mxu0 0.0
          %1217 = vmatpush1.msra.mxu0 0.0
          %1218 = vmatprep.subr.mxu0 0.0
          %1219 = vmatpush1.msra.mxu0 0.0
          %1220 = vmatprep.subr.mxu0 0.0
          %1221 = vmatpush1.msra.mxu0 0.0
          %1222 = vmatprep.subr.mxu0 0.0
          %1223 = vmatpush1.msra.mxu0 0.0
          %1224 = vmatprep.subr.mxu0 0.0
          %1225 = vmatpush1.msra.mxu0 0.0
          %1226 = vmatprep.subr.mxu0 0.0
          %1227 = vmatpush1.msra.mxu0 0.0
          %1228 = vmatprep.subr.mxu0 0.0
          %1229 = vmatpush1.msra.mxu0 0.0
          %1230 = vmatprep.subr.mxu0 0.0
          %1231 = vmatpush1.msra.mxu0 0.0
          %1232 = vmatprep.subr.mxu0 0.0
          %1233 = vmatpush1.msra.mxu0 0.0
          %1234 = vmatprep.subr.mxu0 0.0
          %1235 = vmatpush1.msra.mxu0 0.0
          %1236 = vmatprep.subr.mxu0 0.0
          %1237 = vmatpush1.msra.mxu0 0.0
          %1238 = vmatprep.subr.mxu0 0.0
          %1239 = vmatpush1.msra.mxu0 0.0
          %1240 = vmatprep.subr.mxu0 0.0
          %1241 = vmatpush1.msra.mxu0 0.0
          %1242 = vmatprep.subr.mxu0 0.0
          %1243 = vmatpush1.msra.mxu0 0.0
          %1244 = vmatprep.subr.mxu0 0.0
          %1245 = vmatpush1.msra.mxu0 0.0
          %1246 = vmatprep.subr.mxu0 0.0
          %1247 = vmatpush1.msra.mxu0 0.0
          %1248 = vmatprep.subr.mxu0 0.0
          %1249 = vmatpush1.msra.mxu0 0.0
          %1250 = vmatprep.subr.mxu0 0.0
          %1251 = vmatpush1.msra.mxu0 0.0
          %1252 = vmatprep.subr.mxu0 0.0
          %1253 = vmatpush1.msra.mxu0 0.0
          %1254 = vmatprep.subr.mxu0 0.0
          %1255 = vmatpush1.msra.mxu0 0.0
          %1256 = vmatprep.subr.mxu0 0.0
          %1257 = vmatpush1.msra.mxu0 0.0
          %1258 = vmatprep.subr.mxu0 0.0
          %1259 = vmatpush1.msra.mxu0 0.0
          %1260 = vmatprep.subr.mxu0 0.0
          %1261 = vmatpush1.msra.mxu0 0.0
          %1262 = vmatprep.subr.mxu0 0.0
          %1263 = vmatpush1.msra.mxu0 0.0
          %1264 = vmatprep.mubr.f32.mxu0 0.0
          %1265 = vmatmul.mubr.f32.gmra.mrb[0].mxu0 %v1149
          %v1266 = vpop.f32.mrb[0].mxu0
          %v1267 = vadd.f32 0.0, %v1266
          %v1268 = vpop.f32.mrb[0].mxu0
          %1269 = vmatprep.mubr.f32.mxu0 0.0
          %1270 = vmatmul.mubr.f32.gmra.mrb[0].mxu0 %v1152
          %v1271 = vpop.f32.mrb[0].mxu0
          %v1272 = vadd.f32 0.0, %v1271
          %v1273 = vpop.f32.mrb[0].mxu0
          %1274 = vmatprep.mubr.f32.mxu0 0.0
          %1275 = vmatmul.mubr.f32.gmra.mrb[0].mxu0 %v1155
          %v1276 = vpop.f32.mrb[0].mxu0
          %v1277 = vadd.f32 0.0, %v1276
          %v1278 = vpop.f32.mrb[0].mxu0
          %1279 = vmatprep.mubr.f32.mxu0 0.0
          %1280 = vmatmul.mubr.f32.gmra.mrb[0].mxu0 %v1158
          %v1281 = vpop.f32.mrb[0].mxu0
          %v1282 = vadd.f32 0.0, %v1281
          %v1283 = vpop.f32.mrb[0].mxu0
          %1284 = vmatprep.mubr.f32.mxu0 0.0
          %1285 = vmatmul.mubr.f32.gmra.mrb[0].mxu0 %v1161
          %v1286 = vpop.f32.mrb[0].mxu0
          %v1287 = vadd.f32 0.0, %v1286
          %v1288 = vpop.f32.mrb[0].mxu0
          %1289 = vmatprep.mubr.f32.mxu0 0.0
          %1290 = vmatmul.mubr.f32.gmra.mrb[0].mxu0 %v1164
          %v1291 = vpop.f32.mrb[0].mxu0
          %v1292 = vadd.f32 0.0, %v1291
          %v1293 = vpop.f32.mrb[0].mxu0
          %1294 = vmatprep.mubr.f32.mxu0 0.0
          %1295 = vmatmul.mubr.f32.gmra.mrb[0].mxu0 %v1167
          %v1296 = vpop.f32.mrb[0].mxu0
          %v1297 = vadd.f32 0.0, %v1296
          %v1298 = vpop.f32.mrb[0].mxu0
          %1299 = vmatprep.mubr.f32.mxu0 0.0
          %1300 = vmatmul.mubr.f32.gmra.mrb[0].mxu0 %v1170
          %v1301 = vpop.f32.mrb[0].mxu0
          %v1302 = vadd.f32 0.0, %v1301
          %v1303 = vpop.f32.mrb[0].mxu0
          %1304 = vmatprep.mubr.f32.mxu0 0.0
          %1305 = vmatmul.mubr.f32.gmra.mrb[0].mxu0 %v1173
          %v1306 = vpop.f32.mrb[0].mxu0
          %v1307 = vadd.f32 0.0, %v1306
          %v1308 = vpop.f32.mrb[0].mxu0
          %1309 = vmatprep.mubr.f32.mxu0 0.0
          %1310 = vmatmul.mubr.f32.gmra.mrb[0].mxu0 %v1176
          %v1311 = vpop.f32.mrb[0].mxu0
          %v1312 = vadd.f32 0.0, %v1311
          %v1313 = vpop.f32.mrb[0].mxu0
          %1314 = vmatprep.mubr.f32.mxu0 0.0
          %1315 = vmatmul.mubr.f32.gmra.mrb[0].mxu0 %v1179
          %v1316 = vpop.f32.mrb[0].mxu0
          %v1317 = vadd.f32 0.0, %v1316
          %v1318 = vpop.f32.mrb[0].mxu0
          %1319 = vmatprep.mubr.f32.mxu0 0.0
          %1320 = vmatmul.mubr.f32.gmra.mrb[0].mxu0 %v1182
          %v1321 = vpop.f32.mrb[0].mxu0
          %v1322 = vadd.f32 0.0, %v1321
          %v1323 = vpop.f32.mrb[0].mxu0
          %1324 = vmatprep.mubr.f32.mxu0 0.0
          %1325 = vmatmul.mubr.f32.gmra.mrb[0].mxu0 %v1185
          %v1326 = vpop.f32.mrb[0].mxu0
          %v1327 = vadd.f32 0.0, %v1326
          %v1328 = vpop.f32.mrb[0].mxu0
          %1329 = vmatprep.mubr.f32.mxu0 0.0
          %1330 = vmatmul.mubr.f32.gmra.mrb[0].mxu0 %v1188
          %v1331 = vpop.f32.mrb[0].mxu0
          %v1332 = vadd.f32 0.0, %v1331
          %v1333 = vpop.f32.mrb[0].mxu0
          %1334 = vmatprep.mubr.f32.mxu0 0.0
          %1335 = vmatmul.mubr.f32.gmra.mrb[0].mxu0 %v1191
          %v1336 = vpop.f32.mrb[0].mxu0
          %v1337 = vadd.f32 0.0, %v1336
          %v1338 = vpop.f32.mrb[0].mxu0
          %1339 = vmatprep.mubr.f32.mxu0 0.0
          %1340 = vmatmul.mubr.f32.gmra.mrb[0].mxu0 %v1194
          %v1341 = vpop.f32.mrb[0].mxu0
          %v1342 = vadd.f32 0.0, %v1341
          %v1343 = vpop.f32.mrb[0].mxu0
          %1344 = vdwg.mxu0
          %1345 = vst [vmem:[#allocation2] sm:$0xff] %v1267
          %1346 = vst [vmem:[#allocation2 + $0x8] sm:$0xff] %v1272
          %1347 = vst [vmem:[#allocation2 + $0x10] sm:$0xff] %v1277
          %1348 = vst [vmem:[#allocation2 + $0x18] sm:$0xff] %v1282
          %1349 = vst [vmem:[#allocation2 + $0x20] sm:$0xff] %v1287
          %1350 = vst [vmem:[#allocation2 + $0x28] sm:$0xff] %v1292
          %1351 = vst [vmem:[#allocation2 + $0x30] sm:$0xff] %v1297
          %1352 = vst [vmem:[#allocation2 + $0x38] sm:$0xff] %v1302
          %1353 = vst [vmem:[#allocation2 + $0x40] sm:$0xff] %v1307
          %1354 = vst [vmem:[#allocation2 + $0x48] sm:$0xff] %v1312
          %1355 = vst [vmem:[#allocation2 + $0x50] sm:$0xff] %v1317
          %1356 = vst [vmem:[#allocation2 + $0x58] sm:$0xff] %v1322
          %1357 = vst [vmem:[#allocation2 + $0x60] sm:$0xff] %v1327
          %1358 = vst [vmem:[#allocation2 + $0x68] sm:$0xff] %v1332
          %1359 = vst [vmem:[#allocation2 + $0x70] sm:$0xff] %v1337
          %1360 = vst [vmem:[#allocation2 + $0x78] sm:$0xff] %v1342
          %1361 = vst [vmem:[#allocation3] sm:$0xff] 0.0
          %1362 = vst [vmem:[#allocation3 + $0x8] sm:$0xff] 0.0
          %1363 = vst [vmem:[#allocation3 + $0x10] sm:$0xff] 0.0
          %1364 = vst [vmem:[#allocation3 + $0x18] sm:$0xff] 0.0
          %1365 = vst [vmem:[#allocation3 + $0x20] sm:$0xff] 0.0
          %1366 = vst [vmem:[#allocation3 + $0x28] sm:$0xff] 0.0
          %1367 = vst [vmem:[#allocation3 + $0x30] sm:$0xff] 0.0
          %1368 = vst [vmem:[#allocation3 + $0x38] sm:$0xff] 0.0
          %1369 = vst [vmem:[#allocation3 + $0x40] sm:$0xff] 0.0
          %1370 = vst [vmem:[#allocation3 + $0x48] sm:$0xff] 0.0
          %1371 = vst [vmem:[#allocation3 + $0x50] sm:$0xff] 0.0
          %1372 = vst [vmem:[#allocation3 + $0x58] sm:$0xff] 0.0
          %1373 = vst [vmem:[#allocation3 + $0x60] sm:$0xff] 0.0
          %1374 = vst [vmem:[#allocation3 + $0x68] sm:$0xff] 0.0
          %1375 = vst [vmem:[#allocation3 + $0x70] sm:$0xff] 0.0
          %1376 = vst [vmem:[#allocation3 + $0x78] sm:$0xff] 0.0
        $region176: #{encoder_forward.1} parent=95 // pred_fallthru
          _
        %v1377 = vld [vmem:[#allocation2] sm:$0xff]
        %v1378 = vld [vmem:[#allocation2 + $0x8] sm:$0xff]
        %v1379 = vld [vmem:[#allocation2 + $0x10] sm:$0xff]
        %v1380 = vld [vmem:[#allocation2 + $0x18] sm:$0xff]
        %v1381 = vld [vmem:[#allocation2 + $0x20] sm:$0xff]
        %v1382 = vld [vmem:[#allocation2 + $0x28] sm:$0xff]
        %v1383 = vld [vmem:[#allocation2 + $0x30] sm:$0xff]
        %v1384 = vld [vmem:[#allocation2 + $0x38] sm:$0xff]
        %v1385 = vld [vmem:[#allocation2 + $0x40] sm:$0xff]
        %v1386 = vld [vmem:[#allocation2 + $0x48] sm:$0xff]
        %v1387 = vld [vmem:[#allocation2 + $0x50] sm:$0xff]
        %v1388 = vld [vmem:[#allocation2 + $0x58] sm:$0xff]
        %v1389 = vld [vmem:[#allocation2 + $0x60] sm:$0xff]
        %v1390 = vld [vmem:[#allocation2 + $0x68] sm:$0xff]
        %v1391 = vld [vmem:[#allocation2 + $0x70] sm:$0xff]
        %v1392 = vld [vmem:[#allocation2 + $0x78] sm:$0xff]
        %v1393 = vmul.f32 %v1377, %v1125
        %v1394 = vmul.f32 %v1378, %v1125
        %v1395 = vmul.f32 %v1379, %v1125
        %v1396 = vmul.f32 %v1380, %v1125
        %v1397 = vmul.f32 %v1381, %v1125
        %v1398 = vmul.f32 %v1382, %v1125
        %v1399 = vmul.f32 %v1383, %v1125
        %v1400 = vmul.f32 %v1384, %v1125
        %v1401 = vmul.f32 %v1385, %v1125
        %v1402 = vmul.f32 %v1386, %v1125
        %v1403 = vmul.f32 %v1387, %v1125
        %v1404 = vmul.f32 %v1388, %v1125
        %v1405 = vmul.f32 %v1389, %v1125
        %v1406 = vmul.f32 %v1390, %v1125
        %v1407 = vmul.f32 %v1391, %v1125
        %v1408 = vmul.f32 %v1392, %v1125
        %1409 = vadd.xlane.f32.xlu0 %v1393
        %v1410 = vpop.xlane.xlu0 %1409
        %1411 = vadd.xlane.f32.xlu0 %v1394
        %v1412 = vpop.xlane.xlu0 %1411
        %1413 = vadd.xlane.f32.xlu0 %v1395
        %v1414 = vpop.xlane.xlu0 %1413
        %1415 = vadd.xlane.f32.xlu0 %v1396
        %v1416 = vpop.xlane.xlu0 %1415
        %1417 = vadd.xlane.f32.xlu0 %v1397
        %v1418 = vpop.xlane.xlu0 %1417
        %1419 = vadd.xlane.f32.xlu0 %v1398
        %v1420 = vpop.xlane.xlu0 %1419
        %1421 = vadd.xlane.f32.xlu0 %v1399
        %v1422 = vpop.xlane.xlu0 %1421
        %1423 = vadd.xlane.f32.xlu0 %v1400
        %v1424 = vpop.xlane.xlu0 %1423
        %1425 = vadd.xlane.f32.xlu0 %v1401
        %v1426 = vpop.xlane.xlu0 %1425
        %1427 = vadd.xlane.f32.xlu0 %v1402
        %v1428 = vpop.xlane.xlu0 %1427
        %1429 = vadd.xlane.f32.xlu0 %v1403
        %v1430 = vpop.xlane.xlu0 %1429
        %1431 = vadd.xlane.f32.xlu0 %v1404
        %v1432 = vpop.xlane.xlu0 %1431
        %1433 = vadd.xlane.f32.xlu0 %v1405
        %v1434 = vpop.xlane.xlu0 %1433
        %1435 = vadd.xlane.f32.xlu0 %v1406
        %v1436 = vpop.xlane.xlu0 %1435
        %1437 = vadd.xlane.f32.xlu0 %v1407
        %v1438 = vpop.xlane.xlu0 %1437
        %1439 = vadd.xlane.f32.xlu0 %v1408
        %v1440 = vpop.xlane.xlu0 %1439
        %v1441 = vmul.f32 %v1410, 0.03125
        %v1442 = vmul.f32 %v1412, 0.03125
        %v1443 = vmul.f32 %v1414, 0.03125
        %v1444 = vmul.f32 %v1416, 0.03125
        %v1445 = vmul.f32 %v1418, 0.03125
        %v1446 = vmul.f32 %v1420, 0.03125
        %v1447 = vmul.f32 %v1422, 0.03125
        %v1448 = vmul.f32 %v1424, 0.03125
        %v1449 = vmul.f32 %v1426, 0.03125
        %v1450 = vmul.f32 %v1428, 0.03125
        %v1451 = vmul.f32 %v1430, 0.03125
        %v1452 = vmul.f32 %v1432, 0.03125
        %v1453 = vmul.f32 %v1434, 0.03125
        %v1454 = vmul.f32 %v1436, 0.03125
        %v1455 = vmul.f32 %v1438, 0.03125
        %v1456 = vmul.f32 %v1440, 0.03125
        %v1457 = vsub.f32 %v1377, %v1441
        %v1458 = vsub.f32 %v1378, %v1442
        %v1459 = vsub.f32 %v1379, %v1443
        %v1460 = vsub.f32 %v1380, %v1444
        %v1461 = vsub.f32 %v1381, %v1445
        %v1462 = vsub.f32 %v1382, %v1446
        %v1463 = vsub.f32 %v1383, %v1447
        %v1464 = vsub.f32 %v1384, %v1448
        %v1465 = vsub.f32 %v1385, %v1449
        %v1466 = vsub.f32 %v1386, %v1450
        %v1467 = vsub.f32 %v1387, %v1451
        %v1468 = vsub.f32 %v1388, %v1452
        %v1469 = vsub.f32 %v1389, %v1453
        %v1470 = vsub.f32 %v1390, %v1454
        %v1471 = vsub.f32 %v1391, %v1455
        %v1472 = vsub.f32 %v1392, %v1456
        %v1473 = vmul.f32 %v1457, %v1125
        %v1474 = vmul.f32 %v1458, %v1125
        %v1475 = vmul.f32 %v1459, %v1125
        %v1476 = vmul.f32 %v1460, %v1125
        %v1477 = vmul.f32 %v1461, %v1125
        %v1478 = vmul.f32 %v1462, %v1125
        %v1479 = vmul.f32 %v1463, %v1125
        %v1480 = vmul.f32 %v1464, %v1125
        %v1481 = vmul.f32 %v1465, %v1125
        %v1482 = vmul.f32 %v1466, %v1125
        %v1483 = vmul.f32 %v1467, %v1125
        %v1484 = vmul.f32 %v1468, %v1125
        %v1485 = vmul.f32 %v1469, %v1125
        %v1486 = vmul.f32 %v1470, %v1125
        %v1487 = vmul.f32 %v1471, %v1125
        %v1488 = vmul.f32 %v1472, %v1125
        %v1489 = vmul.f32 %v1473, %v1473
        %v1490 = vmul.f32 %v1474, %v1474
        %v1491 = vmul.f32 %v1475, %v1475
        %v1492 = vmul.f32 %v1476, %v1476
        %v1493 = vmul.f32 %v1477, %v1477
        %v1494 = vmul.f32 %v1478, %v1478
        %v1495 = vmul.f32 %v1479, %v1479
        %v1496 = vmul.f32 %v1480, %v1480
        %v1497 = vmul.f32 %v1481, %v1481
        %v1498 = vmul.f32 %v1482, %v1482
        %v1499 = vmul.f32 %v1483, %v1483
        %v1500 = vmul.f32 %v1484, %v1484
        %v1501 = vmul.f32 %v1485, %v1485
        %v1502 = vmul.f32 %v1486, %v1486
        %v1503 = vmul.f32 %v1487, %v1487
        %v1504 = vmul.f32 %v1488, %v1488
        %1505 = vadd.xlane.f32.xlu0 %v1489
        %v1506 = vpop.xlane.xlu0 %1505
        %1507 = vadd.xlane.f32.xlu0 %v1490
        %v1508 = vpop.xlane.xlu0 %1507
        %1509 = vadd.xlane.f32.xlu0 %v1491
        %v1510 = vpop.xlane.xlu0 %1509
        %1511 = vadd.xlane.f32.xlu0 %v1492
        %v1512 = vpop.xlane.xlu0 %1511
        %1513 = vadd.xlane.f32.xlu0 %v1493
        %v1514 = vpop.xlane.xlu0 %1513
        %1515 = vadd.xlane.f32.xlu0 %v1494
        %v1516 = vpop.xlane.xlu0 %1515
        %1517 = vadd.xlane.f32.xlu0 %v1495
        %v1518 = vpop.xlane.xlu0 %1517
        %1519 = vadd.xlane.f32.xlu0 %v1496
        %v1520 = vpop.xlane.xlu0 %1519
        %1521 = vadd.xlane.f32.xlu0 %v1497
        %v1522 = vpop.xlane.xlu0 %1521
        %1523 = vadd.xlane.f32.xlu0 %v1498
        %v1524 = vpop.xlane.xlu0 %1523
        %1525 = vadd.xlane.f32.xlu0 %v1499
        %v1526 = vpop.xlane.xlu0 %1525
        %1527 = vadd.xlane.f32.xlu0 %v1500
        %v1528 = vpop.xlane.xlu0 %1527
        %1529 = vadd.xlane.f32.xlu0 %v1501
        %v1530 = vpop.xlane.xlu0 %1529
        %1531 = vadd.xlane.f32.xlu0 %v1502
        %v1532 = vpop.xlane.xlu0 %1531
        %1533 = vadd.xlane.f32.xlu0 %v1503
        %v1534 = vpop.xlane.xlu0 %1533
        %1535 = vadd.xlane.f32.xlu0 %v1504
        %v1536 = vpop.xlane.xlu0 %1535
        %v1537 = vmul.f32 %v1506, 0.03125
        %v1538 = vmul.f32 %v1508, 0.03125
        %v1539 = vmul.f32 %v1510, 0.03125
        %v1540 = vmul.f32 %v1512, 0.03125
        %v1541 = vmul.f32 %v1514, 0.03125
        %v1542 = vmul.f32 %v1516, 0.03125
        %v1543 = vmul.f32 %v1518, 0.03125
        %v1544 = vmul.f32 %v1520, 0.03125
        %v1545 = vmul.f32 %v1522, 0.03125
        %v1546 = vmul.f32 %v1524, 0.03125
        %v1547 = vmul.f32 %v1526, 0.03125
        %v1548 = vmul.f32 %v1528, 0.03125
        %v1549 = vmul.f32 %v1530, 0.03125
        %v1550 = vmul.f32 %v1532, 0.03125
        %v1551 = vmul.f32 %v1534, 0.03125
        %v1552 = vmul.f32 %v1536, 0.03125
        %v1553 = vadd.f32 %v1537, 1e-05
        %v1554 = vadd.f32 %v1538, 1e-05
        %v1555 = vadd.f32 %v1539, 1e-05
        %v1556 = vadd.f32 %v1540, 1e-05
        %v1557 = vadd.f32 %v1541, 1e-05
        %v1558 = vadd.f32 %v1542, 1e-05
        %v1559 = vadd.f32 %v1543, 1e-05
        %v1560 = vadd.f32 %v1544, 1e-05
        %v1561 = vadd.f32 %v1545, 1e-05
        %v1562 = vadd.f32 %v1546, 1e-05
        %v1563 = vadd.f32 %v1547, 1e-05
        %v1564 = vadd.f32 %v1548, 1e-05
        %v1565 = vadd.f32 %v1549, 1e-05
        %v1566 = vadd.f32 %v1550, 1e-05
        %v1567 = vadd.f32 %v1551, 1e-05
        %v1568 = vadd.f32 %v1552, 1e-05
        %v1569 = vrsqrt.pop %v1553
        %v1570 = vrsqrt.pop %v1554
        %v1571 = vrsqrt.pop %v1555
        %v1572 = vrsqrt.pop %v1556
        %v1573 = vrsqrt.pop %v1557
        %v1574 = vrsqrt.pop %v1558
        %v1575 = vrsqrt.pop %v1559
        %v1576 = vrsqrt.pop %v1560
        %v1577 = vrsqrt.pop %v1561
        %v1578 = vrsqrt.pop %v1562
        %v1579 = vrsqrt.pop %v1563
        %v1580 = vrsqrt.pop %v1564
        %v1581 = vrsqrt.pop %v1565
        %v1582 = vrsqrt.pop %v1566
        %v1583 = vrsqrt.pop %v1567
        %v1584 = vrsqrt.pop %v1568
        %v1585 = vmul.f32 %v1473, %v1569
        %v1586 = vmul.f32 %v1474, %v1570
        %v1587 = vmul.f32 %v1475, %v1571
        %v1588 = vmul.f32 %v1476, %v1572
        %v1589 = vmul.f32 %v1477, %v1573
        %v1590 = vmul.f32 %v1478, %v1574
        %v1591 = vmul.f32 %v1479, %v1575
        %v1592 = vmul.f32 %v1480, %v1576
        %v1593 = vmul.f32 %v1481, %v1577
        %v1594 = vmul.f32 %v1482, %v1578
        %v1595 = vmul.f32 %v1483, %v1579
        %v1596 = vmul.f32 %v1484, %v1580
        %v1597 = vmul.f32 %v1485, %v1581
        %v1598 = vmul.f32 %v1486, %v1582
        %v1599 = vmul.f32 %v1487, %v1583
        %v1600 = vmul.f32 %v1488, %v1584
        %v1602 = vlaneseq
        %v1603 = vshrl.u32 %v1602, 7
        %v1604 = vsub.s32 0, %v1603
        %v1605 = vrot.slane %v1119, %v1604
        %v1607 = vmul.f32 %v1585, %v1605
        %v1608 = vmul.f32 %v1586, %v1605
        %v1609 = vmul.f32 %v1587, %v1605
        %v1610 = vmul.f32 %v1588, %v1605
        %v1611 = vmul.f32 %v1589, %v1605
        %v1612 = vmul.f32 %v1590, %v1605
        %v1613 = vmul.f32 %v1591, %v1605
        %v1614 = vmul.f32 %v1592, %v1605
        %v1615 = vmul.f32 %v1593, %v1605
        %v1616 = vmul.f32 %v1594, %v1605
        %v1617 = vmul.f32 %v1595, %v1605
        %v1618 = vmul.f32 %v1596, %v1605
        %v1619 = vmul.f32 %v1597, %v1605
        %v1620 = vmul.f32 %v1598, %v1605
        %v1621 = vmul.f32 %v1599, %v1605
        %v1622 = vmul.f32 %v1600, %v1605
        %v1624 = vlaneseq
        %v1625 = vshrl.u32 %v1624, 7
        %v1626 = vsub.s32 0, %v1625
        %v1627 = vrot.slane %v1120, %v1626
        %v1629 = vadd.f32 %v1607, %v1627
        %v1630 = vadd.f32 %v1608, %v1627
        %v1631 = vadd.f32 %v1609, %v1627
        %v1632 = vadd.f32 %v1610, %v1627
        %v1633 = vadd.f32 %v1611, %v1627
        %v1634 = vadd.f32 %v1612, %v1627
        %v1635 = vadd.f32 %v1613, %v1627
        %v1636 = vadd.f32 %v1614, %v1627
        %v1637 = vadd.f32 %v1615, %v1627
        %v1638 = vadd.f32 %v1616, %v1627
        %v1639 = vadd.f32 %v1617, %v1627
        %v1640 = vadd.f32 %v1618, %v1627
        %v1641 = vadd.f32 %v1619, %v1627
        %v1642 = vadd.f32 %v1620, %v1627
        %v1643 = vadd.f32 %v1621, %v1627
        %v1644 = vadd.f32 %v1622, %v1627
        %v1645 = vpack.c.bf16 %v1630, %v1629
        %v1646 = vpack.c.bf16 %v1632, %v1631
        %v1647 = vpack.c.bf16 %v1634, %v1633
        %v1648 = vpack.c.bf16 %v1636, %v1635
        %v1649 = vpack.c.bf16 %v1638, %v1637
        %v1650 = vpack.c.bf16 %v1640, %v1639
        %v1651 = vpack.c.bf16 %v1642, %v1641
        %v1652 = vpack.c.bf16 %v1644, %v1643
        %v1653 = vld [vmem:[%s892] sm:$0xff]
        %v1654 = vld [vmem:[%s892 + $0x8] sm:$0xf]
        %v1655 = vld [vmem:[%s892 + $0xc] sm:$0xff]
        %v1656 = vld [vmem:[%s892 + $0x14] sm:$0xf]
        %v1657 = vld [vmem:[%s892 + $0x18] sm:$0xff]
        %v1658 = vld [vmem:[%s892 + $0x20] sm:$0xf]
        %v1659 = vld [vmem:[%s892 + $0x24] sm:$0xff]
        %v1660 = vld [vmem:[%s892 + $0x2c] sm:$0xf]
        %v1661 = vld [vmem:[%s892 + $0x30] sm:$0xff]
        %v1662 = vld [vmem:[%s892 + $0x38] sm:$0xf]
        %v1663 = vld [vmem:[%s892 + $0x3c] sm:$0xff]
        %v1664 = vld [vmem:[%s892 + $0x44] sm:$0xf]
        %v1665 = vld [vmem:[%s892 + $0x48] sm:$0xff]
        %v1666 = vld [vmem:[%s892 + $0x50] sm:$0xf]
        %v1667 = vld [vmem:[%s892 + $0x54] sm:$0xff]
        %v1668 = vld [vmem:[%s892 + $0x5c] sm:$0xf]
        %v1669 = vld [vmem:[%s892 + $0x60] sm:$0xff]
        %v1670 = vld [vmem:[%s892 + $0x68] sm:$0xf]
        %v1671 = vld [vmem:[%s892 + $0x6c] sm:$0xff]
        %v1672 = vld [vmem:[%s892 + $0x74] sm:$0xf]
        %v1673 = vld [vmem:[%s892 + $0x78] sm:$0xff]
        %v1674 = vld [vmem:[%s892 + $0x80] sm:$0xf]
        %v1675 = vld [vmem:[%s892 + $0x84] sm:$0xff]
        %v1676 = vld [vmem:[%s892 + $0x8c] sm:$0xf]
        %v1677 = vld [vmem:[%s892 + $0x90] sm:$0xff]
        %v1678 = vld [vmem:[%s892 + $0x98] sm:$0xf]
        %v1679 = vld [vmem:[%s892 + $0x9c] sm:$0xff]
        %v1680 = vld [vmem:[%s892 + $0xa4] sm:$0xf]
        %v1681 = vld [vmem:[%s892 + $0xa8] sm:$0xff]
        %v1682 = vld [vmem:[%s892 + $0xb0] sm:$0xf]
        %v1683 = vld [vmem:[%s892 + $0xb4] sm:$0xff]
        %v1684 = vld [vmem:[%s892 + $0xbc] sm:$0xf]
        %v1685 = vld [vmem:[%s901] sm:$0x7]
        %v1687 = vlaneseq
        %v1688 = vshrl.u32 %v1687, 7
        %v1689 = vsub.s32 0, %v1688
        %v1690 = vrot.slane %v1685, %v1689
        %v1691 = vlaneseq
        %v1692 = vshrl.u32 %v1691, 7
        %v1693 = vsub.s32 1, %v1692
        %v1694 = vrot.slane %v1685, %v1693
        %v1695 = vlaneseq
        %v1696 = vshrl.u32 %v1695, 7
        %v1697 = vsub.s32 2, %v1696
        %v1698 = vrot.slane %v1685, %v1697
        %v1734 = vunpack.c.l.b16 %v1653
        %v1735 = vunpack.c.h.b16 %v1653
        %v1736 = vunpack.c.l.b16 %v1654
        %v1737 = vunpack.c.l.b16 %v1655
        %v1738 = vunpack.c.h.b16 %v1655
        %v1739 = vunpack.c.l.b16 %v1656
        %v1740 = vunpack.c.l.b16 %v1657
        %v1741 = vunpack.c.h.b16 %v1657
        %v1742 = vunpack.c.l.b16 %v1658
        %v1743 = vunpack.c.l.b16 %v1659
        %v1744 = vunpack.c.h.b16 %v1659
        %v1745 = vunpack.c.l.b16 %v1660
        %v1746 = vunpack.c.l.b16 %v1661
        %v1747 = vunpack.c.h.b16 %v1661
        %v1748 = vunpack.c.l.b16 %v1662
        %v1749 = vunpack.c.l.b16 %v1663
        %v1750 = vunpack.c.h.b16 %v1663
        %v1751 = vunpack.c.l.b16 %v1664
        %v1752 = vunpack.c.l.b16 %v1665
        %v1753 = vunpack.c.h.b16 %v1665
        %v1754 = vunpack.c.l.b16 %v1666
        %v1755 = vunpack.c.l.b16 %v1667
        %v1756 = vunpack.c.h.b16 %v1667
        %v1757 = vunpack.c.l.b16 %v1668
        %v1758 = vunpack.c.l.b16 %v1669
        %v1759 = vunpack.c.h.b16 %v1669
        %v1760 = vunpack.c.l.b16 %v1670
        %v1761 = vunpack.c.l.b16 %v1671
        %v1762 = vunpack.c.h.b16 %v1671
        %v1763 = vunpack.c.l.b16 %v1672
        %v1764 = vunpack.c.l.b16 %v1673
        %v1765 = vunpack.c.h.b16 %v1673
        %v1766 = vunpack.c.l.b16 %v1674
        %v1767 = vunpack.c.l.b16 %v1675
        %v1768 = vunpack.c.h.b16 %v1675
        %v1769 = vunpack.c.l.b16 %v1676
        %v1770 = vunpack.c.l.b16 %v1677
        %v1771 = vunpack.c.h.b16 %v1677
        %v1772 = vunpack.c.l.b16 %v1678
        %v1773 = vunpack.c.l.b16 %v1679
        %v1774 = vunpack.c.h.b16 %v1679
        %v1775 = vunpack.c.l.b16 %v1680
        %v1776 = vunpack.c.l.b16 %v1681
        %v1777 = vunpack.c.h.b16 %v1681
        %v1778 = vunpack.c.l.b16 %v1682
        %v1779 = vunpack.c.l.b16 %v1683
        %v1780 = vunpack.c.h.b16 %v1683
        %v1781 = vunpack.c.l.b16 %v1684
        %v1782 = vpack.c.b16 %v1737, %v1734
        %v1783 = vpack.c.b16 %v1738, %v1735
        %v1784 = vpack.c.b16 %v1739, %v1736
        %v1785 = vpack.c.b16 %v1743, %v1740
        %v1786 = vpack.c.b16 %v1744, %v1741
        %v1787 = vpack.c.b16 %v1745, %v1742
        %v1788 = vpack.c.b16 %v1749, %v1746
        %v1789 = vpack.c.b16 %v1750, %v1747
        %v1790 = vpack.c.b16 %v1751, %v1748
        %v1791 = vpack.c.b16 %v1755, %v1752
        %v1792 = vpack.c.b16 %v1756, %v1753
        %v1793 = vpack.c.b16 %v1757, %v1754
        %v1794 = vpack.c.b16 %v1761, %v1758
        %v1795 = vpack.c.b16 %v1762, %v1759
        %v1796 = vpack.c.b16 %v1763, %v1760
        %v1797 = vpack.c.b16 %v1767, %v1764
        %v1798 = vpack.c.b16 %v1768, %v1765
        %v1799 = vpack.c.b16 %v1769, %v1766
        %v1800 = vpack.c.b16 %v1773, %v1770
        %v1801 = vpack.c.b16 %v1774, %v1771
        %v1802 = vpack.c.b16 %v1775, %v1772
        %v1803 = vpack.c.b16 %v1779, %v1776
        %v1804 = vpack.c.b16 %v1780, %v1777
        %v1805 = vpack.c.b16 %v1781, %v1778
        %1830 = vmatprep.subr.bf16.mxu0 %v1783
        %1831 = vmatpush1.bf16.msra.mxu0 %v1782
        %1832 = vmatprep.subr.bf16.mxu0 %v1786
        %1833 = vmatpush1.bf16.msra.mxu0 %v1785
        %1834 = vmatprep.subr.bf16.mxu0 %v1789
        %1835 = vmatpush1.bf16.msra.mxu0 %v1788
        %1836 = vmatprep.subr.bf16.mxu0 %v1792
        %1837 = vmatpush1.bf16.msra.mxu0 %v1791
        %1838 = vmatprep.subr.bf16.mxu0 %v1795
        %1839 = vmatpush1.bf16.msra.mxu0 %v1794
        %1840 = vmatprep.subr.bf16.mxu0 %v1798
        %1841 = vmatpush1.bf16.msra.mxu0 %v1797
        %1842 = vmatprep.subr.bf16.mxu0 %v1801
        %1843 = vmatpush1.bf16.msra.mxu0 %v1800
        %1844 = vmatprep.subr.bf16.mxu0 %v1804
        %1845 = vmatpush1.bf16.msra.mxu0 %v1803
        %1846 = vmatprep.subr.bf16.mxu0 0
        %1847 = vmatpush1.bf16.msra.mxu0 0
        %1848 = vmatprep.subr.bf16.mxu0 0
        %1849 = vmatpush1.bf16.msra.mxu0 0
        %1850 = vmatprep.subr.bf16.mxu0 0
        %1851 = vmatpush1.bf16.msra.mxu0 0
        %1852 = vmatprep.subr.bf16.mxu0 0
        %1853 = vmatpush1.bf16.msra.mxu0 0
        %1854 = vmatprep.subr.bf16.mxu0 0
        %1855 = vmatpush1.bf16.msra.mxu0 0
        %1856 = vmatprep.subr.bf16.mxu0 0
        %1857 = vmatpush1.bf16.msra.mxu0 0
        %1858 = vmatprep.subr.bf16.mxu0 0
        %1859 = vmatpush1.bf16.msra.mxu0 0
        %1860 = vmatprep.subr.bf16.mxu0 0
        %1861 = vmatpush1.bf16.msra.mxu0 0
        %1862 = vmatprep.mubr.bf16.mxu0 0
        %1863 = vmatmul.mubr.bf16.gmra.mrb[0].mxu0 %v1645
        %v1864 = vpop.f32.mrb[0].mxu0
        %v1865 = vadd.f32 %v1690, %v1864
        %v1866 = vpop.f32.mrb[0].mxu0
        %v1867 = vadd.f32 %v1694, %v1866
        %v1868 = vpop.f32.mrb[0].mxu0
        %v1869 = vadd.f32 %v1690, %v1868
        %v1870 = vpop.f32.mrb[0].mxu0
        %v1871 = vadd.f32 %v1694, %v1870
        %1872 = vmatprep.mubr.bf16.mxu0 0
        %1873 = vmatmul.mubr.bf16.gmra.mrb[0].mxu0 %v1646
        %v1874 = vpop.f32.mrb[0].mxu0
        %v1875 = vadd.f32 %v1690, %v1874
        %v1876 = vpop.f32.mrb[0].mxu0
        %v1877 = vadd.f32 %v1694, %v1876
        %v1878 = vpop.f32.mrb[0].mxu0
        %v1879 = vadd.f32 %v1690, %v1878
        %v1880 = vpop.f32.mrb[0].mxu0
        %v1881 = vadd.f32 %v1694, %v1880
        %1882 = vmatprep.mubr.bf16.mxu0 0
        %1883 = vmatmul.mubr.bf16.gmra.mrb[0].mxu0 %v1647
        %v1884 = vpop.f32.mrb[0].mxu0
        %v1885 = vadd.f32 %v1690, %v1884
        %v1886 = vpop.f32.mrb[0].mxu0
        %v1887 = vadd.f32 %v1694, %v1886
        %v1888 = vpop.f32.mrb[0].mxu0
        %v1889 = vadd.f32 %v1690, %v1888
        %v1890 = vpop.f32.mrb[0].mxu0
        %v1891 = vadd.f32 %v1694, %v1890
        %1892 = vmatprep.mubr.bf16.mxu0 0
        %1893 = vmatmul.mubr.bf16.gmra.mrb[0].mxu0 %v1648
        %v1894 = vpop.f32.mrb[0].mxu0
        %v1895 = vadd.f32 %v1690, %v1894
        %v1896 = vpop.f32.mrb[0].mxu0
        %v1897 = vadd.f32 %v1694, %v1896
        %v1898 = vpop.f32.mrb[0].mxu0
        %v1899 = vadd.f32 %v1690, %v1898
        %v1900 = vpop.f32.mrb[0].mxu0
        %v1901 = vadd.f32 %v1694, %v1900
        %1902 = vmatprep.mubr.bf16.mxu0 0
        %1903 = vmatmul.mubr.bf16.gmra.mrb[0].mxu0 %v1649
        %v1904 = vpop.f32.mrb[0].mxu0
        %v1905 = vadd.f32 %v1690, %v1904
        %v1906 = vpop.f32.mrb[0].mxu0
        %v1907 = vadd.f32 %v1694, %v1906
        %v1908 = vpop.f32.mrb[0].mxu0
        %v1909 = vadd.f32 %v1690, %v1908
        %v1910 = vpop.f32.mrb[0].mxu0
        %v1911 = vadd.f32 %v1694, %v1910
        %1912 = vmatprep.mubr.bf16.mxu0 0
        %1913 = vmatmul.mubr.bf16.gmra.mrb[0].mxu0 %v1650
        %v1914 = vpop.f32.mrb[0].mxu0
        %v1915 = vadd.f32 %v1690, %v1914
        %v1916 = vpop.f32.mrb[0].mxu0
        %v1917 = vadd.f32 %v1694, %v1916
        %v1918 = vpop.f32.mrb[0].mxu0
        %v1919 = vadd.f32 %v1690, %v1918
        %v1920 = vpop.f32.mrb[0].mxu0
        %v1921 = vadd.f32 %v1694, %v1920
        %1922 = vmatprep.mubr.bf16.mxu0 0
        %1923 = vmatmul.mubr.bf16.gmra.mrb[0].mxu0 %v1651
        %v1924 = vpop.f32.mrb[0].mxu0
        %v1925 = vadd.f32 %v1690, %v1924
        %v1926 = vpop.f32.mrb[0].mxu0
        %v1927 = vadd.f32 %v1694, %v1926
        %v1928 = vpop.f32.mrb[0].mxu0
        %v1929 = vadd.f32 %v1690, %v1928
        %v1930 = vpop.f32.mrb[0].mxu0
        %v1931 = vadd.f32 %v1694, %v1930
        %1932 = vmatprep.mubr.bf16.mxu0 0
        %1933 = vmatmul.mubr.bf16.gmra.mrb[0].mxu0 %v1652
        %v1934 = vpop.f32.mrb[0].mxu0
        %v1935 = vadd.f32 %v1690, %v1934
        %v1936 = vpop.f32.mrb[0].mxu0
        %v1937 = vadd.f32 %v1694, %v1936
        %v1938 = vpop.f32.mrb[0].mxu0
        %v1939 = vadd.f32 %v1690, %v1938
        %v1940 = vpop.f32.mrb[0].mxu0
        %v1941 = vadd.f32 %v1694, %v1940
        %1942 = vdwg.mxu0
        %1943 = vmatprep.subr.bf16.mxu0 0
        %1944 = vmatpush1.bf16.msra.mxu0 %v1784
        %1945 = vmatprep.subr.bf16.mxu0 0
        %1946 = vmatpush1.bf16.msra.mxu0 %v1787
        %1947 = vmatprep.subr.bf16.mxu0 0
        %1948 = vmatpush1.bf16.msra.mxu0 %v1790
        %1949 = vmatprep.subr.bf16.mxu0 0
        %1950 = vmatpush1.bf16.msra.mxu0 %v1793
        %1951 = vmatprep.subr.bf16.mxu0 0
        %1952 = vmatpush1.bf16.msra.mxu0 %v1796
        %1953 = vmatprep.subr.bf16.mxu0 0
        %1954 = vmatpush1.bf16.msra.mxu0 %v1799
        %1955 = vmatprep.subr.bf16.mxu0 0
        %1956 = vmatpush1.bf16.msra.mxu0 %v1802
        %1957 = vmatprep.subr.bf16.mxu0 0
        %1958 = vmatpush1.bf16.msra.mxu0 %v1805
        %1959 = vmatprep.subr.bf16.mxu0 0
        %1960 = vmatpush1.bf16.msra.mxu0 0
        %1961 = vmatprep.subr.bf16.mxu0 0
        %1962 = vmatpush1.bf16.msra.mxu0 0
        %1963 = vmatprep.subr.bf16.mxu0 0
        %1964 = vmatpush1.bf16.msra.mxu0 0
        %1965 = vmatprep.subr.bf16.mxu0 0
        %1966 = vmatpush1.bf16.msra.mxu0 0
        %1967 = vmatprep.subr.bf16.mxu0 0
        %1968 = vmatpush1.bf16.msra.mxu0 0
        %1969 = vmatprep.subr.bf16.mxu0 0
        %1970 = vmatpush1.bf16.msra.mxu0 0
        %1971 = vmatprep.subr.bf16.mxu0 0
        %1972 = vmatpush1.bf16.msra.mxu0 0
        %1973 = vmatprep.subr.bf16.mxu0 0
        %1974 = vmatpush1.bf16.msra.mxu0 0
        %1975 = vmatprep.mubr.bf16.mxu0 0
        %1976 = vmatmul.mubr.bf16.gmra.mrb[0].mxu0 %v1645
        %v1977 = vpop.f32.mrb[0].mxu0
        %v1978 = vadd.f32 %v1698, %v1977
        %v1979 = vpop.f32.mrb[0].mxu0
        %v1980 = vpop.f32.mrb[0].mxu0
        %v1981 = vadd.f32 %v1698, %v1980
        %v1982 = vpop.f32.mrb[0].mxu0
        %1983 = vmatprep.mubr.bf16.mxu0 0
        %1984 = vmatmul.mubr.bf16.gmra.mrb[0].mxu0 %v1646
        %v1985 = vpop.f32.mrb[0].mxu0
        %v1986 = vadd.f32 %v1698, %v1985
        %v1987 = vpop.f32.mrb[0].mxu0
        %v1988 = vpop.f32.mrb[0].mxu0
        %v1989 = vadd.f32 %v1698, %v1988
        %v1990 = vpop.f32.mrb[0].mxu0
        %1991 = vmatprep.mubr.bf16.mxu0 0
        %1992 = vmatmul.mubr.bf16.gmra.mrb[0].mxu0 %v1647
        %v1993 = vpop.f32.mrb[0].mxu0
        %v1994 = vadd.f32 %v1698, %v1993
        %v1995 = vpop.f32.mrb[0].mxu0
        %v1996 = vpop.f32.mrb[0].mxu0
        %v1997 = vadd.f32 %v1698, %v1996
        %v1998 = vpop.f32.mrb[0].mxu0
        %1999 = vmatprep.mubr.bf16.mxu0 0
        %2000 = vmatmul.mubr.bf16.gmra.mrb[0].mxu0 %v1648
        %v2001 = vpop.f32.mrb[0].mxu0
        %v2002 = vadd.f32 %v1698, %v2001
        %v2003 = vpop.f32.mrb[0].mxu0
        %v2004 = vpop.f32.mrb[0].mxu0
        %v2005 = vadd.f32 %v1698, %v2004
        %v2006 = vpop.f32.mrb[0].mxu0
        %2007 = vmatprep.mubr.bf16.mxu0 0
        %2008 = vmatmul.mubr.bf16.gmra.mrb[0].mxu0 %v1649
        %v2009 = vpop.f32.mrb[0].mxu0
        %v2010 = vadd.f32 %v1698, %v2009
        %v2011 = vpop.f32.mrb[0].mxu0
        %v2012 = vpop.f32.mrb[0].mxu0
        %v2013 = vadd.f32 %v1698, %v2012
        %v2014 = vpop.f32.mrb[0].mxu0
        %2015 = vmatprep.mubr.bf16.mxu0 0
        %2016 = vmatmul.mubr.bf16.gmra.mrb[0].mxu0 %v1650
        %v2017 = vpop.f32.mrb[0].mxu0
        %v2018 = vadd.f32 %v1698, %v2017
        %v2019 = vpop.f32.mrb[0].mxu0
        %v2020 = vpop.f32.mrb[0].mxu0
        %v2021 = vadd.f32 %v1698, %v2020
        %v2022 = vpop.f32.mrb[0].mxu0
        %2023 = vmatprep.mubr.bf16.mxu0 0
        %2024 = vmatmul.mubr.bf16.gmra.mrb[0].mxu0 %v1651
        %v2025 = vpop.f32.mrb[0].mxu0
        %v2026 = vadd.f32 %v1698, %v2025
        %v2027 = vpop.f32.mrb[0].mxu0
        %v2028 = vpop.f32.mrb[0].mxu0
        %v2029 = vadd.f32 %v1698, %v2028
        %v2030 = vpop.f32.mrb[0].mxu0
        %2031 = vmatprep.mubr.bf16.mxu0 0
        %2032 = vmatmul.mubr.bf16.gmra.mrb[0].mxu0 %v1652
        %v2033 = vpop.f32.mrb[0].mxu0
        %v2034 = vadd.f32 %v1698, %v2033
        %v2035 = vpop.f32.mrb[0].mxu0
        %v2036 = vpop.f32.mrb[0].mxu0
        %v2037 = vadd.f32 %v1698, %v2036
        %v2038 = vpop.f32.mrb[0].mxu0
        %2039 = vdwg.mxu0
        %v2040 = vlaneseq
        %v2041 = vshrl.u32 %v2040, 7
        %v2042 = vadd.s32 %v2041, 8
        %v2043 = vadd.s32 %v2041, 16
        %v2044 = vadd.s32 %v2041, 24
        %v2045 = vadd.s32 %v2041, 32
        %v2046 = vadd.s32 %v2041, 40
        %v2047 = vadd.s32 %v2041, 48
        %v2048 = vadd.s32 %v2041, 56
        %v2049 = vadd.s32 %v2041, 64
        %v2050 = vadd.s32 %v2041, 72
        %v2051 = vadd.s32 %v2041, 80
        %v2052 = vadd.s32 %v2041, 88
        %v2053 = vadd.s32 %v2041, 96
        %v2054 = vadd.s32 %v2041, 104
        %v2055 = vadd.s32 %v2041, 112
        %v2056 = vadd.s32 %v2041, 120
        %v2057 = vand.u32 %v2041, 63
        %v2058 = vand.u32 %v2042, 63
        %v2059 = vand.u32 %v2043, 63
        %v2060 = vand.u32 %v2044, 63
        %v2061 = vand.u32 %v2045, 63
        %v2062 = vand.u32 %v2046, 63
        %v2063 = vand.u32 %v2047, 63
        %v2064 = vand.u32 %v2048, 63
        %v2065 = vand.u32 %v2049, 63
        %v2066 = vand.u32 %v2050, 63
        %v2067 = vand.u32 %v2051, 63
        %v2068 = vand.u32 %v2052, 63
        %v2069 = vand.u32 %v2053, 63
        %v2070 = vand.u32 %v2054, 63
        %v2071 = vand.u32 %v2055, 63
        %v2072 = vand.u32 %v2056, 63
        %vm2073 = vcmp.ge.s32.totalorder %v2057, 1
        %vm2074 = vcmp.ge.s32.totalorder %v2058, 1
        %vm2075 = vcmp.ge.s32.totalorder %v2059, 1
        %vm2076 = vcmp.ge.s32.totalorder %v2060, 1
        %vm2077 = vcmp.ge.s32.totalorder %v2061, 1
        %vm2078 = vcmp.ge.s32.totalorder %v2062, 1
        %vm2079 = vcmp.ge.s32.totalorder %v2063, 1
        %vm2080 = vcmp.ge.s32.totalorder %v2064, 1
        %vm2081 = vcmp.ge.s32.totalorder %v2065, 1
        %vm2082 = vcmp.ge.s32.totalorder %v2066, 1
        %vm2083 = vcmp.ge.s32.totalorder %v2067, 1
        %vm2084 = vcmp.ge.s32.totalorder %v2068, 1
        %vm2085 = vcmp.ge.s32.totalorder %v2069, 1
        %vm2086 = vcmp.ge.s32.totalorder %v2070, 1
        %vm2087 = vcmp.ge.s32.totalorder %v2071, 1
        %vm2088 = vcmp.ge.s32.totalorder %v2072, 1
        %v2089 = vsel %vm2073, 1, 0
        %v2090 = vsel %vm2074, 1, 0
        %v2091 = vsel %vm2075, 1, 0
        %v2092 = vsel %vm2076, 1, 0
        %v2093 = vsel %vm2077, 1, 0
        %v2094 = vsel %vm2078, 1, 0
        %v2095 = vsel %vm2079, 1, 0
        %v2096 = vsel %vm2080, 1, 0
        %v2097 = vsel %vm2081, 1, 0
        %v2098 = vsel %vm2082, 1, 0
        %v2099 = vsel %vm2083, 1, 0
        %v2100 = vsel %vm2084, 1, 0
        %v2101 = vsel %vm2085, 1, 0
        %v2102 = vsel %vm2086, 1, 0
        %v2103 = vsel %vm2087, 1, 0
        %v2104 = vsel %vm2088, 1, 0
        %v2105 = vcvt.s32.f32 %v2089
        %v2106 = vcvt.s32.f32 %v2090
        %v2107 = vcvt.s32.f32 %v2091
        %v2108 = vcvt.s32.f32 %v2092
        %v2109 = vcvt.s32.f32 %v2093
        %v2110 = vcvt.s32.f32 %v2094
        %v2111 = vcvt.s32.f32 %v2095
        %v2112 = vcvt.s32.f32 %v2096
        %v2113 = vcvt.s32.f32 %v2097
        %v2114 = vcvt.s32.f32 %v2098
        %v2115 = vcvt.s32.f32 %v2099
        %v2116 = vcvt.s32.f32 %v2100
        %v2117 = vcvt.s32.f32 %v2101
        %v2118 = vcvt.s32.f32 %v2102
        %v2119 = vcvt.s32.f32 %v2103
        %v2120 = vcvt.s32.f32 %v2104
        %vm2121 = vcmp.ge.s32.totalorder %v2057, 2
        %vm2122 = vcmp.ge.s32.totalorder %v2058, 2
        %vm2123 = vcmp.ge.s32.totalorder %v2059, 2
        %vm2124 = vcmp.ge.s32.totalorder %v2060, 2
        %vm2125 = vcmp.ge.s32.totalorder %v2061, 2
        %vm2126 = vcmp.ge.s32.totalorder %v2062, 2
        %vm2127 = vcmp.ge.s32.totalorder %v2063, 2
        %vm2128 = vcmp.ge.s32.totalorder %v2064, 2
        %vm2129 = vcmp.ge.s32.totalorder %v2065, 2
        %vm2130 = vcmp.ge.s32.totalorder %v2066, 2
        %vm2131 = vcmp.ge.s32.totalorder %v2067, 2
        %vm2132 = vcmp.ge.s32.totalorder %v2068, 2
        %vm2133 = vcmp.ge.s32.totalorder %v2069, 2
        %vm2134 = vcmp.ge.s32.totalorder %v2070, 2
        %vm2135 = vcmp.ge.s32.totalorder %v2071, 2
        %vm2136 = vcmp.ge.s32.totalorder %v2072, 2
        %v2137 = vsel %vm2121, 1, 0
        %v2138 = vsel %vm2122, 1, 0
        %v2139 = vsel %vm2123, 1, 0
        %v2140 = vsel %vm2124, 1, 0
        %v2141 = vsel %vm2125, 1, 0
        %v2142 = vsel %vm2126, 1, 0
        %v2143 = vsel %vm2127, 1, 0
        %v2144 = vsel %vm2128, 1, 0
        %v2145 = vsel %vm2129, 1, 0
        %v2146 = vsel %vm2130, 1, 0
        %v2147 = vsel %vm2131, 1, 0
        %v2148 = vsel %vm2132, 1, 0
        %v2149 = vsel %vm2133, 1, 0
        %v2150 = vsel %vm2134, 1, 0
        %v2151 = vsel %vm2135, 1, 0
        %v2152 = vsel %vm2136, 1, 0
        %v2153 = vcvt.s32.f32 %v2137
        %v2154 = vcvt.s32.f32 %v2138
        %v2155 = vcvt.s32.f32 %v2139
        %v2156 = vcvt.s32.f32 %v2140
        %v2157 = vcvt.s32.f32 %v2141
        %v2158 = vcvt.s32.f32 %v2142
        %v2159 = vcvt.s32.f32 %v2143
        %v2160 = vcvt.s32.f32 %v2144
        %v2161 = vcvt.s32.f32 %v2145
        %v2162 = vcvt.s32.f32 %v2146
        %v2163 = vcvt.s32.f32 %v2147
        %v2164 = vcvt.s32.f32 %v2148
        %v2165 = vcvt.s32.f32 %v2149
        %v2166 = vcvt.s32.f32 %v2150
        %v2167 = vcvt.s32.f32 %v2151
        %v2168 = vcvt.s32.f32 %v2152
        %v2169 = vld [vmem:[%s910] sm:$0x77]
        %v2170 = vld [vmem:[%s910 + $0x8] sm:$0x7]
        %v2171 = vrot.slane %v1865, 7
        %v2172 = vrot.slane %v1867, 7
        %v2173 = vrot.slane %v1978, 7
        %v2174 = vrot.slane %v1869, 7
        %v2175 = vrot.slane %v1871, 7
        %v2176 = vrot.slane %v1981, 7
        %v2177 = vrot.slane %v1875, 7
        %v2178 = vrot.slane %v1877, 7
        %v2179 = vrot.slane %v1986, 7
        %v2180 = vrot.slane %v1879, 7
        %v2181 = vrot.slane %v1881, 7
        %v2182 = vrot.slane %v1989, 7
        %v2183 = vrot.slane %v1885, 7
        %v2184 = vrot.slane %v1887, 7
        %v2185 = vrot.slane %v1994, 7
        %v2186 = vrot.slane %v1889, 7
        %v2187 = vrot.slane %v1891, 7
        %v2188 = vrot.slane %v1997, 7
        %v2189 = vrot.slane %v1895, 7
        %v2190 = vrot.slane %v1897, 7
        %v2191 = vrot.slane %v2002, 7
        %v2192 = vrot.slane %v1899, 7
        %v2193 = vrot.slane %v1901, 7
        %v2194 = vrot.slane %v2005, 7
        %v2195 = vrot.slane %v1905, 7
        %v2196 = vrot.slane %v1907, 7
        %v2197 = vrot.slane %v2010, 7
        %v2198 = vrot.slane %v1909, 7
        %v2199 = vrot.slane %v1911, 7
        %v2200 = vrot.slane %v2013, 7
        %v2201 = vrot.slane %v1915, 7
        %v2202 = vrot.slane %v1917, 7
        %v2203 = vrot.slane %v2018, 7
        %v2204 = vrot.slane %v1919, 7
        %v2205 = vrot.slane %v1921, 7
        %v2206 = vrot.slane %v2021, 7
        %v2207 = vrot.slane %v1925, 7
        %v2208 = vrot.slane %v1927, 7
        %v2209 = vrot.slane %v2026, 7
        %v2210 = vrot.slane %v1929, 7
        %v2211 = vrot.slane %v1931, 7
        %v2212 = vrot.slane %v2029, 7
        %v2213 = vrot.slane %v1935, 7
        %v2214 = vrot.slane %v1937, 7
        %v2215 = vrot.slane %v2034, 7
        %v2216 = vrot.slane %v1939, 7
        %v2217 = vrot.slane %v1941, 7
        %v2218 = vrot.slane %v2037, 7
        %vm2219 = vcmp.lt.s32.totalorder %v2041, 1
        %v2220 = vsel %vm2219, %v2213, %v2216
        %v2221 = vsel %vm2219, %v2214, %v2217
        %v2222 = vsel %vm2219, %v2215, %v2218
        %v2223 = vsel %vm2219, %v2210, %v2213
        %v2224 = vsel %vm2219, %v2211, %v2214
        %v2225 = vsel %vm2219, %v2212, %v2215
        %v2226 = vsel %vm2219, %v2207, %v2210
        %v2227 = vsel %vm2219, %v2208, %v2211
        %v2228 = vsel %vm2219, %v2209, %v2212
        %v2229 = vsel %vm2219, %v2204, %v2207
        %v2230 = vsel %vm2219, %v2205, %v2208
        %v2231 = vsel %vm2219, %v2206, %v2209
        %v2232 = vsel %vm2219, %v2201, %v2204
        %v2233 = vsel %vm2219, %v2202, %v2205
        %v2234 = vsel %vm2219, %v2203, %v2206
        %v2235 = vsel %vm2219, %v2198, %v2201
        %v2236 = vsel %vm2219, %v2199, %v2202
        %v2237 = vsel %vm2219, %v2200, %v2203
        %v2238 = vsel %vm2219, %v2195, %v2198
        %v2239 = vsel %vm2219, %v2196, %v2199
        %v2240 = vsel %vm2219, %v2197, %v2200
        %v2241 = vsel %vm2219, %v2192, %v2195
        %v2242 = vsel %vm2219, %v2193, %v2196
        %v2243 = vsel %vm2219, %v2194, %v2197
        %v2244 = vsel %vm2219, %v2189, %v2192
        %v2245 = vsel %vm2219, %v2190, %v2193
        %v2246 = vsel %vm2219, %v2191, %v2194
        %v2247 = vsel %vm2219, %v2186, %v2189
        %v2248 = vsel %vm2219, %v2187, %v2190
        %v2249 = vsel %vm2219, %v2188, %v2191
        %v2250 = vsel %vm2219, %v2183, %v2186
        %v2251 = vsel %vm2219, %v2184, %v2187
        %v2252 = vsel %vm2219, %v2185, %v2188
        %v2253 = vsel %vm2219, %v2180, %v2183
        %v2254 = vsel %vm2219, %v2181, %v2184
        %v2255 = vsel %vm2219, %v2182, %v2185
        %v2256 = vsel %vm2219, %v2177, %v2180
        %v2257 = vsel %vm2219, %v2178, %v2181
        %v2258 = vsel %vm2219, %v2179, %v2182
        %v2259 = vsel %vm2219, %v2174, %v2177
        %v2260 = vsel %vm2219, %v2175, %v2178
        %v2261 = vsel %vm2219, %v2176, %v2179
        %v2262 = vsel %vm2219, %v2171, %v2174
        %v2263 = vsel %vm2219, %v2172, %v2175
        %v2264 = vsel %vm2219, %v2173, %v2176
        %v2265 = vsel %vm2219, %v2216, %v2171
        %v2266 = vsel %vm2219, %v2217, %v2172
        %v2267 = vsel %vm2219, %v2218, %v2173
        %v2268 = vmul.f32 %v2265, %v2105
        %v2269 = vmul.f32 %v2266, %v2105
        %v2270 = vmul.f32 %v2267, %v2105
        %v2271 = vmul.f32 %v2262, %v2106
        %v2272 = vmul.f32 %v2263, %v2106
        %v2273 = vmul.f32 %v2264, %v2106
        %v2274 = vmul.f32 %v2259, %v2107
        %v2275 = vmul.f32 %v2260, %v2107
        %v2276 = vmul.f32 %v2261, %v2107
        %v2277 = vmul.f32 %v2256, %v2108
        %v2278 = vmul.f32 %v2257, %v2108
        %v2279 = vmul.f32 %v2258, %v2108
        %v2280 = vmul.f32 %v2253, %v2109
        %v2281 = vmul.f32 %v2254, %v2109
        %v2282 = vmul.f32 %v2255, %v2109
        %v2283 = vmul.f32 %v2250, %v2110
        %v2284 = vmul.f32 %v2251, %v2110
        %v2285 = vmul.f32 %v2252, %v2110
        %v2286 = vmul.f32 %v2247, %v2111
        %v2287 = vmul.f32 %v2248, %v2111
        %v2288 = vmul.f32 %v2249, %v2111
        %v2289 = vmul.f32 %v2244, %v2112
        %v2290 = vmul.f32 %v2245, %v2112
        %v2291 = vmul.f32 %v2246, %v2112
        %v2292 = vmul.f32 %v2241, %v2113
        %v2293 = vmul.f32 %v2242, %v2113
        %v2294 = vmul.f32 %v2243, %v2113
        %v2295 = vmul.f32 %v2238, %v2114
        %v2296 = vmul.f32 %v2239, %v2114
        %v2297 = vmul.f32 %v2240, %v2114
        %v2298 = vmul.f32 %v2235, %v2115
        %v2299 = vmul.f32 %v2236, %v2115
        %v2300 = vmul.f32 %v2237, %v2115
        %v2301 = vmul.f32 %v2232, %v2116
        %v2302 = vmul.f32 %v2233, %v2116
        %v2303 = vmul.f32 %v2234, %v2116
        %v2304 = vmul.f32 %v2229, %v2117
        %v2305 = vmul.f32 %v2230, %v2117
        %v2306 = vmul.f32 %v2231, %v2117
        %v2307 = vmul.f32 %v2226, %v2118
        %v2308 = vmul.f32 %v2227, %v2118
        %v2309 = vmul.f32 %v2228, %v2118
        %v2310 = vmul.f32 %v2223, %v2119
        %v2311 = vmul.f32 %v2224, %v2119
        %v2312 = vmul.f32 %v2225, %v2119
        %v2313 = vmul.f32 %v2220, %v2120
        %v2314 = vmul.f32 %v2221, %v2120
        %v2315 = vmul.f32 %v2222, %v2120
        %v2316 = vrot.slane %v1865, 6
        %v2317 = vrot.slane %v1867, 6
        %v2318 = vrot.slane %v1978, 6
        %v2319 = vrot.slane %v1869, 6
        %v2320 = vrot.slane %v1871, 6
        %v2321 = vrot.slane %v1981, 6
        %v2322 = vrot.slane %v1875, 6
        %v2323 = vrot.slane %v1877, 6
        %v2324 = vrot.slane %v1986, 6
        %v2325 = vrot.slane %v1879, 6
        %v2326 = vrot.slane %v1881, 6
        %v2327 = vrot.slane %v1989, 6
        %v2328 = vrot.slane %v1885, 6
        %v2329 = vrot.slane %v1887, 6
        %v2330 = vrot.slane %v1994, 6
        %v2331 = vrot.slane %v1889, 6
        %v2332 = vrot.slane %v1891, 6
        %v2333 = vrot.slane %v1997, 6
        %v2334 = vrot.slane %v1895, 6
        %v2335 = vrot.slane %v1897, 6
        %v2336 = vrot.slane %v2002, 6
        %v2337 = vrot.slane %v1899, 6
        %v2338 = vrot.slane %v1901, 6
        %v2339 = vrot.slane %v2005, 6
        %v2340 = vrot.slane %v1905, 6
        %v2341 = vrot.slane %v1907, 6
        %v2342 = vrot.slane %v2010, 6
        %v2343 = vrot.slane %v1909, 6
        %v2344 = vrot.slane %v1911, 6
        %v2345 = vrot.slane %v2013, 6
        %v2346 = vrot.slane %v1915, 6
        %v2347 = vrot.slane %v1917, 6
        %v2348 = vrot.slane %v2018, 6
        %v2349 = vrot.slane %v1919, 6
        %v2350 = vrot.slane %v1921, 6
        %v2351 = vrot.slane %v2021, 6
        %v2352 = vrot.slane %v1925, 6
        %v2353 = vrot.slane %v1927, 6
        %v2354 = vrot.slane %v2026, 6
        %v2355 = vrot.slane %v1929, 6
        %v2356 = vrot.slane %v1931, 6
        %v2357 = vrot.slane %v2029, 6
        %v2358 = vrot.slane %v1935, 6
        %v2359 = vrot.slane %v1937, 6
        %v2360 = vrot.slane %v2034, 6
        %v2361 = vrot.slane %v1939, 6
        %v2362 = vrot.slane %v1941, 6
        %v2363 = vrot.slane %v2037, 6
        %vm2364 = vcmp.lt.s32.totalorder %v2041, 2
        %v2365 = vsel %vm2364, %v2358, %v2361
        %v2366 = vsel %vm2364, %v2359, %v2362
        %v2367 = vsel %vm2364, %v2360, %v2363
        %v2368 = vsel %vm2364, %v2355, %v2358
        %v2369 = vsel %vm2364, %v2356, %v2359
        %v2370 = vsel %vm2364, %v2357, %v2360
        %v2371 = vsel %vm2364, %v2352, %v2355
        %v2372 = vsel %vm2364, %v2353, %v2356
        %v2373 = vsel %vm2364, %v2354, %v2357
        %v2374 = vsel %vm2364, %v2349, %v2352
        %v2375 = vsel %vm2364, %v2350, %v2353
        %v2376 = vsel %vm2364, %v2351, %v2354
        %v2377 = vsel %vm2364, %v2346, %v2349
        %v2378 = vsel %vm2364, %v2347, %v2350
        %v2379 = vsel %vm2364, %v2348, %v2351
        %v2380 = vsel %vm2364, %v2343, %v2346
        %v2381 = vsel %vm2364, %v2344, %v2347
        %v2382 = vsel %vm2364, %v2345, %v2348
        %v2383 = vsel %vm2364, %v2340, %v2343
        %v2384 = vsel %vm2364, %v2341, %v2344
        %v2385 = vsel %vm2364, %v2342, %v2345
        %v2386 = vsel %vm2364, %v2337, %v2340
        %v2387 = vsel %vm2364, %v2338, %v2341
        %v2388 = vsel %vm2364, %v2339, %v2342
        %v2389 = vsel %vm2364, %v2334, %v2337
        %v2390 = vsel %vm2364, %v2335, %v2338
        %v2391 = vsel %vm2364, %v2336, %v2339
        %v2392 = vsel %vm2364, %v2331, %v2334
        %v2393 = vsel %vm2364, %v2332, %v2335
        %v2394 = vsel %vm2364, %v2333, %v2336
        %v2395 = vsel %vm2364, %v2328, %v2331
        %v2396 = vsel %vm2364, %v2329, %v2332
        %v2397 = vsel %vm2364, %v2330, %v2333
        %v2398 = vsel %vm2364, %v2325, %v2328
        %v2399 = vsel %vm2364, %v2326, %v2329
        %v2400 = vsel %vm2364, %v2327, %v2330
        %v2401 = vsel %vm2364, %v2322, %v2325
        %v2402 = vsel %vm2364, %v2323, %v2326
        %v2403 = vsel %vm2364, %v2324, %v2327
        %v2404 = vsel %vm2364, %v2319, %v2322
        %v2405 = vsel %vm2364, %v2320, %v2323
        %v2406 = vsel %vm2364, %v2321, %v2324
        %v2407 = vsel %vm2364, %v2316, %v2319
        %v2408 = vsel %vm2364, %v2317, %v2320
        %v2409 = vsel %vm2364, %v2318, %v2321
        %v2410 = vsel %vm2364, %v2361, %v2316
        %v2411 = vsel %vm2364, %v2362, %v2317
        %v2412 = vsel %vm2364, %v2363, %v2318
        %v2413 = vmul.f32 %v2410, %v2153
        %v2414 = vmul.f32 %v2411, %v2153
        %v2415 = vmul.f32 %v2412, %v2153
        %v2416 = vmul.f32 %v2407, %v2154
        %v2417 = vmul.f32 %v2408, %v2154
        %v2418 = vmul.f32 %v2409, %v2154
        %v2419 = vmul.f32 %v2404, %v2155
        %v2420 = vmul.f32 %v2405, %v2155
        %v2421 = vmul.f32 %v2406, %v2155
        %v2422 = vmul.f32 %v2401, %v2156
        %v2423 = vmul.f32 %v2402, %v2156
        %v2424 = vmul.f32 %v2403, %v2156
        %v2425 = vmul.f32 %v2398, %v2157
        %v2426 = vmul.f32 %v2399, %v2157
        %v2427 = vmul.f32 %v2400, %v2157
        %v2428 = vmul.f32 %v2395, %v2158
        %v2429 = vmul.f32 %v2396, %v2158
        %v2430 = vmul.f32 %v2397, %v2158
        %v2431 = vmul.f32 %v2392, %v2159
        %v2432 = vmul.f32 %v2393, %v2159
        %v2433 = vmul.f32 %v2394, %v2159
        %v2434 = vmul.f32 %v2389, %v2160
        %v2435 = vmul.f32 %v2390, %v2160
        %v2436 = vmul.f32 %v2391, %v2160
        %v2437 = vmul.f32 %v2386, %v2161
        %v2438 = vmul.f32 %v2387, %v2161
        %v2439 = vmul.f32 %v2388, %v2161
        %v2440 = vmul.f32 %v2383, %v2162
        %v2441 = vmul.f32 %v2384, %v2162
        %v2442 = vmul.f32 %v2385, %v2162
        %v2443 = vmul.f32 %v2380, %v2163
        %v2444 = vmul.f32 %v2381, %v2163
        %v2445 = vmul.f32 %v2382, %v2163
        %v2446 = vmul.f32 %v2377, %v2164
        %v2447 = vmul.f32 %v2378, %v2164
        %v2448 = vmul.f32 %v2379, %v2164
        %v2449 = vmul.f32 %v2374, %v2165
        %v2450 = vmul.f32 %v2375, %v2165
        %v2451 = vmul.f32 %v2376, %v2165
        %v2452 = vmul.f32 %v2371, %v2166
        %v2453 = vmul.f32 %v2372, %v2166
        %v2454 = vmul.f32 %v2373, %v2166
        %v2455 = vmul.f32 %v2368, %v2167
        %v2456 = vmul.f32 %v2369, %v2167
        %v2457 = vmul.f32 %v2370, %v2167
        %v2458 = vmul.f32 %v2365, %v2168
        %v2459 = vmul.f32 %v2366, %v2168
        %v2460 = vmul.f32 %v2367, %v2168
        %v2463 = vlaneseq
        %v2464 = vshrl.u32 %v2463, 7
        %v2465 = vsub.s32 2, %v2464
        %v2466 = vrot.slane %v2169, %v2465
        %v2467 = vlaneseq
        %v2468 = vshrl.u32 %v2467, 7
        %v2469 = vsub.s32 6, %v2468
        %v2470 = vrot.slane %v2169, %v2469
        %v2471 = vlaneseq
        %v2472 = vshrl.u32 %v2471, 7
        %v2473 = vsub.s32 2, %v2472
        %v2474 = vrot.slane %v2170, %v2473
        %v2478 = vlaneseq
        %v2479 = vshrl.u32 %v2478, 7
        %v2480 = vsub.s32 2, %v2479
        %v2481 = vrot.slane %v2466, %v2480
        %v2482 = vlaneseq
        %v2483 = vshrl.u32 %v2482, 7
        %v2484 = vsub.s32 2, %v2483
        %v2485 = vrot.slane %v2470, %v2484
        %v2486 = vlaneseq
        %v2487 = vshrl.u32 %v2486, 7
        %v2488 = vsub.s32 2, %v2487
        %v2489 = vrot.slane %v2474, %v2488
        %v2490 = vmul.f32 %v2481, %v1865
        %v2491 = vmul.f32 %v2485, %v1867
        %v2492 = vmul.f32 %v2489, %v1978
        %v2493 = vmul.f32 %v2481, %v1869
        %v2494 = vmul.f32 %v2485, %v1871
        %v2495 = vmul.f32 %v2489, %v1981
        %v2496 = vmul.f32 %v2481, %v1875
        %v2497 = vmul.f32 %v2485, %v1877
        %v2498 = vmul.f32 %v2489, %v1986
        %v2499 = vmul.f32 %v2481, %v1879
        %v2500 = vmul.f32 %v2485, %v1881
        %v2501 = vmul.f32 %v2489, %v1989
        %v2502 = vmul.f32 %v2481, %v1885
        %v2503 = vmul.f32 %v2485, %v1887
        %v2504 = vmul.f32 %v2489, %v1994
        %v2505 = vmul.f32 %v2481, %v1889
        %v2506 = vmul.f32 %v2485, %v1891
        %v2507 = vmul.f32 %v2489, %v1997
        %v2508 = vmul.f32 %v2481, %v1895
        %v2509 = vmul.f32 %v2485, %v1897
        %v2510 = vmul.f32 %v2489, %v2002
        %v2511 = vmul.f32 %v2481, %v1899
        %v2512 = vmul.f32 %v2485, %v1901
        %v2513 = vmul.f32 %v2489, %v2005
        %v2514 = vmul.f32 %v2481, %v1905
        %v2515 = vmul.f32 %v2485, %v1907
        %v2516 = vmul.f32 %v2489, %v2010
        %v2517 = vmul.f32 %v2481, %v1909
        %v2518 = vmul.f32 %v2485, %v1911
        %v2519 = vmul.f32 %v2489, %v2013
        %v2520 = vmul.f32 %v2481, %v1915
        %v2521 = vmul.f32 %v2485, %v1917
        %v2522 = vmul.f32 %v2489, %v2018
        %v2523 = vmul.f32 %v2481, %v1919
        %v2524 = vmul.f32 %v2485, %v1921
        %v2525 = vmul.f32 %v2489, %v2021
        %v2526 = vmul.f32 %v2481, %v1925
        %v2527 = vmul.f32 %v2485, %v1927
        %v2528 = vmul.f32 %v2489, %v2026
        %v2529 = vmul.f32 %v2481, %v1929
        %v2530 = vmul.f32 %v2485, %v1931
        %v2531 = vmul.f32 %v2489, %v2029
        %v2532 = vmul.f32 %v2481, %v1935
        %v2533 = vmul.f32 %v2485, %v1937
        %v2534 = vmul.f32 %v2489, %v2034
        %v2535 = vmul.f32 %v2481, %v1939
        %v2536 = vmul.f32 %v2485, %v1941
        %v2537 = vmul.f32 %v2489, %v2037
        %v2538 = vlaneseq
        %v2539 = vshrl.u32 %v2538, 7
        %v2540 = vsub.s32 1, %v2539
        %v2541 = vrot.slane %v2169, %v2540
        %v2542 = vlaneseq
        %v2543 = vshrl.u32 %v2542, 7
        %v2544 = vsub.s32 5, %v2543
        %v2545 = vrot.slane %v2169, %v2544
        %v2546 = vlaneseq
        %v2547 = vshrl.u32 %v2546, 7
        %v2548 = vsub.s32 1, %v2547
        %v2549 = vrot.slane %v2170, %v2548
        %v2553 = vlaneseq
        %v2554 = vshrl.u32 %v2553, 7
        %v2555 = vsub.s32 1, %v2554
        %v2556 = vrot.slane %v2541, %v2555
        %v2557 = vlaneseq
        %v2558 = vshrl.u32 %v2557, 7
        %v2559 = vsub.s32 1, %v2558
        %v2560 = vrot.slane %v2545, %v2559
        %v2561 = vlaneseq
        %v2562 = vshrl.u32 %v2561, 7
        %v2563 = vsub.s32 1, %v2562
        %v2564 = vrot.slane %v2549, %v2563
        %v2565 = vmul.f32 %v2556, %v2268
        %v2566 = vmul.f32 %v2560, %v2269
        %v2567 = vmul.f32 %v2564, %v2270
        %v2568 = vmul.f32 %v2556, %v2271
        %v2569 = vmul.f32 %v2560, %v2272
        %v2570 = vmul.f32 %v2564, %v2273
        %v2571 = vmul.f32 %v2556, %v2274
        %v2572 = vmul.f32 %v2560, %v2275
        %v2573 = vmul.f32 %v2564, %v2276
        %v2574 = vmul.f32 %v2556, %v2277
        %v2575 = vmul.f32 %v2560, %v2278
        %v2576 = vmul.f32 %v2564, %v2279
        %v2577 = vmul.f32 %v2556, %v2280
        %v2578 = vmul.f32 %v2560, %v2281
        %v2579 = vmul.f32 %v2564, %v2282
        %v2580 = vmul.f32 %v2556, %v2283
        %v2581 = vmul.f32 %v2560, %v2284
        %v2582 = vmul.f32 %v2564, %v2285
        %v2583 = vmul.f32 %v2556, %v2286
        %v2584 = vmul.f32 %v2560, %v2287
        %v2585 = vmul.f32 %v2564, %v2288
        %v2586 = vmul.f32 %v2556, %v2289
        %v2587 = vmul.f32 %v2560, %v2290
        %v2588 = vmul.f32 %v2564, %v2291
        %v2589 = vmul.f32 %v2556, %v2292
        %v2590 = vmul.f32 %v2560, %v2293
        %v2591 = vmul.f32 %v2564, %v2294
        %v2592 = vmul.f32 %v2556, %v2295
        %v2593 = vmul.f32 %v2560, %v2296
        %v2594 = vmul.f32 %v2564, %v2297
        %v2595 = vmul.f32 %v2556, %v2298
        %v2596 = vmul.f32 %v2560, %v2299
        %v2597 = vmul.f32 %v2564, %v2300
        %v2598 = vmul.f32 %v2556, %v2301
        %v2599 = vmul.f32 %v2560, %v2302
        %v2600 = vmul.f32 %v2564, %v2303
        %v2601 = vmul.f32 %v2556, %v2304
        %v2602 = vmul.f32 %v2560, %v2305
        %v2603 = vmul.f32 %v2564, %v2306
        %v2604 = vmul.f32 %v2556, %v2307
        %v2605 = vmul.f32 %v2560, %v2308
        %v2606 = vmul.f32 %v2564, %v2309
        %v2607 = vmul.f32 %v2556, %v2310
        %v2608 = vmul.f32 %v2560, %v2311
        %v2609 = vmul.f32 %v2564, %v2312
        %v2610 = vmul.f32 %v2556, %v2313
        %v2611 = vmul.f32 %v2560, %v2314
        %v2612 = vmul.f32 %v2564, %v2315
        %v2613 = vadd.f32 %v2490, %v2565
        %v2614 = vadd.f32 %v2491, %v2566
        %v2615 = vadd.f32 %v2492, %v2567
        %v2616 = vadd.f32 %v2493, %v2568
        %v2617 = vadd.f32 %v2494, %v2569
        %v2618 = vadd.f32 %v2495, %v2570
        %v2619 = vadd.f32 %v2496, %v2571
        %v2620 = vadd.f32 %v2497, %v2572
        %v2621 = vadd.f32 %v2498, %v2573
        %v2622 = vadd.f32 %v2499, %v2574
        %v2623 = vadd.f32 %v2500, %v2575
        %v2624 = vadd.f32 %v2501, %v2576
        %v2625 = vadd.f32 %v2502, %v2577
        %v2626 = vadd.f32 %v2503, %v2578
        %v2627 = vadd.f32 %v2504, %v2579
        %v2628 = vadd.f32 %v2505, %v2580
        %v2629 = vadd.f32 %v2506, %v2581
        %v2630 = vadd.f32 %v2507, %v2582
        %v2631 = vadd.f32 %v2508, %v2583
        %v2632 = vadd.f32 %v2509, %v2584
        %v2633 = vadd.f32 %v2510, %v2585
        %v2634 = vadd.f32 %v2511, %v2586
        %v2635 = vadd.f32 %v2512, %v2587
        %v2636 = vadd.f32 %v2513, %v2588
        %v2637 = vadd.f32 %v2514, %v2589
        %v2638 = vadd.f32 %v2515, %v2590
        %v2639 = vadd.f32 %v2516, %v2591
        %v2640 = vadd.f32 %v2517, %v2592
        %v2641 = vadd.f32 %v2518, %v2593
        %v2642 = vadd.f32 %v2519, %v2594
        %v2643 = vadd.f32 %v2520, %v2595
        %v2644 = vadd.f32 %v2521, %v2596
        %v2645 = vadd.f32 %v2522, %v2597
        %v2646 = vadd.f32 %v2523, %v2598
        %v2647 = vadd.f32 %v2524, %v2599
        %v2648 = vadd.f32 %v2525, %v2600
        %v2649 = vadd.f32 %v2526, %v2601
        %v2650 = vadd.f32 %v2527, %v2602
        %v2651 = vadd.f32 %v2528, %v2603
        %v2652 = vadd.f32 %v2529, %v2604
        %v2653 = vadd.f32 %v2530, %v2605
        %v2654 = vadd.f32 %v2531, %v2606
        %v2655 = vadd.f32 %v2532, %v2607
        %v2656 = vadd.f32 %v2533, %v2608
        %v2657 = vadd.f32 %v2534, %v2609
        %v2658 = vadd.f32 %v2535, %v2610
        %v2659 = vadd.f32 %v2536, %v2611
        %v2660 = vadd.f32 %v2537, %v2612
        %v2661 = vlaneseq
        %v2662 = vshrl.u32 %v2661, 7
        %v2663 = vsub.s32 0, %v2662
        %v2664 = vrot.slane %v2169, %v2663
        %v2665 = vlaneseq
        %v2666 = vshrl.u32 %v2665, 7
        %v2667 = vsub.s32 4, %v2666
        %v2668 = vrot.slane %v2169, %v2667
        %v2669 = vlaneseq
        %v2670 = vshrl.u32 %v2669, 7
        %v2671 = vsub.s32 0, %v2670
        %v2672 = vrot.slane %v2170, %v2671
        %v2676 = vlaneseq
        %v2677 = vshrl.u32 %v2676, 7
        %v2678 = vsub.s32 0, %v2677
        %v2679 = vrot.slane %v2664, %v2678
        %v2680 = vlaneseq
        %v2681 = vshrl.u32 %v2680, 7
        %v2682 = vsub.s32 0, %v2681
        %v2683 = vrot.slane %v2668, %v2682
        %v2684 = vlaneseq
        %v2685 = vshrl.u32 %v2684, 7
        %v2686 = vsub.s32 0, %v2685
        %v2687 = vrot.slane %v2672, %v2686
        %v2688 = vmul.f32 %v2679, %v2413
        %v2689 = vmul.f32 %v2683, %v2414
        %v2690 = vmul.f32 %v2687, %v2415
        %v2691 = vmul.f32 %v2679, %v2416
        %v2692 = vmul.f32 %v2683, %v2417
        %v2693 = vmul.f32 %v2687, %v2418
        %v2694 = vmul.f32 %v2679, %v2419
        %v2695 = vmul.f32 %v2683, %v2420
        %v2696 = vmul.f32 %v2687, %v2421
        %v2697 = vmul.f32 %v2679, %v2422
        %v2698 = vmul.f32 %v2683, %v2423
        %v2699 = vmul.f32 %v2687, %v2424
        %v2700 = vmul.f32 %v2679, %v2425
        %v2701 = vmul.f32 %v2683, %v2426
        %v2702 = vmul.f32 %v2687, %v2427
        %v2703 = vmul.f32 %v2679, %v2428
        %v2704 = vmul.f32 %v2683, %v2429
        %v2705 = vmul.f32 %v2687, %v2430
        %v2706 = vmul.f32 %v2679, %v2431
        %v2707 = vmul.f32 %v2683, %v2432
        %v2708 = vmul.f32 %v2687, %v2433
        %v2709 = vmul.f32 %v2679, %v2434
        %v2710 = vmul.f32 %v2683, %v2435
        %v2711 = vmul.f32 %v2687, %v2436
        %v2712 = vmul.f32 %v2679, %v2437
        %v2713 = vmul.f32 %v2683, %v2438
        %v2714 = vmul.f32 %v2687, %v2439
        %v2715 = vmul.f32 %v2679, %v2440
        %v2716 = vmul.f32 %v2683, %v2441
        %v2717 = vmul.f32 %v2687, %v2442
        %v2718 = vmul.f32 %v2679, %v2443
        %v2719 = vmul.f32 %v2683, %v2444
        %v2720 = vmul.f32 %v2687, %v2445
        %v2721 = vmul.f32 %v2679, %v2446
        %v2722 = vmul.f32 %v2683, %v2447
        %v2723 = vmul.f32 %v2687, %v2448
        %v2724 = vmul.f32 %v2679, %v2449
        %v2725 = vmul.f32 %v2683, %v2450
        %v2726 = vmul.f32 %v2687, %v2451
        %v2727 = vmul.f32 %v2679, %v2452
        %v2728 = vmul.f32 %v2683, %v2453
        %v2729 = vmul.f32 %v2687, %v2454
        %v2730 = vmul.f32 %v2679, %v2455
        %v2731 = vmul.f32 %v2683, %v2456
        %v2732 = vmul.f32 %v2687, %v2457
        %v2733 = vmul.f32 %v2679, %v2458
        %v2734 = vmul.f32 %v2683, %v2459
        %v2735 = vmul.f32 %v2687, %v2460
        %v2736 = vadd.f32 %v2613, %v2688
        %v2737 = vadd.f32 %v2614, %v2689
        %v2738 = vadd.f32 %v2615, %v2690
        %v2739 = vadd.f32 %v2616, %v2691
        %v2740 = vadd.f32 %v2617, %v2692
        %v2741 = vadd.f32 %v2618, %v2693
        %v2742 = vadd.f32 %v2619, %v2694
        %v2743 = vadd.f32 %v2620, %v2695
        %v2744 = vadd.f32 %v2621, %v2696
        %v2745 = vadd.f32 %v2622, %v2697
        %v2746 = vadd.f32 %v2623, %v2698
        %v2747 = vadd.f32 %v2624, %v2699
        %v2748 = vadd.f32 %v2625, %v2700
        %v2749 = vadd.f32 %v2626, %v2701
        %v2750 = vadd.f32 %v2627, %v2702
        %v2751 = vadd.f32 %v2628, %v2703
        %v2752 = vadd.f32 %v2629, %v2704
        %v2753 = vadd.f32 %v2630, %v2705
        %v2754 = vadd.f32 %v2631, %v2706
        %v2755 = vadd.f32 %v2632, %v2707
        %v2756 = vadd.f32 %v2633, %v2708
        %v2757 = vadd.f32 %v2634, %v2709
        %v2758 = vadd.f32 %v2635, %v2710
        %v2759 = vadd.f32 %v2636, %v2711
        %v2760 = vadd.f32 %v2637, %v2712
        %v2761 = vadd.f32 %v2638, %v2713
        %v2762 = vadd.f32 %v2639, %v2714
        %v2763 = vadd.f32 %v2640, %v2715
        %v2764 = vadd.f32 %v2641, %v2716
        %v2765 = vadd.f32 %v2642, %v2717
        %v2766 = vadd.f32 %v2643, %v2718
        %v2767 = vadd.f32 %v2644, %v2719
        %v2768 = vadd.f32 %v2645, %v2720
        %v2769 = vadd.f32 %v2646, %v2721
        %v2770 = vadd.f32 %v2647, %v2722
        %v2771 = vadd.f32 %v2648, %v2723
        %v2772 = vadd.f32 %v2649, %v2724
        %v2773 = vadd.f32 %v2650, %v2725
        %v2774 = vadd.f32 %v2651, %v2726
        %v2775 = vadd.f32 %v2652, %v2727
        %v2776 = vadd.f32 %v2653, %v2728
        %v2777 = vadd.f32 %v2654, %v2729
        %v2778 = vadd.f32 %v2655, %v2730
        %v2779 = vadd.f32 %v2656, %v2731
        %v2780 = vadd.f32 %v2657, %v2732
        %v2781 = vadd.f32 %v2658, %v2733
        %v2782 = vadd.f32 %v2659, %v2734
        %v2783 = vadd.f32 %v2660, %v2735
        %v2784 = vld [vmem:[%s919] sm:$0x7]
        %v2786 = vlaneseq
        %v2787 = vshrl.u32 %v2786, 7
        %v2788 = vsub.s32 0, %v2787
        %v2789 = vrot.slane %v2784, %v2788
        %v2790 = vlaneseq
        %v2791 = vshrl.u32 %v2790, 7
        %v2792 = vsub.s32 1, %v2791
        %v2793 = vrot.slane %v2784, %v2792
        %v2794 = vlaneseq
        %v2795 = vshrl.u32 %v2794, 7
        %v2796 = vsub.s32 2, %v2795
        %v2797 = vrot.slane %v2784, %v2796
        %v2801 = vadd.f32 %v2736, %v2789
        %v2802 = vadd.f32 %v2737, %v2793
        %v2803 = vadd.f32 %v2738, %v2797
        %v2804 = vadd.f32 %v2739, %v2789
        %v2805 = vadd.f32 %v2740, %v2793
        %v2806 = vadd.f32 %v2741, %v2797
        %v2807 = vadd.f32 %v2742, %v2789
        %v2808 = vadd.f32 %v2743, %v2793
        %v2809 = vadd.f32 %v2744, %v2797
        %v2810 = vadd.f32 %v2745, %v2789
        %v2811 = vadd.f32 %v2746, %v2793
        %v2812 = vadd.f32 %v2747, %v2797
        %v2813 = vadd.f32 %v2748, %v2789
        %v2814 = vadd.f32 %v2749, %v2793
        %v2815 = vadd.f32 %v2750, %v2797
        %v2816 = vadd.f32 %v2751, %v2789
        %v2817 = vadd.f32 %v2752, %v2793
        %v2818 = vadd.f32 %v2753, %v2797
        %v2819 = vadd.f32 %v2754, %v2789
        %v2820 = vadd.f32 %v2755, %v2793
        %v2821 = vadd.f32 %v2756, %v2797
        %v2822 = vadd.f32 %v2757, %v2789
        %v2823 = vadd.f32 %v2758, %v2793
        %v2824 = vadd.f32 %v2759, %v2797
        %v2825 = vadd.f32 %v2760, %v2789
        %v2826 = vadd.f32 %v2761, %v2793
        %v2827 = vadd.f32 %v2762, %v2797
        %v2828 = vadd.f32 %v2763, %v2789
        %v2829 = vadd.f32 %v2764, %v2793
        %v2830 = vadd.f32 %v2765, %v2797
        %v2831 = vadd.f32 %v2766, %v2789
        %v2832 = vadd.f32 %v2767, %v2793
        %v2833 = vadd.f32 %v2768, %v2797
        %v2834 = vadd.f32 %v2769, %v2789
        %v2835 = vadd.f32 %v2770, %v2793
        %v2836 = vadd.f32 %v2771, %v2797
        %v2837 = vadd.f32 %v2772, %v2789
        %v2838 = vadd.f32 %v2773, %v2793
        %v2839 = vadd.f32 %v2774, %v2797
        %v2840 = vadd.f32 %v2775, %v2789
        %v2841 = vadd.f32 %v2776, %v2793
        %v2842 = vadd.f32 %v2777, %v2797
        %v2843 = vadd.f32 %v2778, %v2789
        %v2844 = vadd.f32 %v2779, %v2793
        %v2845 = vadd.f32 %v2780, %v2797
        %v2846 = vadd.f32 %v2781, %v2789
        %v2847 = vadd.f32 %v2782, %v2793
        %v2848 = vadd.f32 %v2783, %v2797
        %v2849 = vmul.f32 %v2803, %v2802
        %v2850 = vmul.f32 %v2806, %v2805
        %v2851 = vmul.f32 %v2809, %v2808
        %v2852 = vmul.f32 %v2812, %v2811
        %v2853 = vmul.f32 %v2815, %v2814
        %v2854 = vmul.f32 %v2818, %v2817
        %v2855 = vmul.f32 %v2821, %v2820
        %v2856 = vmul.f32 %v2824, %v2823
        %v2857 = vmul.f32 %v2827, %v2826
        %v2858 = vmul.f32 %v2830, %v2829
        %v2859 = vmul.f32 %v2833, %v2832
        %v2860 = vmul.f32 %v2836, %v2835
        %v2861 = vmul.f32 %v2839, %v2838
        %v2862 = vmul.f32 %v2842, %v2841
        %v2863 = vmul.f32 %v2845, %v2844
        %v2864 = vmul.f32 %v2848, %v2847
        %v2865 = vld [vmem:[%s928] sm:$0xf]
        %v2866 = vld [vmem:[%s928 + $0x4] sm:$0xf]
        %v2867 = vld [vmem:[%s928 + $0x8] sm:$0xf]
        %v2868 = vld [vmem:[%s928 + $0xc] sm:$0xf]
        %v2869 = vld [vmem:[%s928 + $0x10] sm:$0xf]
        %v2870 = vld [vmem:[%s928 + $0x14] sm:$0xf]
        %v2871 = vld [vmem:[%s928 + $0x18] sm:$0xf]
        %v2872 = vld [vmem:[%s928 + $0x1c] sm:$0xf]
        %v2873 = vld [vmem:[%s928 + $0x20] sm:$0xf]
        %v2874 = vld [vmem:[%s928 + $0x24] sm:$0xf]
        %v2875 = vld [vmem:[%s928 + $0x28] sm:$0xf]
        %v2876 = vld [vmem:[%s928 + $0x2c] sm:$0xf]
        %v2877 = vld [vmem:[%s928 + $0x30] sm:$0xf]
        %v2878 = vld [vmem:[%s928 + $0x34] sm:$0xf]
        %v2879 = vld [vmem:[%s928 + $0x38] sm:$0xf]
        %v2880 = vld [vmem:[%s928 + $0x3c] sm:$0xf]
        %v2881 = vld [vmem:[%s928 + $0x40] sm:$0xf]
        %v2882 = vld [vmem:[%s928 + $0x44] sm:$0xf]
        %v2883 = vld [vmem:[%s928 + $0x48] sm:$0xf]
        %v2884 = vld [vmem:[%s928 + $0x4c] sm:$0xf]
        %v2885 = vld [vmem:[%s928 + $0x50] sm:$0xf]
        %v2886 = vld [vmem:[%s928 + $0x54] sm:$0xf]
        %v2887 = vld [vmem:[%s928 + $0x58] sm:$0xf]
        %v2888 = vld [vmem:[%s928 + $0x5c] sm:$0xf]
        %v2889 = vld [vmem:[%s928 + $0x60] sm:$0xf]
        %v2890 = vld [vmem:[%s928 + $0x64] sm:$0xf]
        %v2891 = vld [vmem:[%s928 + $0x68] sm:$0xf]
        %v2892 = vld [vmem:[%s928 + $0x6c] sm:$0xf]
        %v2893 = vld [vmem:[%s928 + $0x70] sm:$0xf]
        %v2894 = vld [vmem:[%s928 + $0x74] sm:$0xf]
        %v2895 = vld [vmem:[%s928 + $0x78] sm:$0xf]
        %v2896 = vld [vmem:[%s928 + $0x7c] sm:$0xf]
        %v2897 = vld [vmem:[%s928 + $0x80] sm:$0xf]
        %v2898 = vld [vmem:[%s928 + $0x84] sm:$0xf]
        %v2899 = vld [vmem:[%s928 + $0x88] sm:$0xf]
        %v2900 = vld [vmem:[%s928 + $0x8c] sm:$0xf]
        %v2901 = vld [vmem:[%s928 + $0x90] sm:$0xf]
        %v2902 = vld [vmem:[%s928 + $0x94] sm:$0xf]
        %v2903 = vld [vmem:[%s928 + $0x98] sm:$0xf]
        %v2904 = vld [vmem:[%s928 + $0x9c] sm:$0xf]
        %v2905 = vld [vmem:[%s928 + $0xa0] sm:$0xf]
        %v2906 = vld [vmem:[%s928 + $0xa4] sm:$0xf]
        %v2907 = vld [vmem:[%s928 + $0xa8] sm:$0xf]
        %v2908 = vld [vmem:[%s928 + $0xac] sm:$0xf]
        %v2909 = vld [vmem:[%s928 + $0xb0] sm:$0xf]
        %v2910 = vld [vmem:[%s928 + $0xb4] sm:$0xf]
        %v2911 = vld [vmem:[%s928 + $0xb8] sm:$0xf]
        %v2912 = vld [vmem:[%s928 + $0xbc] sm:$0xf]
        %v2913 = vld [vmem:[%s928 + $0xc0] sm:$0xf]
        %v2914 = vld [vmem:[%s928 + $0xc4] sm:$0xf]
        %v2915 = vld [vmem:[%s928 + $0xc8] sm:$0xf]
        %v2916 = vld [vmem:[%s928 + $0xcc] sm:$0xf]
        %v2917 = vld [vmem:[%s928 + $0xd0] sm:$0xf]
        %v2918 = vld [vmem:[%s928 + $0xd4] sm:$0xf]
        %v2919 = vld [vmem:[%s928 + $0xd8] sm:$0xf]
        %v2920 = vld [vmem:[%s928 + $0xdc] sm:$0xf]
        %v2921 = vld [vmem:[%s928 + $0xe0] sm:$0xf]
        %v2922 = vld [vmem:[%s928 + $0xe4] sm:$0xf]
        %v2923 = vld [vmem:[%s928 + $0xe8] sm:$0xf]
        %v2924 = vld [vmem:[%s928 + $0xec] sm:$0xf]
        %v2925 = vld [vmem:[%s928 + $0xf0] sm:$0xf]
        %v2926 = vld [vmem:[%s928 + $0xf4] sm:$0xf]
        %v2927 = vld [vmem:[%s928 + $0xf8] sm:$0xf]
        %v2928 = vld [vmem:[%s928 + $0xfc] sm:$0xf]
        %v2929 = vld [vmem:[%s928 + $0x100] sm:$0xf]
        %v2930 = vld [vmem:[%s928 + $0x104] sm:$0xf]
        %v2931 = vld [vmem:[%s928 + $0x108] sm:$0xf]
        %v2932 = vld [vmem:[%s928 + $0x10c] sm:$0xf]
        %v2933 = vld [vmem:[%s928 + $0x110] sm:$0xf]
        %v2934 = vld [vmem:[%s928 + $0x114] sm:$0xf]
        %v2935 = vld [vmem:[%s928 + $0x118] sm:$0xf]
        %v2936 = vld [vmem:[%s928 + $0x11c] sm:$0xf]
        %v2937 = vld [vmem:[%s928 + $0x120] sm:$0xf]
        %v2938 = vld [vmem:[%s928 + $0x124] sm:$0xf]
        %v2939 = vld [vmem:[%s928 + $0x128] sm:$0xf]
        %v2940 = vld [vmem:[%s928 + $0x12c] sm:$0xf]
        %v2941 = vld [vmem:[%s928 + $0x130] sm:$0xf]
        %v2942 = vld [vmem:[%s928 + $0x134] sm:$0xf]
        %v2943 = vld [vmem:[%s928 + $0x138] sm:$0xf]
        %v2944 = vld [vmem:[%s928 + $0x13c] sm:$0xf]
        %v2945 = vld [vmem:[%s928 + $0x140] sm:$0xf]
        %v2946 = vld [vmem:[%s928 + $0x144] sm:$0xf]
        %v2947 = vld [vmem:[%s928 + $0x148] sm:$0xf]
        %v2948 = vld [vmem:[%s928 + $0x14c] sm:$0xf]
        %v2949 = vld [vmem:[%s928 + $0x150] sm:$0xf]
        %v2950 = vld [vmem:[%s928 + $0x154] sm:$0xf]
        %v2951 = vld [vmem:[%s928 + $0x158] sm:$0xf]
        %v2952 = vld [vmem:[%s928 + $0x15c] sm:$0xf]
        %v2953 = vld [vmem:[%s928 + $0x160] sm:$0xf]
        %v2954 = vld [vmem:[%s928 + $0x164] sm:$0xf]
        %v2955 = vld [vmem:[%s928 + $0x168] sm:$0xf]
        %v2956 = vld [vmem:[%s928 + $0x16c] sm:$0xf]
        %v2957 = vld [vmem:[%s928 + $0x170] sm:$0xf]
        %v2958 = vld [vmem:[%s928 + $0x174] sm:$0xf]
        %v2959 = vld [vmem:[%s928 + $0x178] sm:$0xf]
        %v2960 = vld [vmem:[%s928 + $0x17c] sm:$0xf]
        %v2961 = vld [vmem:[%s928 + $0x180] sm:$0xf]
        %v2962 = vld [vmem:[%s928 + $0x184] sm:$0xf]
        %v2963 = vld [vmem:[%s928 + $0x188] sm:$0xf]
        %v2964 = vld [vmem:[%s928 + $0x18c] sm:$0xf]
        %v2965 = vld [vmem:[%s928 + $0x190] sm:$0xf]
        %v2966 = vld [vmem:[%s928 + $0x194] sm:$0xf]
        %v2967 = vld [vmem:[%s928 + $0x198] sm:$0xf]
        %v2968 = vld [vmem:[%s928 + $0x19c] sm:$0xf]
        %v2969 = vld [vmem:[%s928 + $0x1a0] sm:$0xf]
        %v2970 = vld [vmem:[%s928 + $0x1a4] sm:$0xf]
        %v2971 = vld [vmem:[%s928 + $0x1a8] sm:$0xf]
        %v2972 = vld [vmem:[%s928 + $0x1ac] sm:$0xf]
        %v2973 = vld [vmem:[%s928 + $0x1b0] sm:$0xf]
        %v2974 = vld [vmem:[%s928 + $0x1b4] sm:$0xf]
        %v2975 = vld [vmem:[%s928 + $0x1b8] sm:$0xf]
        %v2976 = vld [vmem:[%s928 + $0x1bc] sm:$0xf]
        %v2977 = vld [vmem:[%s928 + $0x1c0] sm:$0xf]
        %v2978 = vld [vmem:[%s928 + $0x1c4] sm:$0xf]
        %v2979 = vld [vmem:[%s928 + $0x1c8] sm:$0xf]
        %v2980 = vld [vmem:[%s928 + $0x1cc] sm:$0xf]
        %v2981 = vld [vmem:[%s928 + $0x1d0] sm:$0xf]
        %v2982 = vld [vmem:[%s928 + $0x1d4] sm:$0xf]
        %v2983 = vld [vmem:[%s928 + $0x1d8] sm:$0xf]
        %v2984 = vld [vmem:[%s928 + $0x1dc] sm:$0xf]
        %v2985 = vld [vmem:[%s928 + $0x1e0] sm:$0xf]
        %v2986 = vld [vmem:[%s928 + $0x1e4] sm:$0xf]
        %v2987 = vld [vmem:[%s928 + $0x1e8] sm:$0xf]
        %v2988 = vld [vmem:[%s928 + $0x1ec] sm:$0xf]
        %v2989 = vld [vmem:[%s928 + $0x1f0] sm:$0xf]
        %v2990 = vld [vmem:[%s928 + $0x1f4] sm:$0xf]
        %v2991 = vld [vmem:[%s928 + $0x1f8] sm:$0xf]
        %v2992 = vld [vmem:[%s928 + $0x1fc] sm:$0xf]
        %v2993 = vld [vmem:[%s928 + $0x200] sm:$0xf]
        %v2994 = vld [vmem:[%s928 + $0x204] sm:$0xf]
        %v2995 = vld [vmem:[%s928 + $0x208] sm:$0xf]
        %v2996 = vld [vmem:[%s928 + $0x20c] sm:$0xf]
        %v2997 = vld [vmem:[%s928 + $0x210] sm:$0xf]
        %v2998 = vld [vmem:[%s928 + $0x214] sm:$0xf]
        %v2999 = vld [vmem:[%s928 + $0x218] sm:$0xf]
        %v3000 = vld [vmem:[%s928 + $0x21c] sm:$0xf]
        %v3001 = vld [vmem:[%s928 + $0x220] sm:$0xf]
        %v3002 = vld [vmem:[%s928 + $0x224] sm:$0xf]
        %v3003 = vld [vmem:[%s928 + $0x228] sm:$0xf]
        %v3004 = vld [vmem:[%s928 + $0x22c] sm:$0xf]
        %v3005 = vld [vmem:[%s928 + $0x230] sm:$0xf]
        %v3006 = vld [vmem:[%s928 + $0x234] sm:$0xf]
        %v3007 = vld [vmem:[%s928 + $0x238] sm:$0xf]
        %v3008 = vld [vmem:[%s928 + $0x23c] sm:$0xf]
        %v3009 = vld [vmem:[%s928 + $0x240] sm:$0xf]
        %v3010 = vld [vmem:[%s928 + $0x244] sm:$0xf]
        %v3011 = vld [vmem:[%s928 + $0x248] sm:$0xf]
        %v3012 = vld [vmem:[%s928 + $0x24c] sm:$0xf]
        %v3013 = vld [vmem:[%s928 + $0x250] sm:$0xf]
        %v3014 = vld [vmem:[%s928 + $0x254] sm:$0xf]
        %v3015 = vld [vmem:[%s928 + $0x258] sm:$0xf]
        %v3016 = vld [vmem:[%s928 + $0x25c] sm:$0xf]
        %v3017 = vld [vmem:[%s928 + $0x260] sm:$0xf]
        %v3018 = vld [vmem:[%s928 + $0x264] sm:$0xf]
        %v3019 = vld [vmem:[%s928 + $0x268] sm:$0xf]
        %v3020 = vld [vmem:[%s928 + $0x26c] sm:$0xf]
        %v3021 = vld [vmem:[%s928 + $0x270] sm:$0xf]
        %v3022 = vld [vmem:[%s928 + $0x274] sm:$0xf]
        %v3023 = vld [vmem:[%s928 + $0x278] sm:$0xf]
        %v3024 = vld [vmem:[%s928 + $0x27c] sm:$0xf]
        %v3025 = vld [vmem:[%s928 + $0x280] sm:$0xf]
        %v3026 = vld [vmem:[%s928 + $0x284] sm:$0xf]
        %v3027 = vld [vmem:[%s928 + $0x288] sm:$0xf]
        %v3028 = vld [vmem:[%s928 + $0x28c] sm:$0xf]
        %v3029 = vld [vmem:[%s928 + $0x290] sm:$0xf]
        %v3030 = vld [vmem:[%s928 + $0x294] sm:$0xf]
        %v3031 = vld [vmem:[%s928 + $0x298] sm:$0xf]
        %v3032 = vld [vmem:[%s928 + $0x29c] sm:$0xf]
        %v3033 = vld [vmem:[%s928 + $0x2a0] sm:$0xf]
        %v3034 = vld [vmem:[%s928 + $0x2a4] sm:$0xf]
        %v3035 = vld [vmem:[%s928 + $0x2a8] sm:$0xf]
        %v3036 = vld [vmem:[%s928 + $0x2ac] sm:$0xf]
        %v3037 = vld [vmem:[%s928 + $0x2b0] sm:$0xf]
        %v3038 = vld [vmem:[%s928 + $0x2b4] sm:$0xf]
        %v3039 = vld [vmem:[%s928 + $0x2b8] sm:$0xf]
        %v3040 = vld [vmem:[%s928 + $0x2bc] sm:$0xf]
        %v3041 = vld [vmem:[%s928 + $0x2c0] sm:$0xf]
        %v3042 = vld [vmem:[%s928 + $0x2c4] sm:$0xf]
        %v3043 = vld [vmem:[%s928 + $0x2c8] sm:$0xf]
        %v3044 = vld [vmem:[%s928 + $0x2cc] sm:$0xf]
        %v3045 = vld [vmem:[%s928 + $0x2d0] sm:$0xf]
        %v3046 = vld [vmem:[%s928 + $0x2d4] sm:$0xf]
        %v3047 = vld [vmem:[%s928 + $0x2d8] sm:$0xf]
        %v3048 = vld [vmem:[%s928 + $0x2dc] sm:$0xf]
        %v3049 = vld [vmem:[%s928 + $0x2e0] sm:$0xf]
        %v3050 = vld [vmem:[%s928 + $0x2e4] sm:$0xf]
        %v3051 = vld [vmem:[%s928 + $0x2e8] sm:$0xf]
        %v3052 = vld [vmem:[%s928 + $0x2ec] sm:$0xf]
        %v3053 = vld [vmem:[%s928 + $0x2f0] sm:$0xf]
        %v3054 = vld [vmem:[%s928 + $0x2f4] sm:$0xf]
        %v3055 = vld [vmem:[%s928 + $0x2f8] sm:$0xf]
        %v3056 = vld [vmem:[%s928 + $0x2fc] sm:$0xf]
        %v3057 = vld [vmem:[%s928 + $0x300] sm:$0xf]
        %v3058 = vld [vmem:[%s928 + $0x304] sm:$0xf]
        %v3059 = vld [vmem:[%s928 + $0x308] sm:$0xf]
        %v3060 = vld [vmem:[%s928 + $0x30c] sm:$0xf]
        %v3061 = vld [vmem:[%s928 + $0x310] sm:$0xf]
        %v3062 = vld [vmem:[%s928 + $0x314] sm:$0xf]
        %v3063 = vld [vmem:[%s928 + $0x318] sm:$0xf]
        %v3064 = vld [vmem:[%s928 + $0x31c] sm:$0xf]
        %v3065 = vld [vmem:[%s928 + $0x320] sm:$0xf]
        %v3066 = vld [vmem:[%s928 + $0x324] sm:$0xf]
        %v3067 = vld [vmem:[%s928 + $0x328] sm:$0xf]
        %v3068 = vld [vmem:[%s928 + $0x32c] sm:$0xf]
        %v3069 = vld [vmem:[%s928 + $0x330] sm:$0xf]
        %v3070 = vld [vmem:[%s928 + $0x334] sm:$0xf]
        %v3071 = vld [vmem:[%s928 + $0x338] sm:$0xf]
        %v3072 = vld [vmem:[%s928 + $0x33c] sm:$0xf]
        %v3073 = vld [vmem:[%s928 + $0x340] sm:$0xf]
        %v3074 = vld [vmem:[%s928 + $0x344] sm:$0xf]
        %v3075 = vld [vmem:[%s928 + $0x348] sm:$0xf]
        %v3076 = vld [vmem:[%s928 + $0x34c] sm:$0xf]
        %v3077 = vld [vmem:[%s928 + $0x350] sm:$0xf]
        %v3078 = vld [vmem:[%s928 + $0x354] sm:$0xf]
        %v3079 = vld [vmem:[%s928 + $0x358] sm:$0xf]
        %v3080 = vld [vmem:[%s928 + $0x35c] sm:$0xf]
        %v3081 = vld [vmem:[%s928 + $0x360] sm:$0xf]
        %v3082 = vld [vmem:[%s928 + $0x364] sm:$0xf]
        %v3083 = vld [vmem:[%s928 + $0x368] sm:$0xf]
        %v3084 = vld [vmem:[%s928 + $0x36c] sm:$0xf]
        %v3085 = vld [vmem:[%s928 + $0x370] sm:$0xf]
        %v3086 = vld [vmem:[%s928 + $0x374] sm:$0xf]
        %v3087 = vld [vmem:[%s928 + $0x378] sm:$0xf]
        %v3088 = vld [vmem:[%s928 + $0x37c] sm:$0xf]
        %v3089 = vld [vmem:[%s928 + $0x380] sm:$0xf]
        %v3090 = vld [vmem:[%s928 + $0x384] sm:$0xf]
        %v3091 = vld [vmem:[%s928 + $0x388] sm:$0xf]
        %v3092 = vld [vmem:[%s928 + $0x38c] sm:$0xf]
        %v3093 = vld [vmem:[%s928 + $0x390] sm:$0xf]
        %v3094 = vld [vmem:[%s928 + $0x394] sm:$0xf]
        %v3095 = vld [vmem:[%s928 + $0x398] sm:$0xf]
        %v3096 = vld [vmem:[%s928 + $0x39c] sm:$0xf]
        %v3097 = vld [vmem:[%s928 + $0x3a0] sm:$0xf]
        %v3098 = vld [vmem:[%s928 + $0x3a4] sm:$0xf]
        %v3099 = vld [vmem:[%s928 + $0x3a8] sm:$0xf]
        %v3100 = vld [vmem:[%s928 + $0x3ac] sm:$0xf]
        %v3101 = vld [vmem:[%s928 + $0x3b0] sm:$0xf]
        %v3102 = vld [vmem:[%s928 + $0x3b4] sm:$0xf]
        %v3103 = vld [vmem:[%s928 + $0x3b8] sm:$0xf]
        %v3104 = vld [vmem:[%s928 + $0x3bc] sm:$0xf]
        %v3105 = vld [vmem:[%s928 + $0x3c0] sm:$0xf]
        %v3106 = vld [vmem:[%s928 + $0x3c4] sm:$0xf]
        %v3107 = vld [vmem:[%s928 + $0x3c8] sm:$0xf]
        %v3108 = vld [vmem:[%s928 + $0x3cc] sm:$0xf]
        %v3109 = vld [vmem:[%s928 + $0x3d0] sm:$0xf]
        %v3110 = vld [vmem:[%s928 + $0x3d4] sm:$0xf]
        %v3111 = vld [vmem:[%s928 + $0x3d8] sm:$0xf]
        %v3112 = vld [vmem:[%s928 + $0x3dc] sm:$0xf]
        %v3113 = vld [vmem:[%s928 + $0x3e0] sm:$0xf]
        %v3114 = vld [vmem:[%s928 + $0x3e4] sm:$0xf]
        %v3115 = vld [vmem:[%s928 + $0x3e8] sm:$0xf]
        %v3116 = vld [vmem:[%s928 + $0x3ec] sm:$0xf]
        %v3117 = vld [vmem:[%s928 + $0x3f0] sm:$0xf]
        %v3118 = vld [vmem:[%s928 + $0x3f4] sm:$0xf]
        %v3119 = vld [vmem:[%s928 + $0x3f8] sm:$0xf]
        %v3120 = vld [vmem:[%s928 + $0x3fc] sm:$0xf]
        %3129 = vrot.lane.b32.xlu0 %v2857, 32
        %v3130 = vpop.permute.xlu0 %3129
        %3131 = vrot.lane.b32.xlu0 %v2858, 32
        %v3132 = vpop.permute.xlu0 %3131
        %3133 = vrot.lane.b32.xlu0 %v2859, 32
        %v3134 = vpop.permute.xlu0 %3133
        %3135 = vrot.lane.b32.xlu0 %v2860, 32
        %v3136 = vpop.permute.xlu0 %3135
        %3137 = vrot.lane.b32.xlu0 %v2861, 32
        %v3138 = vpop.permute.xlu0 %3137
        %3139 = vrot.lane.b32.xlu0 %v2862, 32
        %v3140 = vpop.permute.xlu0 %3139
        %3141 = vrot.lane.b32.xlu0 %v2863, 32
        %v3142 = vpop.permute.xlu0 %3141
        %3143 = vrot.lane.b32.xlu0 %v2864, 32
        %v3144 = vpop.permute.xlu0 %3143
        %vm3153 = vcmask 261120
        %v3154 = vsel %vm3153, %v2849, %v3130
        %v3155 = vsel %vm3153, %v2850, %v3132
        %v3156 = vsel %vm3153, %v2851, %v3134
        %v3157 = vsel %vm3153, %v2852, %v3136
        %v3158 = vsel %vm3153, %v2853, %v3138
        %v3159 = vsel %vm3153, %v2854, %v3140
        %v3160 = vsel %vm3153, %v2855, %v3142
        %v3161 = vsel %vm3153, %v2856, %v3144
        %v3162 = vpack.c.bf16 %v3155, %v3154
        %v3163 = vpack.c.bf16 %v3157, %v3156
        %v3164 = vpack.c.bf16 %v3159, %v3158
        %v3165 = vpack.c.bf16 %v3161, %v3160
        %v3422 = vunpack.c.l.b16 %v2865
        %v3423 = vunpack.c.l.b16 %v2866
        %v3424 = vunpack.c.l.b16 %v2867
        %v3425 = vunpack.c.l.b16 %v2868
        %v3426 = vunpack.c.l.b16 %v2869
        %v3427 = vunpack.c.l.b16 %v2870
        %v3428 = vunpack.c.l.b16 %v2871
        %v3429 = vunpack.c.l.b16 %v2872
        %v3430 = vunpack.c.l.b16 %v2873
        %v3431 = vunpack.c.l.b16 %v2874
        %v3432 = vunpack.c.l.b16 %v2875
        %v3433 = vunpack.c.l.b16 %v2876
        %v3434 = vunpack.c.l.b16 %v2877
        %v3435 = vunpack.c.l.b16 %v2878
        %v3436 = vunpack.c.l.b16 %v2879
        %v3437 = vunpack.c.l.b16 %v2880
        %v3438 = vunpack.c.l.b16 %v2881
        %v3439 = vunpack.c.l.b16 %v2882
        %v3440 = vunpack.c.l.b16 %v2883
        %v3441 = vunpack.c.l.b16 %v2884
        %v3442 = vunpack.c.l.b16 %v2885
        %v3443 = vunpack.c.l.b16 %v2886
        %v3444 = vunpack.c.l.b16 %v2887
        %v3445 = vunpack.c.l.b16 %v2888
        %v3446 = vunpack.c.l.b16 %v2889
        %v3447 = vunpack.c.l.b16 %v2890
        %v3448 = vunpack.c.l.b16 %v2891
        %v3449 = vunpack.c.l.b16 %v2892
        %v3450 = vunpack.c.l.b16 %v2893
        %v3451 = vunpack.c.l.b16 %v2894
        %v3452 = vunpack.c.l.b16 %v2895
        %v3453 = vunpack.c.l.b16 %v2896
        %v3454 = vunpack.c.l.b16 %v2897
        %v3455 = vunpack.c.l.b16 %v2898
        %v3456 = vunpack.c.l.b16 %v2899
        %v3457 = vunpack.c.l.b16 %v2900
        %v3458 = vunpack.c.l.b16 %v2901
        %v3459 = vunpack.c.l.b16 %v2902
        %v3460 = vunpack.c.l.b16 %v2903
        %v3461 = vunpack.c.l.b16 %v2904
        %v3462 = vunpack.c.l.b16 %v2905
        %v3463 = vunpack.c.l.b16 %v2906
        %v3464 = vunpack.c.l.b16 %v2907
        %v3465 = vunpack.c.l.b16 %v2908
        %v3466 = vunpack.c.l.b16 %v2909
        %v3467 = vunpack.c.l.b16 %v2910
        %v3468 = vunpack.c.l.b16 %v2911
        %v3469 = vunpack.c.l.b16 %v2912
        %v3470 = vunpack.c.l.b16 %v2913
        %v3471 = vunpack.c.l.b16 %v2914
        %v3472 = vunpack.c.l.b16 %v2915
        %v3473 = vunpack.c.l.b16 %v2916
        %v3474 = vunpack.c.l.b16 %v2917
        %v3475 = vunpack.c.l.b16 %v2918
        %v3476 = vunpack.c.l.b16 %v2919
        %v3477 = vunpack.c.l.b16 %v2920
        %v3478 = vunpack.c.l.b16 %v2921
        %v3479 = vunpack.c.l.b16 %v2922
        %v3480 = vunpack.c.l.b16 %v2923
        %v3481 = vunpack.c.l.b16 %v2924
        %v3482 = vunpack.c.l.b16 %v2925
        %v3483 = vunpack.c.l.b16 %v2926
        %v3484 = vunpack.c.l.b16 %v2927
        %v3485 = vunpack.c.l.b16 %v2928
        %v3486 = vunpack.c.l.b16 %v2929
        %v3487 = vunpack.c.l.b16 %v2930
        %v3488 = vunpack.c.l.b16 %v2931
        %v3489 = vunpack.c.l.b16 %v2932
        %v3490 = vunpack.c.l.b16 %v2933
        %v3491 = vunpack.c.l.b16 %v2934
        %v3492 = vunpack.c.l.b16 %v2935
        %v3493 = vunpack.c.l.b16 %v2936
        %v3494 = vunpack.c.l.b16 %v2937
        %v3495 = vunpack.c.l.b16 %v2938
        %v3496 = vunpack.c.l.b16 %v2939
        %v3497 = vunpack.c.l.b16 %v2940
        %v3498 = vunpack.c.l.b16 %v2941
        %v3499 = vunpack.c.l.b16 %v2942
        %v3500 = vunpack.c.l.b16 %v2943
        %v3501 = vunpack.c.l.b16 %v2944
        %v3502 = vunpack.c.l.b16 %v2945
        %v3503 = vunpack.c.l.b16 %v2946
        %v3504 = vunpack.c.l.b16 %v2947
        %v3505 = vunpack.c.l.b16 %v2948
        %v3506 = vunpack.c.l.b16 %v2949
        %v3507 = vunpack.c.l.b16 %v2950
        %v3508 = vunpack.c.l.b16 %v2951
        %v3509 = vunpack.c.l.b16 %v2952
        %v3510 = vunpack.c.l.b16 %v2953
        %v3511 = vunpack.c.l.b16 %v2954
        %v3512 = vunpack.c.l.b16 %v2955
        %v3513 = vunpack.c.l.b16 %v2956
        %v3514 = vunpack.c.l.b16 %v2957
        %v3515 = vunpack.c.l.b16 %v2958
        %v3516 = vunpack.c.l.b16 %v2959
        %v3517 = vunpack.c.l.b16 %v2960
        %v3518 = vunpack.c.l.b16 %v2961
        %v3519 = vunpack.c.l.b16 %v2962
        %v3520 = vunpack.c.l.b16 %v2963
        %v3521 = vunpack.c.l.b16 %v2964
        %v3522 = vunpack.c.l.b16 %v2965
        %v3523 = vunpack.c.l.b16 %v2966
        %v3524 = vunpack.c.l.b16 %v2967
        %v3525 = vunpack.c.l.b16 %v2968
        %v3526 = vunpack.c.l.b16 %v2969
        %v3527 = vunpack.c.l.b16 %v2970
        %v3528 = vunpack.c.l.b16 %v2971
        %v3529 = vunpack.c.l.b16 %v2972
        %v3530 = vunpack.c.l.b16 %v2973
        %v3531 = vunpack.c.l.b16 %v2974
        %v3532 = vunpack.c.l.b16 %v2975
        %v3533 = vunpack.c.l.b16 %v2976
        %v3534 = vunpack.c.l.b16 %v2977
        %v3535 = vunpack.c.l.b16 %v2978
        %v3536 = vunpack.c.l.b16 %v2979
        %v3537 = vunpack.c.l.b16 %v2980
        %v3538 = vunpack.c.l.b16 %v2981
        %v3539 = vunpack.c.l.b16 %v2982
        %v3540 = vunpack.c.l.b16 %v2983
        %v3541 = vunpack.c.l.b16 %v2984
        %v3542 = vunpack.c.l.b16 %v2985
        %v3543 = vunpack.c.l.b16 %v2986
        %v3544 = vunpack.c.l.b16 %v2987
        %v3545 = vunpack.c.l.b16 %v2988
        %v3546 = vunpack.c.l.b16 %v2989
        %v3547 = vunpack.c.l.b16 %v2990
        %v3548 = vunpack.c.l.b16 %v2991
        %v3549 = vunpack.c.l.b16 %v2992
        %v3550 = vunpack.c.l.b16 %v2993
        %v3551 = vunpack.c.l.b16 %v2994
        %v3552 = vunpack.c.l.b16 %v2995
        %v3553 = vunpack.c.l.b16 %v2996
        %v3554 = vunpack.c.l.b16 %v2997
        %v3555 = vunpack.c.l.b16 %v2998
        %v3556 = vunpack.c.l.b16 %v2999
        %v3557 = vunpack.c.l.b16 %v3000
        %v3558 = vunpack.c.l.b16 %v3001
        %v3559 = vunpack.c.l.b16 %v3002
        %v3560 = vunpack.c.l.b16 %v3003
        %v3561 = vunpack.c.l.b16 %v3004
        %v3562 = vunpack.c.l.b16 %v3005
        %v3563 = vunpack.c.l.b16 %v3006
        %v3564 = vunpack.c.l.b16 %v3007
        %v3565 = vunpack.c.l.b16 %v3008
        %v3566 = vunpack.c.l.b16 %v3009
        %v3567 = vunpack.c.l.b16 %v3010
        %v3568 = vunpack.c.l.b16 %v3011
        %v3569 = vunpack.c.l.b16 %v3012
        %v3570 = vunpack.c.l.b16 %v3013
        %v3571 = vunpack.c.l.b16 %v3014
        %v3572 = vunpack.c.l.b16 %v3015
        %v3573 = vunpack.c.l.b16 %v3016
        %v3574 = vunpack.c.l.b16 %v3017
        %v3575 = vunpack.c.l.b16 %v3018
        %v3576 = vunpack.c.l.b16 %v3019
        %v3577 = vunpack.c.l.b16 %v3020
        %v3578 = vunpack.c.l.b16 %v3021
        %v3579 = vunpack.c.l.b16 %v3022
        %v3580 = vunpack.c.l.b16 %v3023
        %v3581 = vunpack.c.l.b16 %v3024
        %v3582 = vunpack.c.l.b16 %v3025
        %v3583 = vunpack.c.l.b16 %v3026
        %v3584 = vunpack.c.l.b16 %v3027
        %v3585 = vunpack.c.l.b16 %v3028
        %v3586 = vunpack.c.l.b16 %v3029
        %v3587 = vunpack.c.l.b16 %v3030
        %v3588 = vunpack.c.l.b16 %v3031
        %v3589 = vunpack.c.l.b16 %v3032
        %v3590 = vunpack.c.l.b16 %v3033
        %v3591 = vunpack.c.l.b16 %v3034
        %v3592 = vunpack.c.l.b16 %v3035
        %v3593 = vunpack.c.l.b16 %v3036
        %v3594 = vunpack.c.l.b16 %v3037
        %v3595 = vunpack.c.l.b16 %v3038
        %v3596 = vunpack.c.l.b16 %v3039
        %v3597 = vunpack.c.l.b16 %v3040
        %v3598 = vunpack.c.l.b16 %v3041
        %v3599 = vunpack.c.l.b16 %v3042
        %v3600 = vunpack.c.l.b16 %v3043
        %v3601 = vunpack.c.l.b16 %v3044
        %v3602 = vunpack.c.l.b16 %v3045
        %v3603 = vunpack.c.l.b16 %v3046
        %v3604 = vunpack.c.l.b16 %v3047
        %v3605 = vunpack.c.l.b16 %v3048
        %v3606 = vunpack.c.l.b16 %v3049
        %v3607 = vunpack.c.l.b16 %v3050
        %v3608 = vunpack.c.l.b16 %v3051
        %v3609 = vunpack.c.l.b16 %v3052
        %v3610 = vunpack.c.l.b16 %v3053
        %v3611 = vunpack.c.l.b16 %v3054
        %v3612 = vunpack.c.l.b16 %v3055
        %v3613 = vunpack.c.l.b16 %v3056
        %v3614 = vunpack.c.l.b16 %v3057
        %v3615 = vunpack.c.l.b16 %v3058
        %v3616 = vunpack.c.l.b16 %v3059
        %v3617 = vunpack.c.l.b16 %v3060
        %v3618 = vunpack.c.l.b16 %v3061
        %v3619 = vunpack.c.l.b16 %v3062
        %v3620 = vunpack.c.l.b16 %v3063
        %v3621 = vunpack.c.l.b16 %v3064
        %v3622 = vunpack.c.l.b16 %v3065
        %v3623 = vunpack.c.l.b16 %v3066
        %v3624 = vunpack.c.l.b16 %v3067
        %v3625 = vunpack.c.l.b16 %v3068
        %v3626 = vunpack.c.l.b16 %v3069
        %v3627 = vunpack.c.l.b16 %v3070
        %v3628 = vunpack.c.l.b16 %v3071
        %v3629 = vunpack.c.l.b16 %v3072
        %v3630 = vunpack.c.l.b16 %v3073
        %v3631 = vunpack.c.l.b16 %v3074
        %v3632 = vunpack.c.l.b16 %v3075
        %v3633 = vunpack.c.l.b16 %v3076
        %v3634 = vunpack.c.l.b16 %v3077
        %v3635 = vunpack.c.l.b16 %v3078
        %v3636 = vunpack.c.l.b16 %v3079
        %v3637 = vunpack.c.l.b16 %v3080
        %v3638 = vunpack.c.l.b16 %v3081
        %v3639 = vunpack.c.l.b16 %v3082
        %v3640 = vunpack.c.l.b16 %v3083
        %v3641 = vunpack.c.l.b16 %v3084
        %v3642 = vunpack.c.l.b16 %v3085
        %v3643 = vunpack.c.l.b16 %v3086
        %v3644 = vunpack.c.l.b16 %v3087
        %v3645 = vunpack.c.l.b16 %v3088
        %v3646 = vunpack.c.l.b16 %v3089
        %v3647 = vunpack.c.l.b16 %v3090
        %v3648 = vunpack.c.l.b16 %v3091
        %v3649 = vunpack.c.l.b16 %v3092
        %v3650 = vunpack.c.l.b16 %v3093
        %v3651 = vunpack.c.l.b16 %v3094
        %v3652 = vunpack.c.l.b16 %v3095
        %v3653 = vunpack.c.l.b16 %v3096
        %v3654 = vunpack.c.l.b16 %v3097
        %v3655 = vunpack.c.l.b16 %v3098
        %v3656 = vunpack.c.l.b16 %v3099
        %v3657 = vunpack.c.l.b16 %v3100
        %v3658 = vunpack.c.l.b16 %v3101
        %v3659 = vunpack.c.l.b16 %v3102
        %v3660 = vunpack.c.l.b16 %v3103
        %v3661 = vunpack.c.l.b16 %v3104
        %v3662 = vunpack.c.l.b16 %v3105
        %v3663 = vunpack.c.l.b16 %v3106
        %v3664 = vunpack.c.l.b16 %v3107
        %v3665 = vunpack.c.l.b16 %v3108
        %v3666 = vunpack.c.l.b16 %v3109
        %v3667 = vunpack.c.l.b16 %v3110
        %v3668 = vunpack.c.l.b16 %v3111
        %v3669 = vunpack.c.l.b16 %v3112
        %v3670 = vunpack.c.l.b16 %v3113
        %v3671 = vunpack.c.l.b16 %v3114
        %v3672 = vunpack.c.l.b16 %v3115
        %v3673 = vunpack.c.l.b16 %v3116
        %v3674 = vunpack.c.l.b16 %v3117
        %v3675 = vunpack.c.l.b16 %v3118
        %v3676 = vunpack.c.l.b16 %v3119
        %v3677 = vunpack.c.l.b16 %v3120
        %v3678 = vpack.c.b16 %v3423, %v3422
        %v3679 = vpack.c.b16 %v3425, %v3424
        %v3680 = vpack.c.b16 %v3427, %v3426
        %v3681 = vpack.c.b16 %v3429, %v3428
        %v3682 = vpack.c.b16 %v3431, %v3430
        %v3683 = vpack.c.b16 %v3433, %v3432
        %v3684 = vpack.c.b16 %v3435, %v3434
        %v3685 = vpack.c.b16 %v3437, %v3436
        %v3686 = vpack.c.b16 %v3439, %v3438
        %v3687 = vpack.c.b16 %v3441, %v3440
        %v3688 = vpack.c.b16 %v3443, %v3442
        %v3689 = vpack.c.b16 %v3445, %v3444
        %v3690 = vpack.c.b16 %v3447, %v3446
        %v3691 = vpack.c.b16 %v3449, %v3448
        %v3692 = vpack.c.b16 %v3451, %v3450
        %v3693 = vpack.c.b16 %v3453, %v3452
        %v3694 = vpack.c.b16 %v3455, %v3454
        %v3695 = vpack.c.b16 %v3457, %v3456
        %v3696 = vpack.c.b16 %v3459, %v3458
        %v3697 = vpack.c.b16 %v3461, %v3460
        %v3698 = vpack.c.b16 %v3463, %v3462
        %v3699 = vpack.c.b16 %v3465, %v3464
        %v3700 = vpack.c.b16 %v3467, %v3466
        %v3701 = vpack.c.b16 %v3469, %v3468
        %v3702 = vpack.c.b16 %v3471, %v3470
        %v3703 = vpack.c.b16 %v3473, %v3472
        %v3704 = vpack.c.b16 %v3475, %v3474
        %v3705 = vpack.c.b16 %v3477, %v3476
        %v3706 = vpack.c.b16 %v3479, %v3478
        %v3707 = vpack.c.b16 %v3481, %v3480
        %v3708 = vpack.c.b16 %v3483, %v3482
        %v3709 = vpack.c.b16 %v3485, %v3484
        %v3710 = vpack.c.b16 %v3487, %v3486
        %v3711 = vpack.c.b16 %v3489, %v3488
        %v3712 = vpack.c.b16 %v3491, %v3490
        %v3713 = vpack.c.b16 %v3493, %v3492
        %v3714 = vpack.c.b16 %v3495, %v3494
        %v3715 = vpack.c.b16 %v3497, %v3496
        %v3716 = vpack.c.b16 %v3499, %v3498
        %v3717 = vpack.c.b16 %v3501, %v3500
        %v3718 = vpack.c.b16 %v3503, %v3502
        %v3719 = vpack.c.b16 %v3505, %v3504
        %v3720 = vpack.c.b16 %v3507, %v3506
        %v3721 = vpack.c.b16 %v3509, %v3508
        %v3722 = vpack.c.b16 %v3511, %v3510
        %v3723 = vpack.c.b16 %v3513, %v3512
        %v3724 = vpack.c.b16 %v3515, %v3514
        %v3725 = vpack.c.b16 %v3517, %v3516
        %v3726 = vpack.c.b16 %v3519, %v3518
        %v3727 = vpack.c.b16 %v3521, %v3520
        %v3728 = vpack.c.b16 %v3523, %v3522
        %v3729 = vpack.c.b16 %v3525, %v3524
        %v3730 = vpack.c.b16 %v3527, %v3526
        %v3731 = vpack.c.b16 %v3529, %v3528
        %v3732 = vpack.c.b16 %v3531, %v3530
        %v3733 = vpack.c.b16 %v3533, %v3532
        %v3734 = vpack.c.b16 %v3535, %v3534
        %v3735 = vpack.c.b16 %v3537, %v3536
        %v3736 = vpack.c.b16 %v3539, %v3538
        %v3737 = vpack.c.b16 %v3541, %v3540
        %v3738 = vpack.c.b16 %v3543, %v3542
        %v3739 = vpack.c.b16 %v3545, %v3544
        %v3740 = vpack.c.b16 %v3547, %v3546
        %v3741 = vpack.c.b16 %v3549, %v3548
        %v3742 = vpack.c.b16 %v3551, %v3550
        %v3743 = vpack.c.b16 %v3553, %v3552
        %v3744 = vpack.c.b16 %v3555, %v3554
        %v3745 = vpack.c.b16 %v3557, %v3556
        %v3746 = vpack.c.b16 %v3559, %v3558
        %v3747 = vpack.c.b16 %v3561, %v3560
        %v3748 = vpack.c.b16 %v3563, %v3562
        %v3749 = vpack.c.b16 %v3565, %v3564
        %v3750 = vpack.c.b16 %v3567, %v3566
        %v3751 = vpack.c.b16 %v3569, %v3568
        %v3752 = vpack.c.b16 %v3571, %v3570
        %v3753 = vpack.c.b16 %v3573, %v3572
        %v3754 = vpack.c.b16 %v3575, %v3574
        %v3755 = vpack.c.b16 %v3577, %v3576
        %v3756 = vpack.c.b16 %v3579, %v3578
        %v3757 = vpack.c.b16 %v3581, %v3580
        %v3758 = vpack.c.b16 %v3583, %v3582
        %v3759 = vpack.c.b16 %v3585, %v3584
        %v3760 = vpack.c.b16 %v3587, %v3586
        %v3761 = vpack.c.b16 %v3589, %v3588
        %v3762 = vpack.c.b16 %v3591, %v3590
        %v3763 = vpack.c.b16 %v3593, %v3592
        %v3764 = vpack.c.b16 %v3595, %v3594
        %v3765 = vpack.c.b16 %v3597, %v3596
        %v3766 = vpack.c.b16 %v3599, %v3598
        %v3767 = vpack.c.b16 %v3601, %v3600
        %v3768 = vpack.c.b16 %v3603, %v3602
        %v3769 = vpack.c.b16 %v3605, %v3604
        %v3770 = vpack.c.b16 %v3607, %v3606
        %v3771 = vpack.c.b16 %v3609, %v3608
        %v3772 = vpack.c.b16 %v3611, %v3610
        %v3773 = vpack.c.b16 %v3613, %v3612
        %v3774 = vpack.c.b16 %v3615, %v3614
        %v3775 = vpack.c.b16 %v3617, %v3616
        %v3776 = vpack.c.b16 %v3619, %v3618
        %v3777 = vpack.c.b16 %v3621, %v3620
        %v3778 = vpack.c.b16 %v3623, %v3622
        %v3779 = vpack.c.b16 %v3625, %v3624
        %v3780 = vpack.c.b16 %v3627, %v3626
        %v3781 = vpack.c.b16 %v3629, %v3628
        %v3782 = vpack.c.b16 %v3631, %v3630
        %v3783 = vpack.c.b16 %v3633, %v3632
        %v3784 = vpack.c.b16 %v3635, %v3634
        %v3785 = vpack.c.b16 %v3637, %v3636
        %v3786 = vpack.c.b16 %v3639, %v3638
        %v3787 = vpack.c.b16 %v3641, %v3640
        %v3788 = vpack.c.b16 %v3643, %v3642
        %v3789 = vpack.c.b16 %v3645, %v3644
        %v3790 = vpack.c.b16 %v3647, %v3646
        %v3791 = vpack.c.b16 %v3649, %v3648
        %v3792 = vpack.c.b16 %v3651, %v3650
        %v3793 = vpack.c.b16 %v3653, %v3652
        %v3794 = vpack.c.b16 %v3655, %v3654
        %v3795 = vpack.c.b16 %v3657, %v3656
        %v3796 = vpack.c.b16 %v3659, %v3658
        %v3797 = vpack.c.b16 %v3661, %v3660
        %v3798 = vpack.c.b16 %v3663, %v3662
        %v3799 = vpack.c.b16 %v3665, %v3664
        %v3800 = vpack.c.b16 %v3667, %v3666
        %v3801 = vpack.c.b16 %v3669, %v3668
        %v3802 = vpack.c.b16 %v3671, %v3670
        %v3803 = vpack.c.b16 %v3673, %v3672
        %v3804 = vpack.c.b16 %v3675, %v3674
        %v3805 = vpack.c.b16 %v3677, %v3676
        %vm3806 = vcmask 523264
        %v3808 = vsel %vm3806, %v3678, 0
        %v3811 = vsel %vm3806, %v3679, 0
        %v3814 = vsel %vm3806, %v3680, 0
        %v3817 = vsel %vm3806, %v3681, 0
        %v3820 = vsel %vm3806, %v3682, 0
        %v3823 = vsel %vm3806, %v3683, 0
        %v3826 = vsel %vm3806, %v3684, 0
        %v3829 = vsel %vm3806, %v3685, 0
        %v3832 = vsel %vm3806, %v3686, 0
        %v3835 = vsel %vm3806, %v3687, 0
        %v3838 = vsel %vm3806, %v3688, 0
        %v3841 = vsel %vm3806, %v3689, 0
        %v3844 = vsel %vm3806, %v3690, 0
        %v3847 = vsel %vm3806, %v3691, 0
        %v3850 = vsel %vm3806, %v3692, 0
        %v3853 = vsel %vm3806, %v3693, 0
        %v3856 = vsel %vm3806, %v3694, 0
        %v3859 = vsel %vm3806, %v3695, 0
        %v3862 = vsel %vm3806, %v3696, 0
        %v3865 = vsel %vm3806, %v3697, 0
        %v3868 = vsel %vm3806, %v3698, 0
        %v3871 = vsel %vm3806, %v3699, 0
        %v3874 = vsel %vm3806, %v3700, 0
        %v3877 = vsel %vm3806, %v3701, 0
        %v3880 = vsel %vm3806, %v3702, 0
        %v3883 = vsel %vm3806, %v3703, 0
        %v3886 = vsel %vm3806, %v3704, 0
        %v3889 = vsel %vm3806, %v3705, 0
        %v3892 = vsel %vm3806, %v3706, 0
        %v3895 = vsel %vm3806, %v3707, 0
        %v3898 = vsel %vm3806, %v3708, 0
        %v3901 = vsel %vm3806, %v3709, 0
        %v3904 = vsel %vm3806, %v3710, 0
        %v3907 = vsel %vm3806, %v3711, 0
        %v3910 = vsel %vm3806, %v3712, 0
        %v3913 = vsel %vm3806, %v3713, 0
        %v3916 = vsel %vm3806, %v3714, 0
        %v3919 = vsel %vm3806, %v3715, 0
        %v3922 = vsel %vm3806, %v3716, 0
        %v3925 = vsel %vm3806, %v3717, 0
        %v3928 = vsel %vm3806, %v3718, 0
        %v3931 = vsel %vm3806, %v3719, 0
        %v3934 = vsel %vm3806, %v3720, 0
        %v3937 = vsel %vm3806, %v3721, 0
        %v3940 = vsel %vm3806, %v3722, 0
        %v3943 = vsel %vm3806, %v3723, 0
        %v3946 = vsel %vm3806, %v3724, 0
        %v3949 = vsel %vm3806, %v3725, 0
        %v3952 = vsel %vm3806, %v3726, 0
        %v3955 = vsel %vm3806, %v3727, 0
        %v3958 = vsel %vm3806, %v3728, 0
        %v3961 = vsel %vm3806, %v3729, 0
        %v3964 = vsel %vm3806, %v3730, 0
        %v3967 = vsel %vm3806, %v3731, 0
        %v3970 = vsel %vm3806, %v3732, 0
        %v3973 = vsel %vm3806, %v3733, 0
        %v3976 = vsel %vm3806, %v3734, 0
        %v3979 = vsel %vm3806, %v3735, 0
        %v3982 = vsel %vm3806, %v3736, 0
        %v3985 = vsel %vm3806, %v3737, 0
        %v3988 = vsel %vm3806, %v3738, 0
        %v3991 = vsel %vm3806, %v3739, 0
        %v3994 = vsel %vm3806, %v3740, 0
        %v3997 = vsel %vm3806, %v3741, 0
        %v4000 = vsel %vm3806, %v3742, 0
        %v4003 = vsel %vm3806, %v3743, 0
        %v4006 = vsel %vm3806, %v3744, 0
        %v4009 = vsel %vm3806, %v3745, 0
        %v4012 = vsel %vm3806, %v3746, 0
        %v4015 = vsel %vm3806, %v3747, 0
        %v4018 = vsel %vm3806, %v3748, 0
        %v4021 = vsel %vm3806, %v3749, 0
        %v4024 = vsel %vm3806, %v3750, 0
        %v4027 = vsel %vm3806, %v3751, 0
        %v4030 = vsel %vm3806, %v3752, 0
        %v4033 = vsel %vm3806, %v3753, 0
        %v4036 = vsel %vm3806, %v3754, 0
        %v4039 = vsel %vm3806, %v3755, 0
        %v4042 = vsel %vm3806, %v3756, 0
        %v4045 = vsel %vm3806, %v3757, 0
        %v4048 = vsel %vm3806, %v3758, 0
        %v4051 = vsel %vm3806, %v3759, 0
        %v4054 = vsel %vm3806, %v3760, 0
        %v4057 = vsel %vm3806, %v3761, 0
        %v4060 = vsel %vm3806, %v3762, 0
        %v4063 = vsel %vm3806, %v3763, 0
        %v4066 = vsel %vm3806, %v3764, 0
        %v4069 = vsel %vm3806, %v3765, 0
        %v4072 = vsel %vm3806, %v3766, 0
        %v4075 = vsel %vm3806, %v3767, 0
        %v4078 = vsel %vm3806, %v3768, 0
        %v4081 = vsel %vm3806, %v3769, 0
        %v4084 = vsel %vm3806, %v3770, 0
        %v4087 = vsel %vm3806, %v3771, 0
        %v4090 = vsel %vm3806, %v3772, 0
        %v4093 = vsel %vm3806, %v3773, 0
        %v4096 = vsel %vm3806, %v3774, 0
        %v4099 = vsel %vm3806, %v3775, 0
        %v4102 = vsel %vm3806, %v3776, 0
        %v4105 = vsel %vm3806, %v3777, 0
        %v4108 = vsel %vm3806, %v3778, 0
        %v4111 = vsel %vm3806, %v3779, 0
        %v4114 = vsel %vm3806, %v3780, 0
        %v4117 = vsel %vm3806, %v3781, 0
        %v4120 = vsel %vm3806, %v3782, 0
        %v4123 = vsel %vm3806, %v3783, 0
        %v4126 = vsel %vm3806, %v3784, 0
        %v4129 = vsel %vm3806, %v3785, 0
        %v4132 = vsel %vm3806, %v3786, 0
        %v4135 = vsel %vm3806, %v3787, 0
        %v4138 = vsel %vm3806, %v3788, 0
        %v4141 = vsel %vm3806, %v3789, 0
        %v4144 = vsel %vm3806, %v3790, 0
        %v4147 = vsel %vm3806, %v3791, 0
        %v4150 = vsel %vm3806, %v3792, 0
        %v4153 = vsel %vm3806, %v3793, 0
        %v4156 = vsel %vm3806, %v3794, 0
        %v4159 = vsel %vm3806, %v3795, 0
        %v4162 = vsel %vm3806, %v3796, 0
        %v4165 = vsel %vm3806, %v3797, 0
        %v4168 = vsel %vm3806, %v3798, 0
        %v4171 = vsel %vm3806, %v3799, 0
        %v4174 = vsel %vm3806, %v3800, 0
        %v4177 = vsel %vm3806, %v3801, 0
        %v4180 = vsel %vm3806, %v3802, 0
        %v4183 = vsel %vm3806, %v3803, 0
        %v4186 = vsel %vm3806, %v3804, 0
        %v4189 = vsel %vm3806, %v3805, 0
        %4191 = vmatprep.subr.bf16.mxu0 0
        %4192 = vmatpush1.bf16.msra.mxu0 %v3162
        %4193 = vmatprep.subr.bf16.mxu0 0
        %4194 = vmatpush1.bf16.msra.mxu0 %v3163
        %4195 = vmatprep.subr.bf16.mxu0 0
        %4196 = vmatpush1.bf16.msra.mxu0 %v3164
        %4197 = vmatprep.subr.bf16.mxu0 0
        %4198 = vmatpush1.bf16.msra.mxu0 %v3165
        %4199 = vmatprep.subr.bf16.mxu0 0
        %4200 = vmatpush1.bf16.msra.mxu0 0
        %4201 = vmatprep.subr.bf16.mxu0 0
        %4202 = vmatpush1.bf16.msra.mxu0 0
        %4203 = vmatprep.subr.bf16.mxu0 0
        %4204 = vmatpush1.bf16.msra.mxu0 0
        %4205 = vmatprep.subr.bf16.mxu0 0
        %4206 = vmatpush1.bf16.msra.mxu0 0
        %4207 = vmatprep.subr.bf16.mxu0 0
        %4208 = vmatpush1.bf16.msra.mxu0 0
        %4209 = vmatprep.subr.bf16.mxu0 0
        %4210 = vmatpush1.bf16.msra.mxu0 0
        %4211 = vmatprep.subr.bf16.mxu0 0
        %4212 = vmatpush1.bf16.msra.mxu0 0
        %4213 = vmatprep.subr.bf16.mxu0 0
        %4214 = vmatpush1.bf16.msra.mxu0 0
        %4215 = vmatprep.subr.bf16.mxu0 0
        %4216 = vmatpush1.bf16.msra.mxu0 0
        %4217 = vmatprep.subr.bf16.mxu0 0
        %4218 = vmatpush1.bf16.msra.mxu0 0
        %4219 = vmatprep.subr.bf16.mxu0 0
        %4220 = vmatpush1.bf16.msra.mxu0 0
        %4221 = vmatprep.subr.bf16.mxu0 0
        %4222 = vmatpush1.bf16.msra.mxu0 0
        %4223 = vmatprep.mubr.bf16.mxu0 0
        %4224 = vmatmul.mubr.bf16.gmra.mrb[0].mxu0 %v3808
        %v4225 = vpop.f32.mrb[0].mxu0
        %v4226 = vadd.f32 0.0, %v4225
        %v4227 = vpop.f32.mrb[0].mxu0
        %v4228 = vpop.f32.mrb[0].mxu0
        %v4229 = vadd.f32 0.0, %v4228
        %v4230 = vpop.f32.mrb[0].mxu0
        %4231 = vmatprep.mubr.bf16.mxu0 0
        %4232 = vmatmul.mubr.bf16.gmra.mrb[0].mxu0 %v3811
        %v4233 = vpop.f32.mrb[0].mxu0
        %v4234 = vadd.f32 0.0, %v4233
        %v4235 = vpop.f32.mrb[0].mxu0
        %v4236 = vpop.f32.mrb[0].mxu0
        %v4237 = vadd.f32 0.0, %v4236
        %v4238 = vpop.f32.mrb[0].mxu0
        %4239 = vmatprep.mubr.bf16.mxu0 0
        %4240 = vmatmul.mubr.bf16.gmra.mrb[0].mxu0 %v3814
        %v4241 = vpop.f32.mrb[0].mxu0
        %v4242 = vadd.f32 0.0, %v4241
        %v4243 = vpop.f32.mrb[0].mxu0
        %v4244 = vpop.f32.mrb[0].mxu0
        %v4245 = vadd.f32 0.0, %v4244
        %v4246 = vpop.f32.mrb[0].mxu0
        %4247 = vmatprep.mubr.bf16.mxu0 0
        %4248 = vmatmul.mubr.bf16.gmra.mrb[0].mxu0 %v3817
        %v4249 = vpop.f32.mrb[0].mxu0
        %v4250 = vadd.f32 0.0, %v4249
        %v4251 = vpop.f32.mrb[0].mxu0
        %v4252 = vpop.f32.mrb[0].mxu0
        %v4253 = vadd.f32 0.0, %v4252
        %v4254 = vpop.f32.mrb[0].mxu0
        %4255 = vmatprep.mubr.bf16.mxu0 0
        %4256 = vmatmul.mubr.bf16.gmra.mrb[0].mxu0 %v3820
        %v4257 = vpop.f32.mrb[0].mxu0
        %v4258 = vadd.f32 0.0, %v4257
        %v4259 = vpop.f32.mrb[0].mxu0
        %v4260 = vpop.f32.mrb[0].mxu0
        %v4261 = vadd.f32 0.0, %v4260
        %v4262 = vpop.f32.mrb[0].mxu0
        %4263 = vmatprep.mubr.bf16.mxu0 0
        %4264 = vmatmul.mubr.bf16.gmra.mrb[0].mxu0 %v3823
        %v4265 = vpop.f32.mrb[0].mxu0
        %v4266 = vadd.f32 0.0, %v4265
        %v4267 = vpop.f32.mrb[0].mxu0
        %v4268 = vpop.f32.mrb[0].mxu0
        %v4269 = vadd.f32 0.0, %v4268
        %v4270 = vpop.f32.mrb[0].mxu0
        %4271 = vmatprep.mubr.bf16.mxu0 0
        %4272 = vmatmul.mubr.bf16.gmra.mrb[0].mxu0 %v3826
        %v4273 = vpop.f32.mrb[0].mxu0
        %v4274 = vadd.f32 0.0, %v4273
        %v4275 = vpop.f32.mrb[0].mxu0
        %v4276 = vpop.f32.mrb[0].mxu0
        %v4277 = vadd.f32 0.0, %v4276
        %v4278 = vpop.f32.mrb[0].mxu0
        %4279 = vmatprep.mubr.bf16.mxu0 0
        %4280 = vmatmul.mubr.bf16.gmra.mrb[0].mxu0 %v3829
        %v4281 = vpop.f32.mrb[0].mxu0
        %v4282 = vadd.f32 0.0, %v4281
        %v4283 = vpop.f32.mrb[0].mxu0
        %v4284 = vpop.f32.mrb[0].mxu0
        %v4285 = vadd.f32 0.0, %v4284
        %v4286 = vpop.f32.mrb[0].mxu0
        %4287 = vmatprep.mubr.bf16.mxu0 0
        %4288 = vmatmul.mubr.bf16.gmra.mrb[0].mxu0 %v3832
        %v4289 = vpop.f32.mrb[0].mxu0
        %v4290 = vadd.f32 0.0, %v4289
        %v4291 = vpop.f32.mrb[0].mxu0
        %v4292 = vpop.f32.mrb[0].mxu0
        %v4293 = vadd.f32 0.0, %v4292
        %v4294 = vpop.f32.mrb[0].mxu0
        %4295 = vmatprep.mubr.bf16.mxu0 0
        %4296 = vmatmul.mubr.bf16.gmra.mrb[0].mxu0 %v3835
        %v4297 = vpop.f32.mrb[0].mxu0
        %v4298 = vadd.f32 0.0, %v4297
        %v4299 = vpop.f32.mrb[0].mxu0
        %v4300 = vpop.f32.mrb[0].mxu0
        %v4301 = vadd.f32 0.0, %v4300
        %v4302 = vpop.f32.mrb[0].mxu0
        %4303 = vmatprep.mubr.bf16.mxu0 0
        %4304 = vmatmul.mubr.bf16.gmra.mrb[0].mxu0 %v3838
        %v4305 = vpop.f32.mrb[0].mxu0
        %v4306 = vadd.f32 0.0, %v4305
        %v4307 = vpop.f32.mrb[0].mxu0
        %v4308 = vpop.f32.mrb[0].mxu0
        %v4309 = vadd.f32 0.0, %v4308
        %v4310 = vpop.f32.mrb[0].mxu0
        %4311 = vmatprep.mubr.bf16.mxu0 0
        %4312 = vmatmul.mubr.bf16.gmra.mrb[0].mxu0 %v3841
        %v4313 = vpop.f32.mrb[0].mxu0
        %v4314 = vadd.f32 0.0, %v4313
        %v4315 = vpop.f32.mrb[0].mxu0
        %v4316 = vpop.f32.mrb[0].mxu0
        %v4317 = vadd.f32 0.0, %v4316
        %v4318 = vpop.f32.mrb[0].mxu0
        %4319 = vmatprep.mubr.bf16.mxu0 0
        %4320 = vmatmul.mubr.bf16.gmra.mrb[0].mxu0 %v3844
        %v4321 = vpop.f32.mrb[0].mxu0
        %v4322 = vadd.f32 0.0, %v4321
        %v4323 = vpop.f32.mrb[0].mxu0
        %v4324 = vpop.f32.mrb[0].mxu0
        %v4325 = vadd.f32 0.0, %v4324
        %v4326 = vpop.f32.mrb[0].mxu0
        %4327 = vmatprep.mubr.bf16.mxu0 0
        %4328 = vmatmul.mubr.bf16.gmra.mrb[0].mxu0 %v3847
        %v4329 = vpop.f32.mrb[0].mxu0
        %v4330 = vadd.f32 0.0, %v4329
        %v4331 = vpop.f32.mrb[0].mxu0
        %v4332 = vpop.f32.mrb[0].mxu0
        %v4333 = vadd.f32 0.0, %v4332
        %v4334 = vpop.f32.mrb[0].mxu0
        %4335 = vmatprep.mubr.bf16.mxu0 0
        %4336 = vmatmul.mubr.bf16.gmra.mrb[0].mxu0 %v3850
        %v4337 = vpop.f32.mrb[0].mxu0
        %v4338 = vadd.f32 0.0, %v4337
        %v4339 = vpop.f32.mrb[0].mxu0
        %v4340 = vpop.f32.mrb[0].mxu0
        %v4341 = vadd.f32 0.0, %v4340
        %v4342 = vpop.f32.mrb[0].mxu0
        %4343 = vmatprep.mubr.bf16.mxu0 0
        %4344 = vmatmul.mubr.bf16.gmra.mrb[0].mxu0 %v3853
        %v4345 = vpop.f32.mrb[0].mxu0
        %v4346 = vadd.f32 0.0, %v4345
        %v4347 = vpop.f32.mrb[0].mxu0
        %v4348 = vpop.f32.mrb[0].mxu0
        %v4349 = vadd.f32 0.0, %v4348
        %v4350 = vpop.f32.mrb[0].mxu0
        %4351 = vmatprep.mubr.bf16.mxu0 0
        %4352 = vmatmul.mubr.bf16.gmra.mrb[0].mxu0 %v3856
        %v4353 = vpop.f32.mrb[0].mxu0
        %v4354 = vadd.f32 0.0, %v4353
        %v4355 = vpop.f32.mrb[0].mxu0
        %v4356 = vpop.f32.mrb[0].mxu0
        %v4357 = vadd.f32 0.0, %v4356
        %v4358 = vpop.f32.mrb[0].mxu0
        %4359 = vmatprep.mubr.bf16.mxu0 0
        %4360 = vmatmul.mubr.bf16.gmra.mrb[0].mxu0 %v3859
        %v4361 = vpop.f32.mrb[0].mxu0
        %v4362 = vadd.f32 0.0, %v4361
        %v4363 = vpop.f32.mrb[0].mxu0
        %v4364 = vpop.f32.mrb[0].mxu0
        %v4365 = vadd.f32 0.0, %v4364
        %v4366 = vpop.f32.mrb[0].mxu0
        %4367 = vmatprep.mubr.bf16.mxu0 0
        %4368 = vmatmul.mubr.bf16.gmra.mrb[0].mxu0 %v3862
        %v4369 = vpop.f32.mrb[0].mxu0
        %v4370 = vadd.f32 0.0, %v4369
        %v4371 = vpop.f32.mrb[0].mxu0
        %v4372 = vpop.f32.mrb[0].mxu0
        %v4373 = vadd.f32 0.0, %v4372
        %v4374 = vpop.f32.mrb[0].mxu0
        %4375 = vmatprep.mubr.bf16.mxu0 0
        %4376 = vmatmul.mubr.bf16.gmra.mrb[0].mxu0 %v3865
        %v4377 = vpop.f32.mrb[0].mxu0
        %v4378 = vadd.f32 0.0, %v4377
        %v4379 = vpop.f32.mrb[0].mxu0
        %v4380 = vpop.f32.mrb[0].mxu0
        %v4381 = vadd.f32 0.0, %v4380
        %v4382 = vpop.f32.mrb[0].mxu0
        %4383 = vmatprep.mubr.bf16.mxu0 0
        %4384 = vmatmul.mubr.bf16.gmra.mrb[0].mxu0 %v3868
        %v4385 = vpop.f32.mrb[0].mxu0
        %v4386 = vadd.f32 0.0, %v4385
        %v4387 = vpop.f32.mrb[0].mxu0
        %v4388 = vpop.f32.mrb[0].mxu0
        %v4389 = vadd.f32 0.0, %v4388
        %v4390 = vpop.f32.mrb[0].mxu0
        %4391 = vmatprep.mubr.bf16.mxu0 0
        %4392 = vmatmul.mubr.bf16.gmra.mrb[0].mxu0 %v3871
        %v4393 = vpop.f32.mrb[0].mxu0
        %v4394 = vadd.f32 0.0, %v4393
        %v4395 = vpop.f32.mrb[0].mxu0
        %v4396 = vpop.f32.mrb[0].mxu0
        %v4397 = vadd.f32 0.0, %v4396
        %v4398 = vpop.f32.mrb[0].mxu0
        %4399 = vmatprep.mubr.bf16.mxu0 0
        %4400 = vmatmul.mubr.bf16.gmra.mrb[0].mxu0 %v3874
        %v4401 = vpop.f32.mrb[0].mxu0
        %v4402 = vadd.f32 0.0, %v4401
        %v4403 = vpop.f32.mrb[0].mxu0
        %v4404 = vpop.f32.mrb[0].mxu0
        %v4405 = vadd.f32 0.0, %v4404
        %v4406 = vpop.f32.mrb[0].mxu0
        %4407 = vmatprep.mubr.bf16.mxu0 0
        %4408 = vmatmul.mubr.bf16.gmra.mrb[0].mxu0 %v3877
        %v4409 = vpop.f32.mrb[0].mxu0
        %v4410 = vadd.f32 0.0, %v4409
        %v4411 = vpop.f32.mrb[0].mxu0
        %v4412 = vpop.f32.mrb[0].mxu0
        %v4413 = vadd.f32 0.0, %v4412
        %v4414 = vpop.f32.mrb[0].mxu0
        %4415 = vmatprep.mubr.bf16.mxu0 0
        %4416 = vmatmul.mubr.bf16.gmra.mrb[0].mxu0 %v3880
        %v4417 = vpop.f32.mrb[0].mxu0
        %v4418 = vadd.f32 0.0, %v4417
        %v4419 = vpop.f32.mrb[0].mxu0
        %v4420 = vpop.f32.mrb[0].mxu0
        %v4421 = vadd.f32 0.0, %v4420
        %v4422 = vpop.f32.mrb[0].mxu0
        %4423 = vmatprep.mubr.bf16.mxu0 0
        %4424 = vmatmul.mubr.bf16.gmra.mrb[0].mxu0 %v3883
        %v4425 = vpop.f32.mrb[0].mxu0
        %v4426 = vadd.f32 0.0, %v4425
        %v4427 = vpop.f32.mrb[0].mxu0
        %v4428 = vpop.f32.mrb[0].mxu0
        %v4429 = vadd.f32 0.0, %v4428
        %v4430 = vpop.f32.mrb[0].mxu0
        %4431 = vmatprep.mubr.bf16.mxu0 0
        %4432 = vmatmul.mubr.bf16.gmra.mrb[0].mxu0 %v3886
        %v4433 = vpop.f32.mrb[0].mxu0
        %v4434 = vadd.f32 0.0, %v4433
        %v4435 = vpop.f32.mrb[0].mxu0
        %v4436 = vpop.f32.mrb[0].mxu0
        %v4437 = vadd.f32 0.0, %v4436
        %v4438 = vpop.f32.mrb[0].mxu0
        %4439 = vmatprep.mubr.bf16.mxu0 0
        %4440 = vmatmul.mubr.bf16.gmra.mrb[0].mxu0 %v3889
        %v4441 = vpop.f32.mrb[0].mxu0
        %v4442 = vadd.f32 0.0, %v4441
        %v4443 = vpop.f32.mrb[0].mxu0
        %v4444 = vpop.f32.mrb[0].mxu0
        %v4445 = vadd.f32 0.0, %v4444
        %v4446 = vpop.f32.mrb[0].mxu0
        %4447 = vmatprep.mubr.bf16.mxu0 0
        %4448 = vmatmul.mubr.bf16.gmra.mrb[0].mxu0 %v3892
        %v4449 = vpop.f32.mrb[0].mxu0
        %v4450 = vadd.f32 0.0, %v4449
        %v4451 = vpop.f32.mrb[0].mxu0
        %v4452 = vpop.f32.mrb[0].mxu0
        %v4453 = vadd.f32 0.0, %v4452
        %v4454 = vpop.f32.mrb[0].mxu0
        %4455 = vmatprep.mubr.bf16.mxu0 0
        %4456 = vmatmul.mubr.bf16.gmra.mrb[0].mxu0 %v3895
        %v4457 = vpop.f32.mrb[0].mxu0
        %v4458 = vadd.f32 0.0, %v4457
        %v4459 = vpop.f32.mrb[0].mxu0
        %v4460 = vpop.f32.mrb[0].mxu0
        %v4461 = vadd.f32 0.0, %v4460
        %v4462 = vpop.f32.mrb[0].mxu0
        %4463 = vmatprep.mubr.bf16.mxu0 0
        %4464 = vmatmul.mubr.bf16.gmra.mrb[0].mxu0 %v3898
        %v4465 = vpop.f32.mrb[0].mxu0
        %v4466 = vadd.f32 0.0, %v4465
        %v4467 = vpop.f32.mrb[0].mxu0
        %v4468 = vpop.f32.mrb[0].mxu0
        %v4469 = vadd.f32 0.0, %v4468
        %v4470 = vpop.f32.mrb[0].mxu0
        %4471 = vmatprep.mubr.bf16.mxu0 0
        %4472 = vmatmul.mubr.bf16.gmra.mrb[0].mxu0 %v3901
        %v4473 = vpop.f32.mrb[0].mxu0
        %v4474 = vadd.f32 0.0, %v4473
        %v4475 = vpop.f32.mrb[0].mxu0
        %v4476 = vpop.f32.mrb[0].mxu0
        %v4477 = vadd.f32 0.0, %v4476
        %v4478 = vpop.f32.mrb[0].mxu0
        %4479 = vmatprep.mubr.bf16.mxu0 0
        %4480 = vmatmul.mubr.bf16.gmra.mrb[0].mxu0 %v3904
        %v4481 = vpop.f32.mrb[0].mxu0
        %v4482 = vadd.f32 0.0, %v4481
        %v4483 = vpop.f32.mrb[0].mxu0
        %v4484 = vpop.f32.mrb[0].mxu0
        %v4485 = vadd.f32 0.0, %v4484
        %v4486 = vpop.f32.mrb[0].mxu0
        %4487 = vmatprep.mubr.bf16.mxu0 0
        %4488 = vmatmul.mubr.bf16.gmra.mrb[0].mxu0 %v3907
        %v4489 = vpop.f32.mrb[0].mxu0
        %v4490 = vadd.f32 0.0, %v4489
        %v4491 = vpop.f32.mrb[0].mxu0
        %v4492 = vpop.f32.mrb[0].mxu0
        %v4493 = vadd.f32 0.0, %v4492
        %v4494 = vpop.f32.mrb[0].mxu0
        %4495 = vmatprep.mubr.bf16.mxu0 0
        %4496 = vmatmul.mubr.bf16.gmra.mrb[0].mxu0 %v3910
        %v4497 = vpop.f32.mrb[0].mxu0
        %v4498 = vadd.f32 0.0, %v4497
        %v4499 = vpop.f32.mrb[0].mxu0
        %v4500 = vpop.f32.mrb[0].mxu0
        %v4501 = vadd.f32 0.0, %v4500
        %v4502 = vpop.f32.mrb[0].mxu0
        %4503 = vmatprep.mubr.bf16.mxu0 0
        %4504 = vmatmul.mubr.bf16.gmra.mrb[0].mxu0 %v3913
        %v4505 = vpop.f32.mrb[0].mxu0
        %v4506 = vadd.f32 0.0, %v4505
        %v4507 = vpop.f32.mrb[0].mxu0
        %v4508 = vpop.f32.mrb[0].mxu0
        %v4509 = vadd.f32 0.0, %v4508
        %v4510 = vpop.f32.mrb[0].mxu0
        %4511 = vmatprep.mubr.bf16.mxu0 0
        %4512 = vmatmul.mubr.bf16.gmra.mrb[0].mxu0 %v3916
        %v4513 = vpop.f32.mrb[0].mxu0
        %v4514 = vadd.f32 0.0, %v4513
        %v4515 = vpop.f32.mrb[0].mxu0
        %v4516 = vpop.f32.mrb[0].mxu0
        %v4517 = vadd.f32 0.0, %v4516
        %v4518 = vpop.f32.mrb[0].mxu0
        %4519 = vmatprep.mubr.bf16.mxu0 0
        %4520 = vmatmul.mubr.bf16.gmra.mrb[0].mxu0 %v3919
        %v4521 = vpop.f32.mrb[0].mxu0
        %v4522 = vadd.f32 0.0, %v4521
        %v4523 = vpop.f32.mrb[0].mxu0
        %v4524 = vpop.f32.mrb[0].mxu0
        %v4525 = vadd.f32 0.0, %v4524
        %v4526 = vpop.f32.mrb[0].mxu0
        %4527 = vmatprep.mubr.bf16.mxu0 0
        %4528 = vmatmul.mubr.bf16.gmra.mrb[0].mxu0 %v3922
        %v4529 = vpop.f32.mrb[0].mxu0
        %v4530 = vadd.f32 0.0, %v4529
        %v4531 = vpop.f32.mrb[0].mxu0
        %v4532 = vpop.f32.mrb[0].mxu0
        %v4533 = vadd.f32 0.0, %v4532
        %v4534 = vpop.f32.mrb[0].mxu0
        %4535 = vmatprep.mubr.bf16.mxu0 0
        %4536 = vmatmul.mubr.bf16.gmra.mrb[0].mxu0 %v3925
        %v4537 = vpop.f32.mrb[0].mxu0
        %v4538 = vadd.f32 0.0, %v4537
        %v4539 = vpop.f32.mrb[0].mxu0
        %v4540 = vpop.f32.mrb[0].mxu0
        %v4541 = vadd.f32 0.0, %v4540
        %v4542 = vpop.f32.mrb[0].mxu0
        %4543 = vmatprep.mubr.bf16.mxu0 0
        %4544 = vmatmul.mubr.bf16.gmra.mrb[0].mxu0 %v3928
        %v4545 = vpop.f32.mrb[0].mxu0
        %v4546 = vadd.f32 0.0, %v4545
        %v4547 = vpop.f32.mrb[0].mxu0
        %v4548 = vpop.f32.mrb[0].mxu0
        %v4549 = vadd.f32 0.0, %v4548
        %v4550 = vpop.f32.mrb[0].mxu0
        %4551 = vmatprep.mubr.bf16.mxu0 0
        %4552 = vmatmul.mubr.bf16.gmra.mrb[0].mxu0 %v3931
        %v4553 = vpop.f32.mrb[0].mxu0
        %v4554 = vadd.f32 0.0, %v4553
        %v4555 = vpop.f32.mrb[0].mxu0
        %v4556 = vpop.f32.mrb[0].mxu0
        %v4557 = vadd.f32 0.0, %v4556
        %v4558 = vpop.f32.mrb[0].mxu0
        %4559 = vmatprep.mubr.bf16.mxu0 0
        %4560 = vmatmul.mubr.bf16.gmra.mrb[0].mxu0 %v3934
        %v4561 = vpop.f32.mrb[0].mxu0
        %v4562 = vadd.f32 0.0, %v4561
        %v4563 = vpop.f32.mrb[0].mxu0
        %v4564 = vpop.f32.mrb[0].mxu0
        %v4565 = vadd.f32 0.0, %v4564
        %v4566 = vpop.f32.mrb[0].mxu0
        %4567 = vmatprep.mubr.bf16.mxu0 0
        %4568 = vmatmul.mubr.bf16.gmra.mrb[0].mxu0 %v3937
        %v4569 = vpop.f32.mrb[0].mxu0
        %v4570 = vadd.f32 0.0, %v4569
        %v4571 = vpop.f32.mrb[0].mxu0
        %v4572 = vpop.f32.mrb[0].mxu0
        %v4573 = vadd.f32 0.0, %v4572
        %v4574 = vpop.f32.mrb[0].mxu0
        %4575 = vmatprep.mubr.bf16.mxu0 0
        %4576 = vmatmul.mubr.bf16.gmra.mrb[0].mxu0 %v3940
        %v4577 = vpop.f32.mrb[0].mxu0
        %v4578 = vadd.f32 0.0, %v4577
        %v4579 = vpop.f32.mrb[0].mxu0
        %v4580 = vpop.f32.mrb[0].mxu0
        %v4581 = vadd.f32 0.0, %v4580
        %v4582 = vpop.f32.mrb[0].mxu0
        %4583 = vmatprep.mubr.bf16.mxu0 0
        %4584 = vmatmul.mubr.bf16.gmra.mrb[0].mxu0 %v3943
        %v4585 = vpop.f32.mrb[0].mxu0
        %v4586 = vadd.f32 0.0, %v4585
        %v4587 = vpop.f32.mrb[0].mxu0
        %v4588 = vpop.f32.mrb[0].mxu0
        %v4589 = vadd.f32 0.0, %v4588
        %v4590 = vpop.f32.mrb[0].mxu0
        %4591 = vmatprep.mubr.bf16.mxu0 0
        %4592 = vmatmul.mubr.bf16.gmra.mrb[0].mxu0 %v3946
        %v4593 = vpop.f32.mrb[0].mxu0
        %v4594 = vadd.f32 0.0, %v4593
        %v4595 = vpop.f32.mrb[0].mxu0
        %v4596 = vpop.f32.mrb[0].mxu0
        %v4597 = vadd.f32 0.0, %v4596
        %v4598 = vpop.f32.mrb[0].mxu0
        %4599 = vmatprep.mubr.bf16.mxu0 0
        %4600 = vmatmul.mubr.bf16.gmra.mrb[0].mxu0 %v3949
        %v4601 = vpop.f32.mrb[0].mxu0
        %v4602 = vadd.f32 0.0, %v4601
        %v4603 = vpop.f32.mrb[0].mxu0
        %v4604 = vpop.f32.mrb[0].mxu0
        %v4605 = vadd.f32 0.0, %v4604
        %v4606 = vpop.f32.mrb[0].mxu0
        %4607 = vmatprep.mubr.bf16.mxu0 0
        %4608 = vmatmul.mubr.bf16.gmra.mrb[0].mxu0 %v3952
        %v4609 = vpop.f32.mrb[0].mxu0
        %v4610 = vadd.f32 0.0, %v4609
        %v4611 = vpop.f32.mrb[0].mxu0
        %v4612 = vpop.f32.mrb[0].mxu0
        %v4613 = vadd.f32 0.0, %v4612
        %v4614 = vpop.f32.mrb[0].mxu0
        %4615 = vmatprep.mubr.bf16.mxu0 0
        %4616 = vmatmul.mubr.bf16.gmra.mrb[0].mxu0 %v3955
        %v4617 = vpop.f32.mrb[0].mxu0
        %v4618 = vadd.f32 0.0, %v4617
        %v4619 = vpop.f32.mrb[0].mxu0
        %v4620 = vpop.f32.mrb[0].mxu0
        %v4621 = vadd.f32 0.0, %v4620
        %v4622 = vpop.f32.mrb[0].mxu0
        %4623 = vmatprep.mubr.bf16.mxu0 0
        %4624 = vmatmul.mubr.bf16.gmra.mrb[0].mxu0 %v3958
        %v4625 = vpop.f32.mrb[0].mxu0
        %v4626 = vadd.f32 0.0, %v4625
        %v4627 = vpop.f32.mrb[0].mxu0
        %v4628 = vpop.f32.mrb[0].mxu0
        %v4629 = vadd.f32 0.0, %v4628
        %v4630 = vpop.f32.mrb[0].mxu0
        %4631 = vmatprep.mubr.bf16.mxu0 0
        %4632 = vmatmul.mubr.bf16.gmra.mrb[0].mxu0 %v3961
        %v4633 = vpop.f32.mrb[0].mxu0
        %v4634 = vadd.f32 0.0, %v4633
        %v4635 = vpop.f32.mrb[0].mxu0
        %v4636 = vpop.f32.mrb[0].mxu0
        %v4637 = vadd.f32 0.0, %v4636
        %v4638 = vpop.f32.mrb[0].mxu0
        %4639 = vmatprep.mubr.bf16.mxu0 0
        %4640 = vmatmul.mubr.bf16.gmra.mrb[0].mxu0 %v3964
        %v4641 = vpop.f32.mrb[0].mxu0
        %v4642 = vadd.f32 0.0, %v4641
        %v4643 = vpop.f32.mrb[0].mxu0
        %v4644 = vpop.f32.mrb[0].mxu0
        %v4645 = vadd.f32 0.0, %v4644
        %v4646 = vpop.f32.mrb[0].mxu0
        %4647 = vmatprep.mubr.bf16.mxu0 0
        %4648 = vmatmul.mubr.bf16.gmra.mrb[0].mxu0 %v3967
        %v4649 = vpop.f32.mrb[0].mxu0
        %v4650 = vadd.f32 0.0, %v4649
        %v4651 = vpop.f32.mrb[0].mxu0
        %v4652 = vpop.f32.mrb[0].mxu0
        %v4653 = vadd.f32 0.0, %v4652
        %v4654 = vpop.f32.mrb[0].mxu0
        %4655 = vmatprep.mubr.bf16.mxu0 0
        %4656 = vmatmul.mubr.bf16.gmra.mrb[0].mxu0 %v3970
        %v4657 = vpop.f32.mrb[0].mxu0
        %v4658 = vadd.f32 0.0, %v4657
        %v4659 = vpop.f32.mrb[0].mxu0
        %v4660 = vpop.f32.mrb[0].mxu0
        %v4661 = vadd.f32 0.0, %v4660
        %v4662 = vpop.f32.mrb[0].mxu0
        %4663 = vmatprep.mubr.bf16.mxu0 0
        %4664 = vmatmul.mubr.bf16.gmra.mrb[0].mxu0 %v3973
        %v4665 = vpop.f32.mrb[0].mxu0
        %v4666 = vadd.f32 0.0, %v4665
        %v4667 = vpop.f32.mrb[0].mxu0
        %v4668 = vpop.f32.mrb[0].mxu0
        %v4669 = vadd.f32 0.0, %v4668
        %v4670 = vpop.f32.mrb[0].mxu0
        %4671 = vmatprep.mubr.bf16.mxu0 0
        %4672 = vmatmul.mubr.bf16.gmra.mrb[0].mxu0 %v3976
        %v4673 = vpop.f32.mrb[0].mxu0
        %v4674 = vadd.f32 0.0, %v4673
        %v4675 = vpop.f32.mrb[0].mxu0
        %v4676 = vpop.f32.mrb[0].mxu0
        %v4677 = vadd.f32 0.0, %v4676
        %v4678 = vpop.f32.mrb[0].mxu0
        %4679 = vmatprep.mubr.bf16.mxu0 0
        %4680 = vmatmul.mubr.bf16.gmra.mrb[0].mxu0 %v3979
        %v4681 = vpop.f32.mrb[0].mxu0
        %v4682 = vadd.f32 0.0, %v4681
        %v4683 = vpop.f32.mrb[0].mxu0
        %v4684 = vpop.f32.mrb[0].mxu0
        %v4685 = vadd.f32 0.0, %v4684
        %v4686 = vpop.f32.mrb[0].mxu0
        %4687 = vmatprep.mubr.bf16.mxu0 0
        %4688 = vmatmul.mubr.bf16.gmra.mrb[0].mxu0 %v3982
        %v4689 = vpop.f32.mrb[0].mxu0
        %v4690 = vadd.f32 0.0, %v4689
        %v4691 = vpop.f32.mrb[0].mxu0
        %v4692 = vpop.f32.mrb[0].mxu0
        %v4693 = vadd.f32 0.0, %v4692
        %v4694 = vpop.f32.mrb[0].mxu0
        %4695 = vmatprep.mubr.bf16.mxu0 0
        %4696 = vmatmul.mubr.bf16.gmra.mrb[0].mxu0 %v3985
        %v4697 = vpop.f32.mrb[0].mxu0
        %v4698 = vadd.f32 0.0, %v4697
        %v4699 = vpop.f32.mrb[0].mxu0
        %v4700 = vpop.f32.mrb[0].mxu0
        %v4701 = vadd.f32 0.0, %v4700
        %v4702 = vpop.f32.mrb[0].mxu0
        %4703 = vmatprep.mubr.bf16.mxu0 0
        %4704 = vmatmul.mubr.bf16.gmra.mrb[0].mxu0 %v3988
        %v4705 = vpop.f32.mrb[0].mxu0
        %v4706 = vadd.f32 0.0, %v4705
        %v4707 = vpop.f32.mrb[0].mxu0
        %v4708 = vpop.f32.mrb[0].mxu0
        %v4709 = vadd.f32 0.0, %v4708
        %v4710 = vpop.f32.mrb[0].mxu0
        %4711 = vmatprep.mubr.bf16.mxu0 0
        %4712 = vmatmul.mubr.bf16.gmra.mrb[0].mxu0 %v3991
        %v4713 = vpop.f32.mrb[0].mxu0
        %v4714 = vadd.f32 0.0, %v4713
        %v4715 = vpop.f32.mrb[0].mxu0
        %v4716 = vpop.f32.mrb[0].mxu0
        %v4717 = vadd.f32 0.0, %v4716
        %v4718 = vpop.f32.mrb[0].mxu0
        %4719 = vmatprep.mubr.bf16.mxu0 0
        %4720 = vmatmul.mubr.bf16.gmra.mrb[0].mxu0 %v3994
        %v4721 = vpop.f32.mrb[0].mxu0
        %v4722 = vadd.f32 0.0, %v4721
        %v4723 = vpop.f32.mrb[0].mxu0
        %v4724 = vpop.f32.mrb[0].mxu0
        %v4725 = vadd.f32 0.0, %v4724
        %v4726 = vpop.f32.mrb[0].mxu0
        %4727 = vmatprep.mubr.bf16.mxu0 0
        %4728 = vmatmul.mubr.bf16.gmra.mrb[0].mxu0 %v3997
        %v4729 = vpop.f32.mrb[0].mxu0
        %v4730 = vadd.f32 0.0, %v4729
        %v4731 = vpop.f32.mrb[0].mxu0
        %v4732 = vpop.f32.mrb[0].mxu0
        %v4733 = vadd.f32 0.0, %v4732
        %v4734 = vpop.f32.mrb[0].mxu0
        %4735 = vmatprep.mubr.bf16.mxu0 0
        %4736 = vmatmul.mubr.bf16.gmra.mrb[0].mxu0 %v4000
        %v4737 = vpop.f32.mrb[0].mxu0
        %v4738 = vadd.f32 0.0, %v4737
        %v4739 = vpop.f32.mrb[0].mxu0
        %v4740 = vpop.f32.mrb[0].mxu0
        %v4741 = vadd.f32 0.0, %v4740
        %v4742 = vpop.f32.mrb[0].mxu0
        %4743 = vmatprep.mubr.bf16.mxu0 0
        %4744 = vmatmul.mubr.bf16.gmra.mrb[0].mxu0 %v4003
        %v4745 = vpop.f32.mrb[0].mxu0
        %v4746 = vadd.f32 0.0, %v4745
        %v4747 = vpop.f32.mrb[0].mxu0
        %v4748 = vpop.f32.mrb[0].mxu0
        %v4749 = vadd.f32 0.0, %v4748
        %v4750 = vpop.f32.mrb[0].mxu0
        %4751 = vmatprep.mubr.bf16.mxu0 0
        %4752 = vmatmul.mubr.bf16.gmra.mrb[0].mxu0 %v4006
        %v4753 = vpop.f32.mrb[0].mxu0
        %v4754 = vadd.f32 0.0, %v4753
        %v4755 = vpop.f32.mrb[0].mxu0
        %v4756 = vpop.f32.mrb[0].mxu0
        %v4757 = vadd.f32 0.0, %v4756
        %v4758 = vpop.f32.mrb[0].mxu0
        %4759 = vmatprep.mubr.bf16.mxu0 0
        %4760 = vmatmul.mubr.bf16.gmra.mrb[0].mxu0 %v4009
        %v4761 = vpop.f32.mrb[0].mxu0
        %v4762 = vadd.f32 0.0, %v4761
        %v4763 = vpop.f32.mrb[0].mxu0
        %v4764 = vpop.f32.mrb[0].mxu0
        %v4765 = vadd.f32 0.0, %v4764
        %v4766 = vpop.f32.mrb[0].mxu0
        %4767 = vmatprep.mubr.bf16.mxu0 0
        %4768 = vmatmul.mubr.bf16.gmra.mrb[0].mxu0 %v4012
        %v4769 = vpop.f32.mrb[0].mxu0
        %v4770 = vadd.f32 0.0, %v4769
        %v4771 = vpop.f32.mrb[0].mxu0
        %v4772 = vpop.f32.mrb[0].mxu0
        %v4773 = vadd.f32 0.0, %v4772
        %v4774 = vpop.f32.mrb[0].mxu0
        %4775 = vmatprep.mubr.bf16.mxu0 0
        %4776 = vmatmul.mubr.bf16.gmra.mrb[0].mxu0 %v4015
        %v4777 = vpop.f32.mrb[0].mxu0
        %v4778 = vadd.f32 0.0, %v4777
        %v4779 = vpop.f32.mrb[0].mxu0
        %v4780 = vpop.f32.mrb[0].mxu0
        %v4781 = vadd.f32 0.0, %v4780
        %v4782 = vpop.f32.mrb[0].mxu0
        %4783 = vmatprep.mubr.bf16.mxu0 0
        %4784 = vmatmul.mubr.bf16.gmra.mrb[0].mxu0 %v4018
        %v4785 = vpop.f32.mrb[0].mxu0
        %v4786 = vadd.f32 0.0, %v4785
        %v4787 = vpop.f32.mrb[0].mxu0
        %v4788 = vpop.f32.mrb[0].mxu0
        %v4789 = vadd.f32 0.0, %v4788
        %v4790 = vpop.f32.mrb[0].mxu0
        %4791 = vmatprep.mubr.bf16.mxu0 0
        %4792 = vmatmul.mubr.bf16.gmra.mrb[0].mxu0 %v4021
        %v4793 = vpop.f32.mrb[0].mxu0
        %v4794 = vadd.f32 0.0, %v4793
        %v4795 = vpop.f32.mrb[0].mxu0
        %v4796 = vpop.f32.mrb[0].mxu0
        %v4797 = vadd.f32 0.0, %v4796
        %v4798 = vpop.f32.mrb[0].mxu0
        %4799 = vmatprep.mubr.bf16.mxu0 0
        %4800 = vmatmul.mubr.bf16.gmra.mrb[0].mxu0 %v4024
        %v4801 = vpop.f32.mrb[0].mxu0
        %v4802 = vadd.f32 0.0, %v4801
        %v4803 = vpop.f32.mrb[0].mxu0
        %v4804 = vpop.f32.mrb[0].mxu0
        %v4805 = vadd.f32 0.0, %v4804
        %v4806 = vpop.f32.mrb[0].mxu0
        %4807 = vmatprep.mubr.bf16.mxu0 0
        %4808 = vmatmul.mubr.bf16.gmra.mrb[0].mxu0 %v4027
        %v4809 = vpop.f32.mrb[0].mxu0
        %v4810 = vadd.f32 0.0, %v4809
        %v4811 = vpop.f32.mrb[0].mxu0
        %v4812 = vpop.f32.mrb[0].mxu0
        %v4813 = vadd.f32 0.0, %v4812
        %v4814 = vpop.f32.mrb[0].mxu0
        %4815 = vmatprep.mubr.bf16.mxu0 0
        %4816 = vmatmul.mubr.bf16.gmra.mrb[0].mxu0 %v4030
        %v4817 = vpop.f32.mrb[0].mxu0
        %v4818 = vadd.f32 0.0, %v4817
        %v4819 = vpop.f32.mrb[0].mxu0
        %v4820 = vpop.f32.mrb[0].mxu0
        %v4821 = vadd.f32 0.0, %v4820
        %v4822 = vpop.f32.mrb[0].mxu0
        %4823 = vmatprep.mubr.bf16.mxu0 0
        %4824 = vmatmul.mubr.bf16.gmra.mrb[0].mxu0 %v4033
        %v4825 = vpop.f32.mrb[0].mxu0
        %v4826 = vadd.f32 0.0, %v4825
        %v4827 = vpop.f32.mrb[0].mxu0
        %v4828 = vpop.f32.mrb[0].mxu0
        %v4829 = vadd.f32 0.0, %v4828
        %v4830 = vpop.f32.mrb[0].mxu0
        %4831 = vmatprep.mubr.bf16.mxu0 0
        %4832 = vmatmul.mubr.bf16.gmra.mrb[0].mxu0 %v4036
        %v4833 = vpop.f32.mrb[0].mxu0
        %v4834 = vadd.f32 0.0, %v4833
        %v4835 = vpop.f32.mrb[0].mxu0
        %v4836 = vpop.f32.mrb[0].mxu0
        %v4837 = vadd.f32 0.0, %v4836
        %v4838 = vpop.f32.mrb[0].mxu0
        %4839 = vmatprep.mubr.bf16.mxu0 0
        %4840 = vmatmul.mubr.bf16.gmra.mrb[0].mxu0 %v4039
        %v4841 = vpop.f32.mrb[0].mxu0
        %v4842 = vadd.f32 0.0, %v4841
        %v4843 = vpop.f32.mrb[0].mxu0
        %v4844 = vpop.f32.mrb[0].mxu0
        %v4845 = vadd.f32 0.0, %v4844
        %v4846 = vpop.f32.mrb[0].mxu0
        %4847 = vmatprep.mubr.bf16.mxu0 0
        %4848 = vmatmul.mubr.bf16.gmra.mrb[0].mxu0 %v4042
        %v4849 = vpop.f32.mrb[0].mxu0
        %v4850 = vadd.f32 0.0, %v4849
        %v4851 = vpop.f32.mrb[0].mxu0
        %v4852 = vpop.f32.mrb[0].mxu0
        %v4853 = vadd.f32 0.0, %v4852
        %v4854 = vpop.f32.mrb[0].mxu0
        %4855 = vmatprep.mubr.bf16.mxu0 0
        %4856 = vmatmul.mubr.bf16.gmra.mrb[0].mxu0 %v4045
        %v4857 = vpop.f32.mrb[0].mxu0
        %v4858 = vadd.f32 0.0, %v4857
        %v4859 = vpop.f32.mrb[0].mxu0
        %v4860 = vpop.f32.mrb[0].mxu0
        %v4861 = vadd.f32 0.0, %v4860
        %v4862 = vpop.f32.mrb[0].mxu0
        %4863 = vmatprep.mubr.bf16.mxu0 0
        %4864 = vmatmul.mubr.bf16.gmra.mrb[0].mxu0 %v4048
        %v4865 = vpop.f32.mrb[0].mxu0
        %v4866 = vadd.f32 0.0, %v4865
        %v4867 = vpop.f32.mrb[0].mxu0
        %v4868 = vpop.f32.mrb[0].mxu0
        %v4869 = vadd.f32 0.0, %v4868
        %v4870 = vpop.f32.mrb[0].mxu0
        %4871 = vmatprep.mubr.bf16.mxu0 0
        %4872 = vmatmul.mubr.bf16.gmra.mrb[0].mxu0 %v4051
        %v4873 = vpop.f32.mrb[0].mxu0
        %v4874 = vadd.f32 0.0, %v4873
        %v4875 = vpop.f32.mrb[0].mxu0
        %v4876 = vpop.f32.mrb[0].mxu0
        %v4877 = vadd.f32 0.0, %v4876
        %v4878 = vpop.f32.mrb[0].mxu0
        %4879 = vmatprep.mubr.bf16.mxu0 0
        %4880 = vmatmul.mubr.bf16.gmra.mrb[0].mxu0 %v4054
        %v4881 = vpop.f32.mrb[0].mxu0
        %v4882 = vadd.f32 0.0, %v4881
        %v4883 = vpop.f32.mrb[0].mxu0
        %v4884 = vpop.f32.mrb[0].mxu0
        %v4885 = vadd.f32 0.0, %v4884
        %v4886 = vpop.f32.mrb[0].mxu0
        %4887 = vmatprep.mubr.bf16.mxu0 0
        %4888 = vmatmul.mubr.bf16.gmra.mrb[0].mxu0 %v4057
        %v4889 = vpop.f32.mrb[0].mxu0
        %v4890 = vadd.f32 0.0, %v4889
        %v4891 = vpop.f32.mrb[0].mxu0
        %v4892 = vpop.f32.mrb[0].mxu0
        %v4893 = vadd.f32 0.0, %v4892
        %v4894 = vpop.f32.mrb[0].mxu0
        %4895 = vmatprep.mubr.bf16.mxu0 0
        %4896 = vmatmul.mubr.bf16.gmra.mrb[0].mxu0 %v4060
        %v4897 = vpop.f32.mrb[0].mxu0
        %v4898 = vadd.f32 0.0, %v4897
        %v4899 = vpop.f32.mrb[0].mxu0
        %v4900 = vpop.f32.mrb[0].mxu0
        %v4901 = vadd.f32 0.0, %v4900
        %v4902 = vpop.f32.mrb[0].mxu0
        %4903 = vmatprep.mubr.bf16.mxu0 0
        %4904 = vmatmul.mubr.bf16.gmra.mrb[0].mxu0 %v4063
        %v4905 = vpop.f32.mrb[0].mxu0
        %v4906 = vadd.f32 0.0, %v4905
        %v4907 = vpop.f32.mrb[0].mxu0
        %v4908 = vpop.f32.mrb[0].mxu0
        %v4909 = vadd.f32 0.0, %v4908
        %v4910 = vpop.f32.mrb[0].mxu0
        %4911 = vmatprep.mubr.bf16.mxu0 0
        %4912 = vmatmul.mubr.bf16.gmra.mrb[0].mxu0 %v4066
        %v4913 = vpop.f32.mrb[0].mxu0
        %v4914 = vadd.f32 0.0, %v4913
        %v4915 = vpop.f32.mrb[0].mxu0
        %v4916 = vpop.f32.mrb[0].mxu0
        %v4917 = vadd.f32 0.0, %v4916
        %v4918 = vpop.f32.mrb[0].mxu0
        %4919 = vmatprep.mubr.bf16.mxu0 0
        %4920 = vmatmul.mubr.bf16.gmra.mrb[0].mxu0 %v4069
        %v4921 = vpop.f32.mrb[0].mxu0
        %v4922 = vadd.f32 0.0, %v4921
        %v4923 = vpop.f32.mrb[0].mxu0
        %v4924 = vpop.f32.mrb[0].mxu0
        %v4925 = vadd.f32 0.0, %v4924
        %v4926 = vpop.f32.mrb[0].mxu0
        %4927 = vmatprep.mubr.bf16.mxu0 0
        %4928 = vmatmul.mubr.bf16.gmra.mrb[0].mxu0 %v4072
        %v4929 = vpop.f32.mrb[0].mxu0
        %v4930 = vadd.f32 0.0, %v4929
        %v4931 = vpop.f32.mrb[0].mxu0
        %v4932 = vpop.f32.mrb[0].mxu0
        %v4933 = vadd.f32 0.0, %v4932
        %v4934 = vpop.f32.mrb[0].mxu0
        %4935 = vmatprep.mubr.bf16.mxu0 0
        %4936 = vmatmul.mubr.bf16.gmra.mrb[0].mxu0 %v4075
        %v4937 = vpop.f32.mrb[0].mxu0
        %v4938 = vadd.f32 0.0, %v4937
        %v4939 = vpop.f32.mrb[0].mxu0
        %v4940 = vpop.f32.mrb[0].mxu0
        %v4941 = vadd.f32 0.0, %v4940
        %v4942 = vpop.f32.mrb[0].mxu0
        %4943 = vmatprep.mubr.bf16.mxu0 0
        %4944 = vmatmul.mubr.bf16.gmra.mrb[0].mxu0 %v4078
        %v4945 = vpop.f32.mrb[0].mxu0
        %v4946 = vadd.f32 0.0, %v4945
        %v4947 = vpop.f32.mrb[0].mxu0
        %v4948 = vpop.f32.mrb[0].mxu0
        %v4949 = vadd.f32 0.0, %v4948
        %v4950 = vpop.f32.mrb[0].mxu0
        %4951 = vmatprep.mubr.bf16.mxu0 0
        %4952 = vmatmul.mubr.bf16.gmra.mrb[0].mxu0 %v4081
        %v4953 = vpop.f32.mrb[0].mxu0
        %v4954 = vadd.f32 0.0, %v4953
        %v4955 = vpop.f32.mrb[0].mxu0
        %v4956 = vpop.f32.mrb[0].mxu0
        %v4957 = vadd.f32 0.0, %v4956
        %v4958 = vpop.f32.mrb[0].mxu0
        %4959 = vmatprep.mubr.bf16.mxu0 0
        %4960 = vmatmul.mubr.bf16.gmra.mrb[0].mxu0 %v4084
        %v4961 = vpop.f32.mrb[0].mxu0
        %v4962 = vadd.f32 0.0, %v4961
        %v4963 = vpop.f32.mrb[0].mxu0
        %v4964 = vpop.f32.mrb[0].mxu0
        %v4965 = vadd.f32 0.0, %v4964
        %v4966 = vpop.f32.mrb[0].mxu0
        %4967 = vmatprep.mubr.bf16.mxu0 0
        %4968 = vmatmul.mubr.bf16.gmra.mrb[0].mxu0 %v4087
        %v4969 = vpop.f32.mrb[0].mxu0
        %v4970 = vadd.f32 0.0, %v4969
        %v4971 = vpop.f32.mrb[0].mxu0
        %v4972 = vpop.f32.mrb[0].mxu0
        %v4973 = vadd.f32 0.0, %v4972
        %v4974 = vpop.f32.mrb[0].mxu0
        %4975 = vmatprep.mubr.bf16.mxu0 0
        %4976 = vmatmul.mubr.bf16.gmra.mrb[0].mxu0 %v4090
        %v4977 = vpop.f32.mrb[0].mxu0
        %v4978 = vadd.f32 0.0, %v4977
        %v4979 = vpop.f32.mrb[0].mxu0
        %v4980 = vpop.f32.mrb[0].mxu0
        %v4981 = vadd.f32 0.0, %v4980
        %v4982 = vpop.f32.mrb[0].mxu0
        %4983 = vmatprep.mubr.bf16.mxu0 0
        %4984 = vmatmul.mubr.bf16.gmra.mrb[0].mxu0 %v4093
        %v4985 = vpop.f32.mrb[0].mxu0
        %v4986 = vadd.f32 0.0, %v4985
        %v4987 = vpop.f32.mrb[0].mxu0
        %v4988 = vpop.f32.mrb[0].mxu0
        %v4989 = vadd.f32 0.0, %v4988
        %v4990 = vpop.f32.mrb[0].mxu0
        %4991 = vmatprep.mubr.bf16.mxu0 0
        %4992 = vmatmul.mubr.bf16.gmra.mrb[0].mxu0 %v4096
        %v4993 = vpop.f32.mrb[0].mxu0
        %v4994 = vadd.f32 0.0, %v4993
        %v4995 = vpop.f32.mrb[0].mxu0
        %v4996 = vpop.f32.mrb[0].mxu0
        %v4997 = vadd.f32 0.0, %v4996
        %v4998 = vpop.f32.mrb[0].mxu0
        %4999 = vmatprep.mubr.bf16.mxu0 0
        %5000 = vmatmul.mubr.bf16.gmra.mrb[0].mxu0 %v4099
        %v5001 = vpop.f32.mrb[0].mxu0
        %v5002 = vadd.f32 0.0, %v5001
        %v5003 = vpop.f32.mrb[0].mxu0
        %v5004 = vpop.f32.mrb[0].mxu0
        %v5005 = vadd.f32 0.0, %v5004
        %v5006 = vpop.f32.mrb[0].mxu0
        %5007 = vmatprep.mubr.bf16.mxu0 0
        %5008 = vmatmul.mubr.bf16.gmra.mrb[0].mxu0 %v4102
        %v5009 = vpop.f32.mrb[0].mxu0
        %v5010 = vadd.f32 0.0, %v5009
        %v5011 = vpop.f32.mrb[0].mxu0
        %v5012 = vpop.f32.mrb[0].mxu0
        %v5013 = vadd.f32 0.0, %v5012
        %v5014 = vpop.f32.mrb[0].mxu0
        %5015 = vmatprep.mubr.bf16.mxu0 0
        %5016 = vmatmul.mubr.bf16.gmra.mrb[0].mxu0 %v4105
        %v5017 = vpop.f32.mrb[0].mxu0
        %v5018 = vadd.f32 0.0, %v5017
        %v5019 = vpop.f32.mrb[0].mxu0
        %v5020 = vpop.f32.mrb[0].mxu0
        %v5021 = vadd.f32 0.0, %v5020
        %v5022 = vpop.f32.mrb[0].mxu0
        %5023 = vmatprep.mubr.bf16.mxu0 0
        %5024 = vmatmul.mubr.bf16.gmra.mrb[0].mxu0 %v4108
        %v5025 = vpop.f32.mrb[0].mxu0
        %v5026 = vadd.f32 0.0, %v5025
        %v5027 = vpop.f32.mrb[0].mxu0
        %v5028 = vpop.f32.mrb[0].mxu0
        %v5029 = vadd.f32 0.0, %v5028
        %v5030 = vpop.f32.mrb[0].mxu0
        %5031 = vmatprep.mubr.bf16.mxu0 0
        %5032 = vmatmul.mubr.bf16.gmra.mrb[0].mxu0 %v4111
        %v5033 = vpop.f32.mrb[0].mxu0
        %v5034 = vadd.f32 0.0, %v5033
        %v5035 = vpop.f32.mrb[0].mxu0
        %v5036 = vpop.f32.mrb[0].mxu0
        %v5037 = vadd.f32 0.0, %v5036
        %v5038 = vpop.f32.mrb[0].mxu0
        %5039 = vmatprep.mubr.bf16.mxu0 0
        %5040 = vmatmul.mubr.bf16.gmra.mrb[0].mxu0 %v4114
        %v5041 = vpop.f32.mrb[0].mxu0
        %v5042 = vadd.f32 0.0, %v5041
        %v5043 = vpop.f32.mrb[0].mxu0
        %v5044 = vpop.f32.mrb[0].mxu0
        %v5045 = vadd.f32 0.0, %v5044
        %v5046 = vpop.f32.mrb[0].mxu0
        %5047 = vmatprep.mubr.bf16.mxu0 0
        %5048 = vmatmul.mubr.bf16.gmra.mrb[0].mxu0 %v4117
        %v5049 = vpop.f32.mrb[0].mxu0
        %v5050 = vadd.f32 0.0, %v5049
        %v5051 = vpop.f32.mrb[0].mxu0
        %v5052 = vpop.f32.mrb[0].mxu0
        %v5053 = vadd.f32 0.0, %v5052
        %v5054 = vpop.f32.mrb[0].mxu0
        %5055 = vmatprep.mubr.bf16.mxu0 0
        %5056 = vmatmul.mubr.bf16.gmra.mrb[0].mxu0 %v4120
        %v5057 = vpop.f32.mrb[0].mxu0
        %v5058 = vadd.f32 0.0, %v5057
        %v5059 = vpop.f32.mrb[0].mxu0
        %v5060 = vpop.f32.mrb[0].mxu0
        %v5061 = vadd.f32 0.0, %v5060
        %v5062 = vpop.f32.mrb[0].mxu0
        %5063 = vmatprep.mubr.bf16.mxu0 0
        %5064 = vmatmul.mubr.bf16.gmra.mrb[0].mxu0 %v4123
        %v5065 = vpop.f32.mrb[0].mxu0
        %v5066 = vadd.f32 0.0, %v5065
        %v5067 = vpop.f32.mrb[0].mxu0
        %v5068 = vpop.f32.mrb[0].mxu0
        %v5069 = vadd.f32 0.0, %v5068
        %v5070 = vpop.f32.mrb[0].mxu0
        %5071 = vmatprep.mubr.bf16.mxu0 0
        %5072 = vmatmul.mubr.bf16.gmra.mrb[0].mxu0 %v4126
        %v5073 = vpop.f32.mrb[0].mxu0
        %v5074 = vadd.f32 0.0, %v5073
        %v5075 = vpop.f32.mrb[0].mxu0
        %v5076 = vpop.f32.mrb[0].mxu0
        %v5077 = vadd.f32 0.0, %v5076
        %v5078 = vpop.f32.mrb[0].mxu0
        %5079 = vmatprep.mubr.bf16.mxu0 0
        %5080 = vmatmul.mubr.bf16.gmra.mrb[0].mxu0 %v4129
        %v5081 = vpop.f32.mrb[0].mxu0
        %v5082 = vadd.f32 0.0, %v5081
        %v5083 = vpop.f32.mrb[0].mxu0
        %v5084 = vpop.f32.mrb[0].mxu0
        %v5085 = vadd.f32 0.0, %v5084
        %v5086 = vpop.f32.mrb[0].mxu0
        %5087 = vmatprep.mubr.bf16.mxu0 0
        %5088 = vmatmul.mubr.bf16.gmra.mrb[0].mxu0 %v4132
        %v5089 = vpop.f32.mrb[0].mxu0
        %v5090 = vadd.f32 0.0, %v5089
        %v5091 = vpop.f32.mrb[0].mxu0
        %v5092 = vpop.f32.mrb[0].mxu0
        %v5093 = vadd.f32 0.0, %v5092
        %v5094 = vpop.f32.mrb[0].mxu0
        %5095 = vmatprep.mubr.bf16.mxu0 0
        %5096 = vmatmul.mubr.bf16.gmra.mrb[0].mxu0 %v4135
        %v5097 = vpop.f32.mrb[0].mxu0
        %v5098 = vadd.f32 0.0, %v5097
        %v5099 = vpop.f32.mrb[0].mxu0
        %v5100 = vpop.f32.mrb[0].mxu0
        %v5101 = vadd.f32 0.0, %v5100
        %v5102 = vpop.f32.mrb[0].mxu0
        %5103 = vmatprep.mubr.bf16.mxu0 0
        %5104 = vmatmul.mubr.bf16.gmra.mrb[0].mxu0 %v4138
        %v5105 = vpop.f32.mrb[0].mxu0
        %v5106 = vadd.f32 0.0, %v5105
        %v5107 = vpop.f32.mrb[0].mxu0
        %v5108 = vpop.f32.mrb[0].mxu0
        %v5109 = vadd.f32 0.0, %v5108
        %v5110 = vpop.f32.mrb[0].mxu0
        %5111 = vmatprep.mubr.bf16.mxu0 0
        %5112 = vmatmul.mubr.bf16.gmra.mrb[0].mxu0 %v4141
        %v5113 = vpop.f32.mrb[0].mxu0
        %v5114 = vadd.f32 0.0, %v5113
        %v5115 = vpop.f32.mrb[0].mxu0
        %v5116 = vpop.f32.mrb[0].mxu0
        %v5117 = vadd.f32 0.0, %v5116
        %v5118 = vpop.f32.mrb[0].mxu0
        %5119 = vmatprep.mubr.bf16.mxu0 0
        %5120 = vmatmul.mubr.bf16.gmra.mrb[0].mxu0 %v4144
        %v5121 = vpop.f32.mrb[0].mxu0
        %v5122 = vadd.f32 0.0, %v5121
        %v5123 = vpop.f32.mrb[0].mxu0
        %v5124 = vpop.f32.mrb[0].mxu0
        %v5125 = vadd.f32 0.0, %v5124
        %v5126 = vpop.f32.mrb[0].mxu0
        %5127 = vmatprep.mubr.bf16.mxu0 0
        %5128 = vmatmul.mubr.bf16.gmra.mrb[0].mxu0 %v4147
        %v5129 = vpop.f32.mrb[0].mxu0
        %v5130 = vadd.f32 0.0, %v5129
        %v5131 = vpop.f32.mrb[0].mxu0
        %v5132 = vpop.f32.mrb[0].mxu0
        %v5133 = vadd.f32 0.0, %v5132
        %v5134 = vpop.f32.mrb[0].mxu0
        %5135 = vmatprep.mubr.bf16.mxu0 0
        %5136 = vmatmul.mubr.bf16.gmra.mrb[0].mxu0 %v4150
        %v5137 = vpop.f32.mrb[0].mxu0
        %v5138 = vadd.f32 0.0, %v5137
        %v5139 = vpop.f32.mrb[0].mxu0
        %v5140 = vpop.f32.mrb[0].mxu0
        %v5141 = vadd.f32 0.0, %v5140
        %v5142 = vpop.f32.mrb[0].mxu0
        %5143 = vmatprep.mubr.bf16.mxu0 0
        %5144 = vmatmul.mubr.bf16.gmra.mrb[0].mxu0 %v4153
        %v5145 = vpop.f32.mrb[0].mxu0
        %v5146 = vadd.f32 0.0, %v5145
        %v5147 = vpop.f32.mrb[0].mxu0
        %v5148 = vpop.f32.mrb[0].mxu0
        %v5149 = vadd.f32 0.0, %v5148
        %v5150 = vpop.f32.mrb[0].mxu0
        %5151 = vmatprep.mubr.bf16.mxu0 0
        %5152 = vmatmul.mubr.bf16.gmra.mrb[0].mxu0 %v4156
        %v5153 = vpop.f32.mrb[0].mxu0
        %v5154 = vadd.f32 0.0, %v5153
        %v5155 = vpop.f32.mrb[0].mxu0
        %v5156 = vpop.f32.mrb[0].mxu0
        %v5157 = vadd.f32 0.0, %v5156
        %v5158 = vpop.f32.mrb[0].mxu0
        %5159 = vmatprep.mubr.bf16.mxu0 0
        %5160 = vmatmul.mubr.bf16.gmra.mrb[0].mxu0 %v4159
        %v5161 = vpop.f32.mrb[0].mxu0
        %v5162 = vadd.f32 0.0, %v5161
        %v5163 = vpop.f32.mrb[0].mxu0
        %v5164 = vpop.f32.mrb[0].mxu0
        %v5165 = vadd.f32 0.0, %v5164
        %v5166 = vpop.f32.mrb[0].mxu0
        %5167 = vmatprep.mubr.bf16.mxu0 0
        %5168 = vmatmul.mubr.bf16.gmra.mrb[0].mxu0 %v4162
        %v5169 = vpop.f32.mrb[0].mxu0
        %v5170 = vadd.f32 0.0, %v5169
        %v5171 = vpop.f32.mrb[0].mxu0
        %v5172 = vpop.f32.mrb[0].mxu0
        %v5173 = vadd.f32 0.0, %v5172
        %v5174 = vpop.f32.mrb[0].mxu0
        %5175 = vmatprep.mubr.bf16.mxu0 0
        %5176 = vmatmul.mubr.bf16.gmra.mrb[0].mxu0 %v4165
        %v5177 = vpop.f32.mrb[0].mxu0
        %v5178 = vadd.f32 0.0, %v5177
        %v5179 = vpop.f32.mrb[0].mxu0
        %v5180 = vpop.f32.mrb[0].mxu0
        %v5181 = vadd.f32 0.0, %v5180
        %v5182 = vpop.f32.mrb[0].mxu0
        %5183 = vmatprep.mubr.bf16.mxu0 0
        %5184 = vmatmul.mubr.bf16.gmra.mrb[0].mxu0 %v4168
        %v5185 = vpop.f32.mrb[0].mxu0
        %v5186 = vadd.f32 0.0, %v5185
        %v5187 = vpop.f32.mrb[0].mxu0
        %v5188 = vpop.f32.mrb[0].mxu0
        %v5189 = vadd.f32 0.0, %v5188
        %v5190 = vpop.f32.mrb[0].mxu0
        %5191 = vmatprep.mubr.bf16.mxu0 0
        %5192 = vmatmul.mubr.bf16.gmra.mrb[0].mxu0 %v4171
        %v5193 = vpop.f32.mrb[0].mxu0
        %v5194 = vadd.f32 0.0, %v5193
        %v5195 = vpop.f32.mrb[0].mxu0
        %v5196 = vpop.f32.mrb[0].mxu0
        %v5197 = vadd.f32 0.0, %v5196
        %v5198 = vpop.f32.mrb[0].mxu0
        %5199 = vmatprep.mubr.bf16.mxu0 0
        %5200 = vmatmul.mubr.bf16.gmra.mrb[0].mxu0 %v4174
        %v5201 = vpop.f32.mrb[0].mxu0
        %v5202 = vadd.f32 0.0, %v5201
        %v5203 = vpop.f32.mrb[0].mxu0
        %v5204 = vpop.f32.mrb[0].mxu0
        %v5205 = vadd.f32 0.0, %v5204
        %v5206 = vpop.f32.mrb[0].mxu0
        %5207 = vmatprep.mubr.bf16.mxu0 0
        %5208 = vmatmul.mubr.bf16.gmra.mrb[0].mxu0 %v4177
        %v5209 = vpop.f32.mrb[0].mxu0
        %v5210 = vadd.f32 0.0, %v5209
        %v5211 = vpop.f32.mrb[0].mxu0
        %v5212 = vpop.f32.mrb[0].mxu0
        %v5213 = vadd.f32 0.0, %v5212
        %v5214 = vpop.f32.mrb[0].mxu0
        %5215 = vmatprep.mubr.bf16.mxu0 0
        %5216 = vmatmul.mubr.bf16.gmra.mrb[0].mxu0 %v4180
        %v5217 = vpop.f32.mrb[0].mxu0
        %v5218 = vadd.f32 0.0, %v5217
        %v5219 = vpop.f32.mrb[0].mxu0
        %v5220 = vpop.f32.mrb[0].mxu0
        %v5221 = vadd.f32 0.0, %v5220
        %v5222 = vpop.f32.mrb[0].mxu0
        %5223 = vmatprep.mubr.bf16.mxu0 0
        %5224 = vmatmul.mubr.bf16.gmra.mrb[0].mxu0 %v4183
        %v5225 = vpop.f32.mrb[0].mxu0
        %v5226 = vadd.f32 0.0, %v5225
        %v5227 = vpop.f32.mrb[0].mxu0
        %v5228 = vpop.f32.mrb[0].mxu0
        %v5229 = vadd.f32 0.0, %v5228
        %v5230 = vpop.f32.mrb[0].mxu0
        %5231 = vmatprep.mubr.bf16.mxu0 0
        %5232 = vmatmul.mubr.bf16.gmra.mrb[0].mxu0 %v4186
        %v5233 = vpop.f32.mrb[0].mxu0
        %v5234 = vadd.f32 0.0, %v5233
        %v5235 = vpop.f32.mrb[0].mxu0
        %v5236 = vpop.f32.mrb[0].mxu0
        %v5237 = vadd.f32 0.0, %v5236
        %v5238 = vpop.f32.mrb[0].mxu0
        %5239 = vmatprep.mubr.bf16.mxu0 0
        %5240 = vmatmul.mubr.bf16.gmra.mrb[0].mxu0 %v4189
        %v5241 = vpop.f32.mrb[0].mxu0
        %v5242 = vadd.f32 0.0, %v5241
        %v5243 = vpop.f32.mrb[0].mxu0
        %v5244 = vpop.f32.mrb[0].mxu0
        %v5245 = vadd.f32 0.0, %v5244
        %v5246 = vpop.f32.mrb[0].mxu0
        %5247 = vdwg.mxu0
        %v5248 = vand.u32 %v1122, 31
        %vm5249 = vcmp.eq.s32.totalorder %v2041, %v5248
        %vm5250 = vcmp.eq.s32.totalorder %v2042, %v5248
        %vm5251 = vcmp.eq.s32.totalorder %v2043, %v5248
        %vm5252 = vcmp.eq.s32.totalorder %v2044, %v5248
        %v5253 = vsel %vm5249, 1, 0
        %v5254 = vsel %vm5250, 1, 0
        %v5255 = vsel %vm5251, 1, 0
        %v5256 = vsel %vm5252, 1, 0
        %v5257 = vcvt.s32.f32 %v5253
        %v5258 = vcvt.s32.f32 %v5254
        %v5259 = vcvt.s32.f32 %v5255
        %v5260 = vcvt.s32.f32 %v5256
        %v5265 = vcombine.high %v5257, %v5257
        %v5267 = vunpack.c.l.s4 1966171168
        %v5268 = vunpack.c.0.s8 %v5267
        %v5269 = vlaneseq
        %v5270 = vshrl.u32 %v5269, 7
        %v5271 = vsub.s32 %v5268, %v5270
        %v5272 = vrot.slane %v5257, %v5271
        %v5274 = vunpack.c.l.s4 1966171168
        %v5275 = vunpack.c.0.s8 %v5274
        %v5276 = vlaneseq
        %v5277 = vshrl.u32 %v5276, 7
        %v5278 = vsub.s32 %v5275, %v5277
        %v5279 = vrot.slane %v5265, %v5278
        %v5280 = vcombine.high %v5272, %v5272
        %v5281 = vcombine.high %v5279, %v5279
        %v5283 = vunpack.c.l.s4 1966171168
        %v5284 = vunpack.c.0.s8 %v5283
        %v5285 = vlaneseq
        %v5286 = vshrl.u32 %v5285, 7
        %v5287 = vsub.s32 %v5284, %v5286
        %v5288 = vrot.slane %v5272, %v5287
        %v5290 = vunpack.c.l.s4 1966171168
        %v5291 = vunpack.c.0.s8 %v5290
        %v5292 = vlaneseq
        %v5293 = vshrl.u32 %v5292, 7
        %v5294 = vsub.s32 %v5291, %v5293
        %v5295 = vrot.slane %v5279, %v5294
        %v5297 = vunpack.c.l.s4 1966171168
        %v5298 = vunpack.c.0.s8 %v5297
        %v5299 = vlaneseq
        %v5300 = vshrl.u32 %v5299, 7
        %v5301 = vsub.s32 %v5298, %v5300
        %v5302 = vrot.slane %v5280, %v5301
        %v5304 = vunpack.c.l.s4 1966171168
        %v5305 = vunpack.c.0.s8 %v5304
        %v5306 = vlaneseq
        %v5307 = vshrl.u32 %v5306, 7
        %v5308 = vsub.s32 %v5305, %v5307
        %v5309 = vrot.slane %v5281, %v5308
        %v5310 = vcombine.high %v5288, %v5288
        %v5311 = vcombine.high %v5295, %v5295
        %v5312 = vcombine.high %v5302, %v5302
        %v5313 = vcombine.high %v5309, %v5309
        %v5314 = vcombine.high %v5258, %v5258
        %v5316 = vunpack.c.l.s4 1966171168
        %v5317 = vunpack.c.0.s8 %v5316
        %v5318 = vlaneseq
        %v5319 = vshrl.u32 %v5318, 7
        %v5320 = vsub.s32 %v5317, %v5319
        %v5321 = vrot.slane %v5258, %v5320
        %v5323 = vunpack.c.l.s4 1966171168
        %v5324 = vunpack.c.0.s8 %v5323
        %v5325 = vlaneseq
        %v5326 = vshrl.u32 %v5325, 7
        %v5327 = vsub.s32 %v5324, %v5326
        %v5328 = vrot.slane %v5314, %v5327
        %v5329 = vcombine.high %v5321, %v5321
        %v5330 = vcombine.high %v5328, %v5328
        %v5332 = vunpack.c.l.s4 1966171168
        %v5333 = vunpack.c.0.s8 %v5332
        %v5334 = vlaneseq
        %v5335 = vshrl.u32 %v5334, 7
        %v5336 = vsub.s32 %v5333, %v5335
        %v5337 = vrot.slane %v5321, %v5336
        %v5339 = vunpack.c.l.s4 1966171168
        %v5340 = vunpack.c.0.s8 %v5339
        %v5341 = vlaneseq
        %v5342 = vshrl.u32 %v5341, 7
        %v5343 = vsub.s32 %v5340, %v5342
        %v5344 = vrot.slane %v5328, %v5343
        %v5346 = vunpack.c.l.s4 1966171168
        %v5347 = vunpack.c.0.s8 %v5346
        %v5348 = vlaneseq
        %v5349 = vshrl.u32 %v5348, 7
        %v5350 = vsub.s32 %v5347, %v5349
        %v5351 = vrot.slane %v5329, %v5350
        %v5353 = vunpack.c.l.s4 1966171168
        %v5354 = vunpack.c.0.s8 %v5353
        %v5355 = vlaneseq
        %v5356 = vshrl.u32 %v5355, 7
        %v5357 = vsub.s32 %v5354, %v5356
        %v5358 = vrot.slane %v5330, %v5357
        %v5359 = vcombine.high %v5337, %v5337
        %v5360 = vcombine.high %v5344, %v5344
        %v5361 = vcombine.high %v5351, %v5351
        %v5362 = vcombine.high %v5358, %v5358
        %v5363 = vcombine.high %v5259, %v5259
        %v5365 = vunpack.c.l.s4 1966171168
        %v5366 = vunpack.c.0.s8 %v5365
        %v5367 = vlaneseq
        %v5368 = vshrl.u32 %v5367, 7
        %v5369 = vsub.s32 %v5366, %v5368
        %v5370 = vrot.slane %v5259, %v5369
        %v5372 = vunpack.c.l.s4 1966171168
        %v5373 = vunpack.c.0.s8 %v5372
        %v5374 = vlaneseq
        %v5375 = vshrl.u32 %v5374, 7
        %v5376 = vsub.s32 %v5373, %v5375
        %v5377 = vrot.slane %v5363, %v5376
        %v5378 = vcombine.high %v5370, %v5370
        %v5379 = vcombine.high %v5377, %v5377
        %v5381 = vunpack.c.l.s4 1966171168
        %v5382 = vunpack.c.0.s8 %v5381
        %v5383 = vlaneseq
        %v5384 = vshrl.u32 %v5383, 7
        %v5385 = vsub.s32 %v5382, %v5384
        %v5386 = vrot.slane %v5370, %v5385
        %v5388 = vunpack.c.l.s4 1966171168
        %v5389 = vunpack.c.0.s8 %v5388
        %v5390 = vlaneseq
        %v5391 = vshrl.u32 %v5390, 7
        %v5392 = vsub.s32 %v5389, %v5391
        %v5393 = vrot.slane %v5377, %v5392
        %v5395 = vunpack.c.l.s4 1966171168
        %v5396 = vunpack.c.0.s8 %v5395
        %v5397 = vlaneseq
        %v5398 = vshrl.u32 %v5397, 7
        %v5399 = vsub.s32 %v5396, %v5398
        %v5400 = vrot.slane %v5378, %v5399
        %v5402 = vunpack.c.l.s4 1966171168
        %v5403 = vunpack.c.0.s8 %v5402
        %v5404 = vlaneseq
        %v5405 = vshrl.u32 %v5404, 7
        %v5406 = vsub.s32 %v5403, %v5405
        %v5407 = vrot.slane %v5379, %v5406
        %v5408 = vcombine.high %v5386, %v5386
        %v5409 = vcombine.high %v5393, %v5393
        %v5410 = vcombine.high %v5400, %v5400
        %v5411 = vcombine.high %v5407, %v5407
        %v5412 = vcombine.high %v5260, %v5260
        %v5414 = vunpack.c.l.s4 1966171168
        %v5415 = vunpack.c.0.s8 %v5414
        %v5416 = vlaneseq
        %v5417 = vshrl.u32 %v5416, 7
        %v5418 = vsub.s32 %v5415, %v5417
        %v5419 = vrot.slane %v5260, %v5418
        %v5421 = vunpack.c.l.s4 1966171168
        %v5422 = vunpack.c.0.s8 %v5421
        %v5423 = vlaneseq
        %v5424 = vshrl.u32 %v5423, 7
        %v5425 = vsub.s32 %v5422, %v5424
        %v5426 = vrot.slane %v5412, %v5425
        %v5427 = vcombine.high %v5419, %v5419
        %v5428 = vcombine.high %v5426, %v5426
        %v5430 = vunpack.c.l.s4 1966171168
        %v5431 = vunpack.c.0.s8 %v5430
        %v5432 = vlaneseq
        %v5433 = vshrl.u32 %v5432, 7
        %v5434 = vsub.s32 %v5431, %v5433
        %v5435 = vrot.slane %v5419, %v5434
        %v5437 = vunpack.c.l.s4 1966171168
        %v5438 = vunpack.c.0.s8 %v5437
        %v5439 = vlaneseq
        %v5440 = vshrl.u32 %v5439, 7
        %v5441 = vsub.s32 %v5438, %v5440
        %v5442 = vrot.slane %v5426, %v5441
        %v5444 = vunpack.c.l.s4 1966171168
        %v5445 = vunpack.c.0.s8 %v5444
        %v5446 = vlaneseq
        %v5447 = vshrl.u32 %v5446, 7
        %v5448 = vsub.s32 %v5445, %v5447
        %v5449 = vrot.slane %v5427, %v5448
        %v5451 = vunpack.c.l.s4 1966171168
        %v5452 = vunpack.c.0.s8 %v5451
        %v5453 = vlaneseq
        %v5454 = vshrl.u32 %v5453, 7
        %v5455 = vsub.s32 %v5452, %v5454
        %v5456 = vrot.slane %v5428, %v5455
        %v5457 = vcombine.high %v5435, %v5435
        %v5458 = vcombine.high %v5442, %v5442
        %v5459 = vcombine.high %v5449, %v5449
        %v5460 = vcombine.high %v5456, %v5456
        %v5461 = vlaneseq
        %v5462 = vshrl.u32 %v5461, 7
        %v5463 = vsub.s32 0, %v5462
        %v5464 = vrot.slane %v5288, %v5463
        %v5465 = vlaneseq
        %v5466 = vshrl.u32 %v5465, 7
        %v5467 = vsub.s32 0, %v5466
        %v5468 = vrot.slane %v5302, %v5467
        %v5469 = vlaneseq
        %v5470 = vshrl.u32 %v5469, 7
        %v5471 = vsub.s32 0, %v5470
        %v5472 = vrot.slane %v5310, %v5471
        %v5473 = vlaneseq
        %v5474 = vshrl.u32 %v5473, 7
        %v5475 = vsub.s32 0, %v5474
        %v5476 = vrot.slane %v5312, %v5475
        %v5477 = vlaneseq
        %v5478 = vshrl.u32 %v5477, 7
        %v5479 = vsub.s32 0, %v5478
        %v5480 = vrot.slane %v5295, %v5479
        %v5481 = vlaneseq
        %v5482 = vshrl.u32 %v5481, 7
        %v5483 = vsub.s32 0, %v5482
        %v5484 = vrot.slane %v5309, %v5483
        %v5485 = vlaneseq
        %v5486 = vshrl.u32 %v5485, 7
        %v5487 = vsub.s32 0, %v5486
        %v5488 = vrot.slane %v5311, %v5487
        %v5489 = vlaneseq
        %v5490 = vshrl.u32 %v5489, 7
        %v5491 = vsub.s32 0, %v5490
        %v5492 = vrot.slane %v5313, %v5491
        %v5493 = vlaneseq
        %v5494 = vshrl.u32 %v5493, 7
        %v5495 = vsub.s32 0, %v5494
        %v5496 = vrot.slane %v5337, %v5495
        %v5497 = vlaneseq
        %v5498 = vshrl.u32 %v5497, 7
        %v5499 = vsub.s32 0, %v5498
        %v5500 = vrot.slane %v5351, %v5499
        %v5501 = vlaneseq
        %v5502 = vshrl.u32 %v5501, 7
        %v5503 = vsub.s32 0, %v5502
        %v5504 = vrot.slane %v5359, %v5503
        %v5505 = vlaneseq
        %v5506 = vshrl.u32 %v5505, 7
        %v5507 = vsub.s32 0, %v5506
        %v5508 = vrot.slane %v5361, %v5507
        %v5509 = vlaneseq
        %v5510 = vshrl.u32 %v5509, 7
        %v5511 = vsub.s32 0, %v5510
        %v5512 = vrot.slane %v5344, %v5511
        %v5513 = vlaneseq
        %v5514 = vshrl.u32 %v5513, 7
        %v5515 = vsub.s32 0, %v5514
        %v5516 = vrot.slane %v5358, %v5515
        %v5517 = vlaneseq
        %v5518 = vshrl.u32 %v5517, 7
        %v5519 = vsub.s32 0, %v5518
        %v5520 = vrot.slane %v5360, %v5519
        %v5521 = vlaneseq
        %v5522 = vshrl.u32 %v5521, 7
        %v5523 = vsub.s32 0, %v5522
        %v5524 = vrot.slane %v5362, %v5523
        %v5525 = vlaneseq
        %v5526 = vshrl.u32 %v5525, 7
        %v5527 = vsub.s32 0, %v5526
        %v5528 = vrot.slane %v5386, %v5527
        %v5529 = vlaneseq
        %v5530 = vshrl.u32 %v5529, 7
        %v5531 = vsub.s32 0, %v5530
        %v5532 = vrot.slane %v5400, %v5531
        %v5533 = vlaneseq
        %v5534 = vshrl.u32 %v5533, 7
        %v5535 = vsub.s32 0, %v5534
        %v5536 = vrot.slane %v5408, %v5535
        %v5537 = vlaneseq
        %v5538 = vshrl.u32 %v5537, 7
        %v5539 = vsub.s32 0, %v5538
        %v5540 = vrot.slane %v5410, %v5539
        %v5541 = vlaneseq
        %v5542 = vshrl.u32 %v5541, 7
        %v5543 = vsub.s32 0, %v5542
        %v5544 = vrot.slane %v5393, %v5543
        %v5545 = vlaneseq
        %v5546 = vshrl.u32 %v5545, 7
        %v5547 = vsub.s32 0, %v5546
        %v5548 = vrot.slane %v5407, %v5547
        %v5549 = vlaneseq
        %v5550 = vshrl.u32 %v5549, 7
        %v5551 = vsub.s32 0, %v5550
        %v5552 = vrot.slane %v5409, %v5551
        %v5553 = vlaneseq
        %v5554 = vshrl.u32 %v5553, 7
        %v5555 = vsub.s32 0, %v5554
        %v5556 = vrot.slane %v5411, %v5555
        %v5557 = vlaneseq
        %v5558 = vshrl.u32 %v5557, 7
        %v5559 = vsub.s32 0, %v5558
        %v5560 = vrot.slane %v5435, %v5559
        %v5561 = vlaneseq
        %v5562 = vshrl.u32 %v5561, 7
        %v5563 = vsub.s32 0, %v5562
        %v5564 = vrot.slane %v5449, %v5563
        %v5565 = vlaneseq
        %v5566 = vshrl.u32 %v5565, 7
        %v5567 = vsub.s32 0, %v5566
        %v5568 = vrot.slane %v5457, %v5567
        %v5569 = vlaneseq
        %v5570 = vshrl.u32 %v5569, 7
        %v5571 = vsub.s32 0, %v5570
        %v5572 = vrot.slane %v5459, %v5571
        %v5573 = vlaneseq
        %v5574 = vshrl.u32 %v5573, 7
        %v5575 = vsub.s32 0, %v5574
        %v5576 = vrot.slane %v5442, %v5575
        %v5577 = vlaneseq
        %v5578 = vshrl.u32 %v5577, 7
        %v5579 = vsub.s32 0, %v5578
        %v5580 = vrot.slane %v5456, %v5579
        %v5581 = vlaneseq
        %v5582 = vshrl.u32 %v5581, 7
        %v5583 = vsub.s32 0, %v5582
        %v5584 = vrot.slane %v5458, %v5583
        %v5585 = vlaneseq
        %v5586 = vshrl.u32 %v5585, 7
        %v5587 = vsub.s32 0, %v5586
        %v5588 = vrot.slane %v5460, %v5587
        %v5621 = vmul.f32 %v4226, %v5464
        %v5622 = vmul.f32 %v4229, %v5464
        %v5623 = vmul.f32 %v4234, %v5464
        %v5624 = vmul.f32 %v4237, %v5464
        %v5625 = vmul.f32 %v4242, %v5464
        %v5626 = vmul.f32 %v4245, %v5464
        %v5627 = vmul.f32 %v4250, %v5464
        %v5628 = vmul.f32 %v4253, %v5464
        %v5629 = vmul.f32 %v4258, %v5468
        %v5630 = vmul.f32 %v4261, %v5468
        %v5631 = vmul.f32 %v4266, %v5468
        %v5632 = vmul.f32 %v4269, %v5468
        %v5633 = vmul.f32 %v4274, %v5468
        %v5634 = vmul.f32 %v4277, %v5468
        %v5635 = vmul.f32 %v4282, %v5468
        %v5636 = vmul.f32 %v4285, %v5468
        %v5637 = vmul.f32 %v4290, %v5472
        %v5638 = vmul.f32 %v4293, %v5472
        %v5639 = vmul.f32 %v4298, %v5472
        %v5640 = vmul.f32 %v4301, %v5472
        %v5641 = vmul.f32 %v4306, %v5472
        %v5642 = vmul.f32 %v4309, %v5472
        %v5643 = vmul.f32 %v4314, %v5472
        %v5644 = vmul.f32 %v4317, %v5472
        %v5645 = vmul.f32 %v4322, %v5476
        %v5646 = vmul.f32 %v4325, %v5476
        %v5647 = vmul.f32 %v4330, %v5476
        %v5648 = vmul.f32 %v4333, %v5476
        %v5649 = vmul.f32 %v4338, %v5476
        %v5650 = vmul.f32 %v4341, %v5476
        %v5651 = vmul.f32 %v4346, %v5476
        %v5652 = vmul.f32 %v4349, %v5476
        %v5653 = vmul.f32 %v4354, %v5480
        %v5654 = vmul.f32 %v4357, %v5480
        %v5655 = vmul.f32 %v4362, %v5480
        %v5656 = vmul.f32 %v4365, %v5480
        %v5657 = vmul.f32 %v4370, %v5480
        %v5658 = vmul.f32 %v4373, %v5480
        %v5659 = vmul.f32 %v4378, %v5480
        %v5660 = vmul.f32 %v4381, %v5480
        %v5661 = vmul.f32 %v4386, %v5484
        %v5662 = vmul.f32 %v4389, %v5484
        %v5663 = vmul.f32 %v4394, %v5484
        %v5664 = vmul.f32 %v4397, %v5484
        %v5665 = vmul.f32 %v4402, %v5484
        %v5666 = vmul.f32 %v4405, %v5484
        %v5667 = vmul.f32 %v4410, %v5484
        %v5668 = vmul.f32 %v4413, %v5484
        %v5669 = vmul.f32 %v4418, %v5488
        %v5670 = vmul.f32 %v4421, %v5488
        %v5671 = vmul.f32 %v4426, %v5488
        %v5672 = vmul.f32 %v4429, %v5488
        %v5673 = vmul.f32 %v4434, %v5488
        %v5674 = vmul.f32 %v4437, %v5488
        %v5675 = vmul.f32 %v4442, %v5488
        %v5676 = vmul.f32 %v4445, %v5488
        %v5677 = vmul.f32 %v4450, %v5492
        %v5678 = vmul.f32 %v4453, %v5492
        %v5679 = vmul.f32 %v4458, %v5492
        %v5680 = vmul.f32 %v4461, %v5492
        %v5681 = vmul.f32 %v4466, %v5492
        %v5682 = vmul.f32 %v4469, %v5492
        %v5683 = vmul.f32 %v4474, %v5492
        %v5684 = vmul.f32 %v4477, %v5492
        %v5685 = vmul.f32 %v4482, %v5496
        %v5686 = vmul.f32 %v4485, %v5496
        %v5687 = vmul.f32 %v4490, %v5496
        %v5688 = vmul.f32 %v4493, %v5496
        %v5689 = vmul.f32 %v4498, %v5496
        %v5690 = vmul.f32 %v4501, %v5496
        %v5691 = vmul.f32 %v4506, %v5496
        %v5692 = vmul.f32 %v4509, %v5496
        %v5693 = vmul.f32 %v4514, %v5500
        %v5694 = vmul.f32 %v4517, %v5500
        %v5695 = vmul.f32 %v4522, %v5500
        %v5696 = vmul.f32 %v4525, %v5500
        %v5697 = vmul.f32 %v4530, %v5500
        %v5698 = vmul.f32 %v4533, %v5500
        %v5699 = vmul.f32 %v4538, %v5500
        %v5700 = vmul.f32 %v4541, %v5500
        %v5701 = vmul.f32 %v4546, %v5504
        %v5702 = vmul.f32 %v4549, %v5504
        %v5703 = vmul.f32 %v4554, %v5504
        %v5704 = vmul.f32 %v4557, %v5504
        %v5705 = vmul.f32 %v4562, %v5504
        %v5706 = vmul.f32 %v4565, %v5504
        %v5707 = vmul.f32 %v4570, %v5504
        %v5708 = vmul.f32 %v4573, %v5504
        %v5709 = vmul.f32 %v4578, %v5508
        %v5710 = vmul.f32 %v4581, %v5508
        %v5711 = vmul.f32 %v4586, %v5508
        %v5712 = vmul.f32 %v4589, %v5508
        %v5713 = vmul.f32 %v4594, %v5508
        %v5714 = vmul.f32 %v4597, %v5508
        %v5715 = vmul.f32 %v4602, %v5508
        %v5716 = vmul.f32 %v4605, %v5508
        %v5717 = vmul.f32 %v4610, %v5512
        %v5718 = vmul.f32 %v4613, %v5512
        %v5719 = vmul.f32 %v4618, %v5512
        %v5720 = vmul.f32 %v4621, %v5512
        %v5721 = vmul.f32 %v4626, %v5512
        %v5722 = vmul.f32 %v4629, %v5512
        %v5723 = vmul.f32 %v4634, %v5512
        %v5724 = vmul.f32 %v4637, %v5512
        %v5725 = vmul.f32 %v4642, %v5516
        %v5726 = vmul.f32 %v4645, %v5516
        %v5727 = vmul.f32 %v4650, %v5516
        %v5728 = vmul.f32 %v4653, %v5516
        %v5729 = vmul.f32 %v4658, %v5516
        %v5730 = vmul.f32 %v4661, %v5516
        %v5731 = vmul.f32 %v4666, %v5516
        %v5732 = vmul.f32 %v4669, %v5516
        %v5733 = vmul.f32 %v4674, %v5520
        %v5734 = vmul.f32 %v4677, %v5520
        %v5735 = vmul.f32 %v4682, %v5520
        %v5736 = vmul.f32 %v4685, %v5520
        %v5737 = vmul.f32 %v4690, %v5520
        %v5738 = vmul.f32 %v4693, %v5520
        %v5739 = vmul.f32 %v4698, %v5520
        %v5740 = vmul.f32 %v4701, %v5520
        %v5741 = vmul.f32 %v4706, %v5524
        %v5742 = vmul.f32 %v4709, %v5524
        %v5743 = vmul.f32 %v4714, %v5524
        %v5744 = vmul.f32 %v4717, %v5524
        %v5745 = vmul.f32 %v4722, %v5524
        %v5746 = vmul.f32 %v4725, %v5524
        %v5747 = vmul.f32 %v4730, %v5524
        %v5748 = vmul.f32 %v4733, %v5524
        %v5749 = vmul.f32 %v4738, %v5528
        %v5750 = vmul.f32 %v4741, %v5528
        %v5751 = vmul.f32 %v4746, %v5528
        %v5752 = vmul.f32 %v4749, %v5528
        %v5753 = vmul.f32 %v4754, %v5528
        %v5754 = vmul.f32 %v4757, %v5528
        %v5755 = vmul.f32 %v4762, %v5528
        %v5756 = vmul.f32 %v4765, %v5528
        %v5757 = vmul.f32 %v4770, %v5532
        %v5758 = vmul.f32 %v4773, %v5532
        %v5759 = vmul.f32 %v4778, %v5532
        %v5760 = vmul.f32 %v4781, %v5532
        %v5761 = vmul.f32 %v4786, %v5532
        %v5762 = vmul.f32 %v4789, %v5532
        %v5763 = vmul.f32 %v4794, %v5532
        %v5764 = vmul.f32 %v4797, %v5532
        %v5765 = vmul.f32 %v4802, %v5536
        %v5766 = vmul.f32 %v4805, %v5536
        %v5767 = vmul.f32 %v4810, %v5536
        %v5768 = vmul.f32 %v4813, %v5536
        %v5769 = vmul.f32 %v4818, %v5536
        %v5770 = vmul.f32 %v4821, %v5536
        %v5771 = vmul.f32 %v4826, %v5536
        %v5772 = vmul.f32 %v4829, %v5536
        %v5773 = vmul.f32 %v4834, %v5540
        %v5774 = vmul.f32 %v4837, %v5540
        %v5775 = vmul.f32 %v4842, %v5540
        %v5776 = vmul.f32 %v4845, %v5540
        %v5777 = vmul.f32 %v4850, %v5540
        %v5778 = vmul.f32 %v4853, %v5540
        %v5779 = vmul.f32 %v4858, %v5540
        %v5780 = vmul.f32 %v4861, %v5540
        %v5781 = vmul.f32 %v4866, %v5544
        %v5782 = vmul.f32 %v4869, %v5544
        %v5783 = vmul.f32 %v4874, %v5544
        %v5784 = vmul.f32 %v4877, %v5544
        %v5785 = vmul.f32 %v4882, %v5544
        %v5786 = vmul.f32 %v4885, %v5544
        %v5787 = vmul.f32 %v4890, %v5544
        %v5788 = vmul.f32 %v4893, %v5544
        %v5789 = vmul.f32 %v4898, %v5548
        %v5790 = vmul.f32 %v4901, %v5548
        %v5791 = vmul.f32 %v4906, %v5548
        %v5792 = vmul.f32 %v4909, %v5548
        %v5793 = vmul.f32 %v4914, %v5548
        %v5794 = vmul.f32 %v4917, %v5548
        %v5795 = vmul.f32 %v4922, %v5548
        %v5796 = vmul.f32 %v4925, %v5548
        %v5797 = vmul.f32 %v4930, %v5552
        %v5798 = vmul.f32 %v4933, %v5552
        %v5799 = vmul.f32 %v4938, %v5552
        %v5800 = vmul.f32 %v4941, %v5552
        %v5801 = vmul.f32 %v4946, %v5552
        %v5802 = vmul.f32 %v4949, %v5552
        %v5803 = vmul.f32 %v4954, %v5552
        %v5804 = vmul.f32 %v4957, %v5552
        %v5805 = vmul.f32 %v4962, %v5556
        %v5806 = vmul.f32 %v4965, %v5556
        %v5807 = vmul.f32 %v4970, %v5556
        %v5808 = vmul.f32 %v4973, %v5556
        %v5809 = vmul.f32 %v4978, %v5556
        %v5810 = vmul.f32 %v4981, %v5556
        %v5811 = vmul.f32 %v4986, %v5556
        %v5812 = vmul.f32 %v4989, %v5556
        %v5813 = vmul.f32 %v4994, %v5560
        %v5814 = vmul.f32 %v4997, %v5560
        %v5815 = vmul.f32 %v5002, %v5560
        %v5816 = vmul.f32 %v5005, %v5560
        %v5817 = vmul.f32 %v5010, %v5560
        %v5818 = vmul.f32 %v5013, %v5560
        %v5819 = vmul.f32 %v5018, %v5560
        %v5820 = vmul.f32 %v5021, %v5560
        %v5821 = vmul.f32 %v5026, %v5564
        %v5822 = vmul.f32 %v5029, %v5564
        %v5823 = vmul.f32 %v5034, %v5564
        %v5824 = vmul.f32 %v5037, %v5564
        %v5825 = vmul.f32 %v5042, %v5564
        %v5826 = vmul.f32 %v5045, %v5564
        %v5827 = vmul.f32 %v5050, %v5564
        %v5828 = vmul.f32 %v5053, %v5564
        %v5829 = vmul.f32 %v5058, %v5568
        %v5830 = vmul.f32 %v5061, %v5568
        %v5831 = vmul.f32 %v5066, %v5568
        %v5832 = vmul.f32 %v5069, %v5568
        %v5833 = vmul.f32 %v5074, %v5568
        %v5834 = vmul.f32 %v5077, %v5568
        %v5835 = vmul.f32 %v5082, %v5568
        %v5836 = vmul.f32 %v5085, %v5568
        %v5837 = vmul.f32 %v5090, %v5572
        %v5838 = vmul.f32 %v5093, %v5572
        %v5839 = vmul.f32 %v5098, %v5572
        %v5840 = vmul.f32 %v5101, %v5572
        %v5841 = vmul.f32 %v5106, %v5572
        %v5842 = vmul.f32 %v5109, %v5572
        %v5843 = vmul.f32 %v5114, %v5572
        %v5844 = vmul.f32 %v5117, %v5572
        %v5845 = vmul.f32 %v5122, %v5576
        %v5846 = vmul.f32 %v5125, %v5576
        %v5847 = vmul.f32 %v5130, %v5576
        %v5848 = vmul.f32 %v5133, %v5576
        %v5849 = vmul.f32 %v5138, %v5576
        %v5850 = vmul.f32 %v5141, %v5576
        %v5851 = vmul.f32 %v5146, %v5576
        %v5852 = vmul.f32 %v5149, %v5576
        %v5853 = vmul.f32 %v5154, %v5580
        %v5854 = vmul.f32 %v5157, %v5580
        %v5855 = vmul.f32 %v5162, %v5580
        %v5856 = vmul.f32 %v5165, %v5580
        %v5857 = vmul.f32 %v5170, %v5580
        %v5858 = vmul.f32 %v5173, %v5580
        %v5859 = vmul.f32 %v5178, %v5580
        %v5860 = vmul.f32 %v5181, %v5580
        %v5861 = vmul.f32 %v5186, %v5584
        %v5862 = vmul.f32 %v5189, %v5584
        %v5863 = vmul.f32 %v5194, %v5584
        %v5864 = vmul.f32 %v5197, %v5584
        %v5865 = vmul.f32 %v5202, %v5584
        %v5866 = vmul.f32 %v5205, %v5584
        %v5867 = vmul.f32 %v5210, %v5584
        %v5868 = vmul.f32 %v5213, %v5584
        %v5869 = vmul.f32 %v5218, %v5588
        %v5870 = vmul.f32 %v5221, %v5588
        %v5871 = vmul.f32 %v5226, %v5588
        %v5872 = vmul.f32 %v5229, %v5588
        %v5873 = vmul.f32 %v5234, %v5588
        %v5874 = vmul.f32 %v5237, %v5588
        %v5875 = vmul.f32 %v5242, %v5588
        %v5876 = vmul.f32 %v5245, %v5588
        %v5877 = vsel %vm3806, %v5621, 0.0
        %v5878 = vsel %vm3806, %v5629, 0.0
        %v5879 = vadd.f32 %v5877, %v5878
        %v5880 = vsel %vm3806, %v5637, 0.0
        %v5881 = vadd.f32 %v5879, %v5880
        %v5882 = vsel %vm3806, %v5645, 0.0
        %v5883 = vadd.f32 %v5881, %v5882
        %v5884 = vsel %vm3806, %v5653, 0.0
        %v5885 = vadd.f32 %v5883, %v5884
        %v5886 = vsel %vm3806, %v5661, 0.0
        %v5887 = vadd.f32 %v5885, %v5886
        %v5888 = vsel %vm3806, %v5669, 0.0
        %v5889 = vadd.f32 %v5887, %v5888
        %v5890 = vsel %vm3806, %v5677, 0.0
        %v5891 = vadd.f32 %v5889, %v5890
        %v5892 = vsel %vm3806, %v5685, 0.0
        %v5893 = vadd.f32 %v5891, %v5892
        %v5894 = vsel %vm3806, %v5693, 0.0
        %v5895 = vadd.f32 %v5893, %v5894
        %v5896 = vsel %vm3806, %v5701, 0.0
        %v5897 = vadd.f32 %v5895, %v5896
        %v5898 = vsel %vm3806, %v5709, 0.0
        %v5899 = vadd.f32 %v5897, %v5898
        %v5900 = vsel %vm3806, %v5717, 0.0
        %v5901 = vadd.f32 %v5899, %v5900
        %v5902 = vsel %vm3806, %v5725, 0.0
        %v5903 = vadd.f32 %v5901, %v5902
        %v5904 = vsel %vm3806, %v5733, 0.0
        %v5905 = vadd.f32 %v5903, %v5904
        %v5906 = vsel %vm3806, %v5741, 0.0
        %v5907 = vadd.f32 %v5905, %v5906
        %v5908 = vsel %vm3806, %v5749, 0.0
        %v5909 = vadd.f32 %v5907, %v5908
        %v5910 = vsel %vm3806, %v5757, 0.0
        %v5911 = vadd.f32 %v5909, %v5910
        %v5912 = vsel %vm3806, %v5765, 0.0
        %v5913 = vadd.f32 %v5911, %v5912
        %v5914 = vsel %vm3806, %v5773, 0.0
        %v5915 = vadd.f32 %v5913, %v5914
        %v5916 = vsel %vm3806, %v5781, 0.0
        %v5917 = vadd.f32 %v5915, %v5916
        %v5918 = vsel %vm3806, %v5789, 0.0
        %v5919 = vadd.f32 %v5917, %v5918
        %v5920 = vsel %vm3806, %v5797, 0.0
        %v5921 = vadd.f32 %v5919, %v5920
        %v5922 = vsel %vm3806, %v5805, 0.0
        %v5923 = vadd.f32 %v5921, %v5922
        %v5924 = vsel %vm3806, %v5813, 0.0
        %v5925 = vadd.f32 %v5923, %v5924
        %v5926 = vsel %vm3806, %v5821, 0.0
        %v5927 = vadd.f32 %v5925, %v5926
        %v5928 = vsel %vm3806, %v5829, 0.0
        %v5929 = vadd.f32 %v5927, %v5928
        %v5930 = vsel %vm3806, %v5837, 0.0
        %v5931 = vadd.f32 %v5929, %v5930
        %v5932 = vsel %vm3806, %v5845, 0.0
        %v5933 = vadd.f32 %v5931, %v5932
        %v5934 = vsel %vm3806, %v5853, 0.0
        %v5935 = vadd.f32 %v5933, %v5934
        %v5936 = vsel %vm3806, %v5861, 0.0
        %v5937 = vadd.f32 %v5935, %v5936
        %v5938 = vsel %vm3806, %v5869, 0.0
        %v5939 = vadd.f32 %v5937, %v5938
        %v5940 = vsel %vm3806, %v5622, 0.0
        %v5941 = vsel %vm3806, %v5630, 0.0
        %v5942 = vadd.f32 %v5940, %v5941
        %v5943 = vsel %vm3806, %v5638, 0.0
        %v5944 = vadd.f32 %v5942, %v5943
        %v5945 = vsel %vm3806, %v5646, 0.0
        %v5946 = vadd.f32 %v5944, %v5945
        %v5947 = vsel %vm3806, %v5654, 0.0
        %v5948 = vadd.f32 %v5946, %v5947
        %v5949 = vsel %vm3806, %v5662, 0.0
        %v5950 = vadd.f32 %v5948, %v5949
        %v5951 = vsel %vm3806, %v5670, 0.0
        %v5952 = vadd.f32 %v5950, %v5951
        %v5953 = vsel %vm3806, %v5678, 0.0
        %v5954 = vadd.f32 %v5952, %v5953
        %v5955 = vsel %vm3806, %v5686, 0.0
        %v5956 = vadd.f32 %v5954, %v5955
        %v5957 = vsel %vm3806, %v5694, 0.0
        %v5958 = vadd.f32 %v5956, %v5957
        %v5959 = vsel %vm3806, %v5702, 0.0
        %v5960 = vadd.f32 %v5958, %v5959
        %v5961 = vsel %vm3806, %v5710, 0.0
        %v5962 = vadd.f32 %v5960, %v5961
        %v5963 = vsel %vm3806, %v5718, 0.0
        %v5964 = vadd.f32 %v5962, %v5963
        %v5965 = vsel %vm3806, %v5726, 0.0
        %v5966 = vadd.f32 %v5964, %v5965
        %v5967 = vsel %vm3806, %v5734, 0.0
        %v5968 = vadd.f32 %v5966, %v5967
        %v5969 = vsel %vm3806, %v5742, 0.0
        %v5970 = vadd.f32 %v5968, %v5969
        %v5971 = vsel %vm3806, %v5750, 0.0
        %v5972 = vadd.f32 %v5970, %v5971
        %v5973 = vsel %vm3806, %v5758, 0.0
        %v5974 = vadd.f32 %v5972, %v5973
        %v5975 = vsel %vm3806, %v5766, 0.0
        %v5976 = vadd.f32 %v5974, %v5975
        %v5977 = vsel %vm3806, %v5774, 0.0
        %v5978 = vadd.f32 %v5976, %v5977
        %v5979 = vsel %vm3806, %v5782, 0.0
        %v5980 = vadd.f32 %v5978, %v5979
        %v5981 = vsel %vm3806, %v5790, 0.0
        %v5982 = vadd.f32 %v5980, %v5981
        %v5983 = vsel %vm3806, %v5798, 0.0
        %v5984 = vadd.f32 %v5982, %v5983
        %v5985 = vsel %vm3806, %v5806, 0.0
        %v5986 = vadd.f32 %v5984, %v5985
        %v5987 = vsel %vm3806, %v5814, 0.0
        %v5988 = vadd.f32 %v5986, %v5987
        %v5989 = vsel %vm3806, %v5822, 0.0
        %v5990 = vadd.f32 %v5988, %v5989
        %v5991 = vsel %vm3806, %v5830, 0.0
        %v5992 = vadd.f32 %v5990, %v5991
        %v5993 = vsel %vm3806, %v5838, 0.0
        %v5994 = vadd.f32 %v5992, %v5993
        %v5995 = vsel %vm3806, %v5846, 0.0
        %v5996 = vadd.f32 %v5994, %v5995
        %v5997 = vsel %vm3806, %v5854, 0.0
        %v5998 = vadd.f32 %v5996, %v5997
        %v5999 = vsel %vm3806, %v5862, 0.0
        %v6000 = vadd.f32 %v5998, %v5999
        %v6001 = vsel %vm3806, %v5870, 0.0
        %v6002 = vadd.f32 %v6000, %v6001
        %v6003 = vsel %vm3806, %v5623, 0.0
        %v6004 = vsel %vm3806, %v5631, 0.0
        %v6005 = vadd.f32 %v6003, %v6004
        %v6006 = vsel %vm3806, %v5639, 0.0
        %v6007 = vadd.f32 %v6005, %v6006
        %v6008 = vsel %vm3806, %v5647, 0.0
        %v6009 = vadd.f32 %v6007, %v6008
        %v6010 = vsel %vm3806, %v5655, 0.0
        %v6011 = vadd.f32 %v6009, %v6010
        %v6012 = vsel %vm3806, %v5663, 0.0
        %v6013 = vadd.f32 %v6011, %v6012
        %v6014 = vsel %vm3806, %v5671, 0.0
        %v6015 = vadd.f32 %v6013, %v6014
        %v6016 = vsel %vm3806, %v5679, 0.0
        %v6017 = vadd.f32 %v6015, %v6016
        %v6018 = vsel %vm3806, %v5687, 0.0
        %v6019 = vadd.f32 %v6017, %v6018
        %v6020 = vsel %vm3806, %v5695, 0.0
        %v6021 = vadd.f32 %v6019, %v6020
        %v6022 = vsel %vm3806, %v5703, 0.0
        %v6023 = vadd.f32 %v6021, %v6022
        %v6024 = vsel %vm3806, %v5711, 0.0
        %v6025 = vadd.f32 %v6023, %v6024
        %v6026 = vsel %vm3806, %v5719, 0.0
        %v6027 = vadd.f32 %v6025, %v6026
        %v6028 = vsel %vm3806, %v5727, 0.0
        %v6029 = vadd.f32 %v6027, %v6028
        %v6030 = vsel %vm3806, %v5735, 0.0
        %v6031 = vadd.f32 %v6029, %v6030
        %v6032 = vsel %vm3806, %v5743, 0.0
        %v6033 = vadd.f32 %v6031, %v6032
        %v6034 = vsel %vm3806, %v5751, 0.0
        %v6035 = vadd.f32 %v6033, %v6034
        %v6036 = vsel %vm3806, %v5759, 0.0
        %v6037 = vadd.f32 %v6035, %v6036
        %v6038 = vsel %vm3806, %v5767, 0.0
        %v6039 = vadd.f32 %v6037, %v6038
        %v6040 = vsel %vm3806, %v5775, 0.0
        %v6041 = vadd.f32 %v6039, %v6040
        %v6042 = vsel %vm3806, %v5783, 0.0
        %v6043 = vadd.f32 %v6041, %v6042
        %v6044 = vsel %vm3806, %v5791, 0.0
        %v6045 = vadd.f32 %v6043, %v6044
        %v6046 = vsel %vm3806, %v5799, 0.0
        %v6047 = vadd.f32 %v6045, %v6046
        %v6048 = vsel %vm3806, %v5807, 0.0
        %v6049 = vadd.f32 %v6047, %v6048
        %v6050 = vsel %vm3806, %v5815, 0.0
        %v6051 = vadd.f32 %v6049, %v6050
        %v6052 = vsel %vm3806, %v5823, 0.0
        %v6053 = vadd.f32 %v6051, %v6052
        %v6054 = vsel %vm3806, %v5831, 0.0
        %v6055 = vadd.f32 %v6053, %v6054
        %v6056 = vsel %vm3806, %v5839, 0.0
        %v6057 = vadd.f32 %v6055, %v6056
        %v6058 = vsel %vm3806, %v5847, 0.0
        %v6059 = vadd.f32 %v6057, %v6058
        %v6060 = vsel %vm3806, %v5855, 0.0
        %v6061 = vadd.f32 %v6059, %v6060
        %v6062 = vsel %vm3806, %v5863, 0.0
        %v6063 = vadd.f32 %v6061, %v6062
        %v6064 = vsel %vm3806, %v5871, 0.0
        %v6065 = vadd.f32 %v6063, %v6064
        %v6066 = vsel %vm3806, %v5624, 0.0
        %v6067 = vsel %vm3806, %v5632, 0.0
        %v6068 = vadd.f32 %v6066, %v6067
        %v6069 = vsel %vm3806, %v5640, 0.0
        %v6070 = vadd.f32 %v6068, %v6069
        %v6071 = vsel %vm3806, %v5648, 0.0
        %v6072 = vadd.f32 %v6070, %v6071
        %v6073 = vsel %vm3806, %v5656, 0.0
        %v6074 = vadd.f32 %v6072, %v6073
        %v6075 = vsel %vm3806, %v5664, 0.0
        %v6076 = vadd.f32 %v6074, %v6075
        %v6077 = vsel %vm3806, %v5672, 0.0
        %v6078 = vadd.f32 %v6076, %v6077
        %v6079 = vsel %vm3806, %v5680, 0.0
        %v6080 = vadd.f32 %v6078, %v6079
        %v6081 = vsel %vm3806, %v5688, 0.0
        %v6082 = vadd.f32 %v6080, %v6081
        %v6083 = vsel %vm3806, %v5696, 0.0
        %v6084 = vadd.f32 %v6082, %v6083
        %v6085 = vsel %vm3806, %v5704, 0.0
        %v6086 = vadd.f32 %v6084, %v6085
        %v6087 = vsel %vm3806, %v5712, 0.0
        %v6088 = vadd.f32 %v6086, %v6087
        %v6089 = vsel %vm3806, %v5720, 0.0
        %v6090 = vadd.f32 %v6088, %v6089
        %v6091 = vsel %vm3806, %v5728, 0.0
        %v6092 = vadd.f32 %v6090, %v6091
        %v6093 = vsel %vm3806, %v5736, 0.0
        %v6094 = vadd.f32 %v6092, %v6093
        %v6095 = vsel %vm3806, %v5744, 0.0
        %v6096 = vadd.f32 %v6094, %v6095
        %v6097 = vsel %vm3806, %v5752, 0.0
        %v6098 = vadd.f32 %v6096, %v6097
        %v6099 = vsel %vm3806, %v5760, 0.0
        %v6100 = vadd.f32 %v6098, %v6099
        %v6101 = vsel %vm3806, %v5768, 0.0
        %v6102 = vadd.f32 %v6100, %v6101
        %v6103 = vsel %vm3806, %v5776, 0.0
        %v6104 = vadd.f32 %v6102, %v6103
        %v6105 = vsel %vm3806, %v5784, 0.0
        %v6106 = vadd.f32 %v6104, %v6105
        %v6107 = vsel %vm3806, %v5792, 0.0
        %v6108 = vadd.f32 %v6106, %v6107
        %v6109 = vsel %vm3806, %v5800, 0.0
        %v6110 = vadd.f32 %v6108, %v6109
        %v6111 = vsel %vm3806, %v5808, 0.0
        %v6112 = vadd.f32 %v6110, %v6111
        %v6113 = vsel %vm3806, %v5816, 0.0
        %v6114 = vadd.f32 %v6112, %v6113
        %v6115 = vsel %vm3806, %v5824, 0.0
        %v6116 = vadd.f32 %v6114, %v6115
        %v6117 = vsel %vm3806, %v5832, 0.0
        %v6118 = vadd.f32 %v6116, %v6117
        %v6119 = vsel %vm3806, %v5840, 0.0
        %v6120 = vadd.f32 %v6118, %v6119
        %v6121 = vsel %vm3806, %v5848, 0.0
        %v6122 = vadd.f32 %v6120, %v6121
        %v6123 = vsel %vm3806, %v5856, 0.0
        %v6124 = vadd.f32 %v6122, %v6123
        %v6125 = vsel %vm3806, %v5864, 0.0
        %v6126 = vadd.f32 %v6124, %v6125
        %v6127 = vsel %vm3806, %v5872, 0.0
        %v6128 = vadd.f32 %v6126, %v6127
        %v6129 = vsel %vm3806, %v5625, 0.0
        %v6130 = vsel %vm3806, %v5633, 0.0
        %v6131 = vadd.f32 %v6129, %v6130
        %v6132 = vsel %vm3806, %v5641, 0.0
        %v6133 = vadd.f32 %v6131, %v6132
        %v6134 = vsel %vm3806, %v5649, 0.0
        %v6135 = vadd.f32 %v6133, %v6134
        %v6136 = vsel %vm3806, %v5657, 0.0
        %v6137 = vadd.f32 %v6135, %v6136
        %v6138 = vsel %vm3806, %v5665, 0.0
        %v6139 = vadd.f32 %v6137, %v6138
        %v6140 = vsel %vm3806, %v5673, 0.0
        %v6141 = vadd.f32 %v6139, %v6140
        %v6142 = vsel %vm3806, %v5681, 0.0
        %v6143 = vadd.f32 %v6141, %v6142
        %v6144 = vsel %vm3806, %v5689, 0.0
        %v6145 = vadd.f32 %v6143, %v6144
        %v6146 = vsel %vm3806, %v5697, 0.0
        %v6147 = vadd.f32 %v6145, %v6146
        %v6148 = vsel %vm3806, %v5705, 0.0
        %v6149 = vadd.f32 %v6147, %v6148
        %v6150 = vsel %vm3806, %v5713, 0.0
        %v6151 = vadd.f32 %v6149, %v6150
        %v6152 = vsel %vm3806, %v5721, 0.0
        %v6153 = vadd.f32 %v6151, %v6152
        %v6154 = vsel %vm3806, %v5729, 0.0
        %v6155 = vadd.f32 %v6153, %v6154
        %v6156 = vsel %vm3806, %v5737, 0.0
        %v6157 = vadd.f32 %v6155, %v6156
        %v6158 = vsel %vm3806, %v5745, 0.0
        %v6159 = vadd.f32 %v6157, %v6158
        %v6160 = vsel %vm3806, %v5753, 0.0
        %v6161 = vadd.f32 %v6159, %v6160
        %v6162 = vsel %vm3806, %v5761, 0.0
        %v6163 = vadd.f32 %v6161, %v6162
        %v6164 = vsel %vm3806, %v5769, 0.0
        %v6165 = vadd.f32 %v6163, %v6164
        %v6166 = vsel %vm3806, %v5777, 0.0
        %v6167 = vadd.f32 %v6165, %v6166
        %v6168 = vsel %vm3806, %v5785, 0.0
        %v6169 = vadd.f32 %v6167, %v6168
        %v6170 = vsel %vm3806, %v5793, 0.0
        %v6171 = vadd.f32 %v6169, %v6170
        %v6172 = vsel %vm3806, %v5801, 0.0
        %v6173 = vadd.f32 %v6171, %v6172
        %v6174 = vsel %vm3806, %v5809, 0.0
        %v6175 = vadd.f32 %v6173, %v6174
        %v6176 = vsel %vm3806, %v5817, 0.0
        %v6177 = vadd.f32 %v6175, %v6176
        %v6178 = vsel %vm3806, %v5825, 0.0
        %v6179 = vadd.f32 %v6177, %v6178
        %v6180 = vsel %vm3806, %v5833, 0.0
        %v6181 = vadd.f32 %v6179, %v6180
        %v6182 = vsel %vm3806, %v5841, 0.0
        %v6183 = vadd.f32 %v6181, %v6182
        %v6184 = vsel %vm3806, %v5849, 0.0
        %v6185 = vadd.f32 %v6183, %v6184
        %v6186 = vsel %vm3806, %v5857, 0.0
        %v6187 = vadd.f32 %v6185, %v6186
        %v6188 = vsel %vm3806, %v5865, 0.0
        %v6189 = vadd.f32 %v6187, %v6188
        %v6190 = vsel %vm3806, %v5873, 0.0
        %v6191 = vadd.f32 %v6189, %v6190
        %v6192 = vsel %vm3806, %v5626, 0.0
        %v6193 = vsel %vm3806, %v5634, 0.0
        %v6194 = vadd.f32 %v6192, %v6193
        %v6195 = vsel %vm3806, %v5642, 0.0
        %v6196 = vadd.f32 %v6194, %v6195
        %v6197 = vsel %vm3806, %v5650, 0.0
        %v6198 = vadd.f32 %v6196, %v6197
        %v6199 = vsel %vm3806, %v5658, 0.0
        %v6200 = vadd.f32 %v6198, %v6199
        %v6201 = vsel %vm3806, %v5666, 0.0
        %v6202 = vadd.f32 %v6200, %v6201
        %v6203 = vsel %vm3806, %v5674, 0.0
        %v6204 = vadd.f32 %v6202, %v6203
        %v6205 = vsel %vm3806, %v5682, 0.0
        %v6206 = vadd.f32 %v6204, %v6205
        %v6207 = vsel %vm3806, %v5690, 0.0
        %v6208 = vadd.f32 %v6206, %v6207
        %v6209 = vsel %vm3806, %v5698, 0.0
        %v6210 = vadd.f32 %v6208, %v6209
        %v6211 = vsel %vm3806, %v5706, 0.0
        %v6212 = vadd.f32 %v6210, %v6211
        %v6213 = vsel %vm3806, %v5714, 0.0
        %v6214 = vadd.f32 %v6212, %v6213
        %v6215 = vsel %vm3806, %v5722, 0.0
        %v6216 = vadd.f32 %v6214, %v6215
        %v6217 = vsel %vm3806, %v5730, 0.0
        %v6218 = vadd.f32 %v6216, %v6217
        %v6219 = vsel %vm3806, %v5738, 0.0
        %v6220 = vadd.f32 %v6218, %v6219
        %v6221 = vsel %vm3806, %v5746, 0.0
        %v6222 = vadd.f32 %v6220, %v6221
        %v6223 = vsel %vm3806, %v5754, 0.0
        %v6224 = vadd.f32 %v6222, %v6223
        %v6225 = vsel %vm3806, %v5762, 0.0
        %v6226 = vadd.f32 %v6224, %v6225
        %v6227 = vsel %vm3806, %v5770, 0.0
        %v6228 = vadd.f32 %v6226, %v6227
        %v6229 = vsel %vm3806, %v5778, 0.0
        %v6230 = vadd.f32 %v6228, %v6229
        %v6231 = vsel %vm3806, %v5786, 0.0
        %v6232 = vadd.f32 %v6230, %v6231
        %v6233 = vsel %vm3806, %v5794, 0.0
        %v6234 = vadd.f32 %v6232, %v6233
        %v6235 = vsel %vm3806, %v5802, 0.0
        %v6236 = vadd.f32 %v6234, %v6235
        %v6237 = vsel %vm3806, %v5810, 0.0
        %v6238 = vadd.f32 %v6236, %v6237
        %v6239 = vsel %vm3806, %v5818, 0.0
        %v6240 = vadd.f32 %v6238, %v6239
        %v6241 = vsel %vm3806, %v5826, 0.0
        %v6242 = vadd.f32 %v6240, %v6241
        %v6243 = vsel %vm3806, %v5834, 0.0
        %v6244 = vadd.f32 %v6242, %v6243
        %v6245 = vsel %vm3806, %v5842, 0.0
        %v6246 = vadd.f32 %v6244, %v6245
        %v6247 = vsel %vm3806, %v5850, 0.0
        %v6248 = vadd.f32 %v6246, %v6247
        %v6249 = vsel %vm3806, %v5858, 0.0
        %v6250 = vadd.f32 %v6248, %v6249
        %v6251 = vsel %vm3806, %v5866, 0.0
        %v6252 = vadd.f32 %v6250, %v6251
        %v6253 = vsel %vm3806, %v5874, 0.0
        %v6254 = vadd.f32 %v6252, %v6253
        %v6255 = vsel %vm3806, %v5627, 0.0
        %v6256 = vsel %vm3806, %v5635, 0.0
        %v6257 = vadd.f32 %v6255, %v6256
        %v6258 = vsel %vm3806, %v5643, 0.0
        %v6259 = vadd.f32 %v6257, %v6258
        %v6260 = vsel %vm3806, %v5651, 0.0
        %v6261 = vadd.f32 %v6259, %v6260
        %v6262 = vsel %vm3806, %v5659, 0.0
        %v6263 = vadd.f32 %v6261, %v6262
        %v6264 = vsel %vm3806, %v5667, 0.0
        %v6265 = vadd.f32 %v6263, %v6264
        %v6266 = vsel %vm3806, %v5675, 0.0
        %v6267 = vadd.f32 %v6265, %v6266
        %v6268 = vsel %vm3806, %v5683, 0.0
        %v6269 = vadd.f32 %v6267, %v6268
        %v6270 = vsel %vm3806, %v5691, 0.0
        %v6271 = vadd.f32 %v6269, %v6270
        %v6272 = vsel %vm3806, %v5699, 0.0
        %v6273 = vadd.f32 %v6271, %v6272
        %v6274 = vsel %vm3806, %v5707, 0.0
        %v6275 = vadd.f32 %v6273, %v6274
        %v6276 = vsel %vm3806, %v5715, 0.0
        %v6277 = vadd.f32 %v6275, %v6276
        %v6278 = vsel %vm3806, %v5723, 0.0
        %v6279 = vadd.f32 %v6277, %v6278
        %v6280 = vsel %vm3806, %v5731, 0.0
        %v6281 = vadd.f32 %v6279, %v6280
        %v6282 = vsel %vm3806, %v5739, 0.0
        %v6283 = vadd.f32 %v6281, %v6282
        %v6284 = vsel %vm3806, %v5747, 0.0
        %v6285 = vadd.f32 %v6283, %v6284
        %v6286 = vsel %vm3806, %v5755, 0.0
        %v6287 = vadd.f32 %v6285, %v6286
        %v6288 = vsel %vm3806, %v5763, 0.0
        %v6289 = vadd.f32 %v6287, %v6288
        %v6290 = vsel %vm3806, %v5771, 0.0
        %v6291 = vadd.f32 %v6289, %v6290
        %v6292 = vsel %vm3806, %v5779, 0.0
        %v6293 = vadd.f32 %v6291, %v6292
        %v6294 = vsel %vm3806, %v5787, 0.0
        %v6295 = vadd.f32 %v6293, %v6294
        %v6296 = vsel %vm3806, %v5795, 0.0
        %v6297 = vadd.f32 %v6295, %v6296
        %v6298 = vsel %vm3806, %v5803, 0.0
        %v6299 = vadd.f32 %v6297, %v6298
        %v6300 = vsel %vm3806, %v5811, 0.0
        %v6301 = vadd.f32 %v6299, %v6300
        %v6302 = vsel %vm3806, %v5819, 0.0
        %v6303 = vadd.f32 %v6301, %v6302
        %v6304 = vsel %vm3806, %v5827, 0.0
        %v6305 = vadd.f32 %v6303, %v6304
        %v6306 = vsel %vm3806, %v5835, 0.0
        %v6307 = vadd.f32 %v6305, %v6306
        %v6308 = vsel %vm3806, %v5843, 0.0
        %v6309 = vadd.f32 %v6307, %v6308
        %v6310 = vsel %vm3806, %v5851, 0.0
        %v6311 = vadd.f32 %v6309, %v6310
        %v6312 = vsel %vm3806, %v5859, 0.0
        %v6313 = vadd.f32 %v6311, %v6312
        %v6314 = vsel %vm3806, %v5867, 0.0
        %v6315 = vadd.f32 %v6313, %v6314
        %v6316 = vsel %vm3806, %v5875, 0.0
        %v6317 = vadd.f32 %v6315, %v6316
        %v6318 = vsel %vm3806, %v5628, 0.0
        %v6319 = vsel %vm3806, %v5636, 0.0
        %v6320 = vadd.f32 %v6318, %v6319
        %v6321 = vsel %vm3806, %v5644, 0.0
        %v6322 = vadd.f32 %v6320, %v6321
        %v6323 = vsel %vm3806, %v5652, 0.0
        %v6324 = vadd.f32 %v6322, %v6323
        %v6325 = vsel %vm3806, %v5660, 0.0
        %v6326 = vadd.f32 %v6324, %v6325
        %v6327 = vsel %vm3806, %v5668, 0.0
        %v6328 = vadd.f32 %v6326, %v6327
        %v6329 = vsel %vm3806, %v5676, 0.0
        %v6330 = vadd.f32 %v6328, %v6329
        %v6331 = vsel %vm3806, %v5684, 0.0
        %v6332 = vadd.f32 %v6330, %v6331
        %v6333 = vsel %vm3806, %v5692, 0.0
        %v6334 = vadd.f32 %v6332, %v6333
        %v6335 = vsel %vm3806, %v5700, 0.0
        %v6336 = vadd.f32 %v6334, %v6335
        %v6337 = vsel %vm3806, %v5708, 0.0
        %v6338 = vadd.f32 %v6336, %v6337
        %v6339 = vsel %vm3806, %v5716, 0.0
        %v6340 = vadd.f32 %v6338, %v6339
        %v6341 = vsel %vm3806, %v5724, 0.0
        %v6342 = vadd.f32 %v6340, %v6341
        %v6343 = vsel %vm3806, %v5732, 0.0
        %v6344 = vadd.f32 %v6342, %v6343
        %v6345 = vsel %vm3806, %v5740, 0.0
        %v6346 = vadd.f32 %v6344, %v6345
        %v6347 = vsel %vm3806, %v5748, 0.0
        %v6348 = vadd.f32 %v6346, %v6347
        %v6349 = vsel %vm3806, %v5756, 0.0
        %v6350 = vadd.f32 %v6348, %v6349
        %v6351 = vsel %vm3806, %v5764, 0.0
        %v6352 = vadd.f32 %v6350, %v6351
        %v6353 = vsel %vm3806, %v5772, 0.0
        %v6354 = vadd.f32 %v6352, %v6353
        %v6355 = vsel %vm3806, %v5780, 0.0
        %v6356 = vadd.f32 %v6354, %v6355
        %v6357 = vsel %vm3806, %v5788, 0.0
        %v6358 = vadd.f32 %v6356, %v6357
        %v6359 = vsel %vm3806, %v5796, 0.0
        %v6360 = vadd.f32 %v6358, %v6359
        %v6361 = vsel %vm3806, %v5804, 0.0
        %v6362 = vadd.f32 %v6360, %v6361
        %v6363 = vsel %vm3806, %v5812, 0.0
        %v6364 = vadd.f32 %v6362, %v6363
        %v6365 = vsel %vm3806, %v5820, 0.0
        %v6366 = vadd.f32 %v6364, %v6365
        %v6367 = vsel %vm3806, %v5828, 0.0
        %v6368 = vadd.f32 %v6366, %v6367
        %v6369 = vsel %vm3806, %v5836, 0.0
        %v6370 = vadd.f32 %v6368, %v6369
        %v6371 = vsel %vm3806, %v5844, 0.0
        %v6372 = vadd.f32 %v6370, %v6371
        %v6373 = vsel %vm3806, %v5852, 0.0
        %v6374 = vadd.f32 %v6372, %v6373
        %v6375 = vsel %vm3806, %v5860, 0.0
        %v6376 = vadd.f32 %v6374, %v6375
        %v6377 = vsel %vm3806, %v5868, 0.0
        %v6378 = vadd.f32 %v6376, %v6377
        %v6379 = vsel %vm3806, %v5876, 0.0
        %v6380 = vadd.f32 %v6378, %v6379
        %6389 = vrot.lane.b32.xlu0 %v5939, 96
        %v6390 = vpop.permute.xlu0 %6389
        %6391 = vrot.lane.b32.xlu0 %v6002, 96
        %v6392 = vpop.permute.xlu0 %6391
        %6393 = vrot.lane.b32.xlu0 %v6065, 96
        %v6394 = vpop.permute.xlu0 %6393
        %6395 = vrot.lane.b32.xlu0 %v6128, 96
        %v6396 = vpop.permute.xlu0 %6395
        %6397 = vrot.lane.b32.xlu0 %v6191, 96
        %v6398 = vpop.permute.xlu0 %6397
        %6399 = vrot.lane.b32.xlu0 %v6254, 96
        %v6400 = vpop.permute.xlu0 %6399
        %6401 = vrot.lane.b32.xlu0 %v6317, 96
        %v6402 = vpop.permute.xlu0 %6401
        %6403 = vrot.lane.b32.xlu0 %v6380, 96
        %v6404 = vpop.permute.xlu0 %6403
        %v6413 = vsel %vm3153, %v5939, 0.0
        %v6414 = vsel %vm3153, %v6002, 0.0
        %v6415 = vsel %vm3153, %v6065, 0.0
        %v6416 = vsel %vm3153, %v6128, 0.0
        %v6417 = vsel %vm3153, %v6191, 0.0
        %v6418 = vsel %vm3153, %v6254, 0.0
        %v6419 = vsel %vm3153, %v6317, 0.0
        %v6420 = vsel %vm3153, %v6380, 0.0
        %v6421 = vsel %vm3153, %v6390, 0.0
        %v6422 = vsel %vm3153, %v6392, 0.0
        %v6423 = vsel %vm3153, %v6394, 0.0
        %v6424 = vsel %vm3153, %v6396, 0.0
        %v6425 = vsel %vm3153, %v6398, 0.0
        %v6426 = vsel %vm3153, %v6400, 0.0
        %v6427 = vsel %vm3153, %v6402, 0.0
        %v6428 = vsel %vm3153, %v6404, 0.0
        %v6429 = vld [vmem:[%s936] sm:$0x1]
        %v6431 = vlaneseq
        %v6432 = vshrl.u32 %v6431, 7
        %v6433 = vsub.s32 0, %v6432
        %v6434 = vrot.slane %v6429, %v6433
        %v6436 = vmul.f32 %v2849, %v6434
        %v6437 = vmul.f32 %v2850, %v6434
        %v6438 = vmul.f32 %v2851, %v6434
        %v6439 = vmul.f32 %v2852, %v6434
        %v6440 = vmul.f32 %v2853, %v6434
        %v6441 = vmul.f32 %v2854, %v6434
        %v6442 = vmul.f32 %v2855, %v6434
        %v6443 = vmul.f32 %v2856, %v6434
        %v6444 = vmul.f32 %v2857, %v6434
        %v6445 = vmul.f32 %v2858, %v6434
        %v6446 = vmul.f32 %v2859, %v6434
        %v6447 = vmul.f32 %v2860, %v6434
        %v6448 = vmul.f32 %v2861, %v6434
        %v6449 = vmul.f32 %v2862, %v6434
        %v6450 = vmul.f32 %v2863, %v6434
        %v6451 = vmul.f32 %v2864, %v6434
        %v6452 = vadd.f32 %v6413, %v6436
        %v6453 = vadd.f32 %v6414, %v6437
        %v6454 = vadd.f32 %v6415, %v6438
        %v6455 = vadd.f32 %v6416, %v6439
        %v6456 = vadd.f32 %v6417, %v6440
        %v6457 = vadd.f32 %v6418, %v6441
        %v6458 = vadd.f32 %v6419, %v6442
        %v6459 = vadd.f32 %v6420, %v6443
        %v6460 = vadd.f32 %v6421, %v6444
        %v6461 = vadd.f32 %v6422, %v6445
        %v6462 = vadd.f32 %v6423, %v6446
        %v6463 = vadd.f32 %v6424, %v6447
        %v6464 = vadd.f32 %v6425, %v6448
        %v6465 = vadd.f32 %v6426, %v6449
        %v6466 = vadd.f32 %v6427, %v6450
        %v6467 = vadd.f32 %v6428, %v6451
        %v6468 = vmul.f32 %v6452, %v2801
        %v6469 = vmul.f32 %v6453, %v2804
        %v6470 = vmul.f32 %v6454, %v2807
        %v6471 = vmul.f32 %v6455, %v2810
        %v6472 = vmul.f32 %v6456, %v2813
        %v6473 = vmul.f32 %v6457, %v2816
        %v6474 = vmul.f32 %v6458, %v2819
        %v6475 = vmul.f32 %v6459, %v2822
        %v6476 = vmul.f32 %v6460, %v2825
        %v6477 = vmul.f32 %v6461, %v2828
        %v6478 = vmul.f32 %v6462, %v2831
        %v6479 = vmul.f32 %v6463, %v2834
        %v6480 = vmul.f32 %v6464, %v2837
        %v6481 = vmul.f32 %v6465, %v2840
        %v6482 = vmul.f32 %v6466, %v2843
        %v6483 = vmul.f32 %v6467, %v2846
        %v6484 = vpack.c.bf16 %v6469, %v6468
        %v6485 = vpack.c.bf16 %v6471, %v6470
        %v6486 = vpack.c.bf16 %v6473, %v6472
        %v6487 = vpack.c.bf16 %v6475, %v6474
        %v6488 = vpack.c.bf16 %v6477, %v6476
        %v6489 = vpack.c.bf16 %v6479, %v6478
        %v6490 = vpack.c.bf16 %v6481, %v6480
        %v6491 = vpack.c.bf16 %v6483, %v6482
        %v6492 = vld [vmem:[%s945] sm:$0xf]
        %v6493 = vld [vmem:[%s945 + $0x4] sm:$0xf]
        %v6494 = vld [vmem:[%s945 + $0x8] sm:$0xf]
        %v6495 = vld [vmem:[%s945 + $0xc] sm:$0xf]
        %v6496 = vld [vmem:[%s945 + $0x10] sm:$0xf]
        %v6497 = vld [vmem:[%s945 + $0x14] sm:$0xf]
        %v6498 = vld [vmem:[%s945 + $0x18] sm:$0xf]
        %v6499 = vld [vmem:[%s945 + $0x1c] sm:$0xf]
        %v6500 = vld [vmem:[%s945 + $0x20] sm:$0xf]
        %v6501 = vld [vmem:[%s945 + $0x24] sm:$0xf]
        %v6502 = vld [vmem:[%s945 + $0x28] sm:$0xf]
        %v6503 = vld [vmem:[%s945 + $0x2c] sm:$0xf]
        %v6504 = vld [vmem:[%s945 + $0x30] sm:$0xf]
        %v6505 = vld [vmem:[%s945 + $0x34] sm:$0xf]
        %v6506 = vld [vmem:[%s945 + $0x38] sm:$0xf]
        %v6507 = vld [vmem:[%s945 + $0x3c] sm:$0xf]
        %v6508 = vld [vmem:[%s953] sm:$0x1]
        %v6510 = vlaneseq
        %v6511 = vshrl.u32 %v6510, 7
        %v6512 = vsub.s32 0, %v6511
        %v6513 = vrot.slane %v6508, %v6512
        %v6531 = vunpack.c.l.b16 %v6492
        %v6532 = vunpack.c.l.b16 %v6493
        %v6533 = vunpack.c.l.b16 %v6494
        %v6534 = vunpack.c.l.b16 %v6495
        %v6535 = vunpack.c.l.b16 %v6496
        %v6536 = vunpack.c.l.b16 %v6497
        %v6537 = vunpack.c.l.b16 %v6498
        %v6538 = vunpack.c.l.b16 %v6499
        %v6539 = vunpack.c.l.b16 %v6500
        %v6540 = vunpack.c.l.b16 %v6501
        %v6541 = vunpack.c.l.b16 %v6502
        %v6542 = vunpack.c.l.b16 %v6503
        %v6543 = vunpack.c.l.b16 %v6504
        %v6544 = vunpack.c.l.b16 %v6505
        %v6545 = vunpack.c.l.b16 %v6506
        %v6546 = vunpack.c.l.b16 %v6507
        %v6547 = vpack.c.b16 %v6532, %v6531
        %v6548 = vpack.c.b16 %v6534, %v6533
        %v6549 = vpack.c.b16 %v6536, %v6535
        %v6550 = vpack.c.b16 %v6538, %v6537
        %v6551 = vpack.c.b16 %v6540, %v6539
        %v6552 = vpack.c.b16 %v6542, %v6541
        %v6553 = vpack.c.b16 %v6544, %v6543
        %v6554 = vpack.c.b16 %v6546, %v6545
        %6563 = vmatprep.subr.bf16.mxu0 0
        %6564 = vmatpush1.bf16.msra.mxu0 %v6547
        %6565 = vmatprep.subr.bf16.mxu0 0
        %6566 = vmatpush1.bf16.msra.mxu0 %v6548
        %6567 = vmatprep.subr.bf16.mxu0 0
        %6568 = vmatpush1.bf16.msra.mxu0 %v6549
        %6569 = vmatprep.subr.bf16.mxu0 0
        %6570 = vmatpush1.bf16.msra.mxu0 %v6550
        %6571 = vmatprep.subr.bf16.mxu0 0
        %6572 = vmatpush1.bf16.msra.mxu0 %v6551
        %6573 = vmatprep.subr.bf16.mxu0 0
        %6574 = vmatpush1.bf16.msra.mxu0 %v6552
        %6575 = vmatprep.subr.bf16.mxu0 0
        %6576 = vmatpush1.bf16.msra.mxu0 %v6553
        %6577 = vmatprep.subr.bf16.mxu0 0
        %6578 = vmatpush1.bf16.msra.mxu0 %v6554
        %6579 = vmatprep.subr.bf16.mxu0 0
        %6580 = vmatpush1.bf16.msra.mxu0 0
        %6581 = vmatprep.subr.bf16.mxu0 0
        %6582 = vmatpush1.bf16.msra.mxu0 0
        %6583 = vmatprep.subr.bf16.mxu0 0
        %6584 = vmatpush1.bf16.msra.mxu0 0
        %6585 = vmatprep.subr.bf16.mxu0 0
        %6586 = vmatpush1.bf16.msra.mxu0 0
        %6587 = vmatprep.subr.bf16.mxu0 0
        %6588 = vmatpush1.bf16.msra.mxu0 0
        %6589 = vmatprep.subr.bf16.mxu0 0
        %6590 = vmatpush1.bf16.msra.mxu0 0
        %6591 = vmatprep.subr.bf16.mxu0 0
        %6592 = vmatpush1.bf16.msra.mxu0 0
        %6593 = vmatprep.subr.bf16.mxu0 0
        %6594 = vmatpush1.bf16.msra.mxu0 0
        %6595 = vmatprep.mubr.bf16.mxu0 0
        %6596 = vmatmul.mubr.bf16.gmra.mrb[0].mxu0 %v6484
        %v6597 = vpop.f32.mrb[0].mxu0
        %v6598 = vadd.f32 %v6513, %v6597
        %v6599 = vpop.f32.mrb[0].mxu0
        %v6600 = vpop.f32.mrb[0].mxu0
        %v6601 = vadd.f32 %v6513, %v6600
        %v6602 = vpop.f32.mrb[0].mxu0
        %6603 = vmatprep.mubr.bf16.mxu0 0
        %6604 = vmatmul.mubr.bf16.gmra.mrb[0].mxu0 %v6485
        %v6605 = vpop.f32.mrb[0].mxu0
        %v6606 = vadd.f32 %v6513, %v6605
        %v6607 = vpop.f32.mrb[0].mxu0
        %v6608 = vpop.f32.mrb[0].mxu0
        %v6609 = vadd.f32 %v6513, %v6608
        %v6610 = vpop.f32.mrb[0].mxu0
        %6611 = vmatprep.mubr.bf16.mxu0 0
        %6612 = vmatmul.mubr.bf16.gmra.mrb[0].mxu0 %v6486
        %v6613 = vpop.f32.mrb[0].mxu0
        %v6614 = vadd.f32 %v6513, %v6613
        %v6615 = vpop.f32.mrb[0].mxu0
        %v6616 = vpop.f32.mrb[0].mxu0
        %v6617 = vadd.f32 %v6513, %v6616
        %v6618 = vpop.f32.mrb[0].mxu0
        %6619 = vmatprep.mubr.bf16.mxu0 0
        %6620 = vmatmul.mubr.bf16.gmra.mrb[0].mxu0 %v6487
        %v6621 = vpop.f32.mrb[0].mxu0
        %v6622 = vadd.f32 %v6513, %v6621
        %v6623 = vpop.f32.mrb[0].mxu0
        %v6624 = vpop.f32.mrb[0].mxu0
        %v6625 = vadd.f32 %v6513, %v6624
        %v6626 = vpop.f32.mrb[0].mxu0
        %6627 = vmatprep.mubr.bf16.mxu0 0
        %6628 = vmatmul.mubr.bf16.gmra.mrb[0].mxu0 %v6488
        %v6629 = vpop.f32.mrb[0].mxu0
        %v6630 = vadd.f32 %v6513, %v6629
        %v6631 = vpop.f32.mrb[0].mxu0
        %v6632 = vpop.f32.mrb[0].mxu0
        %v6633 = vadd.f32 %v6513, %v6632
        %v6634 = vpop.f32.mrb[0].mxu0
        %6635 = vmatprep.mubr.bf16.mxu0 0
        %6636 = vmatmul.mubr.bf16.gmra.mrb[0].mxu0 %v6489
        %v6637 = vpop.f32.mrb[0].mxu0
        %v6638 = vadd.f32 %v6513, %v6637
        %v6639 = vpop.f32.mrb[0].mxu0
        %v6640 = vpop.f32.mrb[0].mxu0
        %v6641 = vadd.f32 %v6513, %v6640
        %v6642 = vpop.f32.mrb[0].mxu0
        %6643 = vmatprep.mubr.bf16.mxu0 0
        %6644 = vmatmul.mubr.bf16.gmra.mrb[0].mxu0 %v6490
        %v6645 = vpop.f32.mrb[0].mxu0
        %v6646 = vadd.f32 %v6513, %v6645
        %v6647 = vpop.f32.mrb[0].mxu0
        %v6648 = vpop.f32.mrb[0].mxu0
        %v6649 = vadd.f32 %v6513, %v6648
        %v6650 = vpop.f32.mrb[0].mxu0
        %6651 = vmatprep.mubr.bf16.mxu0 0
        %6652 = vmatmul.mubr.bf16.gmra.mrb[0].mxu0 %v6491
        %v6653 = vpop.f32.mrb[0].mxu0
        %v6654 = vadd.f32 %v6513, %v6653
        %v6655 = vpop.f32.mrb[0].mxu0
        %v6656 = vpop.f32.mrb[0].mxu0
        %v6657 = vadd.f32 %v6513, %v6656
        %v6658 = vpop.f32.mrb[0].mxu0
        %6659 = vdwg.mxu0
        %v6660 = vmul.f32 %v6598, %v1125
        %v6661 = vmul.f32 %v6601, %v1125
        %v6662 = vmul.f32 %v6606, %v1125
        %v6663 = vmul.f32 %v6609, %v1125
        %v6664 = vmul.f32 %v6614, %v1125
        %v6665 = vmul.f32 %v6617, %v1125
        %v6666 = vmul.f32 %v6622, %v1125
        %v6667 = vmul.f32 %v6625, %v1125
        %v6668 = vmul.f32 %v6630, %v1125
        %v6669 = vmul.f32 %v6633, %v1125
        %v6670 = vmul.f32 %v6638, %v1125
        %v6671 = vmul.f32 %v6641, %v1125
        %v6672 = vmul.f32 %v6646, %v1125
        %v6673 = vmul.f32 %v6649, %v1125
        %v6674 = vmul.f32 %v6654, %v1125
        %v6675 = vmul.f32 %v6657, %v1125
        %6676 = vadd.xlane.f32.xlu0 %v6660
        %v6677 = vpop.xlane.xlu0 %6676
        %6678 = vadd.xlane.f32.xlu0 %v6661
        %v6679 = vpop.xlane.xlu0 %6678
        %6680 = vadd.xlane.f32.xlu0 %v6662
        %v6681 = vpop.xlane.xlu0 %6680
        %6682 = vadd.xlane.f32.xlu0 %v6663
        %v6683 = vpop.xlane.xlu0 %6682
        %6684 = vadd.xlane.f32.xlu0 %v6664
        %v6685 = vpop.xlane.xlu0 %6684
        %6686 = vadd.xlane.f32.xlu0 %v6665
        %v6687 = vpop.xlane.xlu0 %6686
        %6688 = vadd.xlane.f32.xlu0 %v6666
        %v6689 = vpop.xlane.xlu0 %6688
        %6690 = vadd.xlane.f32.xlu0 %v6667
        %v6691 = vpop.xlane.xlu0 %6690
        %6692 = vadd.xlane.f32.xlu0 %v6668
        %v6693 = vpop.xlane.xlu0 %6692
        %6694 = vadd.xlane.f32.xlu0 %v6669
        %v6695 = vpop.xlane.xlu0 %6694
        %6696 = vadd.xlane.f32.xlu0 %v6670
        %v6697 = vpop.xlane.xlu0 %6696
        %6698 = vadd.xlane.f32.xlu0 %v6671
        %v6699 = vpop.xlane.xlu0 %6698
        %6700 = vadd.xlane.f32.xlu0 %v6672
        %v6701 = vpop.xlane.xlu0 %6700
        %6702 = vadd.xlane.f32.xlu0 %v6673
        %v6703 = vpop.xlane.xlu0 %6702
        %6704 = vadd.xlane.f32.xlu0 %v6674
        %v6705 = vpop.xlane.xlu0 %6704
        %6706 = vadd.xlane.f32.xlu0 %v6675
        %v6707 = vpop.xlane.xlu0 %6706
        %v6708 = vmul.f32 %v6677, 0.03125
        %v6709 = vmul.f32 %v6679, 0.03125
        %v6710 = vmul.f32 %v6681, 0.03125
        %v6711 = vmul.f32 %v6683, 0.03125
        %v6712 = vmul.f32 %v6685, 0.03125
        %v6713 = vmul.f32 %v6687, 0.03125
        %v6714 = vmul.f32 %v6689, 0.03125
        %v6715 = vmul.f32 %v6691, 0.03125
        %v6716 = vmul.f32 %v6693, 0.03125
        %v6717 = vmul.f32 %v6695, 0.03125
        %v6718 = vmul.f32 %v6697, 0.03125
        %v6719 = vmul.f32 %v6699, 0.03125
        %v6720 = vmul.f32 %v6701, 0.03125
        %v6721 = vmul.f32 %v6703, 0.03125
        %v6722 = vmul.f32 %v6705, 0.03125
        %v6723 = vmul.f32 %v6707, 0.03125
        %v6724 = vsub.f32 %v6598, %v6708
        %v6725 = vsub.f32 %v6601, %v6709
        %v6726 = vsub.f32 %v6606, %v6710
        %v6727 = vsub.f32 %v6609, %v6711
        %v6728 = vsub.f32 %v6614, %v6712
        %v6729 = vsub.f32 %v6617, %v6713
        %v6730 = vsub.f32 %v6622, %v6714
        %v6731 = vsub.f32 %v6625, %v6715
        %v6732 = vsub.f32 %v6630, %v6716
        %v6733 = vsub.f32 %v6633, %v6717
        %v6734 = vsub.f32 %v6638, %v6718
        %v6735 = vsub.f32 %v6641, %v6719
        %v6736 = vsub.f32 %v6646, %v6720
        %v6737 = vsub.f32 %v6649, %v6721
        %v6738 = vsub.f32 %v6654, %v6722
        %v6739 = vsub.f32 %v6657, %v6723
        %v6740 = vmul.f32 %v6724, %v1125
        %v6741 = vmul.f32 %v6725, %v1125
        %v6742 = vmul.f32 %v6726, %v1125
        %v6743 = vmul.f32 %v6727, %v1125
        %v6744 = vmul.f32 %v6728, %v1125
        %v6745 = vmul.f32 %v6729, %v1125
        %v6746 = vmul.f32 %v6730, %v1125
        %v6747 = vmul.f32 %v6731, %v1125
        %v6748 = vmul.f32 %v6732, %v1125
        %v6749 = vmul.f32 %v6733, %v1125
        %v6750 = vmul.f32 %v6734, %v1125
        %v6751 = vmul.f32 %v6735, %v1125
        %v6752 = vmul.f32 %v6736, %v1125
        %v6753 = vmul.f32 %v6737, %v1125
        %v6754 = vmul.f32 %v6738, %v1125
        %v6755 = vmul.f32 %v6739, %v1125
        %v6756 = vmul.f32 %v6740, %v6740
        %v6757 = vmul.f32 %v6741, %v6741
        %v6758 = vmul.f32 %v6742, %v6742
        %v6759 = vmul.f32 %v6743, %v6743
        %v6760 = vmul.f32 %v6744, %v6744
        %v6761 = vmul.f32 %v6745, %v6745
        %v6762 = vmul.f32 %v6746, %v6746
        %v6763 = vmul.f32 %v6747, %v6747
        %v6764 = vmul.f32 %v6748, %v6748
        %v6765 = vmul.f32 %v6749, %v6749
        %v6766 = vmul.f32 %v6750, %v6750
        %v6767 = vmul.f32 %v6751, %v6751
        %v6768 = vmul.f32 %v6752, %v6752
        %v6769 = vmul.f32 %v6753, %v6753
        %v6770 = vmul.f32 %v6754, %v6754
        %v6771 = vmul.f32 %v6755, %v6755
        %6772 = vadd.xlane.f32.xlu0 %v6756
        %v6773 = vpop.xlane.xlu0 %6772
        %6774 = vadd.xlane.f32.xlu0 %v6757
        %v6775 = vpop.xlane.xlu0 %6774
        %6776 = vadd.xlane.f32.xlu0 %v6758
        %v6777 = vpop.xlane.xlu0 %6776
        %6778 = vadd.xlane.f32.xlu0 %v6759
        %v6779 = vpop.xlane.xlu0 %6778
        %6780 = vadd.xlane.f32.xlu0 %v6760
        %v6781 = vpop.xlane.xlu0 %6780
        %6782 = vadd.xlane.f32.xlu0 %v6761
        %v6783 = vpop.xlane.xlu0 %6782
        %6784 = vadd.xlane.f32.xlu0 %v6762
        %v6785 = vpop.xlane.xlu0 %6784
        %6786 = vadd.xlane.f32.xlu0 %v6763
        %v6787 = vpop.xlane.xlu0 %6786
        %6788 = vadd.xlane.f32.xlu0 %v6764
        %v6789 = vpop.xlane.xlu0 %6788
        %6790 = vadd.xlane.f32.xlu0 %v6765
        %v6791 = vpop.xlane.xlu0 %6790
        %6792 = vadd.xlane.f32.xlu0 %v6766
        %v6793 = vpop.xlane.xlu0 %6792
        %6794 = vadd.xlane.f32.xlu0 %v6767
        %v6795 = vpop.xlane.xlu0 %6794
        %6796 = vadd.xlane.f32.xlu0 %v6768
        %v6797 = vpop.xlane.xlu0 %6796
        %6798 = vadd.xlane.f32.xlu0 %v6769
        %v6799 = vpop.xlane.xlu0 %6798
        %6800 = vadd.xlane.f32.xlu0 %v6770
        %v6801 = vpop.xlane.xlu0 %6800
        %6802 = vadd.xlane.f32.xlu0 %v6771
        %v6803 = vpop.xlane.xlu0 %6802
        %v6804 = vmul.f32 %v6773, 0.03125
        %v6805 = vmul.f32 %v6775, 0.03125
        %v6806 = vmul.f32 %v6777, 0.03125
        %v6807 = vmul.f32 %v6779, 0.03125
        %v6808 = vmul.f32 %v6781, 0.03125
        %v6809 = vmul.f32 %v6783, 0.03125
        %v6810 = vmul.f32 %v6785, 0.03125
        %v6811 = vmul.f32 %v6787, 0.03125
        %v6812 = vmul.f32 %v6789, 0.03125
        %v6813 = vmul.f32 %v6791, 0.03125
        %v6814 = vmul.f32 %v6793, 0.03125
        %v6815 = vmul.f32 %v6795, 0.03125
        %v6816 = vmul.f32 %v6797, 0.03125
        %v6817 = vmul.f32 %v6799, 0.03125
        %v6818 = vmul.f32 %v6801, 0.03125
        %v6819 = vmul.f32 %v6803, 0.03125
        %v6820 = vadd.f32 %v6804, 1e-05
        %v6821 = vadd.f32 %v6805, 1e-05
        %v6822 = vadd.f32 %v6806, 1e-05
        %v6823 = vadd.f32 %v6807, 1e-05
        %v6824 = vadd.f32 %v6808, 1e-05
        %v6825 = vadd.f32 %v6809, 1e-05
        %v6826 = vadd.f32 %v6810, 1e-05
        %v6827 = vadd.f32 %v6811, 1e-05
        %v6828 = vadd.f32 %v6812, 1e-05
        %v6829 = vadd.f32 %v6813, 1e-05
        %v6830 = vadd.f32 %v6814, 1e-05
        %v6831 = vadd.f32 %v6815, 1e-05
        %v6832 = vadd.f32 %v6816, 1e-05
        %v6833 = vadd.f32 %v6817, 1e-05
        %v6834 = vadd.f32 %v6818, 1e-05
        %v6835 = vadd.f32 %v6819, 1e-05
        %v6836 = vrsqrt.pop %v6820
        %v6837 = vrsqrt.pop %v6821
        %v6838 = vrsqrt.pop %v6822
        %v6839 = vrsqrt.pop %v6823
        %v6840 = vrsqrt.pop %v6824
        %v6841 = vrsqrt.pop %v6825
        %v6842 = vrsqrt.pop %v6826
        %v6843 = vrsqrt.pop %v6827
        %v6844 = vrsqrt.pop %v6828
        %v6845 = vrsqrt.pop %v6829
        %v6846 = vrsqrt.pop %v6830
        %v6847 = vrsqrt.pop %v6831
        %v6848 = vrsqrt.pop %v6832
        %v6849 = vrsqrt.pop %v6833
        %v6850 = vrsqrt.pop %v6834
        %v6851 = vrsqrt.pop %v6835
        %v6852 = vmul.f32 %v6740, %v6836
        %v6853 = vmul.f32 %v6741, %v6837
        %v6854 = vmul.f32 %v6742, %v6838
        %v6855 = vmul.f32 %v6743, %v6839
        %v6856 = vmul.f32 %v6744, %v6840
        %v6857 = vmul.f32 %v6745, %v6841
        %v6858 = vmul.f32 %v6746, %v6842
        %v6859 = vmul.f32 %v6747, %v6843
        %v6860 = vmul.f32 %v6748, %v6844
        %v6861 = vmul.f32 %v6749, %v6845
        %v6862 = vmul.f32 %v6750, %v6846
        %v6863 = vmul.f32 %v6751, %v6847
        %v6864 = vmul.f32 %v6752, %v6848
        %v6865 = vmul.f32 %v6753, %v6849
        %v6866 = vmul.f32 %v6754, %v6850
        %v6867 = vmul.f32 %v6755, %v6851
        %v6868 = vmul.f32 %v6852, %v1605
        %v6869 = vmul.f32 %v6853, %v1605
        %v6870 = vmul.f32 %v6854, %v1605
        %v6871 = vmul.f32 %v6855, %v1605
        %v6872 = vmul.f32 %v6856, %v1605
        %v6873 = vmul.f32 %v6857, %v1605
        %v6874 = vmul.f32 %v6858, %v1605
        %v6875 = vmul.f32 %v6859, %v1605
        %v6876 = vmul.f32 %v6860, %v1605
        %v6877 = vmul.f32 %v6861, %v1605
        %v6878 = vmul.f32 %v6862, %v1605
        %v6879 = vmul.f32 %v6863, %v1605
        %v6880 = vmul.f32 %v6864, %v1605
        %v6881 = vmul.f32 %v6865, %v1605
        %v6882 = vmul.f32 %v6866, %v1605
        %v6883 = vmul.f32 %v6867, %v1605
        %v6884 = vadd.f32 %v6868, %v1627
        %v6885 = vadd.f32 %v6869, %v1627
        %v6886 = vadd.f32 %v6870, %v1627
        %v6887 = vadd.f32 %v6871, %v1627
        %v6888 = vadd.f32 %v6872, %v1627
        %v6889 = vadd.f32 %v6873, %v1627
        %v6890 = vadd.f32 %v6874, %v1627
        %v6891 = vadd.f32 %v6875, %v1627
        %v6892 = vadd.f32 %v6876, %v1627
        %v6893 = vadd.f32 %v6877, %v1627
        %v6894 = vadd.f32 %v6878, %v1627
        %v6895 = vadd.f32 %v6879, %v1627
        %v6896 = vadd.f32 %v6880, %v1627
        %v6897 = vadd.f32 %v6881, %v1627
        %v6898 = vadd.f32 %v6882, %v1627
        %v6899 = vadd.f32 %v6883, %v1627
        %v6900 = vadd.f32 %v6884, %v1377
        %v6901 = vadd.f32 %v6885, %v1378
        %v6902 = vadd.f32 %v6886, %v1379
        %v6903 = vadd.f32 %v6887, %v1380
        %v6904 = vadd.f32 %v6888, %v1381
        %v6905 = vadd.f32 %v6889, %v1382
        %v6906 = vadd.f32 %v6890, %v1383
        %v6907 = vadd.f32 %v6891, %v1384
        %v6908 = vadd.f32 %v6892, %v1385
        %v6909 = vadd.f32 %v6893, %v1386
        %v6910 = vadd.f32 %v6894, %v1387
        %v6911 = vadd.f32 %v6895, %v1388
        %v6912 = vadd.f32 %v6896, %v1389
        %v6913 = vadd.f32 %v6897, %v1390
        %v6914 = vadd.f32 %v6898, %v1391
        %v6915 = vadd.f32 %v6899, %v1392
        %v6916 = vpack.c.bf16 %v6901, %v6900
        %v6917 = vpack.c.bf16 %v6903, %v6902
        %v6918 = vpack.c.bf16 %v6905, %v6904
        %v6919 = vpack.c.bf16 %v6907, %v6906
        %v6920 = vpack.c.bf16 %v6909, %v6908
        %v6921 = vpack.c.bf16 %v6911, %v6910
        %v6922 = vpack.c.bf16 %v6913, %v6912
        %v6923 = vpack.c.bf16 %v6915, %v6914
        %v6924 = vld [vmem:[%s962] sm:$0xf]
        %v6925 = vld [vmem:[%s962 + $0x4] sm:$0xf]
        %v6926 = vld [vmem:[%s962 + $0x8] sm:$0xf]
        %v6927 = vld [vmem:[%s962 + $0xc] sm:$0xf]
        %v6928 = vld [vmem:[%s962 + $0x10] sm:$0xf]
        %v6929 = vld [vmem:[%s962 + $0x14] sm:$0xf]
        %v6930 = vld [vmem:[%s962 + $0x18] sm:$0xf]
        %v6931 = vld [vmem:[%s962 + $0x1c] sm:$0xf]
        %v6932 = vld [vmem:[%s962 + $0x20] sm:$0xf]
        %v6933 = vld [vmem:[%s962 + $0x24] sm:$0xf]
        %v6934 = vld [vmem:[%s962 + $0x28] sm:$0xf]
        %v6935 = vld [vmem:[%s962 + $0x2c] sm:$0xf]
        %v6936 = vld [vmem:[%s962 + $0x30] sm:$0xf]
        %v6937 = vld [vmem:[%s962 + $0x34] sm:$0xf]
        %v6938 = vld [vmem:[%s962 + $0x38] sm:$0xf]
        %v6939 = vld [vmem:[%s962 + $0x3c] sm:$0xf]
        %v6940 = vld [vmem:[%s970] sm:$0x1]
        %v6942 = vlaneseq
        %v6943 = vshrl.u32 %v6942, 7
        %v6944 = vsub.s32 0, %v6943
        %v6945 = vrot.slane %v6940, %v6944
        %v6963 = vunpack.c.l.b16 %v6924
        %v6964 = vunpack.c.l.b16 %v6925
        %v6965 = vunpack.c.l.b16 %v6926
        %v6966 = vunpack.c.l.b16 %v6927
        %v6967 = vunpack.c.l.b16 %v6928
        %v6968 = vunpack.c.l.b16 %v6929
        %v6969 = vunpack.c.l.b16 %v6930
        %v6970 = vunpack.c.l.b16 %v6931
        %v6971 = vunpack.c.l.b16 %v6932
        %v6972 = vunpack.c.l.b16 %v6933
        %v6973 = vunpack.c.l.b16 %v6934
        %v6974 = vunpack.c.l.b16 %v6935
        %v6975 = vunpack.c.l.b16 %v6936
        %v6976 = vunpack.c.l.b16 %v6937
        %v6977 = vunpack.c.l.b16 %v6938
        %v6978 = vunpack.c.l.b16 %v6939
        %v6979 = vpack.c.b16 %v6964, %v6963
        %v6980 = vpack.c.b16 %v6966, %v6965
        %v6981 = vpack.c.b16 %v6968, %v6967
        %v6982 = vpack.c.b16 %v6970, %v6969
        %v6983 = vpack.c.b16 %v6972, %v6971
        %v6984 = vpack.c.b16 %v6974, %v6973
        %v6985 = vpack.c.b16 %v6976, %v6975
        %v6986 = vpack.c.b16 %v6978, %v6977
        %6995 = vmatprep.subr.bf16.mxu0 0
        %6996 = vmatpush1.bf16.msra.mxu0 %v6979
        %6997 = vmatprep.subr.bf16.mxu0 0
        %6998 = vmatpush1.bf16.msra.mxu0 %v6980
        %6999 = vmatprep.subr.bf16.mxu0 0
        %7000 = vmatpush1.bf16.msra.mxu0 %v6981
        %7001 = vmatprep.subr.bf16.mxu0 0
        %7002 = vmatpush1.bf16.msra.mxu0 %v6982
        %7003 = vmatprep.subr.bf16.mxu0 0
        %7004 = vmatpush1.bf16.msra.mxu0 %v6983
        %7005 = vmatprep.subr.bf16.mxu0 0
        %7006 = vmatpush1.bf16.msra.mxu0 %v6984
        %7007 = vmatprep.subr.bf16.mxu0 0
        %7008 = vmatpush1.bf16.msra.mxu0 %v6985
        %7009 = vmatprep.subr.bf16.mxu0 0
        %7010 = vmatpush1.bf16.msra.mxu0 %v6986
        %7011 = vmatprep.subr.bf16.mxu0 0
        %7012 = vmatpush1.bf16.msra.mxu0 0
        %7013 = vmatprep.subr.bf16.mxu0 0
        %7014 = vmatpush1.bf16.msra.mxu0 0
        %7015 = vmatprep.subr.bf16.mxu0 0
        %7016 = vmatpush1.bf16.msra.mxu0 0
        %7017 = vmatprep.subr.bf16.mxu0 0
        %7018 = vmatpush1.bf16.msra.mxu0 0
        %7019 = vmatprep.subr.bf16.mxu0 0
        %7020 = vmatpush1.bf16.msra.mxu0 0
        %7021 = vmatprep.subr.bf16.mxu0 0
        %7022 = vmatpush1.bf16.msra.mxu0 0
        %7023 = vmatprep.subr.bf16.mxu0 0
        %7024 = vmatpush1.bf16.msra.mxu0 0
        %7025 = vmatprep.subr.bf16.mxu0 0
        %7026 = vmatpush1.bf16.msra.mxu0 0
        %7027 = vmatprep.mubr.bf16.mxu0 0
        %7028 = vmatmul.mubr.bf16.gmra.mrb[0].mxu0 %v6916
        %v7029 = vpop.f32.mrb[0].mxu0
        %v7030 = vadd.f32 %v6945, %v7029
        %v7031 = vpop.f32.mrb[0].mxu0
        %v7032 = vpop.f32.mrb[0].mxu0
        %v7033 = vadd.f32 %v6945, %v7032
        %v7034 = vpop.f32.mrb[0].mxu0
        %7035 = vmatprep.mubr.bf16.mxu0 0
        %7036 = vmatmul.mubr.bf16.gmra.mrb[0].mxu0 %v6917
        %v7037 = vpop.f32.mrb[0].mxu0
        %v7038 = vadd.f32 %v6945, %v7037
        %v7039 = vpop.f32.mrb[0].mxu0
        %v7040 = vpop.f32.mrb[0].mxu0
        %v7041 = vadd.f32 %v6945, %v7040
        %v7042 = vpop.f32.mrb[0].mxu0
        %7043 = vmatprep.mubr.bf16.mxu0 0
        %7044 = vmatmul.mubr.bf16.gmra.mrb[0].mxu0 %v6918
        %v7045 = vpop.f32.mrb[0].mxu0
        %v7046 = vadd.f32 %v6945, %v7045
        %v7047 = vpop.f32.mrb[0].mxu0
        %v7048 = vpop.f32.mrb[0].mxu0
        %v7049 = vadd.f32 %v6945, %v7048
        %v7050 = vpop.f32.mrb[0].mxu0
        %7051 = vmatprep.mubr.bf16.mxu0 0
        %7052 = vmatmul.mubr.bf16.gmra.mrb[0].mxu0 %v6919
        %v7053 = vpop.f32.mrb[0].mxu0
        %v7054 = vadd.f32 %v6945, %v7053
        %v7055 = vpop.f32.mrb[0].mxu0
        %v7056 = vpop.f32.mrb[0].mxu0
        %v7057 = vadd.f32 %v6945, %v7056
        %v7058 = vpop.f32.mrb[0].mxu0
        %7059 = vmatprep.mubr.bf16.mxu0 0
        %7060 = vmatmul.mubr.bf16.gmra.mrb[0].mxu0 %v6920
        %v7061 = vpop.f32.mrb[0].mxu0
        %v7062 = vadd.f32 %v6945, %v7061
        %v7063 = vpop.f32.mrb[0].mxu0
        %v7064 = vpop.f32.mrb[0].mxu0
        %v7065 = vadd.f32 %v6945, %v7064
        %v7066 = vpop.f32.mrb[0].mxu0
        %7067 = vmatprep.mubr.bf16.mxu0 0
        %7068 = vmatmul.mubr.bf16.gmra.mrb[0].mxu0 %v6921
        %v7069 = vpop.f32.mrb[0].mxu0
        %v7070 = vadd.f32 %v6945, %v7069
        %v7071 = vpop.f32.mrb[0].mxu0
        %v7072 = vpop.f32.mrb[0].mxu0
        %v7073 = vadd.f32 %v6945, %v7072
        %v7074 = vpop.f32.mrb[0].mxu0
        %7075 = vmatprep.mubr.bf16.mxu0 0
        %7076 = vmatmul.mubr.bf16.gmra.mrb[0].mxu0 %v6922
        %v7077 = vpop.f32.mrb[0].mxu0
        %v7078 = vadd.f32 %v6945, %v7077
        %v7079 = vpop.f32.mrb[0].mxu0
        %v7080 = vpop.f32.mrb[0].mxu0
        %v7081 = vadd.f32 %v6945, %v7080
        %v7082 = vpop.f32.mrb[0].mxu0
        %7083 = vmatprep.mubr.bf16.mxu0 0
        %7084 = vmatmul.mubr.bf16.gmra.mrb[0].mxu0 %v6923
        %v7085 = vpop.f32.mrb[0].mxu0
        %v7086 = vadd.f32 %v6945, %v7085
        %v7087 = vpop.f32.mrb[0].mxu0
        %v7088 = vpop.f32.mrb[0].mxu0
        %v7089 = vadd.f32 %v6945, %v7088
        %v7090 = vpop.f32.mrb[0].mxu0
        %7091 = vdwg.mxu0
        %v7092 = vmul.f32 %v7030, 0.5
        %v7093 = vmul.f32 %v7033, 0.5
        %v7094 = vmul.f32 %v7038, 0.5
        %v7095 = vmul.f32 %v7041, 0.5
        %v7096 = vmul.f32 %v7046, 0.5
        %v7097 = vmul.f32 %v7049, 0.5
        %v7098 = vmul.f32 %v7054, 0.5
        %v7099 = vmul.f32 %v7057, 0.5
        %v7100 = vmul.f32 %v7062, 0.5
        %v7101 = vmul.f32 %v7065, 0.5
        %v7102 = vmul.f32 %v7070, 0.5
        %v7103 = vmul.f32 %v7073, 0.5
        %v7104 = vmul.f32 %v7078, 0.5
        %v7105 = vmul.f32 %v7081, 0.5
        %v7106 = vmul.f32 %v7086, 0.5
        %v7107 = vmul.f32 %v7089, 0.5
        %v7108 = vmul.f32 %v7030, 0.044715
        %v7109 = vmul.f32 %v7033, 0.044715
        %v7110 = vmul.f32 %v7038, 0.044715
        %v7111 = vmul.f32 %v7041, 0.044715
        %v7112 = vmul.f32 %v7046, 0.044715
        %v7113 = vmul.f32 %v7049, 0.044715
        %v7114 = vmul.f32 %v7054, 0.044715
        %v7115 = vmul.f32 %v7057, 0.044715
        %v7116 = vmul.f32 %v7062, 0.044715
        %v7117 = vmul.f32 %v7065, 0.044715
        %v7118 = vmul.f32 %v7070, 0.044715
        %v7119 = vmul.f32 %v7073, 0.044715
        %v7120 = vmul.f32 %v7078, 0.044715
        %v7121 = vmul.f32 %v7081, 0.044715
        %v7122 = vmul.f32 %v7086, 0.044715
        %v7123 = vmul.f32 %v7089, 0.044715
        %v7124 = vmul.f32 %v7108, %v7030
        %v7125 = vmul.f32 %v7109, %v7033
        %v7126 = vmul.f32 %v7110, %v7038
        %v7127 = vmul.f32 %v7111, %v7041
        %v7128 = vmul.f32 %v7112, %v7046
        %v7129 = vmul.f32 %v7113, %v7049
        %v7130 = vmul.f32 %v7114, %v7054
        %v7131 = vmul.f32 %v7115, %v7057
        %v7132 = vmul.f32 %v7116, %v7062
        %v7133 = vmul.f32 %v7117, %v7065
        %v7134 = vmul.f32 %v7118, %v7070
        %v7135 = vmul.f32 %v7119, %v7073
        %v7136 = vmul.f32 %v7120, %v7078
        %v7137 = vmul.f32 %v7121, %v7081
        %v7138 = vmul.f32 %v7122, %v7086
        %v7139 = vmul.f32 %v7123, %v7089
        %v7140 = vmul.f32 %v7124, %v7030
        %v7141 = vmul.f32 %v7125, %v7033
        %v7142 = vmul.f32 %v7126, %v7038
        %v7143 = vmul.f32 %v7127, %v7041
        %v7144 = vmul.f32 %v7128, %v7046
        %v7145 = vmul.f32 %v7129, %v7049
        %v7146 = vmul.f32 %v7130, %v7054
        %v7147 = vmul.f32 %v7131, %v7057
        %v7148 = vmul.f32 %v7132, %v7062
        %v7149 = vmul.f32 %v7133, %v7065
        %v7150 = vmul.f32 %v7134, %v7070
        %v7151 = vmul.f32 %v7135, %v7073
        %v7152 = vmul.f32 %v7136, %v7078
        %v7153 = vmul.f32 %v7137, %v7081
        %v7154 = vmul.f32 %v7138, %v7086
        %v7155 = vmul.f32 %v7139, %v7089
        %v7156 = vadd.f32 %v7030, %v7140
        %v7157 = vadd.f32 %v7033, %v7141
        %v7158 = vadd.f32 %v7038, %v7142
        %v7159 = vadd.f32 %v7041, %v7143
        %v7160 = vadd.f32 %v7046, %v7144
        %v7161 = vadd.f32 %v7049, %v7145
        %v7162 = vadd.f32 %v7054, %v7146
        %v7163 = vadd.f32 %v7057, %v7147
        %v7164 = vadd.f32 %v7062, %v7148
        %v7165 = vadd.f32 %v7065, %v7149
        %v7166 = vadd.f32 %v7070, %v7150
        %v7167 = vadd.f32 %v7073, %v7151
        %v7168 = vadd.f32 %v7078, %v7152
        %v7169 = vadd.f32 %v7081, %v7153
        %v7170 = vadd.f32 %v7086, %v7154
        %v7171 = vadd.f32 %v7089, %v7155
        %v7172 = vmul.f32 %v7156, 0.7978846
        %v7173 = vmul.f32 %v7157, 0.7978846
        %v7174 = vmul.f32 %v7158, 0.7978846
        %v7175 = vmul.f32 %v7159, 0.7978846
        %v7176 = vmul.f32 %v7160, 0.7978846
        %v7177 = vmul.f32 %v7161, 0.7978846
        %v7178 = vmul.f32 %v7162, 0.7978846
        %v7179 = vmul.f32 %v7163, 0.7978846
        %v7180 = vmul.f32 %v7164, 0.7978846
        %v7181 = vmul.f32 %v7165, 0.7978846
        %v7182 = vmul.f32 %v7166, 0.7978846
        %v7183 = vmul.f32 %v7167, 0.7978846
        %v7184 = vmul.f32 %v7168, 0.7978846
        %v7185 = vmul.f32 %v7169, 0.7978846
        %v7186 = vmul.f32 %v7170, 0.7978846
        %v7187 = vmul.f32 %v7171, 0.7978846
        %v7188 = vtanh.pop %v7172
        %v7189 = vtanh.pop %v7173
        %v7190 = vtanh.pop %v7174
        %v7191 = vtanh.pop %v7175
        %v7192 = vtanh.pop %v7176
        %v7193 = vtanh.pop %v7177
        %v7194 = vtanh.pop %v7178
        %v7195 = vtanh.pop %v7179
        %v7196 = vtanh.pop %v7180
        %v7197 = vtanh.pop %v7181
        %v7198 = vtanh.pop %v7182
        %v7199 = vtanh.pop %v7183
        %v7200 = vtanh.pop %v7184
        %v7201 = vtanh.pop %v7185
        %v7202 = vtanh.pop %v7186
        %v7203 = vtanh.pop %v7187
        %v7204 = vadd.f32 %v7188, 1.0
        %v7205 = vadd.f32 %v7189, 1.0
        %v7206 = vadd.f32 %v7190, 1.0
        %v7207 = vadd.f32 %v7191, 1.0
        %v7208 = vadd.f32 %v7192, 1.0
        %v7209 = vadd.f32 %v7193, 1.0
        %v7210 = vadd.f32 %v7194, 1.0
        %v7211 = vadd.f32 %v7195, 1.0
        %v7212 = vadd.f32 %v7196, 1.0
        %v7213 = vadd.f32 %v7197, 1.0
        %v7214 = vadd.f32 %v7198, 1.0
        %v7215 = vadd.f32 %v7199, 1.0
        %v7216 = vadd.f32 %v7200, 1.0
        %v7217 = vadd.f32 %v7201, 1.0
        %v7218 = vadd.f32 %v7202, 1.0
        %v7219 = vadd.f32 %v7203, 1.0
        %v7220 = vmul.f32 %v7092, %v7204
        %v7221 = vmul.f32 %v7093, %v7205
        %v7222 = vmul.f32 %v7094, %v7206
        %v7223 = vmul.f32 %v7095, %v7207
        %v7224 = vmul.f32 %v7096, %v7208
        %v7225 = vmul.f32 %v7097, %v7209
        %v7226 = vmul.f32 %v7098, %v7210
        %v7227 = vmul.f32 %v7099, %v7211
        %v7228 = vmul.f32 %v7100, %v7212
        %v7229 = vmul.f32 %v7101, %v7213
        %v7230 = vmul.f32 %v7102, %v7214
        %v7231 = vmul.f32 %v7103, %v7215
        %v7232 = vmul.f32 %v7104, %v7216
        %v7233 = vmul.f32 %v7105, %v7217
        %v7234 = vmul.f32 %v7106, %v7218
        %v7235 = vmul.f32 %v7107, %v7219
        %v7236 = vpack.c.bf16 %v7221, %v7220
        %v7237 = vpack.c.bf16 %v7223, %v7222
        %v7238 = vpack.c.bf16 %v7225, %v7224
        %v7239 = vpack.c.bf16 %v7227, %v7226
        %v7240 = vpack.c.bf16 %v7229, %v7228
        %v7241 = vpack.c.bf16 %v7231, %v7230
        %v7242 = vpack.c.bf16 %v7233, %v7232
        %v7243 = vpack.c.bf16 %v7235, %v7234
        %v7244 = vld [vmem:[%s979] sm:$0xf]
        %v7245 = vld [vmem:[%s979 + $0x4] sm:$0xf]
        %v7246 = vld [vmem:[%s979 + $0x8] sm:$0xf]
        %v7247 = vld [vmem:[%s979 + $0xc] sm:$0xf]
        %v7248 = vld [vmem:[%s979 + $0x10] sm:$0xf]
        %v7249 = vld [vmem:[%s979 + $0x14] sm:$0xf]
        %v7250 = vld [vmem:[%s979 + $0x18] sm:$0xf]
        %v7251 = vld [vmem:[%s979 + $0x1c] sm:$0xf]
        %v7252 = vld [vmem:[%s979 + $0x20] sm:$0xf]
        %v7253 = vld [vmem:[%s979 + $0x24] sm:$0xf]
        %v7254 = vld [vmem:[%s979 + $0x28] sm:$0xf]
        %v7255 = vld [vmem:[%s979 + $0x2c] sm:$0xf]
        %v7256 = vld [vmem:[%s979 + $0x30] sm:$0xf]
        %v7257 = vld [vmem:[%s979 + $0x34] sm:$0xf]
        %v7258 = vld [vmem:[%s979 + $0x38] sm:$0xf]
        %v7259 = vld [vmem:[%s979 + $0x3c] sm:$0xf]
        %v7260 = vld [vmem:[%s987] sm:$0x1]
        %v7262 = vlaneseq
        %v7263 = vshrl.u32 %v7262, 7
        %v7264 = vsub.s32 0, %v7263
        %v7265 = vrot.slane %v7260, %v7264
        %v7283 = vunpack.c.l.b16 %v7244
        %v7284 = vunpack.c.l.b16 %v7245
        %v7285 = vunpack.c.l.b16 %v7246
        %v7286 = vunpack.c.l.b16 %v7247
        %v7287 = vunpack.c.l.b16 %v7248
        %v7288 = vunpack.c.l.b16 %v7249
        %v7289 = vunpack.c.l.b16 %v7250
        %v7290 = vunpack.c.l.b16 %v7251
        %v7291 = vunpack.c.l.b16 %v7252
        %v7292 = vunpack.c.l.b16 %v7253
        %v7293 = vunpack.c.l.b16 %v7254
        %v7294 = vunpack.c.l.b16 %v7255
        %v7295 = vunpack.c.l.b16 %v7256
        %v7296 = vunpack.c.l.b16 %v7257
        %v7297 = vunpack.c.l.b16 %v7258
        %v7298 = vunpack.c.l.b16 %v7259
        %v7299 = vpack.c.b16 %v7284, %v7283
        %v7300 = vpack.c.b16 %v7286, %v7285
        %v7301 = vpack.c.b16 %v7288, %v7287
        %v7302 = vpack.c.b16 %v7290, %v7289
        %v7303 = vpack.c.b16 %v7292, %v7291
        %v7304 = vpack.c.b16 %v7294, %v7293
        %v7305 = vpack.c.b16 %v7296, %v7295
        %v7306 = vpack.c.b16 %v7298, %v7297
        %7315 = vmatprep.subr.bf16.mxu0 0
        %7316 = vmatpush1.bf16.msra.mxu0 %v7299
        %7317 = vmatprep.subr.bf16.mxu0 0
        %7318 = vmatpush1.bf16.msra.mxu0 %v7300
        %7319 = vmatprep.subr.bf16.mxu0 0
        %7320 = vmatpush1.bf16.msra.mxu0 %v7301
        %7321 = vmatprep.subr.bf16.mxu0 0
        %7322 = vmatpush1.bf16.msra.mxu0 %v7302
        %7323 = vmatprep.subr.bf16.mxu0 0
        %7324 = vmatpush1.bf16.msra.mxu0 %v7303
        %7325 = vmatprep.subr.bf16.mxu0 0
        %7326 = vmatpush1.bf16.msra.mxu0 %v7304
        %7327 = vmatprep.subr.bf16.mxu0 0
        %7328 = vmatpush1.bf16.msra.mxu0 %v7305
        %7329 = vmatprep.subr.bf16.mxu0 0
        %7330 = vmatpush1.bf16.msra.mxu0 %v7306
        %7331 = vmatprep.subr.bf16.mxu0 0
        %7332 = vmatpush1.bf16.msra.mxu0 0
        %7333 = vmatprep.subr.bf16.mxu0 0
        %7334 = vmatpush1.bf16.msra.mxu0 0
        %7335 = vmatprep.subr.bf16.mxu0 0
        %7336 = vmatpush1.bf16.msra.mxu0 0
        %7337 = vmatprep.subr.bf16.mxu0 0
        %7338 = vmatpush1.bf16.msra.mxu0 0
        %7339 = vmatprep.subr.bf16.mxu0 0
        %7340 = vmatpush1.bf16.msra.mxu0 0
        %7341 = vmatprep.subr.bf16.mxu0 0
        %7342 = vmatpush1.bf16.msra.mxu0 0
        %7343 = vmatprep.subr.bf16.mxu0 0
        %7344 = vmatpush1.bf16.msra.mxu0 0
        %7345 = vmatprep.subr.bf16.mxu0 0
        %7346 = vmatpush1.bf16.msra.mxu0 0
        %7347 = vmatprep.mubr.bf16.mxu0 0
        %7348 = vmatmul.mubr.bf16.gmra.mrb[0].mxu0 %v7236
        %v7349 = vpop.f32.mrb[0].mxu0
        %v7350 = vadd.f32 %v7265, %v7349
        %v7351 = vpop.f32.mrb[0].mxu0
        %v7352 = vpop.f32.mrb[0].mxu0
        %v7353 = vadd.f32 %v7265, %v7352
        %v7354 = vpop.f32.mrb[0].mxu0
        %7355 = vmatprep.mubr.bf16.mxu0 0
        %7356 = vmatmul.mubr.bf16.gmra.mrb[0].mxu0 %v7237
        %v7357 = vpop.f32.mrb[0].mxu0
        %v7358 = vadd.f32 %v7265, %v7357
        %v7359 = vpop.f32.mrb[0].mxu0
        %v7360 = vpop.f32.mrb[0].mxu0
        %v7361 = vadd.f32 %v7265, %v7360
        %v7362 = vpop.f32.mrb[0].mxu0
        %7363 = vmatprep.mubr.bf16.mxu0 0
        %7364 = vmatmul.mubr.bf16.gmra.mrb[0].mxu0 %v7238
        %v7365 = vpop.f32.mrb[0].mxu0
        %v7366 = vadd.f32 %v7265, %v7365
        %v7367 = vpop.f32.mrb[0].mxu0
        %v7368 = vpop.f32.mrb[0].mxu0
        %v7369 = vadd.f32 %v7265, %v7368
        %v7370 = vpop.f32.mrb[0].mxu0
        %7371 = vmatprep.mubr.bf16.mxu0 0
        %7372 = vmatmul.mubr.bf16.gmra.mrb[0].mxu0 %v7239
        %v7373 = vpop.f32.mrb[0].mxu0
        %v7374 = vadd.f32 %v7265, %v7373
        %v7375 = vpop.f32.mrb[0].mxu0
        %v7376 = vpop.f32.mrb[0].mxu0
        %v7377 = vadd.f32 %v7265, %v7376
        %v7378 = vpop.f32.mrb[0].mxu0
        %7379 = vmatprep.mubr.bf16.mxu0 0
        %7380 = vmatmul.mubr.bf16.gmra.mrb[0].mxu0 %v7240
        %v7381 = vpop.f32.mrb[0].mxu0
        %v7382 = vadd.f32 %v7265, %v7381
        %v7383 = vpop.f32.mrb[0].mxu0
        %v7384 = vpop.f32.mrb[0].mxu0
        %v7385 = vadd.f32 %v7265, %v7384
        %v7386 = vpop.f32.mrb[0].mxu0
        %7387 = vmatprep.mubr.bf16.mxu0 0
        %7388 = vmatmul.mubr.bf16.gmra.mrb[0].mxu0 %v7241
        %v7389 = vpop.f32.mrb[0].mxu0
        %v7390 = vadd.f32 %v7265, %v7389
        %v7391 = vpop.f32.mrb[0].mxu0
        %v7392 = vpop.f32.mrb[0].mxu0
        %v7393 = vadd.f32 %v7265, %v7392
        %v7394 = vpop.f32.mrb[0].mxu0
        %7395 = vmatprep.mubr.bf16.mxu0 0
        %7396 = vmatmul.mubr.bf16.gmra.mrb[0].mxu0 %v7242
        %v7397 = vpop.f32.mrb[0].mxu0
        %v7398 = vadd.f32 %v7265, %v7397
        %v7399 = vpop.f32.mrb[0].mxu0
        %v7400 = vpop.f32.mrb[0].mxu0
        %v7401 = vadd.f32 %v7265, %v7400
        %v7402 = vpop.f32.mrb[0].mxu0
        %7403 = vmatprep.mubr.bf16.mxu0 0
        %7404 = vmatmul.mubr.bf16.gmra.mrb[0].mxu0 %v7243
        %v7405 = vpop.f32.mrb[0].mxu0
        %v7406 = vadd.f32 %v7265, %v7405
        %v7407 = vpop.f32.mrb[0].mxu0
        %v7408 = vpop.f32.mrb[0].mxu0
        %v7409 = vadd.f32 %v7265, %v7408
        %v7410 = vpop.f32.mrb[0].mxu0
        %7411 = vdwg.mxu0
        %v7412 = vmul.f32 %v7350, 0.5
        %v7413 = vmul.f32 %v7353, 0.5
        %v7414 = vmul.f32 %v7358, 0.5
        %v7415 = vmul.f32 %v7361, 0.5
        %v7416 = vmul.f32 %v7366, 0.5
        %v7417 = vmul.f32 %v7369, 0.5
        %v7418 = vmul.f32 %v7374, 0.5
        %v7419 = vmul.f32 %v7377, 0.5
        %v7420 = vmul.f32 %v7382, 0.5
        %v7421 = vmul.f32 %v7385, 0.5
        %v7422 = vmul.f32 %v7390, 0.5
        %v7423 = vmul.f32 %v7393, 0.5
        %v7424 = vmul.f32 %v7398, 0.5
        %v7425 = vmul.f32 %v7401, 0.5
        %v7426 = vmul.f32 %v7406, 0.5
        %v7427 = vmul.f32 %v7409, 0.5
        %v7428 = vmul.f32 %v7350, 0.044715
        %v7429 = vmul.f32 %v7353, 0.044715
        %v7430 = vmul.f32 %v7358, 0.044715
        %v7431 = vmul.f32 %v7361, 0.044715
        %v7432 = vmul.f32 %v7366, 0.044715
        %v7433 = vmul.f32 %v7369, 0.044715
        %v7434 = vmul.f32 %v7374, 0.044715
        %v7435 = vmul.f32 %v7377, 0.044715
        %v7436 = vmul.f32 %v7382, 0.044715
        %v7437 = vmul.f32 %v7385, 0.044715
        %v7438 = vmul.f32 %v7390, 0.044715
        %v7439 = vmul.f32 %v7393, 0.044715
        %v7440 = vmul.f32 %v7398, 0.044715
        %v7441 = vmul.f32 %v7401, 0.044715
        %v7442 = vmul.f32 %v7406, 0.044715
        %v7443 = vmul.f32 %v7409, 0.044715
        %v7444 = vmul.f32 %v7428, %v7350
        %v7445 = vmul.f32 %v7429, %v7353
        %v7446 = vmul.f32 %v7430, %v7358
        %v7447 = vmul.f32 %v7431, %v7361
        %v7448 = vmul.f32 %v7432, %v7366
        %v7449 = vmul.f32 %v7433, %v7369
        %v7450 = vmul.f32 %v7434, %v7374
        %v7451 = vmul.f32 %v7435, %v7377
        %v7452 = vmul.f32 %v7436, %v7382
        %v7453 = vmul.f32 %v7437, %v7385
        %v7454 = vmul.f32 %v7438, %v7390
        %v7455 = vmul.f32 %v7439, %v7393
        %v7456 = vmul.f32 %v7440, %v7398
        %v7457 = vmul.f32 %v7441, %v7401
        %v7458 = vmul.f32 %v7442, %v7406
        %v7459 = vmul.f32 %v7443, %v7409
        %v7460 = vmul.f32 %v7444, %v7350
        %v7461 = vmul.f32 %v7445, %v7353
        %v7462 = vmul.f32 %v7446, %v7358
        %v7463 = vmul.f32 %v7447, %v7361
        %v7464 = vmul.f32 %v7448, %v7366
        %v7465 = vmul.f32 %v7449, %v7369
        %v7466 = vmul.f32 %v7450, %v7374
        %v7467 = vmul.f32 %v7451, %v7377
        %v7468 = vmul.f32 %v7452, %v7382
        %v7469 = vmul.f32 %v7453, %v7385
        %v7470 = vmul.f32 %v7454, %v7390
        %v7471 = vmul.f32 %v7455, %v7393
        %v7472 = vmul.f32 %v7456, %v7398
        %v7473 = vmul.f32 %v7457, %v7401
        %v7474 = vmul.f32 %v7458, %v7406
        %v7475 = vmul.f32 %v7459, %v7409
        %v7476 = vadd.f32 %v7350, %v7460
        %v7477 = vadd.f32 %v7353, %v7461
        %v7478 = vadd.f32 %v7358, %v7462
        %v7479 = vadd.f32 %v7361, %v7463
        %v7480 = vadd.f32 %v7366, %v7464
        %v7481 = vadd.f32 %v7369, %v7465
        %v7482 = vadd.f32 %v7374, %v7466
        %v7483 = vadd.f32 %v7377, %v7467
        %v7484 = vadd.f32 %v7382, %v7468
        %v7485 = vadd.f32 %v7385, %v7469
        %v7486 = vadd.f32 %v7390, %v7470
        %v7487 = vadd.f32 %v7393, %v7471
        %v7488 = vadd.f32 %v7398, %v7472
        %v7489 = vadd.f32 %v7401, %v7473
        %v7490 = vadd.f32 %v7406, %v7474
        %v7491 = vadd.f32 %v7409, %v7475
        %v7492 = vmul.f32 %v7476, 0.7978846
        %v7493 = vmul.f32 %v7477, 0.7978846
        %v7494 = vmul.f32 %v7478, 0.7978846
        %v7495 = vmul.f32 %v7479, 0.7978846
        %v7496 = vmul.f32 %v7480, 0.7978846
        %v7497 = vmul.f32 %v7481, 0.7978846
        %v7498 = vmul.f32 %v7482, 0.7978846
        %v7499 = vmul.f32 %v7483, 0.7978846
        %v7500 = vmul.f32 %v7484, 0.7978846
        %v7501 = vmul.f32 %v7485, 0.7978846
        %v7502 = vmul.f32 %v7486, 0.7978846
        %v7503 = vmul.f32 %v7487, 0.7978846
        %v7504 = vmul.f32 %v7488, 0.7978846
        %v7505 = vmul.f32 %v7489, 0.7978846
        %v7506 = vmul.f32 %v7490, 0.7978846
        %v7507 = vmul.f32 %v7491, 0.7978846
        %v7508 = vtanh.pop %v7492
        %v7509 = vtanh.pop %v7493
        %v7510 = vtanh.pop %v7494
        %v7511 = vtanh.pop %v7495
        %v7512 = vtanh.pop %v7496
        %v7513 = vtanh.pop %v7497
        %v7514 = vtanh.pop %v7498
        %v7515 = vtanh.pop %v7499
        %v7516 = vtanh.pop %v7500
        %v7517 = vtanh.pop %v7501
        %v7518 = vtanh.pop %v7502
        %v7519 = vtanh.pop %v7503
        %v7520 = vtanh.pop %v7504
        %v7521 = vtanh.pop %v7505
        %v7522 = vtanh.pop %v7506
        %v7523 = vtanh.pop %v7507
        %v7524 = vadd.f32 %v7508, 1.0
        %v7525 = vadd.f32 %v7509, 1.0
        %v7526 = vadd.f32 %v7510, 1.0
        %v7527 = vadd.f32 %v7511, 1.0
        %v7528 = vadd.f32 %v7512, 1.0
        %v7529 = vadd.f32 %v7513, 1.0
        %v7530 = vadd.f32 %v7514, 1.0
        %v7531 = vadd.f32 %v7515, 1.0
        %v7532 = vadd.f32 %v7516, 1.0
        %v7533 = vadd.f32 %v7517, 1.0
        %v7534 = vadd.f32 %v7518, 1.0
        %v7535 = vadd.f32 %v7519, 1.0
        %v7536 = vadd.f32 %v7520, 1.0
        %v7537 = vadd.f32 %v7521, 1.0
        %v7538 = vadd.f32 %v7522, 1.0
        %v7539 = vadd.f32 %v7523, 1.0
        %v7540 = vmul.f32 %v7412, %v7524
        %v7541 = vmul.f32 %v7413, %v7525
        %v7542 = vmul.f32 %v7414, %v7526
        %v7543 = vmul.f32 %v7415, %v7527
        %v7544 = vmul.f32 %v7416, %v7528
        %v7545 = vmul.f32 %v7417, %v7529
        %v7546 = vmul.f32 %v7418, %v7530
        %v7547 = vmul.f32 %v7419, %v7531
        %v7548 = vmul.f32 %v7420, %v7532
        %v7549 = vmul.f32 %v7421, %v7533
        %v7550 = vmul.f32 %v7422, %v7534
        %v7551 = vmul.f32 %v7423, %v7535
        %v7552 = vmul.f32 %v7424, %v7536
        %v7553 = vmul.f32 %v7425, %v7537
        %v7554 = vmul.f32 %v7426, %v7538
        %v7555 = vmul.f32 %v7427, %v7539
        %v7556 = vpack.c.bf16 %v7541, %v7540
        %v7557 = vpack.c.bf16 %v7543, %v7542
        %v7558 = vpack.c.bf16 %v7545, %v7544
        %v7559 = vpack.c.bf16 %v7547, %v7546
        %v7560 = vpack.c.bf16 %v7549, %v7548
        %v7561 = vpack.c.bf16 %v7551, %v7550
        %v7562 = vpack.c.bf16 %v7553, %v7552
        %v7563 = vpack.c.bf16 %v7555, %v7554
        %v7564 = vld [vmem:[%s996] sm:$0xf]
        %v7565 = vld [vmem:[%s996 + $0x4] sm:$0xf]
        %v7566 = vld [vmem:[%s996 + $0x8] sm:$0xf]
        %v7567 = vld [vmem:[%s996 + $0xc] sm:$0xf]
        %v7568 = vld [vmem:[%s996 + $0x10] sm:$0xf]
        %v7569 = vld [vmem:[%s996 + $0x14] sm:$0xf]
        %v7570 = vld [vmem:[%s996 + $0x18] sm:$0xf]
        %v7571 = vld [vmem:[%s996 + $0x1c] sm:$0xf]
        %v7572 = vld [vmem:[%s996 + $0x20] sm:$0xf]
        %v7573 = vld [vmem:[%s996 + $0x24] sm:$0xf]
        %v7574 = vld [vmem:[%s996 + $0x28] sm:$0xf]
        %v7575 = vld [vmem:[%s996 + $0x2c] sm:$0xf]
        %v7576 = vld [vmem:[%s996 + $0x30] sm:$0xf]
        %v7577 = vld [vmem:[%s996 + $0x34] sm:$0xf]
        %v7578 = vld [vmem:[%s996 + $0x38] sm:$0xf]
        %v7579 = vld [vmem:[%s996 + $0x3c] sm:$0xf]
        %v7580 = vld [vmem:[%s1004] sm:$0x1]
        %v7582 = vlaneseq
        %v7583 = vshrl.u32 %v7582, 7
        %v7584 = vsub.s32 0, %v7583
        %v7585 = vrot.slane %v7580, %v7584
        %v7603 = vunpack.c.l.b16 %v7564
        %v7604 = vunpack.c.l.b16 %v7565
        %v7605 = vunpack.c.l.b16 %v7566
        %v7606 = vunpack.c.l.b16 %v7567
        %v7607 = vunpack.c.l.b16 %v7568
        %v7608 = vunpack.c.l.b16 %v7569
        %v7609 = vunpack.c.l.b16 %v7570
        %v7610 = vunpack.c.l.b16 %v7571
        %v7611 = vunpack.c.l.b16 %v7572
        %v7612 = vunpack.c.l.b16 %v7573
        %v7613 = vunpack.c.l.b16 %v7574
        %v7614 = vunpack.c.l.b16 %v7575
        %v7615 = vunpack.c.l.b16 %v7576
        %v7616 = vunpack.c.l.b16 %v7577
        %v7617 = vunpack.c.l.b16 %v7578
        %v7618 = vunpack.c.l.b16 %v7579
        %v7619 = vpack.c.b16 %v7604, %v7603
        %v7620 = vpack.c.b16 %v7606, %v7605
        %v7621 = vpack.c.b16 %v7608, %v7607
        %v7622 = vpack.c.b16 %v7610, %v7609
        %v7623 = vpack.c.b16 %v7612, %v7611
        %v7624 = vpack.c.b16 %v7614, %v7613
        %v7625 = vpack.c.b16 %v7616, %v7615
        %v7626 = vpack.c.b16 %v7618, %v7617
        %7635 = vmatprep.subr.bf16.mxu0 0
        %7636 = vmatpush1.bf16.msra.mxu0 %v7619
        %7637 = vmatprep.subr.bf16.mxu0 0
        %7638 = vmatpush1.bf16.msra.mxu0 %v7620
        %7639 = vmatprep.subr.bf16.mxu0 0
        %7640 = vmatpush1.bf16.msra.mxu0 %v7621
        %7641 = vmatprep.subr.bf16.mxu0 0
        %7642 = vmatpush1.bf16.msra.mxu0 %v7622
        %7643 = vmatprep.subr.bf16.mxu0 0
        %7644 = vmatpush1.bf16.msra.mxu0 %v7623
        %7645 = vmatprep.subr.bf16.mxu0 0
        %7646 = vmatpush1.bf16.msra.mxu0 %v7624
        %7647 = vmatprep.subr.bf16.mxu0 0
        %7648 = vmatpush1.bf16.msra.mxu0 %v7625
        %7649 = vmatprep.subr.bf16.mxu0 0
        %7650 = vmatpush1.bf16.msra.mxu0 %v7626
        %7651 = vmatprep.subr.bf16.mxu0 0
        %7652 = vmatpush1.bf16.msra.mxu0 0
        %7653 = vmatprep.subr.bf16.mxu0 0
        %7654 = vmatpush1.bf16.msra.mxu0 0
        %7655 = vmatprep.subr.bf16.mxu0 0
        %7656 = vmatpush1.bf16.msra.mxu0 0
        %7657 = vmatprep.subr.bf16.mxu0 0
        %7658 = vmatpush1.bf16.msra.mxu0 0
        %7659 = vmatprep.subr.bf16.mxu0 0
        %7660 = vmatpush1.bf16.msra.mxu0 0
        %7661 = vmatprep.subr.bf16.mxu0 0
        %7662 = vmatpush1.bf16.msra.mxu0 0
        %7663 = vmatprep.subr.bf16.mxu0 0
        %7664 = vmatpush1.bf16.msra.mxu0 0
        %7665 = vmatprep.subr.bf16.mxu0 0
        %7666 = vmatpush1.bf16.msra.mxu0 0
        %7667 = vmatprep.mubr.bf16.mxu0 0
        %7668 = vmatmul.mubr.bf16.gmra.mrb[0].mxu0 %v7556
        %v7669 = vpop.f32.mrb[0].mxu0
        %v7670 = vadd.f32 %v7585, %v7669
        %v7671 = vpop.f32.mrb[0].mxu0
        %v7672 = vpop.f32.mrb[0].mxu0
        %v7673 = vadd.f32 %v7585, %v7672
        %v7674 = vpop.f32.mrb[0].mxu0
        %7675 = vmatprep.mubr.bf16.mxu0 0
        %7676 = vmatmul.mubr.bf16.gmra.mrb[0].mxu0 %v7557
        %v7677 = vpop.f32.mrb[0].mxu0
        %v7678 = vadd.f32 %v7585, %v7677
        %v7679 = vpop.f32.mrb[0].mxu0
        %v7680 = vpop.f32.mrb[0].mxu0
        %v7681 = vadd.f32 %v7585, %v7680
        %v7682 = vpop.f32.mrb[0].mxu0
        %7683 = vmatprep.mubr.bf16.mxu0 0
        %7684 = vmatmul.mubr.bf16.gmra.mrb[0].mxu0 %v7558
        %v7685 = vpop.f32.mrb[0].mxu0
        %v7686 = vadd.f32 %v7585, %v7685
        %v7687 = vpop.f32.mrb[0].mxu0
        %v7688 = vpop.f32.mrb[0].mxu0
        %v7689 = vadd.f32 %v7585, %v7688
        %v7690 = vpop.f32.mrb[0].mxu0
        %7691 = vmatprep.mubr.bf16.mxu0 0
        %7692 = vmatmul.mubr.bf16.gmra.mrb[0].mxu0 %v7559
        %v7693 = vpop.f32.mrb[0].mxu0
        %v7694 = vadd.f32 %v7585, %v7693
        %v7695 = vpop.f32.mrb[0].mxu0
        %v7696 = vpop.f32.mrb[0].mxu0
        %v7697 = vadd.f32 %v7585, %v7696
        %v7698 = vpop.f32.mrb[0].mxu0
        %7699 = vmatprep.mubr.bf16.mxu0 0
        %7700 = vmatmul.mubr.bf16.gmra.mrb[0].mxu0 %v7560
        %v7701 = vpop.f32.mrb[0].mxu0
        %v7702 = vadd.f32 %v7585, %v7701
        %v7703 = vpop.f32.mrb[0].mxu0
        %v7704 = vpop.f32.mrb[0].mxu0
        %v7705 = vadd.f32 %v7585, %v7704
        %v7706 = vpop.f32.mrb[0].mxu0
        %7707 = vmatprep.mubr.bf16.mxu0 0
        %7708 = vmatmul.mubr.bf16.gmra.mrb[0].mxu0 %v7561
        %v7709 = vpop.f32.mrb[0].mxu0
        %v7710 = vadd.f32 %v7585, %v7709
        %v7711 = vpop.f32.mrb[0].mxu0
        %v7712 = vpop.f32.mrb[0].mxu0
        %v7713 = vadd.f32 %v7585, %v7712
        %v7714 = vpop.f32.mrb[0].mxu0
        %7715 = vmatprep.mubr.bf16.mxu0 0
        %7716 = vmatmul.mubr.bf16.gmra.mrb[0].mxu0 %v7562
        %v7717 = vpop.f32.mrb[0].mxu0
        %v7718 = vadd.f32 %v7585, %v7717
        %v7719 = vpop.f32.mrb[0].mxu0
        %v7720 = vpop.f32.mrb[0].mxu0
        %v7721 = vadd.f32 %v7585, %v7720
        %v7722 = vpop.f32.mrb[0].mxu0
        %7723 = vmatprep.mubr.bf16.mxu0 0
        %7724 = vmatmul.mubr.bf16.gmra.mrb[0].mxu0 %v7563
        %v7725 = vpop.f32.mrb[0].mxu0
        %v7726 = vadd.f32 %v7585, %v7725
        %v7727 = vpop.f32.mrb[0].mxu0
        %v7728 = vpop.f32.mrb[0].mxu0
        %v7729 = vadd.f32 %v7585, %v7728
        %v7730 = vpop.f32.mrb[0].mxu0
        %7731 = vdwg.mxu0
        %v7732 = vld [vmem:[#allocation3] sm:$0xff]
        %v7733 = vld [vmem:[#allocation3 + $0x8] sm:$0xff]
        %v7734 = vld [vmem:[#allocation3 + $0x10] sm:$0xff]
        %v7735 = vld [vmem:[#allocation3 + $0x18] sm:$0xff]
        %v7736 = vld [vmem:[#allocation3 + $0x20] sm:$0xff]
        %v7737 = vld [vmem:[#allocation3 + $0x28] sm:$0xff]
        %v7738 = vld [vmem:[#allocation3 + $0x30] sm:$0xff]
        %v7739 = vld [vmem:[#allocation3 + $0x38] sm:$0xff]
        %v7740 = vld [vmem:[#allocation3 + $0x40] sm:$0xff]
        %v7741 = vld [vmem:[#allocation3 + $0x48] sm:$0xff]
        %v7742 = vld [vmem:[#allocation3 + $0x50] sm:$0xff]
        %v7743 = vld [vmem:[#allocation3 + $0x58] sm:$0xff]
        %v7744 = vld [vmem:[#allocation3 + $0x60] sm:$0xff]
        %v7745 = vld [vmem:[#allocation3 + $0x68] sm:$0xff]
        %v7746 = vld [vmem:[#allocation3 + $0x70] sm:$0xff]
        %v7747 = vld [vmem:[#allocation3 + $0x78] sm:$0xff]
        %v7748 = vadd.f32 %v7732, %v7670
        %v7749 = vadd.f32 %v7733, %v7673
        %v7750 = vadd.f32 %v7734, %v7678
        %v7751 = vadd.f32 %v7735, %v7681
        %v7752 = vadd.f32 %v7736, %v7686
        %v7753 = vadd.f32 %v7737, %v7689
        %v7754 = vadd.f32 %v7738, %v7694
        %v7755 = vadd.f32 %v7739, %v7697
        %v7756 = vadd.f32 %v7740, %v7702
        %v7757 = vadd.f32 %v7741, %v7705
        %v7758 = vadd.f32 %v7742, %v7710
        %v7759 = vadd.f32 %v7743, %v7713
        %v7760 = vadd.f32 %v7744, %v7718
        %v7761 = vadd.f32 %v7745, %v7721
        %v7762 = vadd.f32 %v7746, %v7726
        %v7763 = vadd.f32 %v7747, %v7729
        %7764 = vst [vmem:[#allocation3] sm:$0xff] %v7748
        %7765 = vst [vmem:[#allocation3 + $0x8] sm:$0xff] %v7749
        %7766 = vst [vmem:[#allocation3 + $0x10] sm:$0xff] %v7750
        %7767 = vst [vmem:[#allocation3 + $0x18] sm:$0xff] %v7751
        %7768 = vst [vmem:[#allocation3 + $0x20] sm:$0xff] %v7752
        %7769 = vst [vmem:[#allocation3 + $0x28] sm:$0xff] %v7753
        %7770 = vst [vmem:[#allocation3 + $0x30] sm:$0xff] %v7754
        %7771 = vst [vmem:[#allocation3 + $0x38] sm:$0xff] %v7755
        %7772 = vst [vmem:[#allocation3 + $0x40] sm:$0xff] %v7756
        %7773 = vst [vmem:[#allocation3 + $0x48] sm:$0xff] %v7757
        %7774 = vst [vmem:[#allocation3 + $0x50] sm:$0xff] %v7758
        %7775 = vst [vmem:[#allocation3 + $0x58] sm:$0xff] %v7759
        %7776 = vst [vmem:[#allocation3 + $0x60] sm:$0xff] %v7760
        %7777 = vst [vmem:[#allocation3 + $0x68] sm:$0xff] %v7761
        %7778 = vst [vmem:[#allocation3 + $0x70] sm:$0xff] %v7762
        %7779 = vst [vmem:[#allocation3 + $0x78] sm:$0xff] %v7763
        %p7780 = scmp.eq.s32.totalorder %s34, 7
        // Predicated region
        $region177: #{encoder_forward.1} parent=95 // pred_check
          %p7781 = pneg %p7780
        $region178: #{encoder_forward.1} parent=95 // pred_check_branch
          %7783 = sbr.rel (%p7781) target = $region180
        $region179: #{encoder_forward.1} parent=95 // pred_region
          %v7784 = vld [vmem:[#allocation3] sm:$0xff]
          %v7785 = vld [vmem:[#allocation3 + $0x8] sm:$0xff]
          %v7786 = vld [vmem:[#allocation3 + $0x10] sm:$0xff]
          %v7787 = vld [vmem:[#allocation3 + $0x18] sm:$0xff]
          %v7788 = vld [vmem:[#allocation3 + $0x20] sm:$0xff]
          %v7789 = vld [vmem:[#allocation3 + $0x28] sm:$0xff]
          %v7790 = vld [vmem:[#allocation3 + $0x30] sm:$0xff]
          %v7791 = vld [vmem:[#allocation3 + $0x38] sm:$0xff]
          %v7792 = vld [vmem:[#allocation3 + $0x40] sm:$0xff]
          %v7793 = vld [vmem:[#allocation3 + $0x48] sm:$0xff]
          %v7794 = vld [vmem:[#allocation3 + $0x50] sm:$0xff]
          %v7795 = vld [vmem:[#allocation3 + $0x58] sm:$0xff]
          %v7796 = vld [vmem:[#allocation3 + $0x60] sm:$0xff]
          %v7797 = vld [vmem:[#allocation3 + $0x68] sm:$0xff]
          %v7798 = vld [vmem:[#allocation3 + $0x70] sm:$0xff]
          %v7799 = vld [vmem:[#allocation3 + $0x78] sm:$0xff]
          %v7800 = vmul.f32 %v7784, %v1125
          %v7801 = vmul.f32 %v7785, %v1125
          %v7802 = vmul.f32 %v7786, %v1125
          %v7803 = vmul.f32 %v7787, %v1125
          %v7804 = vmul.f32 %v7788, %v1125
          %v7805 = vmul.f32 %v7789, %v1125
          %v7806 = vmul.f32 %v7790, %v1125
          %v7807 = vmul.f32 %v7791, %v1125
          %v7808 = vmul.f32 %v7792, %v1125
          %v7809 = vmul.f32 %v7793, %v1125
          %v7810 = vmul.f32 %v7794, %v1125
          %v7811 = vmul.f32 %v7795, %v1125
          %v7812 = vmul.f32 %v7796, %v1125
          %v7813 = vmul.f32 %v7797, %v1125
          %v7814 = vmul.f32 %v7798, %v1125
          %v7815 = vmul.f32 %v7799, %v1125
          %7816 = vadd.xlane.f32.xlu0 %v7800
          %v7817 = vpop.xlane.xlu0 %7816
          %7818 = vadd.xlane.f32.xlu0 %v7801
          %v7819 = vpop.xlane.xlu0 %7818
          %7820 = vadd.xlane.f32.xlu0 %v7802
          %v7821 = vpop.xlane.xlu0 %7820
          %7822 = vadd.xlane.f32.xlu0 %v7803
          %v7823 = vpop.xlane.xlu0 %7822
          %7824 = vadd.xlane.f32.xlu0 %v7804
          %v7825 = vpop.xlane.xlu0 %7824
          %7826 = vadd.xlane.f32.xlu0 %v7805
          %v7827 = vpop.xlane.xlu0 %7826
          %7828 = vadd.xlane.f32.xlu0 %v7806
          %v7829 = vpop.xlane.xlu0 %7828
          %7830 = vadd.xlane.f32.xlu0 %v7807
          %v7831 = vpop.xlane.xlu0 %7830
          %7832 = vadd.xlane.f32.xlu0 %v7808
          %v7833 = vpop.xlane.xlu0 %7832
          %7834 = vadd.xlane.f32.xlu0 %v7809
          %v7835 = vpop.xlane.xlu0 %7834
          %7836 = vadd.xlane.f32.xlu0 %v7810
          %v7837 = vpop.xlane.xlu0 %7836
          %7838 = vadd.xlane.f32.xlu0 %v7811
          %v7839 = vpop.xlane.xlu0 %7838
          %7840 = vadd.xlane.f32.xlu0 %v7812
          %v7841 = vpop.xlane.xlu0 %7840
          %7842 = vadd.xlane.f32.xlu0 %v7813
          %v7843 = vpop.xlane.xlu0 %7842
          %7844 = vadd.xlane.f32.xlu0 %v7814
          %v7845 = vpop.xlane.xlu0 %7844
          %7846 = vadd.xlane.f32.xlu0 %v7815
          %v7847 = vpop.xlane.xlu0 %7846
          %v7848 = vmul.f32 %v7817, 0.03125
          %v7849 = vmul.f32 %v7819, 0.03125
          %v7850 = vmul.f32 %v7821, 0.03125
          %v7851 = vmul.f32 %v7823, 0.03125
          %v7852 = vmul.f32 %v7825, 0.03125
          %v7853 = vmul.f32 %v7827, 0.03125
          %v7854 = vmul.f32 %v7829, 0.03125
          %v7855 = vmul.f32 %v7831, 0.03125
          %v7856 = vmul.f32 %v7833, 0.03125
          %v7857 = vmul.f32 %v7835, 0.03125
          %v7858 = vmul.f32 %v7837, 0.03125
          %v7859 = vmul.f32 %v7839, 0.03125
          %v7860 = vmul.f32 %v7841, 0.03125
          %v7861 = vmul.f32 %v7843, 0.03125
          %v7862 = vmul.f32 %v7845, 0.03125
          %v7863 = vmul.f32 %v7847, 0.03125
          %v7864 = vsub.f32 %v7784, %v7848
          %v7865 = vsub.f32 %v7785, %v7849
          %v7866 = vsub.f32 %v7786, %v7850
          %v7867 = vsub.f32 %v7787, %v7851
          %v7868 = vsub.f32 %v7788, %v7852
          %v7869 = vsub.f32 %v7789, %v7853
          %v7870 = vsub.f32 %v7790, %v7854
          %v7871 = vsub.f32 %v7791, %v7855
          %v7872 = vsub.f32 %v7792, %v7856
          %v7873 = vsub.f32 %v7793, %v7857
          %v7874 = vsub.f32 %v7794, %v7858
          %v7875 = vsub.f32 %v7795, %v7859
          %v7876 = vsub.f32 %v7796, %v7860
          %v7877 = vsub.f32 %v7797, %v7861
          %v7878 = vsub.f32 %v7798, %v7862
          %v7879 = vsub.f32 %v7799, %v7863
          %v7880 = vmul.f32 %v7864, %v1125
          %v7881 = vmul.f32 %v7865, %v1125
          %v7882 = vmul.f32 %v7866, %v1125
          %v7883 = vmul.f32 %v7867, %v1125
          %v7884 = vmul.f32 %v7868, %v1125
          %v7885 = vmul.f32 %v7869, %v1125
          %v7886 = vmul.f32 %v7870, %v1125
          %v7887 = vmul.f32 %v7871, %v1125
          %v7888 = vmul.f32 %v7872, %v1125
          %v7889 = vmul.f32 %v7873, %v1125
          %v7890 = vmul.f32 %v7874, %v1125
          %v7891 = vmul.f32 %v7875, %v1125
          %v7892 = vmul.f32 %v7876, %v1125
          %v7893 = vmul.f32 %v7877, %v1125
          %v7894 = vmul.f32 %v7878, %v1125
          %v7895 = vmul.f32 %v7879, %v1125
          %v7896 = vmul.f32 %v7880, %v7880
          %v7897 = vmul.f32 %v7881, %v7881
          %v7898 = vmul.f32 %v7882, %v7882
          %v7899 = vmul.f32 %v7883, %v7883
          %v7900 = vmul.f32 %v7884, %v7884
          %v7901 = vmul.f32 %v7885, %v7885
          %v7902 = vmul.f32 %v7886, %v7886
          %v7903 = vmul.f32 %v7887, %v7887
          %v7904 = vmul.f32 %v7888, %v7888
          %v7905 = vmul.f32 %v7889, %v7889
          %v7906 = vmul.f32 %v7890, %v7890
          %v7907 = vmul.f32 %v7891, %v7891
          %v7908 = vmul.f32 %v7892, %v7892
          %v7909 = vmul.f32 %v7893, %v7893
          %v7910 = vmul.f32 %v7894, %v7894
          %v7911 = vmul.f32 %v7895, %v7895
          %7912 = vadd.xlane.f32.xlu0 %v7896
          %v7913 = vpop.xlane.xlu0 %7912
          %7914 = vadd.xlane.f32.xlu0 %v7897
          %v7915 = vpop.xlane.xlu0 %7914
          %7916 = vadd.xlane.f32.xlu0 %v7898
          %v7917 = vpop.xlane.xlu0 %7916
          %7918 = vadd.xlane.f32.xlu0 %v7899
          %v7919 = vpop.xlane.xlu0 %7918
          %7920 = vadd.xlane.f32.xlu0 %v7900
          %v7921 = vpop.xlane.xlu0 %7920
          %7922 = vadd.xlane.f32.xlu0 %v7901
          %v7923 = vpop.xlane.xlu0 %7922
          %7924 = vadd.xlane.f32.xlu0 %v7902
          %v7925 = vpop.xlane.xlu0 %7924
          %7926 = vadd.xlane.f32.xlu0 %v7903
          %v7927 = vpop.xlane.xlu0 %7926
          %7928 = vadd.xlane.f32.xlu0 %v7904
          %v7929 = vpop.xlane.xlu0 %7928
          %7930 = vadd.xlane.f32.xlu0 %v7905
          %v7931 = vpop.xlane.xlu0 %7930
          %7932 = vadd.xlane.f32.xlu0 %v7906
          %v7933 = vpop.xlane.xlu0 %7932
          %7934 = vadd.xlane.f32.xlu0 %v7907
          %v7935 = vpop.xlane.xlu0 %7934
          %7936 = vadd.xlane.f32.xlu0 %v7908
          %v7937 = vpop.xlane.xlu0 %7936
          %7938 = vadd.xlane.f32.xlu0 %v7909
          %v7939 = vpop.xlane.xlu0 %7938
          %7940 = vadd.xlane.f32.xlu0 %v7910
          %v7941 = vpop.xlane.xlu0 %7940
          %7942 = vadd.xlane.f32.xlu0 %v7911
          %v7943 = vpop.xlane.xlu0 %7942
          %v7944 = vmul.f32 %v7913, 0.03125
          %v7945 = vmul.f32 %v7915, 0.03125
          %v7946 = vmul.f32 %v7917, 0.03125
          %v7947 = vmul.f32 %v7919, 0.03125
          %v7948 = vmul.f32 %v7921, 0.03125
          %v7949 = vmul.f32 %v7923, 0.03125
          %v7950 = vmul.f32 %v7925, 0.03125
          %v7951 = vmul.f32 %v7927, 0.03125
          %v7952 = vmul.f32 %v7929, 0.03125
          %v7953 = vmul.f32 %v7931, 0.03125
          %v7954 = vmul.f32 %v7933, 0.03125
          %v7955 = vmul.f32 %v7935, 0.03125
          %v7956 = vmul.f32 %v7937, 0.03125
          %v7957 = vmul.f32 %v7939, 0.03125
          %v7958 = vmul.f32 %v7941, 0.03125
          %v7959 = vmul.f32 %v7943, 0.03125
          %v7960 = vadd.f32 %v7944, 1e-05
          %v7961 = vadd.f32 %v7945, 1e-05
          %v7962 = vadd.f32 %v7946, 1e-05
          %v7963 = vadd.f32 %v7947, 1e-05
          %v7964 = vadd.f32 %v7948, 1e-05
          %v7965 = vadd.f32 %v7949, 1e-05
          %v7966 = vadd.f32 %v7950, 1e-05
          %v7967 = vadd.f32 %v7951, 1e-05
          %v7968 = vadd.f32 %v7952, 1e-05
          %v7969 = vadd.f32 %v7953, 1e-05
          %v7970 = vadd.f32 %v7954, 1e-05
          %v7971 = vadd.f32 %v7955, 1e-05
          %v7972 = vadd.f32 %v7956, 1e-05
          %v7973 = vadd.f32 %v7957, 1e-05
          %v7974 = vadd.f32 %v7958, 1e-05
          %v7975 = vadd.f32 %v7959, 1e-05
          %v7976 = vrsqrt.pop %v7960
          %v7977 = vrsqrt.pop %v7961
          %v7978 = vrsqrt.pop %v7962
          %v7979 = vrsqrt.pop %v7963
          %v7980 = vrsqrt.pop %v7964
          %v7981 = vrsqrt.pop %v7965
          %v7982 = vrsqrt.pop %v7966
          %v7983 = vrsqrt.pop %v7967
          %v7984 = vrsqrt.pop %v7968
          %v7985 = vrsqrt.pop %v7969
          %v7986 = vrsqrt.pop %v7970
          %v7987 = vrsqrt.pop %v7971
          %v7988 = vrsqrt.pop %v7972
          %v7989 = vrsqrt.pop %v7973
          %v7990 = vrsqrt.pop %v7974
          %v7991 = vrsqrt.pop %v7975
          %v7992 = vmul.f32 %v7880, %v7976
          %v7993 = vmul.f32 %v7881, %v7977
          %v7994 = vmul.f32 %v7882, %v7978
          %v7995 = vmul.f32 %v7883, %v7979
          %v7996 = vmul.f32 %v7884, %v7980
          %v7997 = vmul.f32 %v7885, %v7981
          %v7998 = vmul.f32 %v7886, %v7982
          %v7999 = vmul.f32 %v7887, %v7983
          %v8000 = vmul.f32 %v7888, %v7984
          %v8001 = vmul.f32 %v7889, %v7985
          %v8002 = vmul.f32 %v7890, %v7986
          %v8003 = vmul.f32 %v7891, %v7987
          %v8004 = vmul.f32 %v7892, %v7988
          %v8005 = vmul.f32 %v7893, %v7989
          %v8006 = vmul.f32 %v7894, %v7990
          %v8007 = vmul.f32 %v7895, %v7991
          %v8008 = vmul.f32 %v7992, %v1605
          %v8009 = vmul.f32 %v7993, %v1605
          %v8010 = vmul.f32 %v7994, %v1605
          %v8011 = vmul.f32 %v7995, %v1605
          %v8012 = vmul.f32 %v7996, %v1605
          %v8013 = vmul.f32 %v7997, %v1605
          %v8014 = vmul.f32 %v7998, %v1605
          %v8015 = vmul.f32 %v7999, %v1605
          %v8016 = vmul.f32 %v8000, %v1605
          %v8017 = vmul.f32 %v8001, %v1605
          %v8018 = vmul.f32 %v8002, %v1605
          %v8019 = vmul.f32 %v8003, %v1605
          %v8020 = vmul.f32 %v8004, %v1605
          %v8021 = vmul.f32 %v8005, %v1605
          %v8022 = vmul.f32 %v8006, %v1605
          %v8023 = vmul.f32 %v8007, %v1605
          %v8024 = vadd.f32 %v8008, %v1627
          %v8025 = vadd.f32 %v8009, %v1627
          %v8026 = vadd.f32 %v8010, %v1627
          %v8027 = vadd.f32 %v8011, %v1627
          %v8028 = vadd.f32 %v8012, %v1627
          %v8029 = vadd.f32 %v8013, %v1627
          %v8030 = vadd.f32 %v8014, %v1627
          %v8031 = vadd.f32 %v8015, %v1627
          %v8032 = vadd.f32 %v8016, %v1627
          %v8033 = vadd.f32 %v8017, %v1627
          %v8034 = vadd.f32 %v8018, %v1627
          %v8035 = vadd.f32 %v8019, %v1627
          %v8036 = vadd.f32 %v8020, %v1627
          %v8037 = vadd.f32 %v8021, %v1627
          %v8038 = vadd.f32 %v8022, %v1627
          %v8039 = vadd.f32 %v8023, %v1627
          %v8040 = vpack.c.bf16 %v8025, %v8024
          %v8041 = vpack.c.bf16 %v8027, %v8026
          %v8042 = vpack.c.bf16 %v8029, %v8028
          %v8043 = vpack.c.bf16 %v8031, %v8030
          %v8044 = vpack.c.bf16 %v8033, %v8032
          %v8045 = vpack.c.bf16 %v8035, %v8034
          %v8046 = vpack.c.bf16 %v8037, %v8036
          %v8047 = vpack.c.bf16 %v8039, %v8038
          %v8048 = vld [vmem:[#allocation26] sm:$0xf]
          %v8049 = vld [vmem:[#allocation26 + $0x4] sm:$0xf]
          %v8050 = vld [vmem:[#allocation26 + $0x8] sm:$0xf]
          %v8051 = vld [vmem:[#allocation26 + $0xc] sm:$0xf]
          %v8052 = vld [vmem:[#allocation26 + $0x10] sm:$0xf]
          %v8053 = vld [vmem:[#allocation26 + $0x14] sm:$0xf]
          %v8054 = vld [vmem:[#allocation26 + $0x18] sm:$0xf]
          %v8055 = vld [vmem:[#allocation26 + $0x1c] sm:$0xf]
          %v8056 = vld [vmem:[#allocation26 + $0x20] sm:$0xf]
          %v8057 = vld [vmem:[#allocation26 + $0x24] sm:$0xf]
          %v8058 = vld [vmem:[#allocation26 + $0x28] sm:$0xf]
          %v8059 = vld [vmem:[#allocation26 + $0x2c] sm:$0xf]
          %v8060 = vld [vmem:[#allocation26 + $0x30] sm:$0xf]
          %v8061 = vld [vmem:[#allocation26 + $0x34] sm:$0xf]
          %v8062 = vld [vmem:[#allocation26 + $0x38] sm:$0xf]
          %v8063 = vld [vmem:[#allocation26 + $0x3c] sm:$0xf]
          %v8080 = vunpack.c.l.b16 %v8048
          %v8081 = vunpack.c.l.b16 %v8049
          %v8082 = vunpack.c.l.b16 %v8050
          %v8083 = vunpack.c.l.b16 %v8051
          %v8084 = vunpack.c.l.b16 %v8052
          %v8085 = vunpack.c.l.b16 %v8053
          %v8086 = vunpack.c.l.b16 %v8054
          %v8087 = vunpack.c.l.b16 %v8055
          %v8088 = vunpack.c.l.b16 %v8056
          %v8089 = vunpack.c.l.b16 %v8057
          %v8090 = vunpack.c.l.b16 %v8058
          %v8091 = vunpack.c.l.b16 %v8059
          %v8092 = vunpack.c.l.b16 %v8060
          %v8093 = vunpack.c.l.b16 %v8061
          %v8094 = vunpack.c.l.b16 %v8062
          %v8095 = vunpack.c.l.b16 %v8063
          %v8096 = vpack.c.b16 %v8081, %v8080
          %v8097 = vpack.c.b16 %v8083, %v8082
          %v8098 = vpack.c.b16 %v8085, %v8084
          %v8099 = vpack.c.b16 %v8087, %v8086
          %v8100 = vpack.c.b16 %v8089, %v8088
          %v8101 = vpack.c.b16 %v8091, %v8090
          %v8102 = vpack.c.b16 %v8093, %v8092
          %v8103 = vpack.c.b16 %v8095, %v8094
          %8112 = vmatprep.subr.bf16.mxu0 0
          %8113 = vmatpush1.bf16.msra.mxu0 %v8096
          %8114 = vmatprep.subr.bf16.mxu0 0
          %8115 = vmatpush1.bf16.msra.mxu0 %v8097
          %8116 = vmatprep.subr.bf16.mxu0 0
          %8117 = vmatpush1.bf16.msra.mxu0 %v8098
          %8118 = vmatprep.subr.bf16.mxu0 0
          %8119 = vmatpush1.bf16.msra.mxu0 %v8099
          %8120 = vmatprep.subr.bf16.mxu0 0
          %8121 = vmatpush1.bf16.msra.mxu0 %v8100
          %8122 = vmatprep.subr.bf16.mxu0 0
          %8123 = vmatpush1.bf16.msra.mxu0 %v8101
          %8124 = vmatprep.subr.bf16.mxu0 0
          %8125 = vmatpush1.bf16.msra.mxu0 %v8102
          %8126 = vmatprep.subr.bf16.mxu0 0
          %8127 = vmatpush1.bf16.msra.mxu0 %v8103
          %8128 = vmatprep.subr.bf16.mxu0 0
          %8129 = vmatpush1.bf16.msra.mxu0 0
          %8130 = vmatprep.subr.bf16.mxu0 0
          %8131 = vmatpush1.bf16.msra.mxu0 0
          %8132 = vmatprep.subr.bf16.mxu0 0
          %8133 = vmatpush1.bf16.msra.mxu0 0
          %8134 = vmatprep.subr.bf16.mxu0 0
          %8135 = vmatpush1.bf16.msra.mxu0 0
          %8136 = vmatprep.subr.bf16.mxu0 0
          %8137 = vmatpush1.bf16.msra.mxu0 0
          %8138 = vmatprep.subr.bf16.mxu0 0
          %8139 = vmatpush1.bf16.msra.mxu0 0
          %8140 = vmatprep.subr.bf16.mxu0 0
          %8141 = vmatpush1.bf16.msra.mxu0 0
          %8142 = vmatprep.subr.bf16.mxu0 0
          %8143 = vmatpush1.bf16.msra.mxu0 0
          %8144 = vmatprep.mubr.bf16.mxu0 0
          %8145 = vmatmul.mubr.bf16.gmra.mrb[0].mxu0 %v8040
          %v8146 = vpop.f32.mrb[0].mxu0
          %v8147 = vadd.f32 0.0, %v8146
          %v8148 = vpop.f32.mrb[0].mxu0
          %v8149 = vpop.f32.mrb[0].mxu0
          %v8150 = vadd.f32 0.0, %v8149
          %v8151 = vpop.f32.mrb[0].mxu0
          %8152 = vmatprep.mubr.bf16.mxu0 0
          %8153 = vmatmul.mubr.bf16.gmra.mrb[0].mxu0 %v8041
          %v8154 = vpop.f32.mrb[0].mxu0
          %v8155 = vadd.f32 0.0, %v8154
          %v8156 = vpop.f32.mrb[0].mxu0
          %v8157 = vpop.f32.mrb[0].mxu0
          %v8158 = vadd.f32 0.0, %v8157
          %v8159 = vpop.f32.mrb[0].mxu0
          %8160 = vmatprep.mubr.bf16.mxu0 0
          %8161 = vmatmul.mubr.bf16.gmra.mrb[0].mxu0 %v8042
          %v8162 = vpop.f32.mrb[0].mxu0
          %v8163 = vadd.f32 0.0, %v8162
          %v8164 = vpop.f32.mrb[0].mxu0
          %v8165 = vpop.f32.mrb[0].mxu0
          %v8166 = vadd.f32 0.0, %v8165
          %v8167 = vpop.f32.mrb[0].mxu0
          %8168 = vmatprep.mubr.bf16.mxu0 0
          %8169 = vmatmul.mubr.bf16.gmra.mrb[0].mxu0 %v8043
          %v8170 = vpop.f32.mrb[0].mxu0
          %v8171 = vadd.f32 0.0, %v8170
          %v8172 = vpop.f32.mrb[0].mxu0
          %v8173 = vpop.f32.mrb[0].mxu0
          %v8174 = vadd.f32 0.0, %v8173
          %v8175 = vpop.f32.mrb[0].mxu0
          %8176 = vmatprep.mubr.bf16.mxu0 0
          %8177 = vmatmul.mubr.bf16.gmra.mrb[0].mxu0 %v8044
          %v8178 = vpop.f32.mrb[0].mxu0
          %v8179 = vadd.f32 0.0, %v8178
          %v8180 = vpop.f32.mrb[0].mxu0
          %v8181 = vpop.f32.mrb[0].mxu0
          %v8182 = vadd.f32 0.0, %v8181
          %v8183 = vpop.f32.mrb[0].mxu0
          %8184 = vmatprep.mubr.bf16.mxu0 0
          %8185 = vmatmul.mubr.bf16.gmra.mrb[0].mxu0 %v8045
          %v8186 = vpop.f32.mrb[0].mxu0
          %v8187 = vadd.f32 0.0, %v8186
          %v8188 = vpop.f32.mrb[0].mxu0
          %v8189 = vpop.f32.mrb[0].mxu0
          %v8190 = vadd.f32 0.0, %v8189
          %v8191 = vpop.f32.mrb[0].mxu0
          %8192 = vmatprep.mubr.bf16.mxu0 0
          %8193 = vmatmul.mubr.bf16.gmra.mrb[0].mxu0 %v8046
          %v8194 = vpop.f32.mrb[0].mxu0
          %v8195 = vadd.f32 0.0, %v8194
          %v8196 = vpop.f32.mrb[0].mxu0
          %v8197 = vpop.f32.mrb[0].mxu0
          %v8198 = vadd.f32 0.0, %v8197
          %v8199 = vpop.f32.mrb[0].mxu0
          %8200 = vmatprep.mubr.bf16.mxu0 0
          %8201 = vmatmul.mubr.bf16.gmra.mrb[0].mxu0 %v8047
          %v8202 = vpop.f32.mrb[0].mxu0
          %v8203 = vadd.f32 0.0, %v8202
          %v8204 = vpop.f32.mrb[0].mxu0
          %v8205 = vpop.f32.mrb[0].mxu0
          %v8206 = vadd.f32 0.0, %v8205
          %v8207 = vpop.f32.mrb[0].mxu0
          %8208 = vdwg.mxu0
          %8209 = vst [vmem:[#allocation27] sm:$0xff] %v8147
          %8210 = vst [vmem:[#allocation27 + $0x8] sm:$0xff] %v8150
          %8211 = vst [vmem:[#allocation27 + $0x10] sm:$0xff] %v8155
          %8212 = vst [vmem:[#allocation27 + $0x18] sm:$0xff] %v8158
          %8213 = vst [vmem:[#allocation27 + $0x20] sm:$0xff] %v8163
          %8214 = vst [vmem:[#allocation27 + $0x28] sm:$0xff] %v8166
          %8215 = vst [vmem:[#allocation27 + $0x30] sm:$0xff] %v8171
          %8216 = vst [vmem:[#allocation27 + $0x38] sm:$0xff] %v8174
          %8217 = vst [vmem:[#allocation27 + $0x40] sm:$0xff] %v8179
          %8218 = vst [vmem:[#allocation27 + $0x48] sm:$0xff] %v8182
          %8219 = vst [vmem:[#allocation27 + $0x50] sm:$0xff] %v8187
          %8220 = vst [vmem:[#allocation27 + $0x58] sm:$0xff] %v8190
          %8221 = vst [vmem:[#allocation27 + $0x60] sm:$0xff] %v8195
          %8222 = vst [vmem:[#allocation27 + $0x68] sm:$0xff] %v8198
          %8223 = vst [vmem:[#allocation27 + $0x70] sm:$0xff] %v8203
          %8224 = vst [vmem:[#allocation27 + $0x78] sm:$0xff] %v8206
        $region180: #{encoder_forward.1} parent=95 // pred_fallthru
          _
        // Predicated region
        $region181: #{encoder_forward.1} parent=95 // pred_check
          %p8225 = pneg %p516
        $region182: #{encoder_forward.1} parent=95 // pred_check_branch
          %8227 = sbr.rel (%p8225) target = $region184
        $region183: #{encoder_forward.1} parent=95 // pred_region
          %s8229 = ssub.s32 2048, 2048
          %8230 = vsyncadd [#allocation6], %s8229
          %s8231 = sshll.u32 [#allocation27], 4
          %s8232 = int_to_ptr.vmem [resolvable:$true] %s8231
          %8237 = dma.vmem_to_hbm [thread:$0]  %s8232, 2048, %s19, [#allocation6], 128, 128, 8
        $region184: #{encoder_forward.1} parent=95 // pred_fallthru
          _
        // Predicated region
        $region185: #{encoder_forward.1} parent=95 // pred_check
          %p8238 = pneg %p516
        $region186: #{encoder_forward.1} parent=95 // pred_check_branch
          %8240 = sbr.rel (%p8238) target = $region188
        $region187: #{encoder_forward.1} parent=95 // pred_region
          %8241 = dma.done [#allocation6], 2048
        $region188: #{encoder_forward.1} parent=95 // pred_fallthru
          _
      $region96: #{encoder_forward.1} parent=5 // pred_fallthru
        _
      %p8242 = scmp.le.s32.totalorder 2, %s29
      // Predicated region
      $region189: #{encoder_forward.1} parent=5 // pred_check
        %p8243 = pneg %p8242
      $region190: #{encoder_forward.1} parent=5 // pred_check_branch
        %8245 = sbr.rel (%p8243) target = $region192
      $region191: #{encoder_forward.1} parent=5 // pred_region
        %s8246 = ssub.s32 %s29, 2
      $region192: #{encoder_forward.1} parent=5 // pred_fallthru
        _
    $region6: #{encoder_forward.1} parent=1 // loop_footer
      %s33 = sadd.s32 1, %s29
    $region7: #{encoder_forward.1} parent=1 // loop_footer_branch
      %28 = sbr.rel target = $region3
    $region8: #{encoder_forward.1} parent=1 // loop_exit
      _
    %8247 = vsyncpa [#allocation5], 1
    %s8248 = scalar_lea.sflag [#allocation5], 1
    %8249 = vsyncpa %s8248, 1
    %8250 = vsyncpa [#allocation8], 1
    %8251 = vsyncpa [#allocation11], 1
    %8252 = vsyncpa [#allocation6], 1
    %s8253 = scalar_lea.sflag [#allocation6], 1
    %8254 = vsyncpa %s8253, 1

</llo_original>
